<compile_context>
chip_gen: v7x
topology: tpu7x:2x2x1
jax: 0.10.0
libtpu: 0.0.40
codegen_flags: <defaults>
</compile_context>

<pallas_src>
import functools
import numpy as np

import jax
import jax.numpy as jnp
from jax.experimental import pallas as pl
from jax.experimental.pallas import tpu as pltpu


# ----------------------------------------------------------------------------
# In-kernel building blocks (operate on traced values inside the kernel)
# ----------------------------------------------------------------------------
def _dot(x, w_bf16):
    """bf16 MXU matmul with f32 accumulation (weights are stored in bf16)."""
    return jnp.dot(x.astype(jnp.bfloat16), w_bf16,
                   preferred_element_type=jnp.float32)


def _fused_linear(xv, xq, w_wide, b_wide, out_w, activation):
    """Apply the v-stream and q-stream linears of one layer with ONE matmul.

    w_wide = [Wv | Wq]  ([in, 2*out_w], bf16), rows = [v rows ; q rows].
    The cross terms (v@Wq, q@Wv) are computed but discarded by slicing.

    xv: [Rv, in]  xq: [Rq, in]  b_wide: [1, 2*out_w] (f32)
    Returns (yv [Rv, out_w], yq [Rq, out_w]).
    """
    rv = xv.shape[0]
    x = jnp.concatenate([xv, xq], axis=0)
    y = _dot(x, w_wide) + b_wide
    if activation == "relu":
        y = jnp.maximum(y, 0.0)
    elif activation == "sigmoid":
        y = jax.nn.sigmoid(y)
    return y[:rv, :out_w], y[rv:, out_w:2 * out_w]


def _attention(qv, kv, vv, num_head, inv_scale):
    """Multi-head attention with all heads folded into one batched einsum pair.

    qv: [B, Nq, D]   kv, vv: [B, Nk, D]   -> [B, Nq, D]
    Head split/merge uses static lane slices + leading-axis concats only
    (no per-head matmul loop); softmax reductions run once over all heads.
    """
    B, Nq, D = qv.shape
    dh = D // num_head

    def split(x):     # [B, N, H*dh] -> [H*B, N, dh]   (head-major stacking)
        return jnp.concatenate(
            [x[:, :, h * dh:(h + 1) * dh] for h in range(num_head)], axis=0)

    q_r = split(qv).astype(jnp.bfloat16)
    k_r = split(kv).astype(jnp.bfloat16)
    v_r = split(vv).astype(jnp.bfloat16)

    s = jnp.einsum("bqd,bkd->bqk", q_r, k_r,
                   preferred_element_type=jnp.float32) * inv_scale
    s = s - jnp.max(s, axis=-1, keepdims=True)
    e = jnp.exp(s)
    p = e * pl.reciprocal(jnp.sum(e, axis=-1, keepdims=True), approx=True)
    o = jnp.einsum("bqk,bkd->bqd", p.astype(jnp.bfloat16), v_r,
                   preferred_element_type=jnp.float32)       # [H*B, Nq, dh]
    # merge heads back to lanes (head h -> columns [h*dh:(h+1)*dh])
    return jnp.concatenate(
        [o[h * B:(h + 1) * B] for h in range(num_head)], axis=-1)


def _inter_block(v3, q3, qkv_w, qkv_b, out_w, out_b, num_head, O):
    """InterModalityUpdate forward."""
    B, Nv, _ = v3.shape
    Nq = q3.shape[1]
    v2 = v3.reshape(B * Nv, O)
    q2 = q3.reshape(B * Nq, O)

    v_tran, q_tran = _fused_linear(v2, q2, qkv_w, qkv_b, 3 * O, "relu")
    v_tran = v_tran.reshape(B, Nv, 3 * O)
    q_tran = q_tran.reshape(B, Nq, 3 * O)
    v_key, v_query, v_val = v_tran[..., :O], v_tran[..., O:2 * O], v_tran[..., 2 * O:]
    q_key, q_query, q_val = q_tran[..., :O], q_tran[..., O:2 * O], q_tran[..., 2 * O:]

    inv_scale = 1.0 / float(np.sqrt(O // num_head))
    v_upd = _attention(v_query, q_key, q_val, num_head, inv_scale)   # q -> v
    q_upd = _attention(q_query, v_key, v_val, num_head, inv_scale)   # v -> q

    cat_v = jnp.concatenate([v2, v_upd.reshape(B * Nv, O)], axis=-1)
    cat_q = jnp.concatenate([q2, q_upd.reshape(B * Nq, O)], axis=-1)
    uv, uq = _fused_linear(cat_v, cat_q, out_w, out_b, O, "relu")
    return uv.reshape(B, Nv, O), uq.reshape(B, Nq, O)


def _intra_block(v3, q3, gate_w, gate_b, qkv_w, qkv_b, out_w, out_b,
                 num_head, O):
    """DyIntraModalityUpdate forward."""
    B, Nv, _ = v3.shape
    Nq = q3.shape[1]
    v2 = v3.reshape(B * Nv, O)
    q2 = q3.reshape(B * Nq, O)

    v_mean = jnp.sum(v3, axis=1) * (1.0 / Nv)                    # [B, O]
    q_mean = jnp.sum(q3, axis=1) * (1.0 / Nq)
    # v4q_gate = sigmoid(v4q_gate_lin(v_mean)), q4v_gate = sigmoid(q4v_gate_lin(q_mean))
    v4q_gate, q4v_gate = _fused_linear(v_mean, q_mean, gate_w, gate_b, O, "sigmoid")

    v_tran, q_tran = _fused_linear(v2, q2, qkv_w, qkv_b, 3 * O, "relu")
    v_tran = v_tran.reshape(B, Nv, 3 * O)
    q_tran = q_tran.reshape(B, Nq, 3 * O)
    v_key, v_query, v_val = v_tran[..., :O], v_tran[..., O:2 * O], v_tran[..., 2 * O:]
    q_key, q_query, q_val = q_tran[..., :O], q_tran[..., O:2 * O], q_tran[..., 2 * O:]

    # Original module applies (1 + gate) to query, key AND value.
    gv = (1.0 + q4v_gate)[:, None, :]      # q-derived gate on the v stream
    gq = (1.0 + v4q_gate)[:, None, :]      # v-derived gate on the q stream
    inv_scale = 1.0 / float(np.sqrt(O // num_head))

    v_upd = _attention(gv * v_query, gv * v_key, gv * v_val, num_head, inv_scale)
    q_upd = _attention(gq * q_query, gq * q_key, gq * q_val, num_head, inv_scale)

    uv, uq = _fused_linear(v2 + v_upd.reshape(B * Nv, O),
                           q2 + q_upd.reshape(B * Nq, O),
                           out_w, out_b, O, "relu")
    return uv.reshape(B, Nv, O), uq.reshape(B, Nq, O)


# ----------------------------------------------------------------------------
# The single fused kernel: whole MultiBlocks forward in one pallas_call
# ----------------------------------------------------------------------------
def _multiblocks_kernel(v_ref, q_ref, w_init_ref, b_init_ref,
                        qkv_w_ref, qkv_b_ref, out2_w_ref, small_w_ref,
                        b2o_ref, out_v_ref, out_q_ref,
                        *, num_blocks, output_size, num_inter_head,
                        num_intra_head):
    O = output_size
    B, Nv, Dv = v_ref.shape
    Nq, Dq = q_ref.shape[1], q_ref.shape[2]

    # Initial projections (both streams in one matmul).
    v0, q0 = _fused_linear(v_ref[...].reshape(B * Nv, Dv),
                           q_ref[...].reshape(B * Nq, Dq),
                           w_init_ref[...], b_init_ref[...], O, "relu")
    v0 = v0.reshape(B, Nv, O)
    q0 = q0.reshape(B, Nq, O)

    x_v, x_q = v0, q0            # container[-1] (next block input)
    res_v, res_q = v0, q0        # sum(result_v), sum(result_q)
    for i in range(num_blocks):  # static block loop (unrolled)
        # --- InterModalityUpdate ---
        v1, q1 = _inter_block(
            x_v, x_q,
            qkv_w_ref[2 * i], qkv_b_ref[2 * i],
            out2_w_ref[i], b2o_ref[3 * i],
            num_inter_head, O)
        # --- DyIntraModalityUpdate on (inter_out + block_input) ---
        v2_, q2_ = _intra_block(
            v1 + x_v, q1 + x_q,
            small_w_ref[2 * i], b2o_ref[3 * i + 1],
            qkv_w_ref[2 * i + 1], qkv_b_ref[2 * i + 1],
            small_w_ref[2 * i + 1], b2o_ref[3 * i + 2],
            num_intra_head, O)
        res_v = res_v + v1 + v2_
        res_q = res_q + q1 + q2_
        x_v = v2_ + v1 + x_v     # container[-1] + container[-2] + container[-3]
        x_q = q2_ + q1 + x_q

    out_v_ref[...] = res_v
    out_q_ref[...] = res_q


def multiblocks_forward(packed, v, q, *, num_blocks, output_size,
                        num_inter_head, num_intra_head):
    B, Nv, _ = v.shape
    Nq = q.shape[1]
    kernel = functools.partial(
        _multiblocks_kernel, num_blocks=num_blocks, output_size=output_size,
        num_inter_head=num_inter_head, num_intra_head=num_intra_head)
    # Grid-less single invocation: every operand is a full-array VMEM block
    # (total footprint <1 MiB).  Only 9 operands thanks to weight packing.
    # TODO(synk): on v7x a (B,)-grid with dimension_semantics=("parallel",)
    # would use the second TensorCore; omitted to keep v5e/v6e overhead-free.
    out_v, out_q = pl.pallas_call(
        kernel,
        out_shape=(jax.ShapeDtypeStruct((B, Nv, output_size), jnp.float32),
                   jax.ShapeDtypeStruct((B, Nq, output_size), jnp.float32)),
        compiler_params=pltpu.CompilerParams(vmem_limit_bytes=32 * 1024 * 1024),
    )(v, q, packed["w_init"], packed["b_init"], packed["qkv_w"],
      packed["qkv_b"], packed["out2_w"], packed["small_w"], packed["b2o"])
    return out_v, out_q


# ----------------------------------------------------------------------------
# Parameter init (PyTorch-Linear-like uniform init) and weight packing
# ----------------------------------------------------------------------------
def init_fcnet(key, in_size, out_size):
    kw, kb = jax.random.split(key)
    bound = 1.0 / float(np.sqrt(in_size))
    w = jax.random.uniform(kw, (in_size, out_size), jnp.float32, -bound, bound)
    b = jax.random.uniform(kb, (1, out_size), jnp.float32, -bound, bound)
    return {"w": w, "b": b}


def init_inter(key, v_size, q_size, output_size):
    k1, k2, k3, k4 = jax.random.split(key, 4)
    return {
        "v_lin": init_fcnet(k1, v_size, output_size * 3),
        "q_lin": init_fcnet(k2, q_size, output_size * 3),
        "v_output": init_fcnet(k3, output_size + v_size, output_size),
        "q_output": init_fcnet(k4, output_size + q_size, output_size),
    }


def init_intra(key, v_size, q_size, output_size):
    k1, k2, k3, k4, k5, k6 = jax.random.split(key, 6)
    return {
        "v4q_gate_lin": init_fcnet(k1, v_size, output_size),
        "q4v_gate_lin": init_fcnet(k2, q_size, output_size),
        "v_lin": init_fcnet(k3, v_size, output_size * 3),
        "q_lin": init_fcnet(k4, q_size, output_size * 3),
        "v_output": init_fcnet(k5, output_size, output_size),
        "q_output": init_fcnet(k6, output_size, output_size),
    }


def init_multiblocks(key, num_blocks, v_size, q_size, output_size):
    keys = jax.random.split(key, 2 + 2 * num_blocks)
    params = {
        "v_lin": init_fcnet(keys[0], v_size, output_size),
        "q_lin": init_fcnet(keys[1], q_size, output_size),
        "blocks": [],
    }
    for i in range(num_blocks):
        params["blocks"].append(
            init_inter(keys[2 + 2 * i], output_size, output_size, output_size))
        params["blocks"].append(
            init_intra(keys[3 + 2 * i], output_size, output_size, output_size))
    return params


def pack_params(params, num_blocks):
    """Pack the ~46 FCNet tensors into 7 stacked kernel operands.

    Weights are pre-hstacked per layer ([Wv | Wq]) and cast to bf16; biases
    stay f32.  Weight packing happens once, outside the jitted forward.
    """
    def wide_w(a, b):
        assert a["w"].shape[0] == b["w"].shape[0], \
            "stream fusion requires matching input sizes (v_size == q_size)"
        return jnp.concatenate([a["w"], b["w"]], axis=1).astype(jnp.bfloat16)

    def wide_b(a, b):
        return jnp.concatenate([a["b"], b["b"]], axis=1)     # [1, 2*out] f32

    packed = {
        "w_init": wide_w(params["v_lin"], params["q_lin"]),
        "b_init": wide_b(params["v_lin"], params["q_lin"]),
    }
    qkv_w, qkv_b, out2_w, small_w, b2o = [], [], [], [], []
    for i in range(num_blocks):
        inter = params["blocks"][2 * i]
        intra = params["blocks"][2 * i + 1]
        qkv_w += [wide_w(inter["v_lin"], inter["q_lin"]),
                  wide_w(intra["v_lin"], intra["q_lin"])]
        qkv_b += [wide_b(inter["v_lin"], inter["q_lin"]),
                  wide_b(intra["v_lin"], intra["q_lin"])]
        out2_w.append(wide_w(inter["v_output"], inter["q_output"]))
        small_w += [wide_w(intra["v4q_gate_lin"], intra["q4v_gate_lin"]),
                    wide_w(intra["v_output"], intra["q_output"])]
        b2o += [wide_b(inter["v_output"], inter["q_output"]),
                wide_b(intra["v4q_gate_lin"], intra["q4v_gate_lin"]),
                wide_b(intra["v_output"], intra["q_output"])]
    packed["qkv_w"] = jnp.stack(qkv_w)       # [2*nb, O, 6O]  bf16
    packed["qkv_b"] = jnp.stack(qkv_b)       # [2*nb, 1, 6O]  f32
    packed["out2_w"] = jnp.stack(out2_w)     # [nb,   2O, 2O] bf16
    packed["small_w"] = jnp.stack(small_w)   # [2*nb, O, 2O]  bf16
    packed["b2o"] = jnp.stack(b2o)           # [3*nb, 1, 2O]  f32
    return packed


# ----------------------------------------------------------------------------
# Pure-JAX reference (mirrors the PyTorch module) for a tolerance check
# ----------------------------------------------------------------------------
def _ref_fc(x, p, activation=None):
    y = x @ p["w"] + p["b"]
    return jnp.maximum(y, 0.0) if activation == "relu" else y


def _ref_attention(qv, kv, vv, num_head, O):
    D = qv.shape[-1]
    dh = D // num_head
    scale = float(np.sqrt(O // num_head))
    outs = []
    for h in range(num_head):
        sl = slice(h * dh, (h + 1) * dh)
        s = jnp.einsum("bqd,bkd->bqk", qv[..., sl], kv[..., sl]) / scale
        p = jax.nn.softmax(s, axis=-1)
        outs.append(jnp.einsum("bqk,bkd->bqd", p, vv[..., sl]))
    return jnp.concatenate(outs, axis=-1)


def _ref_inter(bp, v, q, num_head, O):
    v_tran = _ref_fc(v, bp["v_lin"], "relu")
    q_tran = _ref_fc(q, bp["q_lin"], "relu")
    v_key, v_query, v_val = jnp.split(v_tran, 3, axis=-1)
    q_key, q_query, q_val = jnp.split(q_tran, 3, axis=-1)
    v_update = _ref_attention(v_query, q_key, q_val, num_head, O)
    q_update = _ref_attention(q_query, v_key, v_val, num_head, O)
    uv = _ref_fc(jnp.concatenate([v, v_update], -1), bp["v_output"], "relu")
    uq = _ref_fc(jnp.concatenate([q, q_update], -1), bp["q_output"], "relu")
    return uv, uq


def _ref_intra(bp, v, q, num_head, O):
    v4q = jax.nn.sigmoid(_ref_fc(v.mean(axis=1), bp["v4q_gate_lin"]))[:, None, :]
    q4v = jax.nn.sigmoid(_ref_fc(q.mean(axis=1), bp["q4v_gate_lin"]))[:, None, :]
    v_tran = _ref_fc(v, bp["v_lin"], "relu")
    q_tran = _ref_fc(q, bp["q_lin"], "relu")
    v_key, v_query, v_val = jnp.split(v_tran, 3, axis=-1)
    q_key, q_query, q_val = jnp.split(q_tran, 3, axis=-1)
    gv, gq = 1.0 + q4v, 1.0 + v4q
    v_update = _ref_attention(gv * v_query, gv * v_key, gv * v_val, num_head, O)
    q_update = _ref_attention(gq * q_query, gq * q_key, gq * q_val, num_head, O)
    uv = _ref_fc(v + v_update, bp["v_output"], "relu")
    uq = _ref_fc(q + q_update, bp["q_output"], "relu")
    return uv, uq


def reference_forward(params, v, q, num_blocks, O, nh_inter, nh_intra):
    v = _ref_fc(v, params["v_lin"], "relu")
    q = _ref_fc(q, params["q_lin"], "relu")
    vc, qc, rv, rq = [v], [q], v, q
    for i in range(num_blocks):
        v1, q1 = _ref_inter(params["blocks"][2 * i], vc[-1], qc[-1], nh_inter, O)
        vc.append(v1); qc.append(q1)
        v2, q2 = _ref_intra(params["blocks"][2 * i + 1],
                            vc[-1] + vc[-2], qc[-1] + qc[-2], nh_intra, O)
        vc.append(v2); qc.append(q2)
        rv = rv + v1 + v2
        rq = rq + q1 + q2
        vc.append(vc[-1] + vc[-2] + vc[-3])
        qc.append(qc[-1] + qc[-2] + qc[-3])
    return rv, rq


# ----------------------------------------------------------------------------
if __name__ == "__main__":
    batch = 2
    regions = 8      # num_obj for v
    max_len = 8      # seq len for q
    v_size = 16
    q_size = 16
    output_size = 32
    num_blocks = 2
    num_inter_head = 2
    num_intra_head = 2

    root = jax.random.PRNGKey(0)
    k_params, k_v, k_q = jax.random.split(root, 3)
    params = init_multiblocks(k_params, num_blocks, v_size, q_size, output_size)
    packed = pack_params(params, num_blocks)

    v = jax.random.normal(k_v, (batch, regions, v_size), jnp.float32)
    q = jax.random.normal(k_q, (batch, max_len, q_size), jnp.float32)

    fwd = jax.jit(functools.partial(
        multiblocks_forward,
        num_blocks=num_blocks,
        output_size=output_size,
        num_inter_head=num_inter_head,
        num_intra_head=num_intra_head))

    out_v, out_q = fwd(packed, v, q)
    jax.block_until_ready((out_v, out_q))

    assert out_v.shape == (batch, regions, output_size)
    assert out_q.shape == (batch, max_len, output_size)
    assert bool(jnp.all(jnp.isfinite(out_v))) and bool(jnp.all(jnp.isfinite(out_q)))

    # Loose parity check vs. a pure-JAX f32 reference (kernel uses bf16 MXU
    # operands + approx reciprocal, so allow a few-percent deviation).
    ref_v, ref_q = reference_forward(params, v, q, num_blocks, output_size,
                                     num_inter_head, num_intra_head)
    err_v = float(jnp.max(jnp.abs(out_v - ref_v)) /
                  (jnp.max(jnp.abs(ref_v)) + 1e-6))
    err_q = float(jnp.max(jnp.abs(out_q - ref_q)) /
                  (jnp.max(jnp.abs(ref_q)) + 1e-6))
    assert err_v < 0.05 and err_q < 0.05, (err_v, err_q)

    print("KERNEL_OK")
</pallas_src>

<mosaic_0001>
module attributes {stable_mosaic.version = 11 : i64} {
  func.func @_multiblocks_kernel(%arg0: memref<2x8x16xf32, #tpu.memory_space<vmem>>, %arg1: memref<2x8x16xf32, #tpu.memory_space<vmem>>, %arg2: memref<16x64xbf16, #tpu.memory_space<vmem>>, %arg3: memref<1x64xf32, #tpu.memory_space<vmem>>, %arg4: memref<4x32x192xbf16, #tpu.memory_space<vmem>>, %arg5: memref<4x1x192xf32, #tpu.memory_space<vmem>>, %arg6: memref<2x64x64xbf16, #tpu.memory_space<vmem>>, %arg7: memref<4x32x64xbf16, #tpu.memory_space<vmem>>, %arg8: memref<6x1x64xf32, #tpu.memory_space<vmem>>, %arg9: memref<2x8x32xf32, #tpu.memory_space<vmem>>, %arg10: memref<2x8x32xf32, #tpu.memory_space<vmem>>) attributes {dimension_semantics = [], scalar_prefetch = 0 : i64, scratch_operands = 0 : i64, tpu.core_type = #tpu.core_type<tc>} {
    %c0 = arith.constant 0 : index
    %c0_0 = arith.constant 0 : index
    %c0_1 = arith.constant 0 : index
    %0 = vector.load %arg0[%c0, %c0_0, %c0_1] : memref<2x8x16xf32, #tpu.memory_space<vmem>>, vector<2x8x16xf32>
    %1 = vector.shape_cast %0 : vector<2x8x16xf32> to vector<16x16xf32>
    %c0_2 = arith.constant 0 : index
    %c0_3 = arith.constant 0 : index
    %c0_4 = arith.constant 0 : index
    %2 = vector.load %arg1[%c0_2, %c0_3, %c0_4] : memref<2x8x16xf32, #tpu.memory_space<vmem>>, vector<2x8x16xf32>
    %3 = vector.shape_cast %2 : vector<2x8x16xf32> to vector<16x16xf32>
    %c0_5 = arith.constant 0 : index
    %c0_6 = arith.constant 0 : index
    %4 = vector.load %arg2[%c0_5, %c0_6] : memref<16x64xbf16, #tpu.memory_space<vmem>>, vector<16x64xbf16>
    %c0_7 = arith.constant 0 : index
    %c0_8 = arith.constant 0 : index
    %5 = vector.load %arg3[%c0_7, %c0_8] : memref<1x64xf32, #tpu.memory_space<vmem>>, vector<1x64xf32>
    %6 = tpu.concatenate %1, %3 in 0 : vector<16x16xf32>, vector<16x16xf32> -> vector<32x16xf32>
    %7 = arith.truncf %6 : vector<32x16xf32> to vector<32x16xbf16>
    %cst = arith.constant dense<0.000000e+00> : vector<32x64xf32>
    %8 = tpu.matmul %7, %4, %cst {dimension_numbers = #tpu.dot_dimension_numbers<[1], [0], [0], [1], [0, 0, 1, 1], [], []>} : vector<32x16xbf16>, vector<16x64xbf16>, vector<32x64xf32> -> vector<32x64xf32>
    %9 = vector.broadcast %5 : vector<1x64xf32> to vector<32x64xf32>
    %10 = arith.addf %8, %9 : vector<32x64xf32>
    %cst_9 = arith.constant 0.000000e+00 : f32
    %11 = vector.broadcast %cst_9 : f32 to vector<32x64xf32>
    %12 = arith.maximumf %10, %11 : vector<32x64xf32>
    %13 = vector.extract_strided_slice %12 {offsets = [0, 0], sizes = [16, 32], strides = [1, 1]} : vector<32x64xf32> to vector<16x32xf32>
    %14 = vector.extract_strided_slice %12 {offsets = [16, 32], sizes = [16, 32], strides = [1, 1]} : vector<32x64xf32> to vector<16x32xf32>
    %15 = vector.shape_cast %13 : vector<16x32xf32> to vector<2x8x32xf32>
    %16 = vector.shape_cast %14 : vector<16x32xf32> to vector<2x8x32xf32>
    %c0_10 = arith.constant 0 : index
    %c0_11 = arith.constant 0 : index
    %c0_12 = arith.constant 0 : index
    %17 = vector.load %arg4[%c0_10, %c0_11, %c0_12] : memref<4x32x192xbf16, #tpu.memory_space<vmem>>, vector<1x32x192xbf16>
    %18 = vector.shape_cast %17 : vector<1x32x192xbf16> to vector<32x192xbf16>
    %c0_13 = arith.constant 0 : index
    %c0_14 = arith.constant 0 : index
    %c0_15 = arith.constant 0 : index
    %19 = vector.load %arg5[%c0_13, %c0_14, %c0_15] : memref<4x1x192xf32, #tpu.memory_space<vmem>>, vector<1x1x192xf32>
    %20 = vector.shape_cast %19 : vector<1x1x192xf32> to vector<1x192xf32>
    %c0_16 = arith.constant 0 : index
    %c0_17 = arith.constant 0 : index
    %c0_18 = arith.constant 0 : index
    %21 = vector.load %arg6[%c0_16, %c0_17, %c0_18] : memref<2x64x64xbf16, #tpu.memory_space<vmem>>, vector<1x64x64xbf16>
    %22 = vector.shape_cast %21 : vector<1x64x64xbf16> to vector<64x64xbf16>
    %c0_19 = arith.constant 0 : index
    %c0_20 = arith.constant 0 : index
    %c0_21 = arith.constant 0 : index
    %23 = vector.load %arg8[%c0_19, %c0_20, %c0_21] : memref<6x1x64xf32, #tpu.memory_space<vmem>>, vector<1x1x64xf32>
    %24 = vector.shape_cast %23 : vector<1x1x64xf32> to vector<1x64xf32>
    %25 = vector.shape_cast %15 : vector<2x8x32xf32> to vector<16x32xf32>
    %26 = vector.shape_cast %16 : vector<2x8x32xf32> to vector<16x32xf32>
    %27 = tpu.concatenate %25, %26 in 0 : vector<16x32xf32>, vector<16x32xf32> -> vector<32x32xf32>
    %28 = arith.truncf %27 : vector<32x32xf32> to vector<32x32xbf16>
    %cst_22 = arith.constant dense<0.000000e+00> : vector<32x192xf32>
    %29 = tpu.matmul %28, %18, %cst_22 {dimension_numbers = #tpu.dot_dimension_numbers<[1], [0], [0], [1], [0, 0, 1, 1], [], []>} : vector<32x32xbf16>, vector<32x192xbf16>, vector<32x192xf32> -> vector<32x192xf32>
    %30 = vector.broadcast %20 : vector<1x192xf32> to vector<32x192xf32>
    %31 = arith.addf %29, %30 : vector<32x192xf32>
    %cst_23 = arith.constant 0.000000e+00 : f32
    %32 = vector.broadcast %cst_23 : f32 to vector<32x192xf32>
    %33 = arith.maximumf %31, %32 : vector<32x192xf32>
    %34 = vector.extract_strided_slice %33 {offsets = [0, 0], sizes = [16, 96], strides = [1, 1]} : vector<32x192xf32> to vector<16x96xf32>
    %35 = vector.extract_strided_slice %33 {offsets = [16, 96], sizes = [16, 96], strides = [1, 1]} : vector<32x192xf32> to vector<16x96xf32>
    %36 = vector.shape_cast %34 : vector<16x96xf32> to vector<2x8x96xf32>
    %37 = vector.shape_cast %35 : vector<16x96xf32> to vector<2x8x96xf32>
    %38 = vector.extract_strided_slice %36 {offsets = [0, 0, 0], sizes = [2, 8, 32], strides = [1, 1, 1]} : vector<2x8x96xf32> to vector<2x8x32xf32>
    %39 = vector.extract_strided_slice %36 {offsets = [0, 0, 32], sizes = [2, 8, 32], strides = [1, 1, 1]} : vector<2x8x96xf32> to vector<2x8x32xf32>
    %40 = vector.extract_strided_slice %36 {offsets = [0, 0, 64], sizes = [2, 8, 32], strides = [1, 1, 1]} : vector<2x8x96xf32> to vector<2x8x32xf32>
    %41 = vector.extract_strided_slice %37 {offsets = [0, 0, 0], sizes = [2, 8, 32], strides = [1, 1, 1]} : vector<2x8x96xf32> to vector<2x8x32xf32>
    %42 = vector.extract_strided_slice %37 {offsets = [0, 0, 32], sizes = [2, 8, 32], strides = [1, 1, 1]} : vector<2x8x96xf32> to vector<2x8x32xf32>
    %43 = vector.extract_strided_slice %37 {offsets = [0, 0, 64], sizes = [2, 8, 32], strides = [1, 1, 1]} : vector<2x8x96xf32> to vector<2x8x32xf32>
    %44 = vector.extract_strided_slice %39 {offsets = [0, 0, 0], sizes = [2, 8, 16], strides = [1, 1, 1]} : vector<2x8x32xf32> to vector<2x8x16xf32>
    %45 = vector.extract_strided_slice %39 {offsets = [0, 0, 16], sizes = [2, 8, 16], strides = [1, 1, 1]} : vector<2x8x32xf32> to vector<2x8x16xf32>
    %46 = tpu.concatenate %44, %45 in 0 : vector<2x8x16xf32>, vector<2x8x16xf32> -> vector<4x8x16xf32>
    %47 = arith.truncf %46 : vector<4x8x16xf32> to vector<4x8x16xbf16>
    %48 = vector.extract_strided_slice %41 {offsets = [0, 0, 0], sizes = [2, 8, 16], strides = [1, 1, 1]} : vector<2x8x32xf32> to vector<2x8x16xf32>
    %49 = vector.extract_strided_slice %41 {offsets = [0, 0, 16], sizes = [2, 8, 16], strides = [1, 1, 1]} : vector<2x8x32xf32> to vector<2x8x16xf32>
    %50 = tpu.concatenate %48, %49 in 0 : vector<2x8x16xf32>, vector<2x8x16xf32> -> vector<4x8x16xf32>
    %51 = arith.truncf %50 : vector<4x8x16xf32> to vector<4x8x16xbf16>
    %52 = vector.extract_strided_slice %43 {offsets = [0, 0, 0], sizes = [2, 8, 16], strides = [1, 1, 1]} : vector<2x8x32xf32> to vector<2x8x16xf32>
    %53 = vector.extract_strided_slice %43 {offsets = [0, 0, 16], sizes = [2, 8, 16], strides = [1, 1, 1]} : vector<2x8x32xf32> to vector<2x8x16xf32>
    %54 = tpu.concatenate %52, %53 in 0 : vector<2x8x16xf32>, vector<2x8x16xf32> -> vector<4x8x16xf32>
    %55 = arith.truncf %54 : vector<4x8x16xf32> to vector<4x8x16xbf16>
    "tpu.trace_start"() <{level = 10 : i32, message = "bqd,bkd->bqk"}> : () -> ()
    %cst_24 = arith.constant dense<0.000000e+00> : vector<4x8x8xf32>
    %56 = tpu.matmul %47, %51, %cst_24 {dimension_numbers = #tpu.dot_dimension_numbers<[2], [2], [1], [1], [0, 0, 0, 1, 1, 1], [0], [0]>} : vector<4x8x16xbf16>, vector<4x8x16xbf16>, vector<4x8x8xf32> -> vector<4x8x8xf32>
    "tpu.trace_stop"() : () -> ()
    %cst_25 = arith.constant 2.500000e-01 : f32
    %57 = vector.broadcast %cst_25 : f32 to vector<4x8x8xf32>
    %58 = arith.mulf %56, %57 : vector<4x8x8xf32>
    %cst_26 = arith.constant dense<0xFF800000> : vector<4x8xf32>
    %59 = vector.multi_reduction <maximumf>, %58, %cst_26 [2] : vector<4x8x8xf32> to vector<4x8xf32>
    %60 = vector.shape_cast %59 : vector<4x8xf32> to vector<4x8x1xf32>
    %61 = vector.broadcast %60 : vector<4x8x1xf32> to vector<4x8x8xf32>
    %62 = arith.subf %58, %61 : vector<4x8x8xf32>
    %63 = math.exp %62 : vector<4x8x8xf32>
    %cst_27 = arith.constant dense<0.000000e+00> : vector<4x8xf32>
    %64 = vector.multi_reduction <add>, %63, %cst_27 [2] : vector<4x8x8xf32> to vector<4x8xf32>
    %65 = vector.shape_cast %64 : vector<4x8xf32> to vector<4x8x1xf32>
    %66 = tpu.reciprocal %65 {approx = true} : vector<4x8x1xf32> -> vector<4x8x1xf32>
    %67 = vector.broadcast %66 : vector<4x8x1xf32> to vector<4x8x8xf32>
    %68 = arith.mulf %63, %67 : vector<4x8x8xf32>
    %69 = arith.truncf %68 : vector<4x8x8xf32> to vector<4x8x8xbf16>
    "tpu.trace_start"() <{level = 10 : i32, message = "bqk,bkd->bqd"}> : () -> ()
    %cst_28 = arith.constant dense<0.000000e+00> : vector<4x8x16xf32>
    %70 = tpu.matmul %69, %55, %cst_28 {dimension_numbers = #tpu.dot_dimension_numbers<[2], [1], [1], [2], [0, 0, 0, 1, 1, 2], [0], [0]>} : vector<4x8x8xbf16>, vector<4x8x16xbf16>, vector<4x8x16xf32> -> vector<4x8x16xf32>
    "tpu.trace_stop"() : () -> ()
    %71 = vector.extract_strided_slice %70 {offsets = [0, 0, 0], sizes = [2, 8, 16], strides = [1, 1, 1]} : vector<4x8x16xf32> to vector<2x8x16xf32>
    %72 = vector.extract_strided_slice %70 {offsets = [2, 0, 0], sizes = [2, 8, 16], strides = [1, 1, 1]} : vector<4x8x16xf32> to vector<2x8x16xf32>
    %73 = tpu.concatenate %71, %72 in 2 : vector<2x8x16xf32>, vector<2x8x16xf32> -> vector<2x8x32xf32>
    %74 = vector.extract_strided_slice %42 {offsets = [0, 0, 0], sizes = [2, 8, 16], strides = [1, 1, 1]} : vector<2x8x32xf32> to vector<2x8x16xf32>
    %75 = vector.extract_strided_slice %42 {offsets = [0, 0, 16], sizes = [2, 8, 16], strides = [1, 1, 1]} : vector<2x8x32xf32> to vector<2x8x16xf32>
    %76 = tpu.concatenate %74, %75 in 0 : vector<2x8x16xf32>, vector<2x8x16xf32> -> vector<4x8x16xf32>
    %77 = arith.truncf %76 : vector<4x8x16xf32> to vector<4x8x16xbf16>
    %78 = vector.extract_strided_slice %38 {offsets = [0, 0, 0], sizes = [2, 8, 16], strides = [1, 1, 1]} : vector<2x8x32xf32> to vector<2x8x16xf32>
    %79 = vector.extract_strided_slice %38 {offsets = [0, 0, 16], sizes = [2, 8, 16], strides = [1, 1, 1]} : vector<2x8x32xf32> to vector<2x8x16xf32>
    %80 = tpu.concatenate %78, %79 in 0 : vector<2x8x16xf32>, vector<2x8x16xf32> -> vector<4x8x16xf32>
    %81 = arith.truncf %80 : vector<4x8x16xf32> to vector<4x8x16xbf16>
    %82 = vector.extract_strided_slice %40 {offsets = [0, 0, 0], sizes = [2, 8, 16], strides = [1, 1, 1]} : vector<2x8x32xf32> to vector<2x8x16xf32>
    %83 = vector.extract_strided_slice %40 {offsets = [0, 0, 16], sizes = [2, 8, 16], strides = [1, 1, 1]} : vector<2x8x32xf32> to vector<2x8x16xf32>
    %84 = tpu.concatenate %82, %83 in 0 : vector<2x8x16xf32>, vector<2x8x16xf32> -> vector<4x8x16xf32>
    %85 = arith.truncf %84 : vector<4x8x16xf32> to vector<4x8x16xbf16>
    "tpu.trace_start"() <{level = 10 : i32, message = "bqd,bkd->bqk"}> : () -> ()
    %cst_29 = arith.constant dense<0.000000e+00> : vector<4x8x8xf32>
    %86 = tpu.matmul %77, %81, %cst_29 {dimension_numbers = #tpu.dot_dimension_numbers<[2], [2], [1], [1], [0, 0, 0, 1, 1, 1], [0], [0]>} : vector<4x8x16xbf16>, vector<4x8x16xbf16>, vector<4x8x8xf32> -> vector<4x8x8xf32>
    "tpu.trace_stop"() : () -> ()
    %cst_30 = arith.constant 2.500000e-01 : f32
    %87 = vector.broadcast %cst_30 : f32 to vector<4x8x8xf32>
    %88 = arith.mulf %86, %87 : vector<4x8x8xf32>
    %cst_31 = arith.constant dense<0xFF800000> : vector<4x8xf32>
    %89 = vector.multi_reduction <maximumf>, %88, %cst_31 [2] : vector<4x8x8xf32> to vector<4x8xf32>
    %90 = vector.shape_cast %89 : vector<4x8xf32> to vector<4x8x1xf32>
    %91 = vector.broadcast %90 : vector<4x8x1xf32> to vector<4x8x8xf32>
    %92 = arith.subf %88, %91 : vector<4x8x8xf32>
    %93 = math.exp %92 : vector<4x8x8xf32>
    %cst_32 = arith.constant dense<0.000000e+00> : vector<4x8xf32>
    %94 = vector.multi_reduction <add>, %93, %cst_32 [2] : vector<4x8x8xf32> to vector<4x8xf32>
    %95 = vector.shape_cast %94 : vector<4x8xf32> to vector<4x8x1xf32>
    %96 = tpu.reciprocal %95 {approx = true} : vector<4x8x1xf32> -> vector<4x8x1xf32>
    %97 = vector.broadcast %96 : vector<4x8x1xf32> to vector<4x8x8xf32>
    %98 = arith.mulf %93, %97 : vector<4x8x8xf32>
    %99 = arith.truncf %98 : vector<4x8x8xf32> to vector<4x8x8xbf16>
    "tpu.trace_start"() <{level = 10 : i32, message = "bqk,bkd->bqd"}> : () -> ()
    %cst_33 = arith.constant dense<0.000000e+00> : vector<4x8x16xf32>
    %100 = tpu.matmul %99, %85, %cst_33 {dimension_numbers = #tpu.dot_dimension_numbers<[2], [1], [1], [2], [0, 0, 0, 1, 1, 2], [0], [0]>} : vector<4x8x8xbf16>, vector<4x8x16xbf16>, vector<4x8x16xf32> -> vector<4x8x16xf32>
    "tpu.trace_stop"() : () -> ()
    %101 = vector.extract_strided_slice %100 {offsets = [0, 0, 0], sizes = [2, 8, 16], strides = [1, 1, 1]} : vector<4x8x16xf32> to vector<2x8x16xf32>
    %102 = vector.extract_strided_slice %100 {offsets = [2, 0, 0], sizes = [2, 8, 16], strides = [1, 1, 1]} : vector<4x8x16xf32> to vector<2x8x16xf32>
    %103 = tpu.concatenate %101, %102 in 2 : vector<2x8x16xf32>, vector<2x8x16xf32> -> vector<2x8x32xf32>
    %104 = vector.shape_cast %73 : vector<2x8x32xf32> to vector<16x32xf32>
    %105 = tpu.concatenate %25, %104 in 1 : vector<16x32xf32>, vector<16x32xf32> -> vector<16x64xf32>
    %106 = vector.shape_cast %103 : vector<2x8x32xf32> to vector<16x32xf32>
    %107 = tpu.concatenate %26, %106 in 1 : vector<16x32xf32>, vector<16x32xf32> -> vector<16x64xf32>
    %108 = tpu.concatenate %105, %107 in 0 : vector<16x64xf32>, vector<16x64xf32> -> vector<32x64xf32>
    %109 = arith.truncf %108 : vector<32x64xf32> to vector<32x64xbf16>
    %cst_34 = arith.constant dense<0.000000e+00> : vector<32x64xf32>
    %110 = tpu.matmul %109, %22, %cst_34 {dimension_numbers = #tpu.dot_dimension_numbers<[1], [0], [0], [1], [0, 0, 1, 1], [], []>} : vector<32x64xbf16>, vector<64x64xbf16>, vector<32x64xf32> -> vector<32x64xf32>
    %111 = vector.broadcast %24 : vector<1x64xf32> to vector<32x64xf32>
    %112 = arith.addf %110, %111 : vector<32x64xf32>
    %cst_35 = arith.constant 0.000000e+00 : f32
    %113 = vector.broadcast %cst_35 : f32 to vector<32x64xf32>
    %114 = arith.maximumf %112, %113 : vector<32x64xf32>
    %115 = vector.extract_strided_slice %114 {offsets = [0, 0], sizes = [16, 32], strides = [1, 1]} : vector<32x64xf32> to vector<16x32xf32>
    %116 = vector.extract_strided_slice %114 {offsets = [16, 32], sizes = [16, 32], strides = [1, 1]} : vector<32x64xf32> to vector<16x32xf32>
    %117 = vector.shape_cast %115 : vector<16x32xf32> to vector<2x8x32xf32>
    %118 = vector.shape_cast %116 : vector<16x32xf32> to vector<2x8x32xf32>
    %119 = arith.addf %117, %15 : vector<2x8x32xf32>
    %120 = arith.addf %118, %16 : vector<2x8x32xf32>
    %c0_36 = arith.constant 0 : index
    %c0_37 = arith.constant 0 : index
    %c0_38 = arith.constant 0 : index
    %121 = vector.load %arg7[%c0_36, %c0_37, %c0_38] : memref<4x32x64xbf16, #tpu.memory_space<vmem>>, vector<1x32x64xbf16>
    %122 = vector.shape_cast %121 : vector<1x32x64xbf16> to vector<32x64xbf16>
    %c1 = arith.constant 1 : index
    %c0_39 = arith.constant 0 : index
    %c0_40 = arith.constant 0 : index
    %123 = vector.load %arg8[%c1, %c0_39, %c0_40] : memref<6x1x64xf32, #tpu.memory_space<vmem>>, vector<1x1x64xf32>
    %124 = vector.shape_cast %123 : vector<1x1x64xf32> to vector<1x64xf32>
    %c1_41 = arith.constant 1 : index
    %c0_42 = arith.constant 0 : index
    %c0_43 = arith.constant 0 : index
    %125 = vector.load %arg4[%c1_41, %c0_42, %c0_43] : memref<4x32x192xbf16, #tpu.memory_space<vmem>>, vector<1x32x192xbf16>
    %126 = vector.shape_cast %125 : vector<1x32x192xbf16> to vector<32x192xbf16>
    %c1_44 = arith.constant 1 : index
    %c0_45 = arith.constant 0 : index
    %c0_46 = arith.constant 0 : index
    %127 = vector.load %arg5[%c1_44, %c0_45, %c0_46] : memref<4x1x192xf32, #tpu.memory_space<vmem>>, vector<1x1x192xf32>
    %128 = vector.shape_cast %127 : vector<1x1x192xf32> to vector<1x192xf32>
    %c1_47 = arith.constant 1 : index
    %c0_48 = arith.constant 0 : index
    %c0_49 = arith.constant 0 : index
    %129 = vector.load %arg7[%c1_47, %c0_48, %c0_49] : memref<4x32x64xbf16, #tpu.memory_space<vmem>>, vector<1x32x64xbf16>
    %130 = vector.shape_cast %129 : vector<1x32x64xbf16> to vector<32x64xbf16>
    %c2 = arith.constant 2 : index
    %c0_50 = arith.constant 0 : index
    %c0_51 = arith.constant 0 : index
    %131 = vector.load %arg8[%c2, %c0_50, %c0_51] : memref<6x1x64xf32, #tpu.memory_space<vmem>>, vector<1x1x64xf32>
    %132 = vector.shape_cast %131 : vector<1x1x64xf32> to vector<1x64xf32>
    %133 = vector.shape_cast %119 : vector<2x8x32xf32> to vector<16x32xf32>
    %134 = vector.shape_cast %120 : vector<2x8x32xf32> to vector<16x32xf32>
    %cst_52 = arith.constant dense<0.000000e+00> : vector<2x32xf32>
    %135 = vector.multi_reduction <add>, %119, %cst_52 [1] : vector<2x8x32xf32> to vector<2x32xf32>
    %cst_53 = arith.constant 1.250000e-01 : f32
    %136 = vector.broadcast %cst_53 : f32 to vector<2x32xf32>
    %137 = arith.mulf %135, %136 : vector<2x32xf32>
    %cst_54 = arith.constant dense<0.000000e+00> : vector<2x32xf32>
    %138 = vector.multi_reduction <add>, %120, %cst_54 [1] : vector<2x8x32xf32> to vector<2x32xf32>
    %cst_55 = arith.constant 1.250000e-01 : f32
    %139 = vector.broadcast %cst_55 : f32 to vector<2x32xf32>
    %140 = arith.mulf %138, %139 : vector<2x32xf32>
    %141 = tpu.concatenate %137, %140 in 0 : vector<2x32xf32>, vector<2x32xf32> -> vector<4x32xf32>
    %142 = arith.truncf %141 : vector<4x32xf32> to vector<4x32xbf16>
    %cst_56 = arith.constant dense<0.000000e+00> : vector<4x64xf32>
    %143 = tpu.matmul %142, %122, %cst_56 {dimension_numbers = #tpu.dot_dimension_numbers<[1], [0], [0], [1], [0, 0, 1, 1], [], []>} : vector<4x32xbf16>, vector<32x64xbf16>, vector<4x64xf32> -> vector<4x64xf32>
    %144 = vector.broadcast %124 : vector<1x64xf32> to vector<4x64xf32>
    %145 = arith.addf %143, %144 : vector<4x64xf32>
    %146 = arith.negf %145 : vector<4x64xf32>
    %147 = math.exp %146 : vector<4x64xf32>
    %cst_57 = arith.constant 1.000000e+00 : f32
    %148 = vector.broadcast %cst_57 : f32 to vector<4x64xf32>
    %149 = arith.addf %148, %147 : vector<4x64xf32>
    %150 = arith.divf %148, %149 : vector<4x64xf32>
    %151 = vector.extract_strided_slice %150 {offsets = [0, 0], sizes = [2, 32], strides = [1, 1]} : vector<4x64xf32> to vector<2x32xf32>
    %152 = vector.extract_strided_slice %150 {offsets = [2, 32], sizes = [2, 32], strides = [1, 1]} : vector<4x64xf32> to vector<2x32xf32>
    %153 = tpu.concatenate %133, %134 in 0 : vector<16x32xf32>, vector<16x32xf32> -> vector<32x32xf32>
    %154 = arith.truncf %153 : vector<32x32xf32> to vector<32x32xbf16>
    %cst_58 = arith.constant dense<0.000000e+00> : vector<32x192xf32>
    %155 = tpu.matmul %154, %126, %cst_58 {dimension_numbers = #tpu.dot_dimension_numbers<[1], [0], [0], [1], [0, 0, 1, 1], [], []>} : vector<32x32xbf16>, vector<32x192xbf16>, vector<32x192xf32> -> vector<32x192xf32>
    %156 = vector.broadcast %128 : vector<1x192xf32> to vector<32x192xf32>
    %157 = arith.addf %155, %156 : vector<32x192xf32>
    %cst_59 = arith.constant 0.000000e+00 : f32
    %158 = vector.broadcast %cst_59 : f32 to vector<32x192xf32>
    %159 = arith.maximumf %157, %158 : vector<32x192xf32>
    %160 = vector.extract_strided_slice %159 {offsets = [0, 0], sizes = [16, 96], strides = [1, 1]} : vector<32x192xf32> to vector<16x96xf32>
    %161 = vector.extract_strided_slice %159 {offsets = [16, 96], sizes = [16, 96], strides = [1, 1]} : vector<32x192xf32> to vector<16x96xf32>
    %162 = vector.shape_cast %160 : vector<16x96xf32> to vector<2x8x96xf32>
    %163 = vector.shape_cast %161 : vector<16x96xf32> to vector<2x8x96xf32>
    %164 = vector.extract_strided_slice %162 {offsets = [0, 0, 0], sizes = [2, 8, 32], strides = [1, 1, 1]} : vector<2x8x96xf32> to vector<2x8x32xf32>
    %165 = vector.extract_strided_slice %162 {offsets = [0, 0, 32], sizes = [2, 8, 32], strides = [1, 1, 1]} : vector<2x8x96xf32> to vector<2x8x32xf32>
    %166 = vector.extract_strided_slice %162 {offsets = [0, 0, 64], sizes = [2, 8, 32], strides = [1, 1, 1]} : vector<2x8x96xf32> to vector<2x8x32xf32>
    %167 = vector.extract_strided_slice %163 {offsets = [0, 0, 0], sizes = [2, 8, 32], strides = [1, 1, 1]} : vector<2x8x96xf32> to vector<2x8x32xf32>
    %168 = vector.extract_strided_slice %163 {offsets = [0, 0, 32], sizes = [2, 8, 32], strides = [1, 1, 1]} : vector<2x8x96xf32> to vector<2x8x32xf32>
    %169 = vector.extract_strided_slice %163 {offsets = [0, 0, 64], sizes = [2, 8, 32], strides = [1, 1, 1]} : vector<2x8x96xf32> to vector<2x8x32xf32>
    %cst_60 = arith.constant 1.000000e+00 : f32
    %170 = vector.broadcast %cst_60 : f32 to vector<2x32xf32>
    %171 = arith.addf %170, %152 : vector<2x32xf32>
    %172 = vector.shape_cast %171 : vector<2x32xf32> to vector<2x1x32xf32>
    %cst_61 = arith.constant 1.000000e+00 : f32
    %173 = vector.broadcast %cst_61 : f32 to vector<2x32xf32>
    %174 = arith.addf %173, %151 : vector<2x32xf32>
    %175 = vector.shape_cast %174 : vector<2x32xf32> to vector<2x1x32xf32>
    %176 = vector.broadcast %172 : vector<2x1x32xf32> to vector<2x8x32xf32>
    %177 = arith.mulf %176, %165 : vector<2x8x32xf32>
    %178 = vector.broadcast %172 : vector<2x1x32xf32> to vector<2x8x32xf32>
    %179 = arith.mulf %178, %164 : vector<2x8x32xf32>
    %180 = vector.broadcast %172 : vector<2x1x32xf32> to vector<2x8x32xf32>
    %181 = arith.mulf %180, %166 : vector<2x8x32xf32>
    %182 = vector.extract_strided_slice %177 {offsets = [0, 0, 0], sizes = [2, 8, 16], strides = [1, 1, 1]} : vector<2x8x32xf32> to vector<2x8x16xf32>
    %183 = vector.extract_strided_slice %177 {offsets = [0, 0, 16], sizes = [2, 8, 16], strides = [1, 1, 1]} : vector<2x8x32xf32> to vector<2x8x16xf32>
    %184 = tpu.concatenate %182, %183 in 0 : vector<2x8x16xf32>, vector<2x8x16xf32> -> vector<4x8x16xf32>
    %185 = arith.truncf %184 : vector<4x8x16xf32> to vector<4x8x16xbf16>
    %186 = vector.extract_strided_slice %179 {offsets = [0, 0, 0], sizes = [2, 8, 16], strides = [1, 1, 1]} : vector<2x8x32xf32> to vector<2x8x16xf32>
    %187 = vector.extract_strided_slice %179 {offsets = [0, 0, 16], sizes = [2, 8, 16], strides = [1, 1, 1]} : vector<2x8x32xf32> to vector<2x8x16xf32>
    %188 = tpu.concatenate %186, %187 in 0 : vector<2x8x16xf32>, vector<2x8x16xf32> -> vector<4x8x16xf32>
    %189 = arith.truncf %188 : vector<4x8x16xf32> to vector<4x8x16xbf16>
    %190 = vector.extract_strided_slice %181 {offsets = [0, 0, 0], sizes = [2, 8, 16], strides = [1, 1, 1]} : vector<2x8x32xf32> to vector<2x8x16xf32>
    %191 = vector.extract_strided_slice %181 {offsets = [0, 0, 16], sizes = [2, 8, 16], strides = [1, 1, 1]} : vector<2x8x32xf32> to vector<2x8x16xf32>
    %192 = tpu.concatenate %190, %191 in 0 : vector<2x8x16xf32>, vector<2x8x16xf32> -> vector<4x8x16xf32>
    %193 = arith.truncf %192 : vector<4x8x16xf32> to vector<4x8x16xbf16>
    "tpu.trace_start"() <{level = 10 : i32, message = "bqd,bkd->bqk"}> : () -> ()
    %cst_62 = arith.constant dense<0.000000e+00> : vector<4x8x8xf32>
    %194 = tpu.matmul %185, %189, %cst_62 {dimension_numbers = #tpu.dot_dimension_numbers<[2], [2], [1], [1], [0, 0, 0, 1, 1, 1], [0], [0]>} : vector<4x8x16xbf16>, vector<4x8x16xbf16>, vector<4x8x8xf32> -> vector<4x8x8xf32>
    "tpu.trace_stop"() : () -> ()
    %cst_63 = arith.constant 2.500000e-01 : f32
    %195 = vector.broadcast %cst_63 : f32 to vector<4x8x8xf32>
    %196 = arith.mulf %194, %195 : vector<4x8x8xf32>
    %cst_64 = arith.constant dense<0xFF800000> : vector<4x8xf32>
    %197 = vector.multi_reduction <maximumf>, %196, %cst_64 [2] : vector<4x8x8xf32> to vector<4x8xf32>
    %198 = vector.shape_cast %197 : vector<4x8xf32> to vector<4x8x1xf32>
    %199 = vector.broadcast %198 : vector<4x8x1xf32> to vector<4x8x8xf32>
    %200 = arith.subf %196, %199 : vector<4x8x8xf32>
    %201 = math.exp %200 : vector<4x8x8xf32>
    %cst_65 = arith.constant dense<0.000000e+00> : vector<4x8xf32>
    %202 = vector.multi_reduction <add>, %201, %cst_65 [2] : vector<4x8x8xf32> to vector<4x8xf32>
    %203 = vector.shape_cast %202 : vector<4x8xf32> to vector<4x8x1xf32>
    %204 = tpu.reciprocal %203 {approx = true} : vector<4x8x1xf32> -> vector<4x8x1xf32>
    %205 = vector.broadcast %204 : vector<4x8x1xf32> to vector<4x8x8xf32>
    %206 = arith.mulf %201, %205 : vector<4x8x8xf32>
    %207 = arith.truncf %206 : vector<4x8x8xf32> to vector<4x8x8xbf16>
    "tpu.trace_start"() <{level = 10 : i32, message = "bqk,bkd->bqd"}> : () -> ()
    %cst_66 = arith.constant dense<0.000000e+00> : vector<4x8x16xf32>
    %208 = tpu.matmul %207, %193, %cst_66 {dimension_numbers = #tpu.dot_dimension_numbers<[2], [1], [1], [2], [0, 0, 0, 1, 1, 2], [0], [0]>} : vector<4x8x8xbf16>, vector<4x8x16xbf16>, vector<4x8x16xf32> -> vector<4x8x16xf32>
    "tpu.trace_stop"() : () -> ()
    %209 = vector.extract_strided_slice %208 {offsets = [0, 0, 0], sizes = [2, 8, 16], strides = [1, 1, 1]} : vector<4x8x16xf32> to vector<2x8x16xf32>
    %210 = vector.extract_strided_slice %208 {offsets = [2, 0, 0], sizes = [2, 8, 16], strides = [1, 1, 1]} : vector<4x8x16xf32> to vector<2x8x16xf32>
    %211 = tpu.concatenate %209, %210 in 2 : vector<2x8x16xf32>, vector<2x8x16xf32> -> vector<2x8x32xf32>
    %212 = vector.broadcast %175 : vector<2x1x32xf32> to vector<2x8x32xf32>
    %213 = arith.mulf %212, %168 : vector<2x8x32xf32>
    %214 = vector.broadcast %175 : vector<2x1x32xf32> to vector<2x8x32xf32>
    %215 = arith.mulf %214, %167 : vector<2x8x32xf32>
    %216 = vector.broadcast %175 : vector<2x1x32xf32> to vector<2x8x32xf32>
    %217 = arith.mulf %216, %169 : vector<2x8x32xf32>
    %218 = vector.extract_strided_slice %213 {offsets = [0, 0, 0], sizes = [2, 8, 16], strides = [1, 1, 1]} : vector<2x8x32xf32> to vector<2x8x16xf32>
    %219 = vector.extract_strided_slice %213 {offsets = [0, 0, 16], sizes = [2, 8, 16], strides = [1, 1, 1]} : vector<2x8x32xf32> to vector<2x8x16xf32>
    %220 = tpu.concatenate %218, %219 in 0 : vector<2x8x16xf32>, vector<2x8x16xf32> -> vector<4x8x16xf32>
    %221 = arith.truncf %220 : vector<4x8x16xf32> to vector<4x8x16xbf16>
    %222 = vector.extract_strided_slice %215 {offsets = [0, 0, 0], sizes = [2, 8, 16], strides = [1, 1, 1]} : vector<2x8x32xf32> to vector<2x8x16xf32>
    %223 = vector.extract_strided_slice %215 {offsets = [0, 0, 16], sizes = [2, 8, 16], strides = [1, 1, 1]} : vector<2x8x32xf32> to vector<2x8x16xf32>
    %224 = tpu.concatenate %222, %223 in 0 : vector<2x8x16xf32>, vector<2x8x16xf32> -> vector<4x8x16xf32>
    %225 = arith.truncf %224 : vector<4x8x16xf32> to vector<4x8x16xbf16>
    %226 = vector.extract_strided_slice %217 {offsets = [0, 0, 0], sizes = [2, 8, 16], strides = [1, 1, 1]} : vector<2x8x32xf32> to vector<2x8x16xf32>
    %227 = vector.extract_strided_slice %217 {offsets = [0, 0, 16], sizes = [2, 8, 16], strides = [1, 1, 1]} : vector<2x8x32xf32> to vector<2x8x16xf32>
    %228 = tpu.concatenate %226, %227 in 0 : vector<2x8x16xf32>, vector<2x8x16xf32> -> vector<4x8x16xf32>
    %229 = arith.truncf %228 : vector<4x8x16xf32> to vector<4x8x16xbf16>
    "tpu.trace_start"() <{level = 10 : i32, message = "bqd,bkd->bqk"}> : () -> ()
    %cst_67 = arith.constant dense<0.000000e+00> : vector<4x8x8xf32>
    %230 = tpu.matmul %221, %225, %cst_67 {dimension_numbers = #tpu.dot_dimension_numbers<[2], [2], [1], [1], [0, 0, 0, 1, 1, 1], [0], [0]>} : vector<4x8x16xbf16>, vector<4x8x16xbf16>, vector<4x8x8xf32> -> vector<4x8x8xf32>
    "tpu.trace_stop"() : () -> ()
    %cst_68 = arith.constant 2.500000e-01 : f32
    %231 = vector.broadcast %cst_68 : f32 to vector<4x8x8xf32>
    %232 = arith.mulf %230, %231 : vector<4x8x8xf32>
    %cst_69 = arith.constant dense<0xFF800000> : vector<4x8xf32>
    %233 = vector.multi_reduction <maximumf>, %232, %cst_69 [2] : vector<4x8x8xf32> to vector<4x8xf32>
    %234 = vector.shape_cast %233 : vector<4x8xf32> to vector<4x8x1xf32>
    %235 = vector.broadcast %234 : vector<4x8x1xf32> to vector<4x8x8xf32>
    %236 = arith.subf %232, %235 : vector<4x8x8xf32>
    %237 = math.exp %236 : vector<4x8x8xf32>
    %cst_70 = arith.constant dense<0.000000e+00> : vector<4x8xf32>
    %238 = vector.multi_reduction <add>, %237, %cst_70 [2] : vector<4x8x8xf32> to vector<4x8xf32>
    %239 = vector.shape_cast %238 : vector<4x8xf32> to vector<4x8x1xf32>
    %240 = tpu.reciprocal %239 {approx = true} : vector<4x8x1xf32> -> vector<4x8x1xf32>
    %241 = vector.broadcast %240 : vector<4x8x1xf32> to vector<4x8x8xf32>
    %242 = arith.mulf %237, %241 : vector<4x8x8xf32>
    %243 = arith.truncf %242 : vector<4x8x8xf32> to vector<4x8x8xbf16>
    "tpu.trace_start"() <{level = 10 : i32, message = "bqk,bkd->bqd"}> : () -> ()
    %cst_71 = arith.constant dense<0.000000e+00> : vector<4x8x16xf32>
    %244 = tpu.matmul %243, %229, %cst_71 {dimension_numbers = #tpu.dot_dimension_numbers<[2], [1], [1], [2], [0, 0, 0, 1, 1, 2], [0], [0]>} : vector<4x8x8xbf16>, vector<4x8x16xbf16>, vector<4x8x16xf32> -> vector<4x8x16xf32>
    "tpu.trace_stop"() : () -> ()
    %245 = vector.extract_strided_slice %244 {offsets = [0, 0, 0], sizes = [2, 8, 16], strides = [1, 1, 1]} : vector<4x8x16xf32> to vector<2x8x16xf32>
    %246 = vector.extract_strided_slice %244 {offsets = [2, 0, 0], sizes = [2, 8, 16], strides = [1, 1, 1]} : vector<4x8x16xf32> to vector<2x8x16xf32>
    %247 = tpu.concatenate %245, %246 in 2 : vector<2x8x16xf32>, vector<2x8x16xf32> -> vector<2x8x32xf32>
    %248 = vector.shape_cast %211 : vector<2x8x32xf32> to vector<16x32xf32>
    %249 = arith.addf %133, %248 : vector<16x32xf32>
    %250 = vector.shape_cast %247 : vector<2x8x32xf32> to vector<16x32xf32>
    %251 = arith.addf %134, %250 : vector<16x32xf32>
    %252 = tpu.concatenate %249, %251 in 0 : vector<16x32xf32>, vector<16x32xf32> -> vector<32x32xf32>
    %253 = arith.truncf %252 : vector<32x32xf32> to vector<32x32xbf16>
    %cst_72 = arith.constant dense<0.000000e+00> : vector<32x64xf32>
    %254 = tpu.matmul %253, %130, %cst_72 {dimension_numbers = #tpu.dot_dimension_numbers<[1], [0], [0], [1], [0, 0, 1, 1], [], []>} : vector<32x32xbf16>, vector<32x64xbf16>, vector<32x64xf32> -> vector<32x64xf32>
    %255 = vector.broadcast %132 : vector<1x64xf32> to vector<32x64xf32>
    %256 = arith.addf %254, %255 : vector<32x64xf32>
    %cst_73 = arith.constant 0.000000e+00 : f32
    %257 = vector.broadcast %cst_73 : f32 to vector<32x64xf32>
    %258 = arith.maximumf %256, %257 : vector<32x64xf32>
    %259 = vector.extract_strided_slice %258 {offsets = [0, 0], sizes = [16, 32], strides = [1, 1]} : vector<32x64xf32> to vector<16x32xf32>
    %260 = vector.extract_strided_slice %258 {offsets = [16, 32], sizes = [16, 32], strides = [1, 1]} : vector<32x64xf32> to vector<16x32xf32>
    %261 = vector.shape_cast %259 : vector<16x32xf32> to vector<2x8x32xf32>
    %262 = vector.shape_cast %260 : vector<16x32xf32> to vector<2x8x32xf32>
    %263 = arith.addf %15, %117 : vector<2x8x32xf32>
    %264 = arith.addf %263, %261 : vector<2x8x32xf32>
    %265 = arith.addf %16, %118 : vector<2x8x32xf32>
    %266 = arith.addf %265, %262 : vector<2x8x32xf32>
    %267 = arith.addf %261, %117 : vector<2x8x32xf32>
    %268 = arith.addf %267, %15 : vector<2x8x32xf32>
    %269 = arith.addf %262, %118 : vector<2x8x32xf32>
    %270 = arith.addf %269, %16 : vector<2x8x32xf32>
    %c2_74 = arith.constant 2 : index
    %c0_75 = arith.constant 0 : index
    %c0_76 = arith.constant 0 : index
    %271 = vector.load %arg4[%c2_74, %c0_75, %c0_76] : memref<4x32x192xbf16, #tpu.memory_space<vmem>>, vector<1x32x192xbf16>
    %272 = vector.shape_cast %271 : vector<1x32x192xbf16> to vector<32x192xbf16>
    %c2_77 = arith.constant 2 : index
    %c0_78 = arith.constant 0 : index
    %c0_79 = arith.constant 0 : index
    %273 = vector.load %arg5[%c2_77, %c0_78, %c0_79] : memref<4x1x192xf32, #tpu.memory_space<vmem>>, vector<1x1x192xf32>
    %274 = vector.shape_cast %273 : vector<1x1x192xf32> to vector<1x192xf32>
    %c1_80 = arith.constant 1 : index
    %c0_81 = arith.constant 0 : index
    %c0_82 = arith.constant 0 : index
    %275 = vector.load %arg6[%c1_80, %c0_81, %c0_82] : memref<2x64x64xbf16, #tpu.memory_space<vmem>>, vector<1x64x64xbf16>
    %276 = vector.shape_cast %275 : vector<1x64x64xbf16> to vector<64x64xbf16>
    %c3 = arith.constant 3 : index
    %c0_83 = arith.constant 0 : index
    %c0_84 = arith.constant 0 : index
    %277 = vector.load %arg8[%c3, %c0_83, %c0_84] : memref<6x1x64xf32, #tpu.memory_space<vmem>>, vector<1x1x64xf32>
    %278 = vector.shape_cast %277 : vector<1x1x64xf32> to vector<1x64xf32>
    %279 = vector.shape_cast %268 : vector<2x8x32xf32> to vector<16x32xf32>
    %280 = vector.shape_cast %270 : vector<2x8x32xf32> to vector<16x32xf32>
    %281 = tpu.concatenate %279, %280 in 0 : vector<16x32xf32>, vector<16x32xf32> -> vector<32x32xf32>
    %282 = arith.truncf %281 : vector<32x32xf32> to vector<32x32xbf16>
    %cst_85 = arith.constant dense<0.000000e+00> : vector<32x192xf32>
    %283 = tpu.matmul %282, %272, %cst_85 {dimension_numbers = #tpu.dot_dimension_numbers<[1], [0], [0], [1], [0, 0, 1, 1], [], []>} : vector<32x32xbf16>, vector<32x192xbf16>, vector<32x192xf32> -> vector<32x192xf32>
    %284 = vector.broadcast %274 : vector<1x192xf32> to vector<32x192xf32>
    %285 = arith.addf %283, %284 : vector<32x192xf32>
    %cst_86 = arith.constant 0.000000e+00 : f32
    %286 = vector.broadcast %cst_86 : f32 to vector<32x192xf32>
    %287 = arith.maximumf %285, %286 : vector<32x192xf32>
    %288 = vector.extract_strided_slice %287 {offsets = [0, 0], sizes = [16, 96], strides = [1, 1]} : vector<32x192xf32> to vector<16x96xf32>
    %289 = vector.extract_strided_slice %287 {offsets = [16, 96], sizes = [16, 96], strides = [1, 1]} : vector<32x192xf32> to vector<16x96xf32>
    %290 = vector.shape_cast %288 : vector<16x96xf32> to vector<2x8x96xf32>
    %291 = vector.shape_cast %289 : vector<16x96xf32> to vector<2x8x96xf32>
    %292 = vector.extract_strided_slice %290 {offsets = [0, 0, 0], sizes = [2, 8, 32], strides = [1, 1, 1]} : vector<2x8x96xf32> to vector<2x8x32xf32>
    %293 = vector.extract_strided_slice %290 {offsets = [0, 0, 32], sizes = [2, 8, 32], strides = [1, 1, 1]} : vector<2x8x96xf32> to vector<2x8x32xf32>
    %294 = vector.extract_strided_slice %290 {offsets = [0, 0, 64], sizes = [2, 8, 32], strides = [1, 1, 1]} : vector<2x8x96xf32> to vector<2x8x32xf32>
    %295 = vector.extract_strided_slice %291 {offsets = [0, 0, 0], sizes = [2, 8, 32], strides = [1, 1, 1]} : vector<2x8x96xf32> to vector<2x8x32xf32>
    %296 = vector.extract_strided_slice %291 {offsets = [0, 0, 32], sizes = [2, 8, 32], strides = [1, 1, 1]} : vector<2x8x96xf32> to vector<2x8x32xf32>
    %297 = vector.extract_strided_slice %291 {offsets = [0, 0, 64], sizes = [2, 8, 32], strides = [1, 1, 1]} : vector<2x8x96xf32> to vector<2x8x32xf32>
    %298 = vector.extract_strided_slice %293 {offsets = [0, 0, 0], sizes = [2, 8, 16], strides = [1, 1, 1]} : vector<2x8x32xf32> to vector<2x8x16xf32>
    %299 = vector.extract_strided_slice %293 {offsets = [0, 0, 16], sizes = [2, 8, 16], strides = [1, 1, 1]} : vector<2x8x32xf32> to vector<2x8x16xf32>
    %300 = tpu.concatenate %298, %299 in 0 : vector<2x8x16xf32>, vector<2x8x16xf32> -> vector<4x8x16xf32>
    %301 = arith.truncf %300 : vector<4x8x16xf32> to vector<4x8x16xbf16>
    %302 = vector.extract_strided_slice %295 {offsets = [0, 0, 0], sizes = [2, 8, 16], strides = [1, 1, 1]} : vector<2x8x32xf32> to vector<2x8x16xf32>
    %303 = vector.extract_strided_slice %295 {offsets = [0, 0, 16], sizes = [2, 8, 16], strides = [1, 1, 1]} : vector<2x8x32xf32> to vector<2x8x16xf32>
    %304 = tpu.concatenate %302, %303 in 0 : vector<2x8x16xf32>, vector<2x8x16xf32> -> vector<4x8x16xf32>
    %305 = arith.truncf %304 : vector<4x8x16xf32> to vector<4x8x16xbf16>
    %306 = vector.extract_strided_slice %297 {offsets = [0, 0, 0], sizes = [2, 8, 16], strides = [1, 1, 1]} : vector<2x8x32xf32> to vector<2x8x16xf32>
    %307 = vector.extract_strided_slice %297 {offsets = [0, 0, 16], sizes = [2, 8, 16], strides = [1, 1, 1]} : vector<2x8x32xf32> to vector<2x8x16xf32>
    %308 = tpu.concatenate %306, %307 in 0 : vector<2x8x16xf32>, vector<2x8x16xf32> -> vector<4x8x16xf32>
    %309 = arith.truncf %308 : vector<4x8x16xf32> to vector<4x8x16xbf16>
    "tpu.trace_start"() <{level = 10 : i32, message = "bqd,bkd->bqk"}> : () -> ()
    %cst_87 = arith.constant dense<0.000000e+00> : vector<4x8x8xf32>
    %310 = tpu.matmul %301, %305, %cst_87 {dimension_numbers = #tpu.dot_dimension_numbers<[2], [2], [1], [1], [0, 0, 0, 1, 1, 1], [0], [0]>} : vector<4x8x16xbf16>, vector<4x8x16xbf16>, vector<4x8x8xf32> -> vector<4x8x8xf32>
    "tpu.trace_stop"() : () -> ()
    %cst_88 = arith.constant 2.500000e-01 : f32
    %311 = vector.broadcast %cst_88 : f32 to vector<4x8x8xf32>
    %312 = arith.mulf %310, %311 : vector<4x8x8xf32>
    %cst_89 = arith.constant dense<0xFF800000> : vector<4x8xf32>
    %313 = vector.multi_reduction <maximumf>, %312, %cst_89 [2] : vector<4x8x8xf32> to vector<4x8xf32>
    %314 = vector.shape_cast %313 : vector<4x8xf32> to vector<4x8x1xf32>
    %315 = vector.broadcast %314 : vector<4x8x1xf32> to vector<4x8x8xf32>
    %316 = arith.subf %312, %315 : vector<4x8x8xf32>
    %317 = math.exp %316 : vector<4x8x8xf32>
    %cst_90 = arith.constant dense<0.000000e+00> : vector<4x8xf32>
    %318 = vector.multi_reduction <add>, %317, %cst_90 [2] : vector<4x8x8xf32> to vector<4x8xf32>
    %319 = vector.shape_cast %318 : vector<4x8xf32> to vector<4x8x1xf32>
    %320 = tpu.reciprocal %319 {approx = true} : vector<4x8x1xf32> -> vector<4x8x1xf32>
    %321 = vector.broadcast %320 : vector<4x8x1xf32> to vector<4x8x8xf32>
    %322 = arith.mulf %317, %321 : vector<4x8x8xf32>
    %323 = arith.truncf %322 : vector<4x8x8xf32> to vector<4x8x8xbf16>
    "tpu.trace_start"() <{level = 10 : i32, message = "bqk,bkd->bqd"}> : () -> ()
    %cst_91 = arith.constant dense<0.000000e+00> : vector<4x8x16xf32>
    %324 = tpu.matmul %323, %309, %cst_91 {dimension_numbers = #tpu.dot_dimension_numbers<[2], [1], [1], [2], [0, 0, 0, 1, 1, 2], [0], [0]>} : vector<4x8x8xbf16>, vector<4x8x16xbf16>, vector<4x8x16xf32> -> vector<4x8x16xf32>
    "tpu.trace_stop"() : () -> ()
    %325 = vector.extract_strided_slice %324 {offsets = [0, 0, 0], sizes = [2, 8, 16], strides = [1, 1, 1]} : vector<4x8x16xf32> to vector<2x8x16xf32>
    %326 = vector.extract_strided_slice %324 {offsets = [2, 0, 0], sizes = [2, 8, 16], strides = [1, 1, 1]} : vector<4x8x16xf32> to vector<2x8x16xf32>
    %327 = tpu.concatenate %325, %326 in 2 : vector<2x8x16xf32>, vector<2x8x16xf32> -> vector<2x8x32xf32>
    %328 = vector.extract_strided_slice %296 {offsets = [0, 0, 0], sizes = [2, 8, 16], strides = [1, 1, 1]} : vector<2x8x32xf32> to vector<2x8x16xf32>
    %329 = vector.extract_strided_slice %296 {offsets = [0, 0, 16], sizes = [2, 8, 16], strides = [1, 1, 1]} : vector<2x8x32xf32> to vector<2x8x16xf32>
    %330 = tpu.concatenate %328, %329 in 0 : vector<2x8x16xf32>, vector<2x8x16xf32> -> vector<4x8x16xf32>
    %331 = arith.truncf %330 : vector<4x8x16xf32> to vector<4x8x16xbf16>
    %332 = vector.extract_strided_slice %292 {offsets = [0, 0, 0], sizes = [2, 8, 16], strides = [1, 1, 1]} : vector<2x8x32xf32> to vector<2x8x16xf32>
    %333 = vector.extract_strided_slice %292 {offsets = [0, 0, 16], sizes = [2, 8, 16], strides = [1, 1, 1]} : vector<2x8x32xf32> to vector<2x8x16xf32>
    %334 = tpu.concatenate %332, %333 in 0 : vector<2x8x16xf32>, vector<2x8x16xf32> -> vector<4x8x16xf32>
    %335 = arith.truncf %334 : vector<4x8x16xf32> to vector<4x8x16xbf16>
    %336 = vector.extract_strided_slice %294 {offsets = [0, 0, 0], sizes = [2, 8, 16], strides = [1, 1, 1]} : vector<2x8x32xf32> to vector<2x8x16xf32>
    %337 = vector.extract_strided_slice %294 {offsets = [0, 0, 16], sizes = [2, 8, 16], strides = [1, 1, 1]} : vector<2x8x32xf32> to vector<2x8x16xf32>
    %338 = tpu.concatenate %336, %337 in 0 : vector<2x8x16xf32>, vector<2x8x16xf32> -> vector<4x8x16xf32>
    %339 = arith.truncf %338 : vector<4x8x16xf32> to vector<4x8x16xbf16>
    "tpu.trace_start"() <{level = 10 : i32, message = "bqd,bkd->bqk"}> : () -> ()
    %cst_92 = arith.constant dense<0.000000e+00> : vector<4x8x8xf32>
    %340 = tpu.matmul %331, %335, %cst_92 {dimension_numbers = #tpu.dot_dimension_numbers<[2], [2], [1], [1], [0, 0, 0, 1, 1, 1], [0], [0]>} : vector<4x8x16xbf16>, vector<4x8x16xbf16>, vector<4x8x8xf32> -> vector<4x8x8xf32>
    "tpu.trace_stop"() : () -> ()
    %cst_93 = arith.constant 2.500000e-01 : f32
    %341 = vector.broadcast %cst_93 : f32 to vector<4x8x8xf32>
    %342 = arith.mulf %340, %341 : vector<4x8x8xf32>
    %cst_94 = arith.constant dense<0xFF800000> : vector<4x8xf32>
    %343 = vector.multi_reduction <maximumf>, %342, %cst_94 [2] : vector<4x8x8xf32> to vector<4x8xf32>
    %344 = vector.shape_cast %343 : vector<4x8xf32> to vector<4x8x1xf32>
    %345 = vector.broadcast %344 : vector<4x8x1xf32> to vector<4x8x8xf32>
    %346 = arith.subf %342, %345 : vector<4x8x8xf32>
    %347 = math.exp %346 : vector<4x8x8xf32>
    %cst_95 = arith.constant dense<0.000000e+00> : vector<4x8xf32>
    %348 = vector.multi_reduction <add>, %347, %cst_95 [2] : vector<4x8x8xf32> to vector<4x8xf32>
    %349 = vector.shape_cast %348 : vector<4x8xf32> to vector<4x8x1xf32>
    %350 = tpu.reciprocal %349 {approx = true} : vector<4x8x1xf32> -> vector<4x8x1xf32>
    %351 = vector.broadcast %350 : vector<4x8x1xf32> to vector<4x8x8xf32>
    %352 = arith.mulf %347, %351 : vector<4x8x8xf32>
    %353 = arith.truncf %352 : vector<4x8x8xf32> to vector<4x8x8xbf16>
    "tpu.trace_start"() <{level = 10 : i32, message = "bqk,bkd->bqd"}> : () -> ()
    %cst_96 = arith.constant dense<0.000000e+00> : vector<4x8x16xf32>
    %354 = tpu.matmul %353, %339, %cst_96 {dimension_numbers = #tpu.dot_dimension_numbers<[2], [1], [1], [2], [0, 0, 0, 1, 1, 2], [0], [0]>} : vector<4x8x8xbf16>, vector<4x8x16xbf16>, vector<4x8x16xf32> -> vector<4x8x16xf32>
    "tpu.trace_stop"() : () -> ()
    %355 = vector.extract_strided_slice %354 {offsets = [0, 0, 0], sizes = [2, 8, 16], strides = [1, 1, 1]} : vector<4x8x16xf32> to vector<2x8x16xf32>
    %356 = vector.extract_strided_slice %354 {offsets = [2, 0, 0], sizes = [2, 8, 16], strides = [1, 1, 1]} : vector<4x8x16xf32> to vector<2x8x16xf32>
    %357 = tpu.concatenate %355, %356 in 2 : vector<2x8x16xf32>, vector<2x8x16xf32> -> vector<2x8x32xf32>
    %358 = vector.shape_cast %327 : vector<2x8x32xf32> to vector<16x32xf32>
    %359 = tpu.concatenate %279, %358 in 1 : vector<16x32xf32>, vector<16x32xf32> -> vector<16x64xf32>
    %360 = vector.shape_cast %357 : vector<2x8x32xf32> to vector<16x32xf32>
    %361 = tpu.concatenate %280, %360 in 1 : vector<16x32xf32>, vector<16x32xf32> -> vector<16x64xf32>
    %362 = tpu.concatenate %359, %361 in 0 : vector<16x64xf32>, vector<16x64xf32> -> vector<32x64xf32>
    %363 = arith.truncf %362 : vector<32x64xf32> to vector<32x64xbf16>
    %cst_97 = arith.constant dense<0.000000e+00> : vector<32x64xf32>
    %364 = tpu.matmul %363, %276, %cst_97 {dimension_numbers = #tpu.dot_dimension_numbers<[1], [0], [0], [1], [0, 0, 1, 1], [], []>} : vector<32x64xbf16>, vector<64x64xbf16>, vector<32x64xf32> -> vector<32x64xf32>
    %365 = vector.broadcast %278 : vector<1x64xf32> to vector<32x64xf32>
    %366 = arith.addf %364, %365 : vector<32x64xf32>
    %cst_98 = arith.constant 0.000000e+00 : f32
    %367 = vector.broadcast %cst_98 : f32 to vector<32x64xf32>
    %368 = arith.maximumf %366, %367 : vector<32x64xf32>
    %369 = vector.extract_strided_slice %368 {offsets = [0, 0], sizes = [16, 32], strides = [1, 1]} : vector<32x64xf32> to vector<16x32xf32>
    %370 = vector.extract_strided_slice %368 {offsets = [16, 32], sizes = [16, 32], strides = [1, 1]} : vector<32x64xf32> to vector<16x32xf32>
    %371 = vector.shape_cast %369 : vector<16x32xf32> to vector<2x8x32xf32>
    %372 = vector.shape_cast %370 : vector<16x32xf32> to vector<2x8x32xf32>
    %373 = arith.addf %371, %268 : vector<2x8x32xf32>
    %374 = arith.addf %372, %270 : vector<2x8x32xf32>
    %c2_99 = arith.constant 2 : index
    %c0_100 = arith.constant 0 : index
    %c0_101 = arith.constant 0 : index
    %375 = vector.load %arg7[%c2_99, %c0_100, %c0_101] : memref<4x32x64xbf16, #tpu.memory_space<vmem>>, vector<1x32x64xbf16>
    %376 = vector.shape_cast %375 : vector<1x32x64xbf16> to vector<32x64xbf16>
    %c4 = arith.constant 4 : index
    %c0_102 = arith.constant 0 : index
    %c0_103 = arith.constant 0 : index
    %377 = vector.load %arg8[%c4, %c0_102, %c0_103] : memref<6x1x64xf32, #tpu.memory_space<vmem>>, vector<1x1x64xf32>
    %378 = vector.shape_cast %377 : vector<1x1x64xf32> to vector<1x64xf32>
    %c3_104 = arith.constant 3 : index
    %c0_105 = arith.constant 0 : index
    %c0_106 = arith.constant 0 : index
    %379 = vector.load %arg4[%c3_104, %c0_105, %c0_106] : memref<4x32x192xbf16, #tpu.memory_space<vmem>>, vector<1x32x192xbf16>
    %380 = vector.shape_cast %379 : vector<1x32x192xbf16> to vector<32x192xbf16>
    %c3_107 = arith.constant 3 : index
    %c0_108 = arith.constant 0 : index
    %c0_109 = arith.constant 0 : index
    %381 = vector.load %arg5[%c3_107, %c0_108, %c0_109] : memref<4x1x192xf32, #tpu.memory_space<vmem>>, vector<1x1x192xf32>
    %382 = vector.shape_cast %381 : vector<1x1x192xf32> to vector<1x192xf32>
    %c3_110 = arith.constant 3 : index
    %c0_111 = arith.constant 0 : index
    %c0_112 = arith.constant 0 : index
    %383 = vector.load %arg7[%c3_110, %c0_111, %c0_112] : memref<4x32x64xbf16, #tpu.memory_space<vmem>>, vector<1x32x64xbf16>
    %384 = vector.shape_cast %383 : vector<1x32x64xbf16> to vector<32x64xbf16>
    %c5 = arith.constant 5 : index
    %c0_113 = arith.constant 0 : index
    %c0_114 = arith.constant 0 : index
    %385 = vector.load %arg8[%c5, %c0_113, %c0_114] : memref<6x1x64xf32, #tpu.memory_space<vmem>>, vector<1x1x64xf32>
    %386 = vector.shape_cast %385 : vector<1x1x64xf32> to vector<1x64xf32>
    %387 = vector.shape_cast %373 : vector<2x8x32xf32> to vector<16x32xf32>
    %388 = vector.shape_cast %374 : vector<2x8x32xf32> to vector<16x32xf32>
    %cst_115 = arith.constant dense<0.000000e+00> : vector<2x32xf32>
    %389 = vector.multi_reduction <add>, %373, %cst_115 [1] : vector<2x8x32xf32> to vector<2x32xf32>
    %cst_116 = arith.constant 1.250000e-01 : f32
    %390 = vector.broadcast %cst_116 : f32 to vector<2x32xf32>
    %391 = arith.mulf %389, %390 : vector<2x32xf32>
    %cst_117 = arith.constant dense<0.000000e+00> : vector<2x32xf32>
    %392 = vector.multi_reduction <add>, %374, %cst_117 [1] : vector<2x8x32xf32> to vector<2x32xf32>
    %cst_118 = arith.constant 1.250000e-01 : f32
    %393 = vector.broadcast %cst_118 : f32 to vector<2x32xf32>
    %394 = arith.mulf %392, %393 : vector<2x32xf32>
    %395 = tpu.concatenate %391, %394 in 0 : vector<2x32xf32>, vector<2x32xf32> -> vector<4x32xf32>
    %396 = arith.truncf %395 : vector<4x32xf32> to vector<4x32xbf16>
    %cst_119 = arith.constant dense<0.000000e+00> : vector<4x64xf32>
    %397 = tpu.matmul %396, %376, %cst_119 {dimension_numbers = #tpu.dot_dimension_numbers<[1], [0], [0], [1], [0, 0, 1, 1], [], []>} : vector<4x32xbf16>, vector<32x64xbf16>, vector<4x64xf32> -> vector<4x64xf32>
    %398 = vector.broadcast %378 : vector<1x64xf32> to vector<4x64xf32>
    %399 = arith.addf %397, %398 : vector<4x64xf32>
    %400 = arith.negf %399 : vector<4x64xf32>
    %401 = math.exp %400 : vector<4x64xf32>
    %cst_120 = arith.constant 1.000000e+00 : f32
    %402 = vector.broadcast %cst_120 : f32 to vector<4x64xf32>
    %403 = arith.addf %402, %401 : vector<4x64xf32>
    %404 = arith.divf %402, %403 : vector<4x64xf32>
    %405 = vector.extract_strided_slice %404 {offsets = [0, 0], sizes = [2, 32], strides = [1, 1]} : vector<4x64xf32> to vector<2x32xf32>
    %406 = vector.extract_strided_slice %404 {offsets = [2, 32], sizes = [2, 32], strides = [1, 1]} : vector<4x64xf32> to vector<2x32xf32>
    %407 = tpu.concatenate %387, %388 in 0 : vector<16x32xf32>, vector<16x32xf32> -> vector<32x32xf32>
    %408 = arith.truncf %407 : vector<32x32xf32> to vector<32x32xbf16>
    %cst_121 = arith.constant dense<0.000000e+00> : vector<32x192xf32>
    %409 = tpu.matmul %408, %380, %cst_121 {dimension_numbers = #tpu.dot_dimension_numbers<[1], [0], [0], [1], [0, 0, 1, 1], [], []>} : vector<32x32xbf16>, vector<32x192xbf16>, vector<32x192xf32> -> vector<32x192xf32>
    %410 = vector.broadcast %382 : vector<1x192xf32> to vector<32x192xf32>
    %411 = arith.addf %409, %410 : vector<32x192xf32>
    %cst_122 = arith.constant 0.000000e+00 : f32
    %412 = vector.broadcast %cst_122 : f32 to vector<32x192xf32>
    %413 = arith.maximumf %411, %412 : vector<32x192xf32>
    %414 = vector.extract_strided_slice %413 {offsets = [0, 0], sizes = [16, 96], strides = [1, 1]} : vector<32x192xf32> to vector<16x96xf32>
    %415 = vector.extract_strided_slice %413 {offsets = [16, 96], sizes = [16, 96], strides = [1, 1]} : vector<32x192xf32> to vector<16x96xf32>
    %416 = vector.shape_cast %414 : vector<16x96xf32> to vector<2x8x96xf32>
    %417 = vector.shape_cast %415 : vector<16x96xf32> to vector<2x8x96xf32>
    %418 = vector.extract_strided_slice %416 {offsets = [0, 0, 0], sizes = [2, 8, 32], strides = [1, 1, 1]} : vector<2x8x96xf32> to vector<2x8x32xf32>
    %419 = vector.extract_strided_slice %416 {offsets = [0, 0, 32], sizes = [2, 8, 32], strides = [1, 1, 1]} : vector<2x8x96xf32> to vector<2x8x32xf32>
    %420 = vector.extract_strided_slice %416 {offsets = [0, 0, 64], sizes = [2, 8, 32], strides = [1, 1, 1]} : vector<2x8x96xf32> to vector<2x8x32xf32>
    %421 = vector.extract_strided_slice %417 {offsets = [0, 0, 0], sizes = [2, 8, 32], strides = [1, 1, 1]} : vector<2x8x96xf32> to vector<2x8x32xf32>
    %422 = vector.extract_strided_slice %417 {offsets = [0, 0, 32], sizes = [2, 8, 32], strides = [1, 1, 1]} : vector<2x8x96xf32> to vector<2x8x32xf32>
    %423 = vector.extract_strided_slice %417 {offsets = [0, 0, 64], sizes = [2, 8, 32], strides = [1, 1, 1]} : vector<2x8x96xf32> to vector<2x8x32xf32>
    %cst_123 = arith.constant 1.000000e+00 : f32
    %424 = vector.broadcast %cst_123 : f32 to vector<2x32xf32>
    %425 = arith.addf %424, %406 : vector<2x32xf32>
    %426 = vector.shape_cast %425 : vector<2x32xf32> to vector<2x1x32xf32>
    %cst_124 = arith.constant 1.000000e+00 : f32
    %427 = vector.broadcast %cst_124 : f32 to vector<2x32xf32>
    %428 = arith.addf %427, %405 : vector<2x32xf32>
    %429 = vector.shape_cast %428 : vector<2x32xf32> to vector<2x1x32xf32>
    %430 = vector.broadcast %426 : vector<2x1x32xf32> to vector<2x8x32xf32>
    %431 = arith.mulf %430, %419 : vector<2x8x32xf32>
    %432 = vector.broadcast %426 : vector<2x1x32xf32> to vector<2x8x32xf32>
    %433 = arith.mulf %432, %418 : vector<2x8x32xf32>
    %434 = vector.broadcast %426 : vector<2x1x32xf32> to vector<2x8x32xf32>
    %435 = arith.mulf %434, %420 : vector<2x8x32xf32>
    %436 = vector.extract_strided_slice %431 {offsets = [0, 0, 0], sizes = [2, 8, 16], strides = [1, 1, 1]} : vector<2x8x32xf32> to vector<2x8x16xf32>
    %437 = vector.extract_strided_slice %431 {offsets = [0, 0, 16], sizes = [2, 8, 16], strides = [1, 1, 1]} : vector<2x8x32xf32> to vector<2x8x16xf32>
    %438 = tpu.concatenate %436, %437 in 0 : vector<2x8x16xf32>, vector<2x8x16xf32> -> vector<4x8x16xf32>
    %439 = arith.truncf %438 : vector<4x8x16xf32> to vector<4x8x16xbf16>
    %440 = vector.extract_strided_slice %433 {offsets = [0, 0, 0], sizes = [2, 8, 16], strides = [1, 1, 1]} : vector<2x8x32xf32> to vector<2x8x16xf32>
    %441 = vector.extract_strided_slice %433 {offsets = [0, 0, 16], sizes = [2, 8, 16], strides = [1, 1, 1]} : vector<2x8x32xf32> to vector<2x8x16xf32>
    %442 = tpu.concatenate %440, %441 in 0 : vector<2x8x16xf32>, vector<2x8x16xf32> -> vector<4x8x16xf32>
    %443 = arith.truncf %442 : vector<4x8x16xf32> to vector<4x8x16xbf16>
    %444 = vector.extract_strided_slice %435 {offsets = [0, 0, 0], sizes = [2, 8, 16], strides = [1, 1, 1]} : vector<2x8x32xf32> to vector<2x8x16xf32>
    %445 = vector.extract_strided_slice %435 {offsets = [0, 0, 16], sizes = [2, 8, 16], strides = [1, 1, 1]} : vector<2x8x32xf32> to vector<2x8x16xf32>
    %446 = tpu.concatenate %444, %445 in 0 : vector<2x8x16xf32>, vector<2x8x16xf32> -> vector<4x8x16xf32>
    %447 = arith.truncf %446 : vector<4x8x16xf32> to vector<4x8x16xbf16>
    "tpu.trace_start"() <{level = 10 : i32, message = "bqd,bkd->bqk"}> : () -> ()
    %cst_125 = arith.constant dense<0.000000e+00> : vector<4x8x8xf32>
    %448 = tpu.matmul %439, %443, %cst_125 {dimension_numbers = #tpu.dot_dimension_numbers<[2], [2], [1], [1], [0, 0, 0, 1, 1, 1], [0], [0]>} : vector<4x8x16xbf16>, vector<4x8x16xbf16>, vector<4x8x8xf32> -> vector<4x8x8xf32>
    "tpu.trace_stop"() : () -> ()
    %cst_126 = arith.constant 2.500000e-01 : f32
    %449 = vector.broadcast %cst_126 : f32 to vector<4x8x8xf32>
    %450 = arith.mulf %448, %449 : vector<4x8x8xf32>
    %cst_127 = arith.constant dense<0xFF800000> : vector<4x8xf32>
    %451 = vector.multi_reduction <maximumf>, %450, %cst_127 [2] : vector<4x8x8xf32> to vector<4x8xf32>
    %452 = vector.shape_cast %451 : vector<4x8xf32> to vector<4x8x1xf32>
    %453 = vector.broadcast %452 : vector<4x8x1xf32> to vector<4x8x8xf32>
    %454 = arith.subf %450, %453 : vector<4x8x8xf32>
    %455 = math.exp %454 : vector<4x8x8xf32>
    %cst_128 = arith.constant dense<0.000000e+00> : vector<4x8xf32>
    %456 = vector.multi_reduction <add>, %455, %cst_128 [2] : vector<4x8x8xf32> to vector<4x8xf32>
    %457 = vector.shape_cast %456 : vector<4x8xf32> to vector<4x8x1xf32>
    %458 = tpu.reciprocal %457 {approx = true} : vector<4x8x1xf32> -> vector<4x8x1xf32>
    %459 = vector.broadcast %458 : vector<4x8x1xf32> to vector<4x8x8xf32>
    %460 = arith.mulf %455, %459 : vector<4x8x8xf32>
    %461 = arith.truncf %460 : vector<4x8x8xf32> to vector<4x8x8xbf16>
    "tpu.trace_start"() <{level = 10 : i32, message = "bqk,bkd->bqd"}> : () -> ()
    %cst_129 = arith.constant dense<0.000000e+00> : vector<4x8x16xf32>
    %462 = tpu.matmul %461, %447, %cst_129 {dimension_numbers = #tpu.dot_dimension_numbers<[2], [1], [1], [2], [0, 0, 0, 1, 1, 2], [0], [0]>} : vector<4x8x8xbf16>, vector<4x8x16xbf16>, vector<4x8x16xf32> -> vector<4x8x16xf32>
    "tpu.trace_stop"() : () -> ()
    %463 = vector.extract_strided_slice %462 {offsets = [0, 0, 0], sizes = [2, 8, 16], strides = [1, 1, 1]} : vector<4x8x16xf32> to vector<2x8x16xf32>
    %464 = vector.extract_strided_slice %462 {offsets = [2, 0, 0], sizes = [2, 8, 16], strides = [1, 1, 1]} : vector<4x8x16xf32> to vector<2x8x16xf32>
    %465 = tpu.concatenate %463, %464 in 2 : vector<2x8x16xf32>, vector<2x8x16xf32> -> vector<2x8x32xf32>
    %466 = vector.broadcast %429 : vector<2x1x32xf32> to vector<2x8x32xf32>
    %467 = arith.mulf %466, %422 : vector<2x8x32xf32>
    %468 = vector.broadcast %429 : vector<2x1x32xf32> to vector<2x8x32xf32>
    %469 = arith.mulf %468, %421 : vector<2x8x32xf32>
    %470 = vector.broadcast %429 : vector<2x1x32xf32> to vector<2x8x32xf32>
    %471 = arith.mulf %470, %423 : vector<2x8x32xf32>
    %472 = vector.extract_strided_slice %467 {offsets = [0, 0, 0], sizes = [2, 8, 16], strides = [1, 1, 1]} : vector<2x8x32xf32> to vector<2x8x16xf32>
    %473 = vector.extract_strided_slice %467 {offsets = [0, 0, 16], sizes = [2, 8, 16], strides = [1, 1, 1]} : vector<2x8x32xf32> to vector<2x8x16xf32>
    %474 = tpu.concatenate %472, %473 in 0 : vector<2x8x16xf32>, vector<2x8x16xf32> -> vector<4x8x16xf32>
    %475 = arith.truncf %474 : vector<4x8x16xf32> to vector<4x8x16xbf16>
    %476 = vector.extract_strided_slice %469 {offsets = [0, 0, 0], sizes = [2, 8, 16], strides = [1, 1, 1]} : vector<2x8x32xf32> to vector<2x8x16xf32>
    %477 = vector.extract_strided_slice %469 {offsets = [0, 0, 16], sizes = [2, 8, 16], strides = [1, 1, 1]} : vector<2x8x32xf32> to vector<2x8x16xf32>
    %478 = tpu.concatenate %476, %477 in 0 : vector<2x8x16xf32>, vector<2x8x16xf32> -> vector<4x8x16xf32>
    %479 = arith.truncf %478 : vector<4x8x16xf32> to vector<4x8x16xbf16>
    %480 = vector.extract_strided_slice %471 {offsets = [0, 0, 0], sizes = [2, 8, 16], strides = [1, 1, 1]} : vector<2x8x32xf32> to vector<2x8x16xf32>
    %481 = vector.extract_strided_slice %471 {offsets = [0, 0, 16], sizes = [2, 8, 16], strides = [1, 1, 1]} : vector<2x8x32xf32> to vector<2x8x16xf32>
    %482 = tpu.concatenate %480, %481 in 0 : vector<2x8x16xf32>, vector<2x8x16xf32> -> vector<4x8x16xf32>
    %483 = arith.truncf %482 : vector<4x8x16xf32> to vector<4x8x16xbf16>
    "tpu.trace_start"() <{level = 10 : i32, message = "bqd,bkd->bqk"}> : () -> ()
    %cst_130 = arith.constant dense<0.000000e+00> : vector<4x8x8xf32>
    %484 = tpu.matmul %475, %479, %cst_130 {dimension_numbers = #tpu.dot_dimension_numbers<[2], [2], [1], [1], [0, 0, 0, 1, 1, 1], [0], [0]>} : vector<4x8x16xbf16>, vector<4x8x16xbf16>, vector<4x8x8xf32> -> vector<4x8x8xf32>
    "tpu.trace_stop"() : () -> ()
    %cst_131 = arith.constant 2.500000e-01 : f32
    %485 = vector.broadcast %cst_131 : f32 to vector<4x8x8xf32>
    %486 = arith.mulf %484, %485 : vector<4x8x8xf32>
    %cst_132 = arith.constant dense<0xFF800000> : vector<4x8xf32>
    %487 = vector.multi_reduction <maximumf>, %486, %cst_132 [2] : vector<4x8x8xf32> to vector<4x8xf32>
    %488 = vector.shape_cast %487 : vector<4x8xf32> to vector<4x8x1xf32>
    %489 = vector.broadcast %488 : vector<4x8x1xf32> to vector<4x8x8xf32>
    %490 = arith.subf %486, %489 : vector<4x8x8xf32>
    %491 = math.exp %490 : vector<4x8x8xf32>
    %cst_133 = arith.constant dense<0.000000e+00> : vector<4x8xf32>
    %492 = vector.multi_reduction <add>, %491, %cst_133 [2] : vector<4x8x8xf32> to vector<4x8xf32>
    %493 = vector.shape_cast %492 : vector<4x8xf32> to vector<4x8x1xf32>
    %494 = tpu.reciprocal %493 {approx = true} : vector<4x8x1xf32> -> vector<4x8x1xf32>
    %495 = vector.broadcast %494 : vector<4x8x1xf32> to vector<4x8x8xf32>
    %496 = arith.mulf %491, %495 : vector<4x8x8xf32>
    %497 = arith.truncf %496 : vector<4x8x8xf32> to vector<4x8x8xbf16>
    "tpu.trace_start"() <{level = 10 : i32, message = "bqk,bkd->bqd"}> : () -> ()
    %cst_134 = arith.constant dense<0.000000e+00> : vector<4x8x16xf32>
    %498 = tpu.matmul %497, %483, %cst_134 {dimension_numbers = #tpu.dot_dimension_numbers<[2], [1], [1], [2], [0, 0, 0, 1, 1, 2], [0], [0]>} : vector<4x8x8xbf16>, vector<4x8x16xbf16>, vector<4x8x16xf32> -> vector<4x8x16xf32>
    "tpu.trace_stop"() : () -> ()
    %499 = vector.extract_strided_slice %498 {offsets = [0, 0, 0], sizes = [2, 8, 16], strides = [1, 1, 1]} : vector<4x8x16xf32> to vector<2x8x16xf32>
    %500 = vector.extract_strided_slice %498 {offsets = [2, 0, 0], sizes = [2, 8, 16], strides = [1, 1, 1]} : vector<4x8x16xf32> to vector<2x8x16xf32>
    %501 = tpu.concatenate %499, %500 in 2 : vector<2x8x16xf32>, vector<2x8x16xf32> -> vector<2x8x32xf32>
    %502 = vector.shape_cast %465 : vector<2x8x32xf32> to vector<16x32xf32>
    %503 = arith.addf %387, %502 : vector<16x32xf32>
    %504 = vector.shape_cast %501 : vector<2x8x32xf32> to vector<16x32xf32>
    %505 = arith.addf %388, %504 : vector<16x32xf32>
    %506 = tpu.concatenate %503, %505 in 0 : vector<16x32xf32>, vector<16x32xf32> -> vector<32x32xf32>
    %507 = arith.truncf %506 : vector<32x32xf32> to vector<32x32xbf16>
    %cst_135 = arith.constant dense<0.000000e+00> : vector<32x64xf32>
    %508 = tpu.matmul %507, %384, %cst_135 {dimension_numbers = #tpu.dot_dimension_numbers<[1], [0], [0], [1], [0, 0, 1, 1], [], []>} : vector<32x32xbf16>, vector<32x64xbf16>, vector<32x64xf32> -> vector<32x64xf32>
    %509 = vector.broadcast %386 : vector<1x64xf32> to vector<32x64xf32>
    %510 = arith.addf %508, %509 : vector<32x64xf32>
    %cst_136 = arith.constant 0.000000e+00 : f32
    %511 = vector.broadcast %cst_136 : f32 to vector<32x64xf32>
    %512 = arith.maximumf %510, %511 : vector<32x64xf32>
    %513 = vector.extract_strided_slice %512 {offsets = [0, 0], sizes = [16, 32], strides = [1, 1]} : vector<32x64xf32> to vector<16x32xf32>
    %514 = vector.extract_strided_slice %512 {offsets = [16, 32], sizes = [16, 32], strides = [1, 1]} : vector<32x64xf32> to vector<16x32xf32>
    %515 = vector.shape_cast %513 : vector<16x32xf32> to vector<2x8x32xf32>
    %516 = vector.shape_cast %514 : vector<16x32xf32> to vector<2x8x32xf32>
    %517 = arith.addf %264, %371 : vector<2x8x32xf32>
    %518 = arith.addf %517, %515 : vector<2x8x32xf32>
    %519 = arith.addf %266, %372 : vector<2x8x32xf32>
    %520 = arith.addf %519, %516 : vector<2x8x32xf32>
    %c0_137 = arith.constant 0 : index
    %c0_138 = arith.constant 0 : index
    %c0_139 = arith.constant 0 : index
    %521 = vector.load %arg9[%c0_137, %c0_138, %c0_139] : memref<2x8x32xf32, #tpu.memory_space<vmem>>, vector<2x8x32xf32>
    tpu.vector_store %arg9[%c0_137, %c0_138, %c0_139], %518 {strides = array<i32>} : memref<2x8x32xf32, #tpu.memory_space<vmem>>, vector<2x8x32xf32>,
    %c0_140 = arith.constant 0 : index
    %c0_141 = arith.constant 0 : index
    %c0_142 = arith.constant 0 : index
    %522 = vector.load %arg10[%c0_140, %c0_141, %c0_142] : memref<2x8x32xf32, #tpu.memory_space<vmem>>, vector<2x8x32xf32>
    tpu.vector_store %arg10[%c0_140, %c0_141, %c0_142], %520 {strides = array<i32>} : memref<2x8x32xf32, #tpu.memory_space<vmem>>, vector<2x8x32xf32>,
    return
  }
}

</mosaic_0001>

<llo_original>
// kernel: multiblocks_forward.1
$region0: #{multiblocks_forward.1}
  #allocation0 [shape = 'u32[]', space=smem, size = 0x4, offset = 0x4, fixed_abs, tag = 'smem constant byte address 0x4 - core index']
  #allocation1 [shape = 'u32[144,128]{1,0:T(1,128)}', space=vmem, size = 0x12000, scoped, tag = 'internal scratch']
  %s0 = inlined_call_operand.vmem [shape: f32[2,8,16], index: 0, kind: input, shape index: {}]
  %s1 = inlined_call_operand.hbm [shape: f32[2,8,16], index: 1, kind: input, shape index: {}]
  %s2 = inlined_call_operand.vmem [shape: bf16[16,64], index: 2, kind: input, shape index: {}]
  %s3 = inlined_call_operand.vmem [shape: f32[1,64], index: 3, kind: input, shape index: {}]
  %s4 = inlined_call_operand.hbm [shape: bf16[4,32,192], index: 4, kind: input, shape index: {}]
  %s5 = inlined_call_operand.hbm [shape: f32[4,1,192], index: 5, kind: input, shape index: {}]
  %s6 = inlined_call_operand.hbm [shape: bf16[2,64,64], index: 6, kind: input, shape index: {}]
  %s7 = inlined_call_operand.hbm [shape: bf16[4,32,64], index: 7, kind: input, shape index: {}]
  %s8 = inlined_call_operand.hbm [shape: f32[6,1,64], index: 8, kind: input, shape index: {}]
  %s9 = inlined_call_operand.hbm [shape: f32[2,8,32], index: 9, kind: output, shape index: {0}]
  %s10 = inlined_call_operand.hbm [shape: f32[2,8,32], index: 10, kind: output, shape index: {1}]
  %11 = xla_tuple %s9, %s10
  %s12 = sld [smem:[#allocation0]]
  $region78: #{multiblocks_forward.1} parent=0
    _
  %s14 = ssub.s32 1, %s12
  %s15 = scalar_select 0, %s14, %s12
  $region1: #{multiblocks_forward.1} parent=0
    #allocation2 [shape = 'u8[8192]{0}', space=vmem, size = 0x2000, scoped, tag = 'input window, operand 1, single buffered']
    #allocation3 [shape = 's32[1]{0}', space=sflag, size = 0x4, scoped, tag = 'scoped memory for multiblocks_forward.1']
    #allocation4 [shape = 's32[1]{0}', space=sflag, size = 0x4, scoped, tag = 'scoped memory for multiblocks_forward.1']
    #allocation5 [shape = 'u8[65536]{0}', space=vmem, size = 0x10000, scoped, tag = 'input window, operand 4, single buffered']
    #allocation6 [shape = 's32[1]{0}', space=sflag, size = 0x4, scoped, tag = 'scoped memory for multiblocks_forward.1']
    #allocation7 [shape = 'u8[4096]{0}', space=vmem, size = 0x1000, scoped, tag = 'input window, operand 5, single buffered']
    #allocation8 [shape = 'u8[32768]{0}', space=vmem, size = 0x8000, scoped, tag = 'input window, operand 6, single buffered']
    #allocation9 [shape = 's32[1]{0}', space=sflag, size = 0x4, scoped, tag = 'scoped memory for multiblocks_forward.1']
    #allocation10 [shape = 'u8[32768]{0}', space=vmem, size = 0x8000, scoped, tag = 'input window, operand 7, single buffered']
    #allocation11 [shape = 'u8[3072]{0}', space=vmem, size = 0xc00, scoped, tag = 'input window, operand 8, single buffered']
    #allocation12 [shape = 's32[1]{0}', space=sflag, size = 0x4, scoped, tag = 'scoped memory for multiblocks_forward.1']
    #allocation13 [shape = 'u8[8192]{0}', space=vmem, size = 0x2000, scoped, tag = 'output window, operand 0, single buffered']
    #allocation14 [shape = 'u8[8192]{0}', space=vmem, size = 0x2000, scoped, tag = 'output window, operand 1, single buffered']
    #allocation15 [shape = 's32[1]{0}', space=sflag, size = 0x4, scoped, tag = 'scoped memory for multiblocks_forward.1']
    %16 = vsyncpa [#allocation3], 0
    %17 = vsyncpa [#allocation6], 0
    %18 = vsyncpa [#allocation9], 0
    %19 = vsyncpa [#allocation12], 0
    %20 = vsyncpa [#allocation4], 0
    %21 = vsyncpa [#allocation15], 0
    // Predicated region
    $region2: #{multiblocks_forward.1} parent=1 // pred_check
      _
    $region3: #{multiblocks_forward.1} parent=1 // pred_check_branch
      %23 = sbr.rel (0) target = $region5
    $region4: #{multiblocks_forward.1} parent=1 // pred_region
      _
    $region5: #{multiblocks_forward.1} parent=1 // pred_fallthru
      _
    // Predicated region
    $region6: #{multiblocks_forward.1} parent=1 // pred_check
      _
    $region7: #{multiblocks_forward.1} parent=1 // pred_check_branch
      %25 = sbr.rel (0) target = $region9
    $region8: #{multiblocks_forward.1} parent=1 // pred_region
      %s27 = ssub.s32 256, 256
      %28 = vsyncadd [#allocation3], %s27
      %s29 = sshll.u32 [#allocation2], 4
      %s30 = int_to_ptr.vmem [resolvable:$true] %s29
      %35 = dma.hbm_to_vmem [thread:$0]  %s1, 256, %s30, [#allocation3], 128, 128, 8
    $region9: #{multiblocks_forward.1} parent=1 // pred_fallthru
      _
    // Predicated region
    $region10: #{multiblocks_forward.1} parent=1 // pred_check
      _
    $region11: #{multiblocks_forward.1} parent=1 // pred_check_branch
      %37 = sbr.rel (0) target = $region13
    $region12: #{multiblocks_forward.1} parent=1 // pred_region
      _
    $region13: #{multiblocks_forward.1} parent=1 // pred_fallthru
      _
    // Predicated region
    $region14: #{multiblocks_forward.1} parent=1 // pred_check
      _
    $region15: #{multiblocks_forward.1} parent=1 // pred_check_branch
      %39 = sbr.rel (0) target = $region17
    $region16: #{multiblocks_forward.1} parent=1 // pred_region
      _
    $region17: #{multiblocks_forward.1} parent=1 // pred_fallthru
      _
    // Predicated region
    $region18: #{multiblocks_forward.1} parent=1 // pred_check
      _
    $region19: #{multiblocks_forward.1} parent=1 // pred_check_branch
      %41 = sbr.rel (0) target = $region21
    $region20: #{multiblocks_forward.1} parent=1 // pred_region
      %s43 = ssub.s32 2048, 2048
      %44 = vsyncadd [#allocation6], %s43
      %s45 = sshll.u32 [#allocation5], 4
      %s46 = int_to_ptr.vmem [resolvable:$true] %s45
      %51 = dma.hbm_to_vmem [thread:$0]  %s4, 2048, %s46, [#allocation6], 128, 128, 8
    $region21: #{multiblocks_forward.1} parent=1 // pred_fallthru
      _
    // Predicated region
    $region22: #{multiblocks_forward.1} parent=1 // pred_check
      _
    $region23: #{multiblocks_forward.1} parent=1 // pred_check_branch
      %53 = sbr.rel (0) target = $region25
    $region24: #{multiblocks_forward.1} parent=1 // pred_region
      %s55 = ssub.s32 128, 128
      %56 = vsyncadd [#allocation6], %s55
      %s57 = sshll.u32 [#allocation7], 4
      %s58 = int_to_ptr.vmem [resolvable:$true] %s57
      %63 = dma.hbm_to_vmem [thread:$0]  %s5, 128, %s58, [#allocation6], 32, 32, 2
    $region25: #{multiblocks_forward.1} parent=1 // pred_fallthru
      _
    // Predicated region
    $region26: #{multiblocks_forward.1} parent=1 // pred_check
      _
    $region27: #{multiblocks_forward.1} parent=1 // pred_check_branch
      %65 = sbr.rel (0) target = $region29
    $region28: #{multiblocks_forward.1} parent=1 // pred_region
      %s67 = ssub.s32 1024, 1024
      %68 = vsyncadd [#allocation9], %s67
      %s69 = sshll.u32 [#allocation8], 4
      %s70 = int_to_ptr.vmem [resolvable:$true] %s69
      %75 = dma.hbm_to_vmem [thread:$0]  %s6, 1024, %s70, [#allocation9], 64, 64, 4
    $region29: #{multiblocks_forward.1} parent=1 // pred_fallthru
      _
    // Predicated region
    $region30: #{multiblocks_forward.1} parent=1 // pred_check
      _
    $region31: #{multiblocks_forward.1} parent=1 // pred_check_branch
      %77 = sbr.rel (0) target = $region33
    $region32: #{multiblocks_forward.1} parent=1 // pred_region
      %s79 = ssub.s32 1024, 1024
      %80 = vsyncadd [#allocation9], %s79
      %s81 = sshll.u32 [#allocation10], 4
      %s82 = int_to_ptr.vmem [resolvable:$true] %s81
      %87 = dma.hbm_to_vmem [thread:$0]  %s7, 1024, %s82, [#allocation9], 64, 64, 4
    $region33: #{multiblocks_forward.1} parent=1 // pred_fallthru
      _
    // Predicated region
    $region34: #{multiblocks_forward.1} parent=1 // pred_check
      _
    $region35: #{multiblocks_forward.1} parent=1 // pred_check_branch
      %89 = sbr.rel (0) target = $region37
    $region36: #{multiblocks_forward.1} parent=1 // pred_region
      %s91 = ssub.s32 96, 96
      %92 = vsyncadd [#allocation12], %s91
      %s93 = sshll.u32 [#allocation11], 4
      %s94 = int_to_ptr.vmem [resolvable:$true] %s93
      %99 = dma.hbm_to_vmem [thread:$0]  %s8, 96, %s94, [#allocation12], 16, 16, 1
    $region37: #{multiblocks_forward.1} parent=1 // pred_fallthru
      _
    // Predicated region
    $region38: #{multiblocks_forward.1} parent=1 // pred_check
      _
    $region39: #{multiblocks_forward.1} parent=1 // pred_check_branch
      %101 = sbr.rel (0) target = $region41
    $region40: #{multiblocks_forward.1} parent=1 // pred_region
      %102 = dma.done [#allocation3], 256
    $region41: #{multiblocks_forward.1} parent=1 // pred_fallthru
      _
    // Predicated region
    $region42: #{multiblocks_forward.1} parent=1 // pred_check
      _
    $region43: #{multiblocks_forward.1} parent=1 // pred_check_branch
      %104 = sbr.rel (0) target = $region45
    $region44: #{multiblocks_forward.1} parent=1 // pred_region
      %105 = dma.done [#allocation6], 2048
    $region45: #{multiblocks_forward.1} parent=1 // pred_fallthru
      _
    // Predicated region
    $region46: #{multiblocks_forward.1} parent=1 // pred_check
      _
    $region47: #{multiblocks_forward.1} parent=1 // pred_check_branch
      %107 = sbr.rel (0) target = $region49
    $region48: #{multiblocks_forward.1} parent=1 // pred_region
      %108 = dma.done [#allocation6], 128
    $region49: #{multiblocks_forward.1} parent=1 // pred_fallthru
      _
    // Predicated region
    $region50: #{multiblocks_forward.1} parent=1 // pred_check
      _
    $region51: #{multiblocks_forward.1} parent=1 // pred_check_branch
      %110 = sbr.rel (0) target = $region53
    $region52: #{multiblocks_forward.1} parent=1 // pred_region
      %111 = dma.done [#allocation9], 1024
    $region53: #{multiblocks_forward.1} parent=1 // pred_fallthru
      _
    // Predicated region
    $region54: #{multiblocks_forward.1} parent=1 // pred_check
      _
    $region55: #{multiblocks_forward.1} parent=1 // pred_check_branch
      %113 = sbr.rel (0) target = $region57
    $region56: #{multiblocks_forward.1} parent=1 // pred_region
      %114 = dma.done [#allocation9], 1024
    $region57: #{multiblocks_forward.1} parent=1 // pred_fallthru
      _
    // Predicated region
    $region58: #{multiblocks_forward.1} parent=1 // pred_check
      _
    $region59: #{multiblocks_forward.1} parent=1 // pred_check_branch
      %116 = sbr.rel (0) target = $region61
    $region60: #{multiblocks_forward.1} parent=1 // pred_region
      %117 = dma.done [#allocation12], 96
    $region61: #{multiblocks_forward.1} parent=1 // pred_fallthru
      _
    %v119 = vld [vmem:[%s0] sm:$0xff]
    %v120 = vld [vmem:[%s0 + $0x8] sm:$0xff]
    %v121 = vld [vmem:[#allocation2] sm:$0xff]
    %v122 = vld [vmem:[#allocation2 + $0x8] sm:$0xff]
    %v123 = vld [vmem:[%s2] sm:$0xf]
    %v124 = vld [vmem:[%s2 + $0x4] sm:$0xf]
    %v125 = vld [vmem:[%s3] sm:$0x1]
    %v126 = vpack.c.bf16 %v120, %v119
    %v127 = vpack.c.bf16 %v122, %v121
    %v129 = vlaneseq
    %v130 = vshrl.u32 %v129, 7
    %v131 = vsub.s32 0, %v130
    %v132 = vrot.slane %v125, %v131
    %v136 = vunpack.c.l.b16 %v123
    %v137 = vunpack.c.l.b16 %v124
    %v138 = vpack.c.b16 %v137, %v136
    %vm140 = vcmask 130048
    %v142 = vsel %vm140, %v126, 0
    %v145 = vsel %vm140, %v127, 0
    %147 = vmatprep.subr.bf16.mxu0 0
    %148 = vmatpush1.bf16.msra.mxu0 %v138
    %149 = vmatprep.subr.bf16.mxu0 0
    %150 = vmatpush1.bf16.msra.mxu0 0
    %151 = vmatprep.subr.bf16.mxu0 0
    %152 = vmatpush1.bf16.msra.mxu0 0
    %153 = vmatprep.subr.bf16.mxu0 0
    %154 = vmatpush1.bf16.msra.mxu0 0
    %155 = vmatprep.subr.bf16.mxu0 0
    %156 = vmatpush1.bf16.msra.mxu0 0
    %157 = vmatprep.subr.bf16.mxu0 0
    %158 = vmatpush1.bf16.msra.mxu0 0
    %159 = vmatprep.subr.bf16.mxu0 0
    %160 = vmatpush1.bf16.msra.mxu0 0
    %161 = vmatprep.subr.bf16.mxu0 0
    %162 = vmatpush1.bf16.msra.mxu0 0
    %163 = vmatprep.subr.bf16.mxu0 0
    %164 = vmatpush1.bf16.msra.mxu0 0
    %165 = vmatprep.subr.bf16.mxu0 0
    %166 = vmatpush1.bf16.msra.mxu0 0
    %167 = vmatprep.subr.bf16.mxu0 0
    %168 = vmatpush1.bf16.msra.mxu0 0
    %169 = vmatprep.subr.bf16.mxu0 0
    %170 = vmatpush1.bf16.msra.mxu0 0
    %171 = vmatprep.subr.bf16.mxu0 0
    %172 = vmatpush1.bf16.msra.mxu0 0
    %173 = vmatprep.subr.bf16.mxu0 0
    %174 = vmatpush1.bf16.msra.mxu0 0
    %175 = vmatprep.subr.bf16.mxu0 0
    %176 = vmatpush1.bf16.msra.mxu0 0
    %177 = vmatprep.subr.bf16.mxu0 0
    %178 = vmatpush1.bf16.msra.mxu0 0
    %179 = vmatprep.mubr.bf16.mxu0 0
    %180 = vmatmul.mubr.bf16.gmra.mrb[0].mxu0 %v142
    %v181 = vpop.f32.mrb[0].mxu0
    %v182 = vadd.f32 %v132, %v181
    %v183 = vpop.f32.mrb[0].mxu0
    %v184 = vpop.f32.mrb[0].mxu0
    %v185 = vadd.f32 %v132, %v184
    %v186 = vpop.f32.mrb[0].mxu0
    %187 = vmatprep.mubr.bf16.mxu0 0
    %188 = vmatmul.mubr.bf16.gmra.mrb[0].mxu0 %v145
    %v189 = vpop.f32.mrb[0].mxu0
    %v190 = vadd.f32 %v132, %v189
    %v191 = vpop.f32.mrb[0].mxu0
    %v192 = vpop.f32.mrb[0].mxu0
    %v193 = vadd.f32 %v132, %v192
    %v194 = vpop.f32.mrb[0].mxu0
    %195 = vdwg.mxu0
    %v196 = vmax.f32 %v182, 0.0
    %v197 = vmax.f32 %v185, 0.0
    %v198 = vmax.f32 %v190, 0.0
    %v199 = vmax.f32 %v193, 0.0
    %v200 = vld [vmem:[#allocation5] sm:$0xff]
    %v201 = vld [vmem:[#allocation5 + $0x8] sm:$0xff]
    %v202 = vld [vmem:[#allocation5 + $0x10] sm:$0xff]
    %v203 = vld [vmem:[#allocation5 + $0x18] sm:$0xff]
    %v204 = vld [vmem:[#allocation7] sm:$0x3]
    %v205 = vld [vmem:[#allocation8] sm:$0xf]
    %v206 = vld [vmem:[#allocation8 + $0x4] sm:$0xf]
    %v207 = vld [vmem:[#allocation8 + $0x8] sm:$0xf]
    %v208 = vld [vmem:[#allocation8 + $0xc] sm:$0xf]
    %v209 = vld [vmem:[#allocation8 + $0x10] sm:$0xf]
    %v210 = vld [vmem:[#allocation8 + $0x14] sm:$0xf]
    %v211 = vld [vmem:[#allocation8 + $0x18] sm:$0xf]
    %v212 = vld [vmem:[#allocation8 + $0x1c] sm:$0xf]
    %v213 = vld [vmem:[#allocation11] sm:$0x1]
    %216 = vrot.lane.b32.xlu0 %v198, 96
    %v217 = vpop.permute.xlu0 %216
    %218 = vrot.lane.b32.xlu0 %v199, 96
    %v219 = vpop.permute.xlu0 %218
    %v222 = vpack.c.bf16 %v197, %v196
    %v223 = vpack.c.bf16 %v219, %v217
    %v225 = vlaneseq
    %v226 = vshrl.u32 %v225, 7
    %v227 = vsub.s32 0, %v226
    %v228 = vrot.slane %v204, %v227
    %v229 = vlaneseq
    %v230 = vshrl.u32 %v229, 7
    %v231 = vsub.s32 1, %v230
    %v232 = vrot.slane %v204, %v231
    %v239 = vunpack.c.l.b16 %v200
    %v240 = vunpack.c.h.b16 %v200
    %v241 = vunpack.c.l.b16 %v201
    %v242 = vunpack.c.h.b16 %v201
    %v243 = vunpack.c.l.b16 %v202
    %v244 = vunpack.c.h.b16 %v202
    %v245 = vunpack.c.l.b16 %v203
    %v246 = vunpack.c.h.b16 %v203
    %v247 = vpack.c.b16 %v241, %v239
    %v248 = vpack.c.b16 %v242, %v240
    %v249 = vpack.c.b16 %v245, %v243
    %v250 = vpack.c.b16 %v246, %v244
    %vm255 = vcmask 261120
    %v257 = vsel %vm255, %v222, 0
    %v260 = vsel %vm255, %v223, 0
    %262 = vmatprep.subr.bf16.mxu0 %v248
    %263 = vmatpush1.bf16.msra.mxu0 %v247
    %264 = vmatprep.subr.bf16.mxu0 %v250
    %265 = vmatpush1.bf16.msra.mxu0 %v249
    %266 = vmatprep.subr.bf16.mxu0 0
    %267 = vmatpush1.bf16.msra.mxu0 0
    %268 = vmatprep.subr.bf16.mxu0 0
    %269 = vmatpush1.bf16.msra.mxu0 0
    %270 = vmatprep.subr.bf16.mxu0 0
    %271 = vmatpush1.bf16.msra.mxu0 0
    %272 = vmatprep.subr.bf16.mxu0 0
    %273 = vmatpush1.bf16.msra.mxu0 0
    %274 = vmatprep.subr.bf16.mxu0 0
    %275 = vmatpush1.bf16.msra.mxu0 0
    %276 = vmatprep.subr.bf16.mxu0 0
    %277 = vmatpush1.bf16.msra.mxu0 0
    %278 = vmatprep.subr.bf16.mxu0 0
    %279 = vmatpush1.bf16.msra.mxu0 0
    %280 = vmatprep.subr.bf16.mxu0 0
    %281 = vmatpush1.bf16.msra.mxu0 0
    %282 = vmatprep.subr.bf16.mxu0 0
    %283 = vmatpush1.bf16.msra.mxu0 0
    %284 = vmatprep.subr.bf16.mxu0 0
    %285 = vmatpush1.bf16.msra.mxu0 0
    %286 = vmatprep.subr.bf16.mxu0 0
    %287 = vmatpush1.bf16.msra.mxu0 0
    %288 = vmatprep.subr.bf16.mxu0 0
    %289 = vmatpush1.bf16.msra.mxu0 0
    %290 = vmatprep.subr.bf16.mxu0 0
    %291 = vmatpush1.bf16.msra.mxu0 0
    %292 = vmatprep.subr.bf16.mxu0 0
    %293 = vmatpush1.bf16.msra.mxu0 0
    %294 = vmatprep.mubr.bf16.mxu0 0
    %295 = vmatmul.mubr.bf16.gmra.mrb[0].mxu0 %v257
    %v296 = vpop.f32.mrb[0].mxu0
    %v297 = vadd.f32 %v228, %v296
    %v298 = vpop.f32.mrb[0].mxu0
    %v299 = vpop.f32.mrb[0].mxu0
    %v300 = vadd.f32 %v228, %v299
    %v301 = vpop.f32.mrb[0].mxu0
    %302 = vmatprep.mubr.bf16.mxu0 0
    %303 = vmatmul.mubr.bf16.gmra.mrb[0].mxu0 %v260
    %v304 = vpop.f32.mrb[0].mxu0
    %v305 = vadd.f32 %v228, %v304
    %v306 = vpop.f32.mrb[0].mxu0
    %v307 = vadd.f32 %v232, %v306
    %v308 = vpop.f32.mrb[0].mxu0
    %v309 = vadd.f32 %v228, %v308
    %v310 = vpop.f32.mrb[0].mxu0
    %v311 = vadd.f32 %v232, %v310
    %312 = vdwg.mxu0
    %v313 = vmax.f32 %v297, 0.0
    %v314 = vmax.f32 %v300, 0.0
    %v315 = vmax.f32 %v305, 0.0
    %v316 = vmax.f32 %v307, 0.0
    %v317 = vmax.f32 %v309, 0.0
    %v318 = vmax.f32 %v311, 0.0
    %321 = vrot.lane.b32.xlu0 %v313, 112
    %v322 = vpop.permute.xlu0 %321
    %323 = vrot.lane.b32.xlu0 %v314, 112
    %v324 = vpop.permute.xlu0 %323
    %v327 = vpack.c.bf16 %v313, %v313
    %v328 = vpack.c.bf16 %v314, %v314
    %v329 = vpack.c.bf16 %v322, %v322
    %v330 = vpack.c.bf16 %v324, %v324
    %333 = vrot.lane.b32.xlu0 %v315, 112
    %v334 = vpop.permute.xlu0 %333
    %335 = vrot.lane.b32.xlu0 %v317, 112
    %v336 = vpop.permute.xlu0 %335
    %v339 = vpack.c.bf16 %v315, %v315
    %v340 = vpack.c.bf16 %v317, %v317
    %v341 = vpack.c.bf16 %v334, %v334
    %v342 = vpack.c.bf16 %v336, %v336
    %345 = vrot.lane.b32.xlu0 %v316, 112
    %v346 = vpop.permute.xlu0 %345
    %347 = vrot.lane.b32.xlu0 %v318, 112
    %v348 = vpop.permute.xlu0 %347
    %v351 = vpack.c.bf16 %v316, %v316
    %v352 = vpack.c.bf16 %v318, %v318
    %v353 = vpack.c.bf16 %v346, %v346
    %v354 = vpack.c.bf16 %v348, %v348
    %356 = vrot.lane.b32.xlu0 %v327, 96
    %v357 = vpop.permute.xlu0 %356
    %359 = vrot.lane.b32.xlu0 %v339, 32
    %v360 = vpop.permute.xlu0 %359
    %v362 = vsel %vm140, %v357, 0
    %v365 = vsel %vm140, %v360, 0
    %367 = vmatprep.subr.bf16.mxu0 0
    %368 = vmatpush1.bf16.xpose.msra.mxu0 %v365
    %369 = vmatprep.subr.bf16.mxu0 0
    %370 = vmatpush1.bf16.xpose.msra.mxu0 0
    %371 = vmatprep.subr.bf16.mxu0 0
    %372 = vmatpush1.bf16.xpose.msra.mxu0 0
    %373 = vmatprep.subr.bf16.mxu0 0
    %374 = vmatpush1.bf16.xpose.msra.mxu0 0
    %375 = vmatprep.subr.bf16.mxu0 0
    %376 = vmatpush1.bf16.xpose.msra.mxu0 0
    %377 = vmatprep.subr.bf16.mxu0 0
    %378 = vmatpush1.bf16.xpose.msra.mxu0 0
    %379 = vmatprep.subr.bf16.mxu0 0
    %380 = vmatpush1.bf16.xpose.msra.mxu0 0
    %381 = vmatprep.subr.bf16.mxu0 0
    %382 = vmatpush1.bf16.xpose.msra.mxu0 0
    %383 = vmatprep.subr.bf16.mxu0 0
    %384 = vmatpush1.bf16.xpose.msra.mxu0 0
    %385 = vmatprep.subr.bf16.mxu0 0
    %386 = vmatpush1.bf16.xpose.msra.mxu0 0
    %387 = vmatprep.subr.bf16.mxu0 0
    %388 = vmatpush1.bf16.xpose.msra.mxu0 0
    %389 = vmatprep.subr.bf16.mxu0 0
    %390 = vmatpush1.bf16.xpose.msra.mxu0 0
    %391 = vmatprep.subr.bf16.mxu0 0
    %392 = vmatpush1.bf16.xpose.msra.mxu0 0
    %393 = vmatprep.subr.bf16.mxu0 0
    %394 = vmatpush1.bf16.xpose.msra.mxu0 0
    %395 = vmatprep.subr.bf16.mxu0 0
    %396 = vmatpush1.bf16.xpose.msra.mxu0 0
    %397 = vmatprep.subr.bf16.mxu0 0
    %398 = vmatpush1.bf16.xpose.msra.mxu0 0
    %399 = vmatprep.mubr.bf16.mxu0 0
    %400 = vmatmul.mubr.bf16.gmra.mrb[0].mxu0 %v362
    %v401 = vpop.f32.mrb[0].mxu0
    %v402 = vadd.f32 0.0, %v401
    %v403 = vpop.f32.mrb[0].mxu0
    %v404 = vpop.f32.mrb[0].mxu0
    %v405 = vpop.f32.mrb[0].mxu0
    %406 = vdwg.mxu0
    %408 = vrot.lane.b32.xlu0 %v328, 96
    %v409 = vpop.permute.xlu0 %408
    %411 = vrot.lane.b32.xlu0 %v340, 32
    %v412 = vpop.permute.xlu0 %411
    %v414 = vsel %vm140, %v409, 0
    %v417 = vsel %vm140, %v412, 0
    %419 = vmatprep.subr.bf16.mxu0 0
    %420 = vmatpush1.bf16.xpose.msra.mxu0 %v417
    %421 = vmatprep.subr.bf16.mxu0 0
    %422 = vmatpush1.bf16.xpose.msra.mxu0 0
    %423 = vmatprep.subr.bf16.mxu0 0
    %424 = vmatpush1.bf16.xpose.msra.mxu0 0
    %425 = vmatprep.subr.bf16.mxu0 0
    %426 = vmatpush1.bf16.xpose.msra.mxu0 0
    %427 = vmatprep.subr.bf16.mxu0 0
    %428 = vmatpush1.bf16.xpose.msra.mxu0 0
    %429 = vmatprep.subr.bf16.mxu0 0
    %430 = vmatpush1.bf16.xpose.msra.mxu0 0
    %431 = vmatprep.subr.bf16.mxu0 0
    %432 = vmatpush1.bf16.xpose.msra.mxu0 0
    %433 = vmatprep.subr.bf16.mxu0 0
    %434 = vmatpush1.bf16.xpose.msra.mxu0 0
    %435 = vmatprep.subr.bf16.mxu0 0
    %436 = vmatpush1.bf16.xpose.msra.mxu0 0
    %437 = vmatprep.subr.bf16.mxu0 0
    %438 = vmatpush1.bf16.xpose.msra.mxu0 0
    %439 = vmatprep.subr.bf16.mxu0 0
    %440 = vmatpush1.bf16.xpose.msra.mxu0 0
    %441 = vmatprep.subr.bf16.mxu0 0
    %442 = vmatpush1.bf16.xpose.msra.mxu0 0
    %443 = vmatprep.subr.bf16.mxu0 0
    %444 = vmatpush1.bf16.xpose.msra.mxu0 0
    %445 = vmatprep.subr.bf16.mxu0 0
    %446 = vmatpush1.bf16.xpose.msra.mxu0 0
    %447 = vmatprep.subr.bf16.mxu0 0
    %448 = vmatpush1.bf16.xpose.msra.mxu0 0
    %449 = vmatprep.subr.bf16.mxu0 0
    %450 = vmatpush1.bf16.xpose.msra.mxu0 0
    %451 = vmatprep.mubr.bf16.mxu0 0
    %452 = vmatmul.mubr.bf16.gmra.mrb[0].mxu0 %v414
    %v453 = vpop.f32.mrb[0].mxu0
    %v454 = vadd.f32 0.0, %v453
    %v455 = vpop.f32.mrb[0].mxu0
    %v456 = vpop.f32.mrb[0].mxu0
    %v457 = vpop.f32.mrb[0].mxu0
    %458 = vdwg.mxu0
    %460 = vrot.lane.b32.xlu0 %v329, 96
    %v461 = vpop.permute.xlu0 %460
    %463 = vrot.lane.b32.xlu0 %v341, 32
    %v464 = vpop.permute.xlu0 %463
    %v466 = vsel %vm140, %v461, 0
    %v469 = vsel %vm140, %v464, 0
    %471 = vmatprep.subr.bf16.mxu0 0
    %472 = vmatpush1.bf16.xpose.msra.mxu0 %v469
    %473 = vmatprep.subr.bf16.mxu0 0
    %474 = vmatpush1.bf16.xpose.msra.mxu0 0
    %475 = vmatprep.subr.bf16.mxu0 0
    %476 = vmatpush1.bf16.xpose.msra.mxu0 0
    %477 = vmatprep.subr.bf16.mxu0 0
    %478 = vmatpush1.bf16.xpose.msra.mxu0 0
    %479 = vmatprep.subr.bf16.mxu0 0
    %480 = vmatpush1.bf16.xpose.msra.mxu0 0
    %481 = vmatprep.subr.bf16.mxu0 0
    %482 = vmatpush1.bf16.xpose.msra.mxu0 0
    %483 = vmatprep.subr.bf16.mxu0 0
    %484 = vmatpush1.bf16.xpose.msra.mxu0 0
    %485 = vmatprep.subr.bf16.mxu0 0
    %486 = vmatpush1.bf16.xpose.msra.mxu0 0
    %487 = vmatprep.subr.bf16.mxu0 0
    %488 = vmatpush1.bf16.xpose.msra.mxu0 0
    %489 = vmatprep.subr.bf16.mxu0 0
    %490 = vmatpush1.bf16.xpose.msra.mxu0 0
    %491 = vmatprep.subr.bf16.mxu0 0
    %492 = vmatpush1.bf16.xpose.msra.mxu0 0
    %493 = vmatprep.subr.bf16.mxu0 0
    %494 = vmatpush1.bf16.xpose.msra.mxu0 0
    %495 = vmatprep.subr.bf16.mxu0 0
    %496 = vmatpush1.bf16.xpose.msra.mxu0 0
    %497 = vmatprep.subr.bf16.mxu0 0
    %498 = vmatpush1.bf16.xpose.msra.mxu0 0
    %499 = vmatprep.subr.bf16.mxu0 0
    %500 = vmatpush1.bf16.xpose.msra.mxu0 0
    %501 = vmatprep.subr.bf16.mxu0 0
    %502 = vmatpush1.bf16.xpose.msra.mxu0 0
    %503 = vmatprep.mubr.bf16.mxu0 0
    %504 = vmatmul.mubr.bf16.gmra.mrb[0].mxu0 %v466
    %v505 = vpop.f32.mrb[0].mxu0
    %v506 = vadd.f32 0.0, %v505
    %v507 = vpop.f32.mrb[0].mxu0
    %v508 = vpop.f32.mrb[0].mxu0
    %v509 = vpop.f32.mrb[0].mxu0
    %510 = vdwg.mxu0
    %512 = vrot.lane.b32.xlu0 %v330, 96
    %v513 = vpop.permute.xlu0 %512
    %515 = vrot.lane.b32.xlu0 %v342, 32
    %v516 = vpop.permute.xlu0 %515
    %v518 = vsel %vm140, %v513, 0
    %v521 = vsel %vm140, %v516, 0
    %523 = vmatprep.subr.bf16.mxu0 0
    %524 = vmatpush1.bf16.xpose.msra.mxu0 %v521
    %525 = vmatprep.subr.bf16.mxu0 0
    %526 = vmatpush1.bf16.xpose.msra.mxu0 0
    %527 = vmatprep.subr.bf16.mxu0 0
    %528 = vmatpush1.bf16.xpose.msra.mxu0 0
    %529 = vmatprep.subr.bf16.mxu0 0
    %530 = vmatpush1.bf16.xpose.msra.mxu0 0
    %531 = vmatprep.subr.bf16.mxu0 0
    %532 = vmatpush1.bf16.xpose.msra.mxu0 0
    %533 = vmatprep.subr.bf16.mxu0 0
    %534 = vmatpush1.bf16.xpose.msra.mxu0 0
    %535 = vmatprep.subr.bf16.mxu0 0
    %536 = vmatpush1.bf16.xpose.msra.mxu0 0
    %537 = vmatprep.subr.bf16.mxu0 0
    %538 = vmatpush1.bf16.xpose.msra.mxu0 0
    %539 = vmatprep.subr.bf16.mxu0 0
    %540 = vmatpush1.bf16.xpose.msra.mxu0 0
    %541 = vmatprep.subr.bf16.mxu0 0
    %542 = vmatpush1.bf16.xpose.msra.mxu0 0
    %543 = vmatprep.subr.bf16.mxu0 0
    %544 = vmatpush1.bf16.xpose.msra.mxu0 0
    %545 = vmatprep.subr.bf16.mxu0 0
    %546 = vmatpush1.bf16.xpose.msra.mxu0 0
    %547 = vmatprep.subr.bf16.mxu0 0
    %548 = vmatpush1.bf16.xpose.msra.mxu0 0
    %549 = vmatprep.subr.bf16.mxu0 0
    %550 = vmatpush1.bf16.xpose.msra.mxu0 0
    %551 = vmatprep.subr.bf16.mxu0 0
    %552 = vmatpush1.bf16.xpose.msra.mxu0 0
    %553 = vmatprep.subr.bf16.mxu0 0
    %554 = vmatpush1.bf16.xpose.msra.mxu0 0
    %555 = vmatprep.mubr.bf16.mxu0 0
    %556 = vmatmul.mubr.bf16.gmra.mrb[0].mxu0 %v518
    %v557 = vpop.f32.mrb[0].mxu0
    %v558 = vadd.f32 0.0, %v557
    %v559 = vpop.f32.mrb[0].mxu0
    %v560 = vpop.f32.mrb[0].mxu0
    %v561 = vpop.f32.mrb[0].mxu0
    %562 = vdwg.mxu0
    %v563 = vmul.f32 %v402, 0.25
    %v564 = vmul.f32 %v454, 0.25
    %v565 = vmul.f32 %v506, 0.25
    %v566 = vmul.f32 %v558, 0.25
    %vm567 = vcmask 64512
    %v568 = vsel %vm567, %v563, -inf
    %569 = vmax.xlane.f32.xlu0 %v568
    %v570 = vpop.xlane.xlu0 %569
    %v571 = vsel %vm567, %v564, -inf
    %572 = vmax.xlane.f32.xlu0 %v571
    %v573 = vpop.xlane.xlu0 %572
    %v574 = vsel %vm567, %v565, -inf
    %575 = vmax.xlane.f32.xlu0 %v574
    %v576 = vpop.xlane.xlu0 %575
    %v577 = vsel %vm567, %v566, -inf
    %578 = vmax.xlane.f32.xlu0 %v577
    %v579 = vpop.xlane.xlu0 %578
    %v580 = vsub.f32 %v563, %v570
    %v581 = vsub.f32 %v564, %v573
    %v582 = vsub.f32 %v565, %v576
    %v583 = vsub.f32 %v566, %v579
    %v584 = vmul.f32 %v580, 1.442695
    %v585 = vpow.pop %v584
    %v586 = vmul.f32 %v581, 1.442695
    %v587 = vpow.pop %v586
    %v588 = vmul.f32 %v582, 1.442695
    %v589 = vpow.pop %v588
    %v590 = vmul.f32 %v583, 1.442695
    %v591 = vpow.pop %v590
    %v592 = vsel %vm567, %v585, 0.0
    %593 = vadd.xlane.f32.xlu0 %v592
    %v594 = vpop.xlane.xlu0 %593
    %v595 = vsel %vm567, %v587, 0.0
    %596 = vadd.xlane.f32.xlu0 %v595
    %v597 = vpop.xlane.xlu0 %596
    %v598 = vsel %vm567, %v589, 0.0
    %599 = vadd.xlane.f32.xlu0 %v598
    %v600 = vpop.xlane.xlu0 %599
    %v601 = vsel %vm567, %v591, 0.0
    %602 = vadd.xlane.f32.xlu0 %v601
    %v603 = vpop.xlane.xlu0 %602
    %v604 = vrcp.pop %v594
    %v605 = vrcp.pop %v597
    %v606 = vrcp.pop %v600
    %v607 = vrcp.pop %v603
    %v608 = vmul.f32 %v585, %v604
    %v609 = vmul.f32 %v587, %v605
    %v610 = vmul.f32 %v589, %v606
    %v611 = vmul.f32 %v591, %v607
    %v612 = vpack.c.bf16 %v608, %v608
    %v613 = vpack.c.bf16 %v609, %v609
    %v614 = vpack.c.bf16 %v610, %v610
    %v615 = vpack.c.bf16 %v611, %v611
    %617 = vrot.lane.b32.xlu0 %v351, 96
    %v618 = vpop.permute.xlu0 %617
    %v620 = vsel %vm567, %v612, 0
    %vm622 = vcmask 1043456
    %v624 = vsel %vm622, %v618, 0
    %626 = vmatprep.subr.bf16.mxu0 0
    %627 = vmatpush1.bf16.msra.mxu0 %v624
    %628 = vmatprep.subr.bf16.mxu0 0
    %629 = vmatpush1.bf16.msra.mxu0 0
    %630 = vmatprep.subr.bf16.mxu0 0
    %631 = vmatpush1.bf16.msra.mxu0 0
    %632 = vmatprep.subr.bf16.mxu0 0
    %633 = vmatpush1.bf16.msra.mxu0 0
    %634 = vmatprep.subr.bf16.mxu0 0
    %635 = vmatpush1.bf16.msra.mxu0 0
    %636 = vmatprep.subr.bf16.mxu0 0
    %637 = vmatpush1.bf16.msra.mxu0 0
    %638 = vmatprep.subr.bf16.mxu0 0
    %639 = vmatpush1.bf16.msra.mxu0 0
    %640 = vmatprep.subr.bf16.mxu0 0
    %641 = vmatpush1.bf16.msra.mxu0 0
    %642 = vmatprep.subr.bf16.mxu0 0
    %643 = vmatpush1.bf16.msra.mxu0 0
    %644 = vmatprep.subr.bf16.mxu0 0
    %645 = vmatpush1.bf16.msra.mxu0 0
    %646 = vmatprep.subr.bf16.mxu0 0
    %647 = vmatpush1.bf16.msra.mxu0 0
    %648 = vmatprep.subr.bf16.mxu0 0
    %649 = vmatpush1.bf16.msra.mxu0 0
    %650 = vmatprep.subr.bf16.mxu0 0
    %651 = vmatpush1.bf16.msra.mxu0 0
    %652 = vmatprep.subr.bf16.mxu0 0
    %653 = vmatpush1.bf16.msra.mxu0 0
    %654 = vmatprep.subr.bf16.mxu0 0
    %655 = vmatpush1.bf16.msra.mxu0 0
    %656 = vmatprep.subr.bf16.mxu0 0
    %657 = vmatpush1.bf16.msra.mxu0 0
    %658 = vmatprep.mubr.bf16.mxu0 0
    %659 = vmatmul.mubr.bf16.gmra.mrb[0].mxu0 %v620
    %v660 = vpop.f32.mrb[0].mxu0
    %v661 = vadd.f32 0.0, %v660
    %v662 = vpop.f32.mrb[0].mxu0
    %v663 = vpop.f32.mrb[0].mxu0
    %v664 = vpop.f32.mrb[0].mxu0
    %665 = vdwg.mxu0
    %667 = vrot.lane.b32.xlu0 %v352, 96
    %v668 = vpop.permute.xlu0 %667
    %v670 = vsel %vm567, %v613, 0
    %v673 = vsel %vm622, %v668, 0
    %675 = vmatprep.subr.bf16.mxu0 0
    %676 = vmatpush1.bf16.msra.mxu0 %v673
    %677 = vmatprep.subr.bf16.mxu0 0
    %678 = vmatpush1.bf16.msra.mxu0 0
    %679 = vmatprep.subr.bf16.mxu0 0
    %680 = vmatpush1.bf16.msra.mxu0 0
    %681 = vmatprep.subr.bf16.mxu0 0
    %682 = vmatpush1.bf16.msra.mxu0 0
    %683 = vmatprep.subr.bf16.mxu0 0
    %684 = vmatpush1.bf16.msra.mxu0 0
    %685 = vmatprep.subr.bf16.mxu0 0
    %686 = vmatpush1.bf16.msra.mxu0 0
    %687 = vmatprep.subr.bf16.mxu0 0
    %688 = vmatpush1.bf16.msra.mxu0 0
    %689 = vmatprep.subr.bf16.mxu0 0
    %690 = vmatpush1.bf16.msra.mxu0 0
    %691 = vmatprep.subr.bf16.mxu0 0
    %692 = vmatpush1.bf16.msra.mxu0 0
    %693 = vmatprep.subr.bf16.mxu0 0
    %694 = vmatpush1.bf16.msra.mxu0 0
    %695 = vmatprep.subr.bf16.mxu0 0
    %696 = vmatpush1.bf16.msra.mxu0 0
    %697 = vmatprep.subr.bf16.mxu0 0
    %698 = vmatpush1.bf16.msra.mxu0 0
    %699 = vmatprep.subr.bf16.mxu0 0
    %700 = vmatpush1.bf16.msra.mxu0 0
    %701 = vmatprep.subr.bf16.mxu0 0
    %702 = vmatpush1.bf16.msra.mxu0 0
    %703 = vmatprep.subr.bf16.mxu0 0
    %704 = vmatpush1.bf16.msra.mxu0 0
    %705 = vmatprep.subr.bf16.mxu0 0
    %706 = vmatpush1.bf16.msra.mxu0 0
    %707 = vmatprep.mubr.bf16.mxu0 0
    %708 = vmatmul.mubr.bf16.gmra.mrb[0].mxu0 %v670
    %v709 = vpop.f32.mrb[0].mxu0
    %v710 = vadd.f32 0.0, %v709
    %v711 = vpop.f32.mrb[0].mxu0
    %v712 = vpop.f32.mrb[0].mxu0
    %v713 = vpop.f32.mrb[0].mxu0
    %714 = vdwg.mxu0
    %716 = vrot.lane.b32.xlu0 %v353, 96
    %v717 = vpop.permute.xlu0 %716
    %v719 = vsel %vm567, %v614, 0
    %v722 = vsel %vm622, %v717, 0
    %724 = vmatprep.subr.bf16.mxu0 0
    %725 = vmatpush1.bf16.msra.mxu0 %v722
    %726 = vmatprep.subr.bf16.mxu0 0
    %727 = vmatpush1.bf16.msra.mxu0 0
    %728 = vmatprep.subr.bf16.mxu0 0
    %729 = vmatpush1.bf16.msra.mxu0 0
    %730 = vmatprep.subr.bf16.mxu0 0
    %731 = vmatpush1.bf16.msra.mxu0 0
    %732 = vmatprep.subr.bf16.mxu0 0
    %733 = vmatpush1.bf16.msra.mxu0 0
    %734 = vmatprep.subr.bf16.mxu0 0
    %735 = vmatpush1.bf16.msra.mxu0 0
    %736 = vmatprep.subr.bf16.mxu0 0
    %737 = vmatpush1.bf16.msra.mxu0 0
    %738 = vmatprep.subr.bf16.mxu0 0
    %739 = vmatpush1.bf16.msra.mxu0 0
    %740 = vmatprep.subr.bf16.mxu0 0
    %741 = vmatpush1.bf16.msra.mxu0 0
    %742 = vmatprep.subr.bf16.mxu0 0
    %743 = vmatpush1.bf16.msra.mxu0 0
    %744 = vmatprep.subr.bf16.mxu0 0
    %745 = vmatpush1.bf16.msra.mxu0 0
    %746 = vmatprep.subr.bf16.mxu0 0
    %747 = vmatpush1.bf16.msra.mxu0 0
    %748 = vmatprep.subr.bf16.mxu0 0
    %749 = vmatpush1.bf16.msra.mxu0 0
    %750 = vmatprep.subr.bf16.mxu0 0
    %751 = vmatpush1.bf16.msra.mxu0 0
    %752 = vmatprep.subr.bf16.mxu0 0
    %753 = vmatpush1.bf16.msra.mxu0 0
    %754 = vmatprep.subr.bf16.mxu0 0
    %755 = vmatpush1.bf16.msra.mxu0 0
    %756 = vmatprep.mubr.bf16.mxu0 0
    %757 = vmatmul.mubr.bf16.gmra.mrb[0].mxu0 %v719
    %v758 = vpop.f32.mrb[0].mxu0
    %v759 = vadd.f32 0.0, %v758
    %v760 = vpop.f32.mrb[0].mxu0
    %v761 = vpop.f32.mrb[0].mxu0
    %v762 = vpop.f32.mrb[0].mxu0
    %763 = vdwg.mxu0
    %765 = vrot.lane.b32.xlu0 %v354, 96
    %v766 = vpop.permute.xlu0 %765
    %v768 = vsel %vm567, %v615, 0
    %v771 = vsel %vm622, %v766, 0
    %773 = vmatprep.subr.bf16.mxu0 0
    %774 = vmatpush1.bf16.msra.mxu0 %v771
    %775 = vmatprep.subr.bf16.mxu0 0
    %776 = vmatpush1.bf16.msra.mxu0 0
    %777 = vmatprep.subr.bf16.mxu0 0
    %778 = vmatpush1.bf16.msra.mxu0 0
    %779 = vmatprep.subr.bf16.mxu0 0
    %780 = vmatpush1.bf16.msra.mxu0 0
    %781 = vmatprep.subr.bf16.mxu0 0
    %782 = vmatpush1.bf16.msra.mxu0 0
    %783 = vmatprep.subr.bf16.mxu0 0
    %784 = vmatpush1.bf16.msra.mxu0 0
    %785 = vmatprep.subr.bf16.mxu0 0
    %786 = vmatpush1.bf16.msra.mxu0 0
    %787 = vmatprep.subr.bf16.mxu0 0
    %788 = vmatpush1.bf16.msra.mxu0 0
    %789 = vmatprep.subr.bf16.mxu0 0
    %790 = vmatpush1.bf16.msra.mxu0 0
    %791 = vmatprep.subr.bf16.mxu0 0
    %792 = vmatpush1.bf16.msra.mxu0 0
    %793 = vmatprep.subr.bf16.mxu0 0
    %794 = vmatpush1.bf16.msra.mxu0 0
    %795 = vmatprep.subr.bf16.mxu0 0
    %796 = vmatpush1.bf16.msra.mxu0 0
    %797 = vmatprep.subr.bf16.mxu0 0
    %798 = vmatpush1.bf16.msra.mxu0 0
    %799 = vmatprep.subr.bf16.mxu0 0
    %800 = vmatpush1.bf16.msra.mxu0 0
    %801 = vmatprep.subr.bf16.mxu0 0
    %802 = vmatpush1.bf16.msra.mxu0 0
    %803 = vmatprep.subr.bf16.mxu0 0
    %804 = vmatpush1.bf16.msra.mxu0 0
    %805 = vmatprep.mubr.bf16.mxu0 0
    %806 = vmatmul.mubr.bf16.gmra.mrb[0].mxu0 %v768
    %v807 = vpop.f32.mrb[0].mxu0
    %v808 = vadd.f32 0.0, %v807
    %v809 = vpop.f32.mrb[0].mxu0
    %v810 = vpop.f32.mrb[0].mxu0
    %v811 = vpop.f32.mrb[0].mxu0
    %812 = vdwg.mxu0
    %815 = vrot.lane.b32.xlu0 %v759, 16
    %v816 = vpop.permute.xlu0 %815
    %817 = vrot.lane.b32.xlu0 %v808, 16
    %v818 = vpop.permute.xlu0 %817
    %v821 = vsel %vm140, %v661, %v816
    %v822 = vsel %vm140, %v710, %v818
    %v824 = vsel %vm140, %v351, 0
    %v827 = vsel %vm140, %v327, 0
    %829 = vmatprep.subr.bf16.mxu0 0
    %830 = vmatpush1.bf16.xpose.msra.mxu0 %v827
    %831 = vmatprep.subr.bf16.mxu0 0
    %832 = vmatpush1.bf16.xpose.msra.mxu0 0
    %833 = vmatprep.subr.bf16.mxu0 0
    %834 = vmatpush1.bf16.xpose.msra.mxu0 0
    %835 = vmatprep.subr.bf16.mxu0 0
    %836 = vmatpush1.bf16.xpose.msra.mxu0 0
    %837 = vmatprep.subr.bf16.mxu0 0
    %838 = vmatpush1.bf16.xpose.msra.mxu0 0
    %839 = vmatprep.subr.bf16.mxu0 0
    %840 = vmatpush1.bf16.xpose.msra.mxu0 0
    %841 = vmatprep.subr.bf16.mxu0 0
    %842 = vmatpush1.bf16.xpose.msra.mxu0 0
    %843 = vmatprep.subr.bf16.mxu0 0
    %844 = vmatpush1.bf16.xpose.msra.mxu0 0
    %845 = vmatprep.subr.bf16.mxu0 0
    %846 = vmatpush1.bf16.xpose.msra.mxu0 0
    %847 = vmatprep.subr.bf16.mxu0 0
    %848 = vmatpush1.bf16.xpose.msra.mxu0 0
    %849 = vmatprep.subr.bf16.mxu0 0
    %850 = vmatpush1.bf16.xpose.msra.mxu0 0
    %851 = vmatprep.subr.bf16.mxu0 0
    %852 = vmatpush1.bf16.xpose.msra.mxu0 0
    %853 = vmatprep.subr.bf16.mxu0 0
    %854 = vmatpush1.bf16.xpose.msra.mxu0 0
    %855 = vmatprep.subr.bf16.mxu0 0
    %856 = vmatpush1.bf16.xpose.msra.mxu0 0
    %857 = vmatprep.subr.bf16.mxu0 0
    %858 = vmatpush1.bf16.xpose.msra.mxu0 0
    %859 = vmatprep.subr.bf16.mxu0 0
    %860 = vmatpush1.bf16.xpose.msra.mxu0 0
    %861 = vmatprep.mubr.bf16.mxu0 0
    %862 = vmatmul.mubr.bf16.gmra.mrb[0].mxu0 %v824
    %v863 = vpop.f32.mrb[0].mxu0
    %v864 = vadd.f32 0.0, %v863
    %v865 = vpop.f32.mrb[0].mxu0
    %v866 = vpop.f32.mrb[0].mxu0
    %v867 = vpop.f32.mrb[0].mxu0
    %868 = vdwg.mxu0
    %v870 = vsel %vm140, %v352, 0
    %v873 = vsel %vm140, %v328, 0
    %875 = vmatprep.subr.bf16.mxu0 0
    %876 = vmatpush1.bf16.xpose.msra.mxu0 %v873
    %877 = vmatprep.subr.bf16.mxu0 0
    %878 = vmatpush1.bf16.xpose.msra.mxu0 0
    %879 = vmatprep.subr.bf16.mxu0 0
    %880 = vmatpush1.bf16.xpose.msra.mxu0 0
    %881 = vmatprep.subr.bf16.mxu0 0
    %882 = vmatpush1.bf16.xpose.msra.mxu0 0
    %883 = vmatprep.subr.bf16.mxu0 0
    %884 = vmatpush1.bf16.xpose.msra.mxu0 0
    %885 = vmatprep.subr.bf16.mxu0 0
    %886 = vmatpush1.bf16.xpose.msra.mxu0 0
    %887 = vmatprep.subr.bf16.mxu0 0
    %888 = vmatpush1.bf16.xpose.msra.mxu0 0
    %889 = vmatprep.subr.bf16.mxu0 0
    %890 = vmatpush1.bf16.xpose.msra.mxu0 0
    %891 = vmatprep.subr.bf16.mxu0 0
    %892 = vmatpush1.bf16.xpose.msra.mxu0 0
    %893 = vmatprep.subr.bf16.mxu0 0
    %894 = vmatpush1.bf16.xpose.msra.mxu0 0
    %895 = vmatprep.subr.bf16.mxu0 0
    %896 = vmatpush1.bf16.xpose.msra.mxu0 0
    %897 = vmatprep.subr.bf16.mxu0 0
    %898 = vmatpush1.bf16.xpose.msra.mxu0 0
    %899 = vmatprep.subr.bf16.mxu0 0
    %900 = vmatpush1.bf16.xpose.msra.mxu0 0
    %901 = vmatprep.subr.bf16.mxu0 0
    %902 = vmatpush1.bf16.xpose.msra.mxu0 0
    %903 = vmatprep.subr.bf16.mxu0 0
    %904 = vmatpush1.bf16.xpose.msra.mxu0 0
    %905 = vmatprep.subr.bf16.mxu0 0
    %906 = vmatpush1.bf16.xpose.msra.mxu0 0
    %907 = vmatprep.mubr.bf16.mxu0 0
    %908 = vmatmul.mubr.bf16.gmra.mrb[0].mxu0 %v870
    %v909 = vpop.f32.mrb[0].mxu0
    %v910 = vadd.f32 0.0, %v909
    %v911 = vpop.f32.mrb[0].mxu0
    %v912 = vpop.f32.mrb[0].mxu0
    %v913 = vpop.f32.mrb[0].mxu0
    %914 = vdwg.mxu0
    %v916 = vsel %vm140, %v353, 0
    %v919 = vsel %vm140, %v329, 0
    %921 = vmatprep.subr.bf16.mxu0 0
    %922 = vmatpush1.bf16.xpose.msra.mxu0 %v919
    %923 = vmatprep.subr.bf16.mxu0 0
    %924 = vmatpush1.bf16.xpose.msra.mxu0 0
    %925 = vmatprep.subr.bf16.mxu0 0
    %926 = vmatpush1.bf16.xpose.msra.mxu0 0
    %927 = vmatprep.subr.bf16.mxu0 0
    %928 = vmatpush1.bf16.xpose.msra.mxu0 0
    %929 = vmatprep.subr.bf16.mxu0 0
    %930 = vmatpush1.bf16.xpose.msra.mxu0 0
    %931 = vmatprep.subr.bf16.mxu0 0
    %932 = vmatpush1.bf16.xpose.msra.mxu0 0
    %933 = vmatprep.subr.bf16.mxu0 0
    %934 = vmatpush1.bf16.xpose.msra.mxu0 0
    %935 = vmatprep.subr.bf16.mxu0 0
    %936 = vmatpush1.bf16.xpose.msra.mxu0 0
    %937 = vmatprep.subr.bf16.mxu0 0
    %938 = vmatpush1.bf16.xpose.msra.mxu0 0
    %939 = vmatprep.subr.bf16.mxu0 0
    %940 = vmatpush1.bf16.xpose.msra.mxu0 0
    %941 = vmatprep.subr.bf16.mxu0 0
    %942 = vmatpush1.bf16.xpose.msra.mxu0 0
    %943 = vmatprep.subr.bf16.mxu0 0
    %944 = vmatpush1.bf16.xpose.msra.mxu0 0
    %945 = vmatprep.subr.bf16.mxu0 0
    %946 = vmatpush1.bf16.xpose.msra.mxu0 0
    %947 = vmatprep.subr.bf16.mxu0 0
    %948 = vmatpush1.bf16.xpose.msra.mxu0 0
    %949 = vmatprep.subr.bf16.mxu0 0
    %950 = vmatpush1.bf16.xpose.msra.mxu0 0
    %951 = vmatprep.subr.bf16.mxu0 0
    %952 = vmatpush1.bf16.xpose.msra.mxu0 0
    %953 = vmatprep.mubr.bf16.mxu0 0
    %954 = vmatmul.mubr.bf16.gmra.mrb[0].mxu0 %v916
    %v955 = vpop.f32.mrb[0].mxu0
    %v956 = vadd.f32 0.0, %v955
    %v957 = vpop.f32.mrb[0].mxu0
    %v958 = vpop.f32.mrb[0].mxu0
    %v959 = vpop.f32.mrb[0].mxu0
    %960 = vdwg.mxu0
    %v962 = vsel %vm140, %v354, 0
    %v965 = vsel %vm140, %v330, 0
    %967 = vmatprep.subr.bf16.mxu0 0
    %968 = vmatpush1.bf16.xpose.msra.mxu0 %v965
    %969 = vmatprep.subr.bf16.mxu0 0
    %970 = vmatpush1.bf16.xpose.msra.mxu0 0
    %971 = vmatprep.subr.bf16.mxu0 0
    %972 = vmatpush1.bf16.xpose.msra.mxu0 0
    %973 = vmatprep.subr.bf16.mxu0 0
    %974 = vmatpush1.bf16.xpose.msra.mxu0 0
    %975 = vmatprep.subr.bf16.mxu0 0
    %976 = vmatpush1.bf16.xpose.msra.mxu0 0
    %977 = vmatprep.subr.bf16.mxu0 0
    %978 = vmatpush1.bf16.xpose.msra.mxu0 0
    %979 = vmatprep.subr.bf16.mxu0 0
    %980 = vmatpush1.bf16.xpose.msra.mxu0 0
    %981 = vmatprep.subr.bf16.mxu0 0
    %982 = vmatpush1.bf16.xpose.msra.mxu0 0
    %983 = vmatprep.subr.bf16.mxu0 0
    %984 = vmatpush1.bf16.xpose.msra.mxu0 0
    %985 = vmatprep.subr.bf16.mxu0 0
    %986 = vmatpush1.bf16.xpose.msra.mxu0 0
    %987 = vmatprep.subr.bf16.mxu0 0
    %988 = vmatpush1.bf16.xpose.msra.mxu0 0
    %989 = vmatprep.subr.bf16.mxu0 0
    %990 = vmatpush1.bf16.xpose.msra.mxu0 0
    %991 = vmatprep.subr.bf16.mxu0 0
    %992 = vmatpush1.bf16.xpose.msra.mxu0 0
    %993 = vmatprep.subr.bf16.mxu0 0
    %994 = vmatpush1.bf16.xpose.msra.mxu0 0
    %995 = vmatprep.subr.bf16.mxu0 0
    %996 = vmatpush1.bf16.xpose.msra.mxu0 0
    %997 = vmatprep.subr.bf16.mxu0 0
    %998 = vmatpush1.bf16.xpose.msra.mxu0 0
    %999 = vmatprep.mubr.bf16.mxu0 0
    %1000 = vmatmul.mubr.bf16.gmra.mrb[0].mxu0 %v962
    %v1001 = vpop.f32.mrb[0].mxu0
    %v1002 = vadd.f32 0.0, %v1001
    %v1003 = vpop.f32.mrb[0].mxu0
    %v1004 = vpop.f32.mrb[0].mxu0
    %v1005 = vpop.f32.mrb[0].mxu0
    %1006 = vdwg.mxu0
    %v1007 = vmul.f32 %v864, 0.25
    %v1008 = vmul.f32 %v910, 0.25
    %v1009 = vmul.f32 %v956, 0.25
    %v1010 = vmul.f32 %v1002, 0.25
    %v1011 = vsel %vm567, %v1007, -inf
    %1012 = vmax.xlane.f32.xlu0 %v1011
    %v1013 = vpop.xlane.xlu0 %1012
    %v1014 = vsel %vm567, %v1008, -inf
    %1015 = vmax.xlane.f32.xlu0 %v1014
    %v1016 = vpop.xlane.xlu0 %1015
    %v1017 = vsel %vm567, %v1009, -inf
    %1018 = vmax.xlane.f32.xlu0 %v1017
    %v1019 = vpop.xlane.xlu0 %1018
    %v1020 = vsel %vm567, %v1010, -inf
    %1021 = vmax.xlane.f32.xlu0 %v1020
    %v1022 = vpop.xlane.xlu0 %1021
    %v1023 = vsub.f32 %v1007, %v1013
    %v1024 = vsub.f32 %v1008, %v1016
    %v1025 = vsub.f32 %v1009, %v1019
    %v1026 = vsub.f32 %v1010, %v1022
    %v1027 = vmul.f32 %v1023, 1.442695
    %v1028 = vpow.pop %v1027
    %v1029 = vmul.f32 %v1024, 1.442695
    %v1030 = vpow.pop %v1029
    %v1031 = vmul.f32 %v1025, 1.442695
    %v1032 = vpow.pop %v1031
    %v1033 = vmul.f32 %v1026, 1.442695
    %v1034 = vpow.pop %v1033
    %v1035 = vsel %vm567, %v1028, 0.0
    %1036 = vadd.xlane.f32.xlu0 %v1035
    %v1037 = vpop.xlane.xlu0 %1036
    %v1038 = vsel %vm567, %v1030, 0.0
    %1039 = vadd.xlane.f32.xlu0 %v1038
    %v1040 = vpop.xlane.xlu0 %1039
    %v1041 = vsel %vm567, %v1032, 0.0
    %1042 = vadd.xlane.f32.xlu0 %v1041
    %v1043 = vpop.xlane.xlu0 %1042
    %v1044 = vsel %vm567, %v1034, 0.0
    %1045 = vadd.xlane.f32.xlu0 %v1044
    %v1046 = vpop.xlane.xlu0 %1045
    %v1047 = vrcp.pop %v1037
    %v1048 = vrcp.pop %v1040
    %v1049 = vrcp.pop %v1043
    %v1050 = vrcp.pop %v1046
    %v1051 = vmul.f32 %v1028, %v1047
    %v1052 = vmul.f32 %v1030, %v1048
    %v1053 = vmul.f32 %v1032, %v1049
    %v1054 = vmul.f32 %v1034, %v1050
    %v1055 = vpack.c.bf16 %v1051, %v1051
    %v1056 = vpack.c.bf16 %v1052, %v1052
    %v1057 = vpack.c.bf16 %v1053, %v1053
    %v1058 = vpack.c.bf16 %v1054, %v1054
    %1059 = vrot.lane.b32.xlu0 %v327, 64
    %v1060 = vpop.permute.xlu0 %1059
    %v1062 = vsel %vm567, %v1055, 0
    %v1065 = vsel %vm622, %v1060, 0
    %1067 = vmatprep.subr.bf16.mxu0 0
    %1068 = vmatpush1.bf16.msra.mxu0 %v1065
    %1069 = vmatprep.subr.bf16.mxu0 0
    %1070 = vmatpush1.bf16.msra.mxu0 0
    %1071 = vmatprep.subr.bf16.mxu0 0
    %1072 = vmatpush1.bf16.msra.mxu0 0
    %1073 = vmatprep.subr.bf16.mxu0 0
    %1074 = vmatpush1.bf16.msra.mxu0 0
    %1075 = vmatprep.subr.bf16.mxu0 0
    %1076 = vmatpush1.bf16.msra.mxu0 0
    %1077 = vmatprep.subr.bf16.mxu0 0
    %1078 = vmatpush1.bf16.msra.mxu0 0
    %1079 = vmatprep.subr.bf16.mxu0 0
    %1080 = vmatpush1.bf16.msra.mxu0 0
    %1081 = vmatprep.subr.bf16.mxu0 0
    %1082 = vmatpush1.bf16.msra.mxu0 0
    %1083 = vmatprep.subr.bf16.mxu0 0
    %1084 = vmatpush1.bf16.msra.mxu0 0
    %1085 = vmatprep.subr.bf16.mxu0 0
    %1086 = vmatpush1.bf16.msra.mxu0 0
    %1087 = vmatprep.subr.bf16.mxu0 0
    %1088 = vmatpush1.bf16.msra.mxu0 0
    %1089 = vmatprep.subr.bf16.mxu0 0
    %1090 = vmatpush1.bf16.msra.mxu0 0
    %1091 = vmatprep.subr.bf16.mxu0 0
    %1092 = vmatpush1.bf16.msra.mxu0 0
    %1093 = vmatprep.subr.bf16.mxu0 0
    %1094 = vmatpush1.bf16.msra.mxu0 0
    %1095 = vmatprep.subr.bf16.mxu0 0
    %1096 = vmatpush1.bf16.msra.mxu0 0
    %1097 = vmatprep.subr.bf16.mxu0 0
    %1098 = vmatpush1.bf16.msra.mxu0 0
    %1099 = vmatprep.mubr.bf16.mxu0 0
    %1100 = vmatmul.mubr.bf16.gmra.mrb[0].mxu0 %v1062
    %v1101 = vpop.f32.mrb[0].mxu0
    %v1102 = vadd.f32 0.0, %v1101
    %v1103 = vpop.f32.mrb[0].mxu0
    %v1104 = vpop.f32.mrb[0].mxu0
    %v1105 = vpop.f32.mrb[0].mxu0
    %1106 = vdwg.mxu0
    %1107 = vrot.lane.b32.xlu0 %v328, 64
    %v1108 = vpop.permute.xlu0 %1107
    %v1110 = vsel %vm567, %v1056, 0
    %v1113 = vsel %vm622, %v1108, 0
    %1115 = vmatprep.subr.bf16.mxu0 0
    %1116 = vmatpush1.bf16.msra.mxu0 %v1113
    %1117 = vmatprep.subr.bf16.mxu0 0
    %1118 = vmatpush1.bf16.msra.mxu0 0
    %1119 = vmatprep.subr.bf16.mxu0 0
    %1120 = vmatpush1.bf16.msra.mxu0 0
    %1121 = vmatprep.subr.bf16.mxu0 0
    %1122 = vmatpush1.bf16.msra.mxu0 0
    %1123 = vmatprep.subr.bf16.mxu0 0
    %1124 = vmatpush1.bf16.msra.mxu0 0
    %1125 = vmatprep.subr.bf16.mxu0 0
    %1126 = vmatpush1.bf16.msra.mxu0 0
    %1127 = vmatprep.subr.bf16.mxu0 0
    %1128 = vmatpush1.bf16.msra.mxu0 0
    %1129 = vmatprep.subr.bf16.mxu0 0
    %1130 = vmatpush1.bf16.msra.mxu0 0
    %1131 = vmatprep.subr.bf16.mxu0 0
    %1132 = vmatpush1.bf16.msra.mxu0 0
    %1133 = vmatprep.subr.bf16.mxu0 0
    %1134 = vmatpush1.bf16.msra.mxu0 0
    %1135 = vmatprep.subr.bf16.mxu0 0
    %1136 = vmatpush1.bf16.msra.mxu0 0
    %1137 = vmatprep.subr.bf16.mxu0 0
    %1138 = vmatpush1.bf16.msra.mxu0 0
    %1139 = vmatprep.subr.bf16.mxu0 0
    %1140 = vmatpush1.bf16.msra.mxu0 0
    %1141 = vmatprep.subr.bf16.mxu0 0
    %1142 = vmatpush1.bf16.msra.mxu0 0
    %1143 = vmatprep.subr.bf16.mxu0 0
    %1144 = vmatpush1.bf16.msra.mxu0 0
    %1145 = vmatprep.subr.bf16.mxu0 0
    %1146 = vmatpush1.bf16.msra.mxu0 0
    %1147 = vmatprep.mubr.bf16.mxu0 0
    %1148 = vmatmul.mubr.bf16.gmra.mrb[0].mxu0 %v1110
    %v1149 = vpop.f32.mrb[0].mxu0
    %v1150 = vadd.f32 0.0, %v1149
    %v1151 = vpop.f32.mrb[0].mxu0
    %v1152 = vpop.f32.mrb[0].mxu0
    %v1153 = vpop.f32.mrb[0].mxu0
    %1154 = vdwg.mxu0
    %1155 = vrot.lane.b32.xlu0 %v329, 64
    %v1156 = vpop.permute.xlu0 %1155
    %v1158 = vsel %vm567, %v1057, 0
    %v1161 = vsel %vm622, %v1156, 0
    %1163 = vmatprep.subr.bf16.mxu0 0
    %1164 = vmatpush1.bf16.msra.mxu0 %v1161
    %1165 = vmatprep.subr.bf16.mxu0 0
    %1166 = vmatpush1.bf16.msra.mxu0 0
    %1167 = vmatprep.subr.bf16.mxu0 0
    %1168 = vmatpush1.bf16.msra.mxu0 0
    %1169 = vmatprep.subr.bf16.mxu0 0
    %1170 = vmatpush1.bf16.msra.mxu0 0
    %1171 = vmatprep.subr.bf16.mxu0 0
    %1172 = vmatpush1.bf16.msra.mxu0 0
    %1173 = vmatprep.subr.bf16.mxu0 0
    %1174 = vmatpush1.bf16.msra.mxu0 0
    %1175 = vmatprep.subr.bf16.mxu0 0
    %1176 = vmatpush1.bf16.msra.mxu0 0
    %1177 = vmatprep.subr.bf16.mxu0 0
    %1178 = vmatpush1.bf16.msra.mxu0 0
    %1179 = vmatprep.subr.bf16.mxu0 0
    %1180 = vmatpush1.bf16.msra.mxu0 0
    %1181 = vmatprep.subr.bf16.mxu0 0
    %1182 = vmatpush1.bf16.msra.mxu0 0
    %1183 = vmatprep.subr.bf16.mxu0 0
    %1184 = vmatpush1.bf16.msra.mxu0 0
    %1185 = vmatprep.subr.bf16.mxu0 0
    %1186 = vmatpush1.bf16.msra.mxu0 0
    %1187 = vmatprep.subr.bf16.mxu0 0
    %1188 = vmatpush1.bf16.msra.mxu0 0
    %1189 = vmatprep.subr.bf16.mxu0 0
    %1190 = vmatpush1.bf16.msra.mxu0 0
    %1191 = vmatprep.subr.bf16.mxu0 0
    %1192 = vmatpush1.bf16.msra.mxu0 0
    %1193 = vmatprep.subr.bf16.mxu0 0
    %1194 = vmatpush1.bf16.msra.mxu0 0
    %1195 = vmatprep.mubr.bf16.mxu0 0
    %1196 = vmatmul.mubr.bf16.gmra.mrb[0].mxu0 %v1158
    %v1197 = vpop.f32.mrb[0].mxu0
    %v1198 = vadd.f32 0.0, %v1197
    %v1199 = vpop.f32.mrb[0].mxu0
    %v1200 = vpop.f32.mrb[0].mxu0
    %v1201 = vpop.f32.mrb[0].mxu0
    %1202 = vdwg.mxu0
    %1203 = vrot.lane.b32.xlu0 %v330, 64
    %v1204 = vpop.permute.xlu0 %1203
    %v1206 = vsel %vm567, %v1058, 0
    %v1209 = vsel %vm622, %v1204, 0
    %1211 = vmatprep.subr.bf16.mxu0 0
    %1212 = vmatpush1.bf16.msra.mxu0 %v1209
    %1213 = vmatprep.subr.bf16.mxu0 0
    %1214 = vmatpush1.bf16.msra.mxu0 0
    %1215 = vmatprep.subr.bf16.mxu0 0
    %1216 = vmatpush1.bf16.msra.mxu0 0
    %1217 = vmatprep.subr.bf16.mxu0 0
    %1218 = vmatpush1.bf16.msra.mxu0 0
    %1219 = vmatprep.subr.bf16.mxu0 0
    %1220 = vmatpush1.bf16.msra.mxu0 0
    %1221 = vmatprep.subr.bf16.mxu0 0
    %1222 = vmatpush1.bf16.msra.mxu0 0
    %1223 = vmatprep.subr.bf16.mxu0 0
    %1224 = vmatpush1.bf16.msra.mxu0 0
    %1225 = vmatprep.subr.bf16.mxu0 0
    %1226 = vmatpush1.bf16.msra.mxu0 0
    %1227 = vmatprep.subr.bf16.mxu0 0
    %1228 = vmatpush1.bf16.msra.mxu0 0
    %1229 = vmatprep.subr.bf16.mxu0 0
    %1230 = vmatpush1.bf16.msra.mxu0 0
    %1231 = vmatprep.subr.bf16.mxu0 0
    %1232 = vmatpush1.bf16.msra.mxu0 0
    %1233 = vmatprep.subr.bf16.mxu0 0
    %1234 = vmatpush1.bf16.msra.mxu0 0
    %1235 = vmatprep.subr.bf16.mxu0 0
    %1236 = vmatpush1.bf16.msra.mxu0 0
    %1237 = vmatprep.subr.bf16.mxu0 0
    %1238 = vmatpush1.bf16.msra.mxu0 0
    %1239 = vmatprep.subr.bf16.mxu0 0
    %1240 = vmatpush1.bf16.msra.mxu0 0
    %1241 = vmatprep.subr.bf16.mxu0 0
    %1242 = vmatpush1.bf16.msra.mxu0 0
    %1243 = vmatprep.mubr.bf16.mxu0 0
    %1244 = vmatmul.mubr.bf16.gmra.mrb[0].mxu0 %v1206
    %v1245 = vpop.f32.mrb[0].mxu0
    %v1246 = vadd.f32 0.0, %v1245
    %v1247 = vpop.f32.mrb[0].mxu0
    %v1248 = vpop.f32.mrb[0].mxu0
    %v1249 = vpop.f32.mrb[0].mxu0
    %1250 = vdwg.mxu0
    %1253 = vrot.lane.b32.xlu0 %v1198, 16
    %v1254 = vpop.permute.xlu0 %1253
    %1255 = vrot.lane.b32.xlu0 %v1246, 16
    %v1256 = vpop.permute.xlu0 %1255
    %v1259 = vsel %vm140, %v1102, %v1254
    %v1260 = vsel %vm140, %v1150, %v1256
    %1263 = vrot.lane.b32.xlu0 %v821, 32
    %v1264 = vpop.permute.xlu0 %1263
    %1265 = vrot.lane.b32.xlu0 %v822, 32
    %v1266 = vpop.permute.xlu0 %1265
    %v1269 = vsel %vm255, %v196, %v1264
    %v1270 = vsel %vm255, %v197, %v1266
    %1273 = vrot.lane.b32.xlu0 %v1259, 32
    %v1274 = vpop.permute.xlu0 %1273
    %1275 = vrot.lane.b32.xlu0 %v1260, 32
    %v1276 = vpop.permute.xlu0 %1275
    %v1279 = vsel %vm255, %v217, %v1274
    %v1280 = vsel %vm255, %v219, %v1276
    %v1281 = vpack.c.bf16 %v1270, %v1269
    %v1282 = vpack.c.bf16 %v1280, %v1279
    %v1284 = vlaneseq
    %v1285 = vshrl.u32 %v1284, 7
    %v1286 = vsub.s32 0, %v1285
    %v1287 = vrot.slane %v213, %v1286
    %v1297 = vunpack.c.l.b16 %v205
    %v1298 = vunpack.c.l.b16 %v206
    %v1299 = vunpack.c.l.b16 %v207
    %v1300 = vunpack.c.l.b16 %v208
    %v1301 = vunpack.c.l.b16 %v209
    %v1302 = vunpack.c.l.b16 %v210
    %v1303 = vunpack.c.l.b16 %v211
    %v1304 = vunpack.c.l.b16 %v212
    %v1305 = vpack.c.b16 %v1298, %v1297
    %v1306 = vpack.c.b16 %v1300, %v1299
    %v1307 = vpack.c.b16 %v1302, %v1301
    %v1308 = vpack.c.b16 %v1304, %v1303
    %vm1313 = vcmask 523264
    %v1315 = vsel %vm1313, %v1281, 0
    %v1318 = vsel %vm1313, %v1282, 0
    %1320 = vmatprep.subr.bf16.mxu0 0
    %1321 = vmatpush1.bf16.msra.mxu0 %v1305
    %1322 = vmatprep.subr.bf16.mxu0 0
    %1323 = vmatpush1.bf16.msra.mxu0 %v1306
    %1324 = vmatprep.subr.bf16.mxu0 0
    %1325 = vmatpush1.bf16.msra.mxu0 %v1307
    %1326 = vmatprep.subr.bf16.mxu0 0
    %1327 = vmatpush1.bf16.msra.mxu0 %v1308
    %1328 = vmatprep.subr.bf16.mxu0 0
    %1329 = vmatpush1.bf16.msra.mxu0 0
    %1330 = vmatprep.subr.bf16.mxu0 0
    %1331 = vmatpush1.bf16.msra.mxu0 0
    %1332 = vmatprep.subr.bf16.mxu0 0
    %1333 = vmatpush1.bf16.msra.mxu0 0
    %1334 = vmatprep.subr.bf16.mxu0 0
    %1335 = vmatpush1.bf16.msra.mxu0 0
    %1336 = vmatprep.subr.bf16.mxu0 0
    %1337 = vmatpush1.bf16.msra.mxu0 0
    %1338 = vmatprep.subr.bf16.mxu0 0
    %1339 = vmatpush1.bf16.msra.mxu0 0
    %1340 = vmatprep.subr.bf16.mxu0 0
    %1341 = vmatpush1.bf16.msra.mxu0 0
    %1342 = vmatprep.subr.bf16.mxu0 0
    %1343 = vmatpush1.bf16.msra.mxu0 0
    %1344 = vmatprep.subr.bf16.mxu0 0
    %1345 = vmatpush1.bf16.msra.mxu0 0
    %1346 = vmatprep.subr.bf16.mxu0 0
    %1347 = vmatpush1.bf16.msra.mxu0 0
    %1348 = vmatprep.subr.bf16.mxu0 0
    %1349 = vmatpush1.bf16.msra.mxu0 0
    %1350 = vmatprep.subr.bf16.mxu0 0
    %1351 = vmatpush1.bf16.msra.mxu0 0
    %1352 = vmatprep.mubr.bf16.mxu0 0
    %1353 = vmatmul.mubr.bf16.gmra.mrb[0].mxu0 %v1315
    %v1354 = vpop.f32.mrb[0].mxu0
    %v1355 = vadd.f32 %v1287, %v1354
    %v1356 = vpop.f32.mrb[0].mxu0
    %v1357 = vpop.f32.mrb[0].mxu0
    %v1358 = vadd.f32 %v1287, %v1357
    %v1359 = vpop.f32.mrb[0].mxu0
    %1360 = vmatprep.mubr.bf16.mxu0 0
    %1361 = vmatmul.mubr.bf16.gmra.mrb[0].mxu0 %v1318
    %v1362 = vpop.f32.mrb[0].mxu0
    %v1363 = vadd.f32 %v1287, %v1362
    %v1364 = vpop.f32.mrb[0].mxu0
    %v1365 = vpop.f32.mrb[0].mxu0
    %v1366 = vadd.f32 %v1287, %v1365
    %v1367 = vpop.f32.mrb[0].mxu0
    %1368 = vdwg.mxu0
    %v1369 = vmax.f32 %v1355, 0.0
    %v1370 = vmax.f32 %v1358, 0.0
    %v1371 = vmax.f32 %v1363, 0.0
    %v1372 = vmax.f32 %v1366, 0.0
    %v1373 = vadd.f32 %v1369, %v196
    %v1374 = vadd.f32 %v1370, %v197
    %v1375 = vadd.f32 %v1371, %v198
    %v1376 = vadd.f32 %v1372, %v199
    %v1377 = vld [vmem:[#allocation10] sm:$0xf]
    %v1378 = vld [vmem:[#allocation10 + $0x4] sm:$0xf]
    %v1379 = vld [vmem:[#allocation10 + $0x8] sm:$0xf]
    %v1380 = vld [vmem:[#allocation10 + $0xc] sm:$0xf]
    %s1381 = scalar_lea.vmem [#allocation11], 1
    %v1382 = vld [vmem:[%s1381] sm:$0x1]
    %s1383 = scalar_lea.vmem [#allocation5], 32
    %v1384 = vld [vmem:[%s1383] sm:$0xff]
    %v1385 = vld [vmem:[%s1383 + $0x8] sm:$0xff]
    %v1386 = vld [vmem:[%s1383 + $0x10] sm:$0xff]
    %v1387 = vld [vmem:[%s1383 + $0x18] sm:$0xff]
    %s1388 = scalar_lea.vmem [#allocation7], 2
    %v1389 = vld [vmem:[%s1388] sm:$0x3]
    %s1390 = scalar_lea.vmem [#allocation10], 16
    %v1391 = vld [vmem:[%s1390] sm:$0xf]
    %v1392 = vld [vmem:[%s1390 + $0x4] sm:$0xf]
    %v1393 = vld [vmem:[%s1390 + $0x8] sm:$0xf]
    %v1394 = vld [vmem:[%s1390 + $0xc] sm:$0xf]
    %s1395 = scalar_lea.vmem [#allocation11], 2
    %v1396 = vld [vmem:[%s1395] sm:$0x1]
    %v1397 = vsel %vm255, %v1373, 0.0
    %v1398 = vrot.slane %v1397, 4
    %v1399 = vadd.f32 %v1397, %v1398
    %v1400 = vrot.slane %v1399, 2
    %v1401 = vadd.f32 %v1399, %v1400
    %v1402 = vrot.slane %v1401, 1
    %v1403 = vadd.f32 %v1401, %v1402
    %v1404 = vsel %vm255, %v1374, 0.0
    %v1405 = vrot.slane %v1404, 4
    %v1406 = vadd.f32 %v1404, %v1405
    %v1407 = vrot.slane %v1406, 2
    %v1408 = vadd.f32 %v1406, %v1407
    %v1409 = vrot.slane %v1408, 1
    %v1410 = vadd.f32 %v1408, %v1409
    %v1411 = vmul.f32 %v1403, 0.125
    %v1412 = vmul.f32 %v1410, 0.125
    %vm1413 = vcmask 523520
    %v1414 = vsel %vm1413, %v1375, 0.0
    %v1415 = vrot.slane %v1414, 4
    %v1416 = vadd.f32 %v1414, %v1415
    %v1417 = vrot.slane %v1416, 2
    %v1418 = vadd.f32 %v1416, %v1417
    %v1419 = vrot.slane %v1418, 1
    %v1420 = vadd.f32 %v1418, %v1419
    %v1421 = vsel %vm1413, %v1376, 0.0
    %v1422 = vrot.slane %v1421, 4
    %v1423 = vadd.f32 %v1421, %v1422
    %v1424 = vrot.slane %v1423, 2
    %v1425 = vadd.f32 %v1423, %v1424
    %v1426 = vrot.slane %v1425, 1
    %v1427 = vadd.f32 %v1425, %v1426
    %v1428 = vmul.f32 %v1420, 0.125
    %v1429 = vmul.f32 %v1427, 0.125
    %vm1432 = vcmask 1041409
    %v1433 = vsel %vm1432, %v1412, %v1411
    %vm1437 = vcmask 1043459
    %v1438 = vsel %vm1437, %v1429, %v1428
    %1439 = vrot.lane.b32.xlu0 %v1438, 96
    %v1440 = vpop.permute.xlu0 %1439
    %vm1442 = vcmask 1041408
    %v1443 = vsel %vm1442, %v1433, %v1440
    %v1444 = vpack.c.bf16 %v1443, %v1443
    %v1446 = vlaneseq
    %v1447 = vshrl.u32 %v1446, 7
    %v1448 = vsub.s32 0, %v1447
    %v1449 = vrot.slane %v1382, %v1448
    %v1455 = vunpack.c.l.b16 %v1377
    %v1456 = vunpack.c.l.b16 %v1378
    %v1457 = vunpack.c.l.b16 %v1379
    %v1458 = vunpack.c.l.b16 %v1380
    %v1459 = vpack.c.b16 %v1456, %v1455
    %v1460 = vpack.c.b16 %v1458, %v1457
    %v1464 = vsel %vm255, %v1444, 0
    %1466 = vmatprep.subr.bf16.mxu0 0
    %1467 = vmatpush1.bf16.msra.mxu0 %v1459
    %1468 = vmatprep.subr.bf16.mxu0 0
    %1469 = vmatpush1.bf16.msra.mxu0 %v1460
    %1470 = vmatprep.subr.bf16.mxu0 0
    %1471 = vmatpush1.bf16.msra.mxu0 0
    %1472 = vmatprep.subr.bf16.mxu0 0
    %1473 = vmatpush1.bf16.msra.mxu0 0
    %1474 = vmatprep.subr.bf16.mxu0 0
    %1475 = vmatpush1.bf16.msra.mxu0 0
    %1476 = vmatprep.subr.bf16.mxu0 0
    %1477 = vmatpush1.bf16.msra.mxu0 0
    %1478 = vmatprep.subr.bf16.mxu0 0
    %1479 = vmatpush1.bf16.msra.mxu0 0
    %1480 = vmatprep.subr.bf16.mxu0 0
    %1481 = vmatpush1.bf16.msra.mxu0 0
    %1482 = vmatprep.subr.bf16.mxu0 0
    %1483 = vmatpush1.bf16.msra.mxu0 0
    %1484 = vmatprep.subr.bf16.mxu0 0
    %1485 = vmatpush1.bf16.msra.mxu0 0
    %1486 = vmatprep.subr.bf16.mxu0 0
    %1487 = vmatpush1.bf16.msra.mxu0 0
    %1488 = vmatprep.subr.bf16.mxu0 0
    %1489 = vmatpush1.bf16.msra.mxu0 0
    %1490 = vmatprep.subr.bf16.mxu0 0
    %1491 = vmatpush1.bf16.msra.mxu0 0
    %1492 = vmatprep.subr.bf16.mxu0 0
    %1493 = vmatpush1.bf16.msra.mxu0 0
    %1494 = vmatprep.subr.bf16.mxu0 0
    %1495 = vmatpush1.bf16.msra.mxu0 0
    %1496 = vmatprep.subr.bf16.mxu0 0
    %1497 = vmatpush1.bf16.msra.mxu0 0
    %1498 = vmatprep.mubr.bf16.mxu0 0
    %1499 = vmatmul.mubr.bf16.gmra.mrb[0].mxu0 %v1464
    %v1500 = vpop.f32.mrb[0].mxu0
    %v1501 = vadd.f32 %v1449, %v1500
    %v1502 = vpop.f32.mrb[0].mxu0
    %v1503 = vpop.f32.mrb[0].mxu0
    %v1504 = vpop.f32.mrb[0].mxu0
    %1505 = vdwg.mxu0
    %v1506 = vxor.u32 %v1501, 2147483648
    %v1507 = vmul.f32 %v1506, 1.442695
    %v1508 = vpow.pop %v1507
    %v1509 = vadd.f32 %v1508, 1.0
    %v1510 = vrcp.pop %v1509
    %v1511 = vmul.f32 1.0, %v1510
    %1514 = vrot.lane.b32.xlu0 %v1375, 96
    %v1515 = vpop.permute.xlu0 %1514
    %1516 = vrot.lane.b32.xlu0 %v1376, 96
    %v1517 = vpop.permute.xlu0 %1516
    %v1520 = vpack.c.bf16 %v1374, %v1373
    %v1521 = vpack.c.bf16 %v1517, %v1515
    %v1523 = vlaneseq
    %v1524 = vshrl.u32 %v1523, 7
    %v1525 = vsub.s32 0, %v1524
    %v1526 = vrot.slane %v1389, %v1525
    %v1527 = vlaneseq
    %v1528 = vshrl.u32 %v1527, 7
    %v1529 = vsub.s32 1, %v1528
    %v1530 = vrot.slane %v1389, %v1529
    %v1537 = vunpack.c.l.b16 %v1384
    %v1538 = vunpack.c.h.b16 %v1384
    %v1539 = vunpack.c.l.b16 %v1385
    %v1540 = vunpack.c.h.b16 %v1385
    %v1541 = vunpack.c.l.b16 %v1386
    %v1542 = vunpack.c.h.b16 %v1386
    %v1543 = vunpack.c.l.b16 %v1387
    %v1544 = vunpack.c.h.b16 %v1387
    %v1545 = vpack.c.b16 %v1539, %v1537
    %v1546 = vpack.c.b16 %v1540, %v1538
    %v1547 = vpack.c.b16 %v1543, %v1541
    %v1548 = vpack.c.b16 %v1544, %v1542
    %v1554 = vsel %vm255, %v1520, 0
    %v1557 = vsel %vm255, %v1521, 0
    %1559 = vmatprep.subr.bf16.mxu0 %v1546
    %1560 = vmatpush1.bf16.msra.mxu0 %v1545
    %1561 = vmatprep.subr.bf16.mxu0 %v1548
    %1562 = vmatpush1.bf16.msra.mxu0 %v1547
    %1563 = vmatprep.subr.bf16.mxu0 0
    %1564 = vmatpush1.bf16.msra.mxu0 0
    %1565 = vmatprep.subr.bf16.mxu0 0
    %1566 = vmatpush1.bf16.msra.mxu0 0
    %1567 = vmatprep.subr.bf16.mxu0 0
    %1568 = vmatpush1.bf16.msra.mxu0 0
    %1569 = vmatprep.subr.bf16.mxu0 0
    %1570 = vmatpush1.bf16.msra.mxu0 0
    %1571 = vmatprep.subr.bf16.mxu0 0
    %1572 = vmatpush1.bf16.msra.mxu0 0
    %1573 = vmatprep.subr.bf16.mxu0 0
    %1574 = vmatpush1.bf16.msra.mxu0 0
    %1575 = vmatprep.subr.bf16.mxu0 0
    %1576 = vmatpush1.bf16.msra.mxu0 0
    %1577 = vmatprep.subr.bf16.mxu0 0
    %1578 = vmatpush1.bf16.msra.mxu0 0
    %1579 = vmatprep.subr.bf16.mxu0 0
    %1580 = vmatpush1.bf16.msra.mxu0 0
    %1581 = vmatprep.subr.bf16.mxu0 0
    %1582 = vmatpush1.bf16.msra.mxu0 0
    %1583 = vmatprep.subr.bf16.mxu0 0
    %1584 = vmatpush1.bf16.msra.mxu0 0
    %1585 = vmatprep.subr.bf16.mxu0 0
    %1586 = vmatpush1.bf16.msra.mxu0 0
    %1587 = vmatprep.subr.bf16.mxu0 0
    %1588 = vmatpush1.bf16.msra.mxu0 0
    %1589 = vmatprep.subr.bf16.mxu0 0
    %1590 = vmatpush1.bf16.msra.mxu0 0
    %1591 = vmatprep.mubr.bf16.mxu0 0
    %1592 = vmatmul.mubr.bf16.gmra.mrb[0].mxu0 %v1554
    %v1593 = vpop.f32.mrb[0].mxu0
    %v1594 = vadd.f32 %v1526, %v1593
    %v1595 = vpop.f32.mrb[0].mxu0
    %v1596 = vpop.f32.mrb[0].mxu0
    %v1597 = vadd.f32 %v1526, %v1596
    %v1598 = vpop.f32.mrb[0].mxu0
    %1599 = vmatprep.mubr.bf16.mxu0 0
    %1600 = vmatmul.mubr.bf16.gmra.mrb[0].mxu0 %v1557
    %v1601 = vpop.f32.mrb[0].mxu0
    %v1602 = vadd.f32 %v1526, %v1601
    %v1603 = vpop.f32.mrb[0].mxu0
    %v1604 = vadd.f32 %v1530, %v1603
    %v1605 = vpop.f32.mrb[0].mxu0
    %v1606 = vadd.f32 %v1526, %v1605
    %v1607 = vpop.f32.mrb[0].mxu0
    %v1608 = vadd.f32 %v1530, %v1607
    %1609 = vdwg.mxu0
    %v1610 = vmax.f32 %v1594, 0.0
    %v1611 = vmax.f32 %v1597, 0.0
    %v1612 = vmax.f32 %v1602, 0.0
    %v1613 = vmax.f32 %v1604, 0.0
    %v1614 = vmax.f32 %v1606, 0.0
    %v1615 = vmax.f32 %v1608, 0.0
    %v1616 = vadd.f32 %v1511, 1.0
    %v1619 = vunpack.c.l.s4 1966171168
    %v1620 = vunpack.c.0.s8 %v1619
    %v1621 = vlaneseq
    %v1622 = vshrl.u32 %v1621, 7
    %v1623 = vsub.s32 %v1620, %v1622
    %v1624 = vrot.slane %v1616, %v1623
    %v1625 = vcombine.high %v1624, %v1624
    %v1627 = vunpack.c.l.s4 1966171168
    %v1628 = vunpack.c.0.s8 %v1627
    %v1629 = vlaneseq
    %v1630 = vshrl.u32 %v1629, 7
    %v1631 = vsub.s32 %v1628, %v1630
    %v1632 = vrot.slane %v1624, %v1631
    %v1634 = vunpack.c.l.s4 1966171168
    %v1635 = vunpack.c.0.s8 %v1634
    %v1636 = vlaneseq
    %v1637 = vshrl.u32 %v1636, 7
    %v1638 = vsub.s32 %v1635, %v1637
    %v1639 = vrot.slane %v1625, %v1638
    %v1640 = vcombine.high %v1632, %v1632
    %v1641 = vcombine.high %v1639, %v1639
    %v1642 = vlaneseq
    %v1643 = vshrl.u32 %v1642, 7
    %v1644 = vsub.s32 0, %v1643
    %v1645 = vrot.slane %v1640, %v1644
    %v1646 = vlaneseq
    %v1647 = vshrl.u32 %v1646, 7
    %v1648 = vsub.s32 0, %v1647
    %v1649 = vrot.slane %v1641, %v1648
    %v1652 = vmul.f32 %v1645, %v1610
    %v1653 = vmul.f32 %v1649, %v1611
    %1656 = vrot.lane.b32.xlu0 %v1610, 32
    %v1657 = vpop.permute.xlu0 %1656
    %1658 = vrot.lane.b32.xlu0 %v1611, 32
    %v1659 = vpop.permute.xlu0 %1658
    %v1662 = vmul.f32 %v1645, %v1657
    %v1663 = vmul.f32 %v1649, %v1659
    %1664 = vrot.lane.b32.xlu0 %v1610, 96
    %v1665 = vpop.permute.xlu0 %1664
    %1666 = vrot.lane.b32.xlu0 %v1611, 96
    %v1667 = vpop.permute.xlu0 %1666
    %v1670 = vmul.f32 %v1645, %v1665
    %v1671 = vmul.f32 %v1649, %v1667
    %1674 = vrot.lane.b32.xlu0 %v1652, 112
    %v1675 = vpop.permute.xlu0 %1674
    %1676 = vrot.lane.b32.xlu0 %v1653, 112
    %v1677 = vpop.permute.xlu0 %1676
    %v1680 = vpack.c.bf16 %v1652, %v1652
    %v1681 = vpack.c.bf16 %v1653, %v1653
    %v1682 = vpack.c.bf16 %v1675, %v1675
    %v1683 = vpack.c.bf16 %v1677, %v1677
    %1686 = vrot.lane.b32.xlu0 %v1662, 112
    %v1687 = vpop.permute.xlu0 %1686
    %1688 = vrot.lane.b32.xlu0 %v1663, 112
    %v1689 = vpop.permute.xlu0 %1688
    %v1692 = vpack.c.bf16 %v1662, %v1662
    %v1693 = vpack.c.bf16 %v1663, %v1663
    %v1694 = vpack.c.bf16 %v1687, %v1687
    %v1695 = vpack.c.bf16 %v1689, %v1689
    %1698 = vrot.lane.b32.xlu0 %v1670, 112
    %v1699 = vpop.permute.xlu0 %1698
    %1700 = vrot.lane.b32.xlu0 %v1671, 112
    %v1701 = vpop.permute.xlu0 %1700
    %v1704 = vpack.c.bf16 %v1670, %v1670
    %v1705 = vpack.c.bf16 %v1671, %v1671
    %v1706 = vpack.c.bf16 %v1699, %v1699
    %v1707 = vpack.c.bf16 %v1701, %v1701
    %1709 = vrot.lane.b32.xlu0 %v1680, 96
    %v1710 = vpop.permute.xlu0 %1709
    %1712 = vrot.lane.b32.xlu0 %v1692, 96
    %v1713 = vpop.permute.xlu0 %1712
    %v1715 = vsel %vm140, %v1710, 0
    %v1718 = vsel %vm140, %v1713, 0
    %1720 = vmatprep.subr.bf16.mxu0 0
    %1721 = vmatpush1.bf16.xpose.msra.mxu0 %v1718
    %1722 = vmatprep.subr.bf16.mxu0 0
    %1723 = vmatpush1.bf16.xpose.msra.mxu0 0
    %1724 = vmatprep.subr.bf16.mxu0 0
    %1725 = vmatpush1.bf16.xpose.msra.mxu0 0
    %1726 = vmatprep.subr.bf16.mxu0 0
    %1727 = vmatpush1.bf16.xpose.msra.mxu0 0
    %1728 = vmatprep.subr.bf16.mxu0 0
    %1729 = vmatpush1.bf16.xpose.msra.mxu0 0
    %1730 = vmatprep.subr.bf16.mxu0 0
    %1731 = vmatpush1.bf16.xpose.msra.mxu0 0
    %1732 = vmatprep.subr.bf16.mxu0 0
    %1733 = vmatpush1.bf16.xpose.msra.mxu0 0
    %1734 = vmatprep.subr.bf16.mxu0 0
    %1735 = vmatpush1.bf16.xpose.msra.mxu0 0
    %1736 = vmatprep.subr.bf16.mxu0 0
    %1737 = vmatpush1.bf16.xpose.msra.mxu0 0
    %1738 = vmatprep.subr.bf16.mxu0 0
    %1739 = vmatpush1.bf16.xpose.msra.mxu0 0
    %1740 = vmatprep.subr.bf16.mxu0 0
    %1741 = vmatpush1.bf16.xpose.msra.mxu0 0
    %1742 = vmatprep.subr.bf16.mxu0 0
    %1743 = vmatpush1.bf16.xpose.msra.mxu0 0
    %1744 = vmatprep.subr.bf16.mxu0 0
    %1745 = vmatpush1.bf16.xpose.msra.mxu0 0
    %1746 = vmatprep.subr.bf16.mxu0 0
    %1747 = vmatpush1.bf16.xpose.msra.mxu0 0
    %1748 = vmatprep.subr.bf16.mxu0 0
    %1749 = vmatpush1.bf16.xpose.msra.mxu0 0
    %1750 = vmatprep.subr.bf16.mxu0 0
    %1751 = vmatpush1.bf16.xpose.msra.mxu0 0
    %1752 = vmatprep.mubr.bf16.mxu0 0
    %1753 = vmatmul.mubr.bf16.gmra.mrb[0].mxu0 %v1715
    %v1754 = vpop.f32.mrb[0].mxu0
    %v1755 = vadd.f32 0.0, %v1754
    %v1756 = vpop.f32.mrb[0].mxu0
    %v1757 = vpop.f32.mrb[0].mxu0
    %v1758 = vpop.f32.mrb[0].mxu0
    %1759 = vdwg.mxu0
    %1761 = vrot.lane.b32.xlu0 %v1681, 96
    %v1762 = vpop.permute.xlu0 %1761
    %1764 = vrot.lane.b32.xlu0 %v1693, 96
    %v1765 = vpop.permute.xlu0 %1764
    %v1767 = vsel %vm140, %v1762, 0
    %v1770 = vsel %vm140, %v1765, 0
    %1772 = vmatprep.subr.bf16.mxu0 0
    %1773 = vmatpush1.bf16.xpose.msra.mxu0 %v1770
    %1774 = vmatprep.subr.bf16.mxu0 0
    %1775 = vmatpush1.bf16.xpose.msra.mxu0 0
    %1776 = vmatprep.subr.bf16.mxu0 0
    %1777 = vmatpush1.bf16.xpose.msra.mxu0 0
    %1778 = vmatprep.subr.bf16.mxu0 0
    %1779 = vmatpush1.bf16.xpose.msra.mxu0 0
    %1780 = vmatprep.subr.bf16.mxu0 0
    %1781 = vmatpush1.bf16.xpose.msra.mxu0 0
    %1782 = vmatprep.subr.bf16.mxu0 0
    %1783 = vmatpush1.bf16.xpose.msra.mxu0 0
    %1784 = vmatprep.subr.bf16.mxu0 0
    %1785 = vmatpush1.bf16.xpose.msra.mxu0 0
    %1786 = vmatprep.subr.bf16.mxu0 0
    %1787 = vmatpush1.bf16.xpose.msra.mxu0 0
    %1788 = vmatprep.subr.bf16.mxu0 0
    %1789 = vmatpush1.bf16.xpose.msra.mxu0 0
    %1790 = vmatprep.subr.bf16.mxu0 0
    %1791 = vmatpush1.bf16.xpose.msra.mxu0 0
    %1792 = vmatprep.subr.bf16.mxu0 0
    %1793 = vmatpush1.bf16.xpose.msra.mxu0 0
    %1794 = vmatprep.subr.bf16.mxu0 0
    %1795 = vmatpush1.bf16.xpose.msra.mxu0 0
    %1796 = vmatprep.subr.bf16.mxu0 0
    %1797 = vmatpush1.bf16.xpose.msra.mxu0 0
    %1798 = vmatprep.subr.bf16.mxu0 0
    %1799 = vmatpush1.bf16.xpose.msra.mxu0 0
    %1800 = vmatprep.subr.bf16.mxu0 0
    %1801 = vmatpush1.bf16.xpose.msra.mxu0 0
    %1802 = vmatprep.subr.bf16.mxu0 0
    %1803 = vmatpush1.bf16.xpose.msra.mxu0 0
    %1804 = vmatprep.mubr.bf16.mxu0 0
    %1805 = vmatmul.mubr.bf16.gmra.mrb[0].mxu0 %v1767
    %v1806 = vpop.f32.mrb[0].mxu0
    %v1807 = vadd.f32 0.0, %v1806
    %v1808 = vpop.f32.mrb[0].mxu0
    %v1809 = vpop.f32.mrb[0].mxu0
    %v1810 = vpop.f32.mrb[0].mxu0
    %1811 = vdwg.mxu0
    %1813 = vrot.lane.b32.xlu0 %v1682, 96
    %v1814 = vpop.permute.xlu0 %1813
    %1816 = vrot.lane.b32.xlu0 %v1694, 96
    %v1817 = vpop.permute.xlu0 %1816
    %v1819 = vsel %vm140, %v1814, 0
    %v1822 = vsel %vm140, %v1817, 0
    %1824 = vmatprep.subr.bf16.mxu0 0
    %1825 = vmatpush1.bf16.xpose.msra.mxu0 %v1822
    %1826 = vmatprep.subr.bf16.mxu0 0
    %1827 = vmatpush1.bf16.xpose.msra.mxu0 0
    %1828 = vmatprep.subr.bf16.mxu0 0
    %1829 = vmatpush1.bf16.xpose.msra.mxu0 0
    %1830 = vmatprep.subr.bf16.mxu0 0
    %1831 = vmatpush1.bf16.xpose.msra.mxu0 0
    %1832 = vmatprep.subr.bf16.mxu0 0
    %1833 = vmatpush1.bf16.xpose.msra.mxu0 0
    %1834 = vmatprep.subr.bf16.mxu0 0
    %1835 = vmatpush1.bf16.xpose.msra.mxu0 0
    %1836 = vmatprep.subr.bf16.mxu0 0
    %1837 = vmatpush1.bf16.xpose.msra.mxu0 0
    %1838 = vmatprep.subr.bf16.mxu0 0
    %1839 = vmatpush1.bf16.xpose.msra.mxu0 0
    %1840 = vmatprep.subr.bf16.mxu0 0
    %1841 = vmatpush1.bf16.xpose.msra.mxu0 0
    %1842 = vmatprep.subr.bf16.mxu0 0
    %1843 = vmatpush1.bf16.xpose.msra.mxu0 0
    %1844 = vmatprep.subr.bf16.mxu0 0
    %1845 = vmatpush1.bf16.xpose.msra.mxu0 0
    %1846 = vmatprep.subr.bf16.mxu0 0
    %1847 = vmatpush1.bf16.xpose.msra.mxu0 0
    %1848 = vmatprep.subr.bf16.mxu0 0
    %1849 = vmatpush1.bf16.xpose.msra.mxu0 0
    %1850 = vmatprep.subr.bf16.mxu0 0
    %1851 = vmatpush1.bf16.xpose.msra.mxu0 0
    %1852 = vmatprep.subr.bf16.mxu0 0
    %1853 = vmatpush1.bf16.xpose.msra.mxu0 0
    %1854 = vmatprep.subr.bf16.mxu0 0
    %1855 = vmatpush1.bf16.xpose.msra.mxu0 0
    %1856 = vmatprep.mubr.bf16.mxu0 0
    %1857 = vmatmul.mubr.bf16.gmra.mrb[0].mxu0 %v1819
    %v1858 = vpop.f32.mrb[0].mxu0
    %v1859 = vadd.f32 0.0, %v1858
    %v1860 = vpop.f32.mrb[0].mxu0
    %v1861 = vpop.f32.mrb[0].mxu0
    %v1862 = vpop.f32.mrb[0].mxu0
    %1863 = vdwg.mxu0
    %1865 = vrot.lane.b32.xlu0 %v1683, 96
    %v1866 = vpop.permute.xlu0 %1865
    %1868 = vrot.lane.b32.xlu0 %v1695, 96
    %v1869 = vpop.permute.xlu0 %1868
    %v1871 = vsel %vm140, %v1866, 0
    %v1874 = vsel %vm140, %v1869, 0
    %1876 = vmatprep.subr.bf16.mxu0 0
    %1877 = vmatpush1.bf16.xpose.msra.mxu0 %v1874
    %1878 = vmatprep.subr.bf16.mxu0 0
    %1879 = vmatpush1.bf16.xpose.msra.mxu0 0
    %1880 = vmatprep.subr.bf16.mxu0 0
    %1881 = vmatpush1.bf16.xpose.msra.mxu0 0
    %1882 = vmatprep.subr.bf16.mxu0 0
    %1883 = vmatpush1.bf16.xpose.msra.mxu0 0
    %1884 = vmatprep.subr.bf16.mxu0 0
    %1885 = vmatpush1.bf16.xpose.msra.mxu0 0
    %1886 = vmatprep.subr.bf16.mxu0 0
    %1887 = vmatpush1.bf16.xpose.msra.mxu0 0
    %1888 = vmatprep.subr.bf16.mxu0 0
    %1889 = vmatpush1.bf16.xpose.msra.mxu0 0
    %1890 = vmatprep.subr.bf16.mxu0 0
    %1891 = vmatpush1.bf16.xpose.msra.mxu0 0
    %1892 = vmatprep.subr.bf16.mxu0 0
    %1893 = vmatpush1.bf16.xpose.msra.mxu0 0
    %1894 = vmatprep.subr.bf16.mxu0 0
    %1895 = vmatpush1.bf16.xpose.msra.mxu0 0
    %1896 = vmatprep.subr.bf16.mxu0 0
    %1897 = vmatpush1.bf16.xpose.msra.mxu0 0
    %1898 = vmatprep.subr.bf16.mxu0 0
    %1899 = vmatpush1.bf16.xpose.msra.mxu0 0
    %1900 = vmatprep.subr.bf16.mxu0 0
    %1901 = vmatpush1.bf16.xpose.msra.mxu0 0
    %1902 = vmatprep.subr.bf16.mxu0 0
    %1903 = vmatpush1.bf16.xpose.msra.mxu0 0
    %1904 = vmatprep.subr.bf16.mxu0 0
    %1905 = vmatpush1.bf16.xpose.msra.mxu0 0
    %1906 = vmatprep.subr.bf16.mxu0 0
    %1907 = vmatpush1.bf16.xpose.msra.mxu0 0
    %1908 = vmatprep.mubr.bf16.mxu0 0
    %1909 = vmatmul.mubr.bf16.gmra.mrb[0].mxu0 %v1871
    %v1910 = vpop.f32.mrb[0].mxu0
    %v1911 = vadd.f32 0.0, %v1910
    %v1912 = vpop.f32.mrb[0].mxu0
    %v1913 = vpop.f32.mrb[0].mxu0
    %v1914 = vpop.f32.mrb[0].mxu0
    %1915 = vdwg.mxu0
    %v1916 = vmul.f32 %v1755, 0.25
    %v1917 = vmul.f32 %v1807, 0.25
    %v1918 = vmul.f32 %v1859, 0.25
    %v1919 = vmul.f32 %v1911, 0.25
    %v1920 = vsel %vm567, %v1916, -inf
    %1921 = vmax.xlane.f32.xlu0 %v1920
    %v1922 = vpop.xlane.xlu0 %1921
    %v1923 = vsel %vm567, %v1917, -inf
    %1924 = vmax.xlane.f32.xlu0 %v1923
    %v1925 = vpop.xlane.xlu0 %1924
    %v1926 = vsel %vm567, %v1918, -inf
    %1927 = vmax.xlane.f32.xlu0 %v1926
    %v1928 = vpop.xlane.xlu0 %1927
    %v1929 = vsel %vm567, %v1919, -inf
    %1930 = vmax.xlane.f32.xlu0 %v1929
    %v1931 = vpop.xlane.xlu0 %1930
    %v1932 = vsub.f32 %v1916, %v1922
    %v1933 = vsub.f32 %v1917, %v1925
    %v1934 = vsub.f32 %v1918, %v1928
    %v1935 = vsub.f32 %v1919, %v1931
    %v1936 = vmul.f32 %v1932, 1.442695
    %v1937 = vpow.pop %v1936
    %v1938 = vmul.f32 %v1933, 1.442695
    %v1939 = vpow.pop %v1938
    %v1940 = vmul.f32 %v1934, 1.442695
    %v1941 = vpow.pop %v1940
    %v1942 = vmul.f32 %v1935, 1.442695
    %v1943 = vpow.pop %v1942
    %v1944 = vsel %vm567, %v1937, 0.0
    %1945 = vadd.xlane.f32.xlu0 %v1944
    %v1946 = vpop.xlane.xlu0 %1945
    %v1947 = vsel %vm567, %v1939, 0.0
    %1948 = vadd.xlane.f32.xlu0 %v1947
    %v1949 = vpop.xlane.xlu0 %1948
    %v1950 = vsel %vm567, %v1941, 0.0
    %1951 = vadd.xlane.f32.xlu0 %v1950
    %v1952 = vpop.xlane.xlu0 %1951
    %v1953 = vsel %vm567, %v1943, 0.0
    %1954 = vadd.xlane.f32.xlu0 %v1953
    %v1955 = vpop.xlane.xlu0 %1954
    %v1956 = vrcp.pop %v1946
    %v1957 = vrcp.pop %v1949
    %v1958 = vrcp.pop %v1952
    %v1959 = vrcp.pop %v1955
    %v1960 = vmul.f32 %v1937, %v1956
    %v1961 = vmul.f32 %v1939, %v1957
    %v1962 = vmul.f32 %v1941, %v1958
    %v1963 = vmul.f32 %v1943, %v1959
    %v1964 = vpack.c.bf16 %v1960, %v1960
    %v1965 = vpack.c.bf16 %v1961, %v1961
    %v1966 = vpack.c.bf16 %v1962, %v1962
    %v1967 = vpack.c.bf16 %v1963, %v1963
    %1969 = vrot.lane.b32.xlu0 %v1704, 96
    %v1970 = vpop.permute.xlu0 %1969
    %v1972 = vsel %vm567, %v1964, 0
    %v1975 = vsel %vm622, %v1970, 0
    %1977 = vmatprep.subr.bf16.mxu0 0
    %1978 = vmatpush1.bf16.msra.mxu0 %v1975
    %1979 = vmatprep.subr.bf16.mxu0 0
    %1980 = vmatpush1.bf16.msra.mxu0 0
    %1981 = vmatprep.subr.bf16.mxu0 0
    %1982 = vmatpush1.bf16.msra.mxu0 0
    %1983 = vmatprep.subr.bf16.mxu0 0
    %1984 = vmatpush1.bf16.msra.mxu0 0
    %1985 = vmatprep.subr.bf16.mxu0 0
    %1986 = vmatpush1.bf16.msra.mxu0 0
    %1987 = vmatprep.subr.bf16.mxu0 0
    %1988 = vmatpush1.bf16.msra.mxu0 0
    %1989 = vmatprep.subr.bf16.mxu0 0
    %1990 = vmatpush1.bf16.msra.mxu0 0
    %1991 = vmatprep.subr.bf16.mxu0 0
    %1992 = vmatpush1.bf16.msra.mxu0 0
    %1993 = vmatprep.subr.bf16.mxu0 0
    %1994 = vmatpush1.bf16.msra.mxu0 0
    %1995 = vmatprep.subr.bf16.mxu0 0
    %1996 = vmatpush1.bf16.msra.mxu0 0
    %1997 = vmatprep.subr.bf16.mxu0 0
    %1998 = vmatpush1.bf16.msra.mxu0 0
    %1999 = vmatprep.subr.bf16.mxu0 0
    %2000 = vmatpush1.bf16.msra.mxu0 0
    %2001 = vmatprep.subr.bf16.mxu0 0
    %2002 = vmatpush1.bf16.msra.mxu0 0
    %2003 = vmatprep.subr.bf16.mxu0 0
    %2004 = vmatpush1.bf16.msra.mxu0 0
    %2005 = vmatprep.subr.bf16.mxu0 0
    %2006 = vmatpush1.bf16.msra.mxu0 0
    %2007 = vmatprep.subr.bf16.mxu0 0
    %2008 = vmatpush1.bf16.msra.mxu0 0
    %2009 = vmatprep.mubr.bf16.mxu0 0
    %2010 = vmatmul.mubr.bf16.gmra.mrb[0].mxu0 %v1972
    %v2011 = vpop.f32.mrb[0].mxu0
    %v2012 = vadd.f32 0.0, %v2011
    %v2013 = vpop.f32.mrb[0].mxu0
    %v2014 = vpop.f32.mrb[0].mxu0
    %v2015 = vpop.f32.mrb[0].mxu0
    %2016 = vdwg.mxu0
    %2018 = vrot.lane.b32.xlu0 %v1705, 96
    %v2019 = vpop.permute.xlu0 %2018
    %v2021 = vsel %vm567, %v1965, 0
    %v2024 = vsel %vm622, %v2019, 0
    %2026 = vmatprep.subr.bf16.mxu0 0
    %2027 = vmatpush1.bf16.msra.mxu0 %v2024
    %2028 = vmatprep.subr.bf16.mxu0 0
    %2029 = vmatpush1.bf16.msra.mxu0 0
    %2030 = vmatprep.subr.bf16.mxu0 0
    %2031 = vmatpush1.bf16.msra.mxu0 0
    %2032 = vmatprep.subr.bf16.mxu0 0
    %2033 = vmatpush1.bf16.msra.mxu0 0
    %2034 = vmatprep.subr.bf16.mxu0 0
    %2035 = vmatpush1.bf16.msra.mxu0 0
    %2036 = vmatprep.subr.bf16.mxu0 0
    %2037 = vmatpush1.bf16.msra.mxu0 0
    %2038 = vmatprep.subr.bf16.mxu0 0
    %2039 = vmatpush1.bf16.msra.mxu0 0
    %2040 = vmatprep.subr.bf16.mxu0 0
    %2041 = vmatpush1.bf16.msra.mxu0 0
    %2042 = vmatprep.subr.bf16.mxu0 0
    %2043 = vmatpush1.bf16.msra.mxu0 0
    %2044 = vmatprep.subr.bf16.mxu0 0
    %2045 = vmatpush1.bf16.msra.mxu0 0
    %2046 = vmatprep.subr.bf16.mxu0 0
    %2047 = vmatpush1.bf16.msra.mxu0 0
    %2048 = vmatprep.subr.bf16.mxu0 0
    %2049 = vmatpush1.bf16.msra.mxu0 0
    %2050 = vmatprep.subr.bf16.mxu0 0
    %2051 = vmatpush1.bf16.msra.mxu0 0
    %2052 = vmatprep.subr.bf16.mxu0 0
    %2053 = vmatpush1.bf16.msra.mxu0 0
    %2054 = vmatprep.subr.bf16.mxu0 0
    %2055 = vmatpush1.bf16.msra.mxu0 0
    %2056 = vmatprep.subr.bf16.mxu0 0
    %2057 = vmatpush1.bf16.msra.mxu0 0
    %2058 = vmatprep.mubr.bf16.mxu0 0
    %2059 = vmatmul.mubr.bf16.gmra.mrb[0].mxu0 %v2021
    %v2060 = vpop.f32.mrb[0].mxu0
    %v2061 = vadd.f32 0.0, %v2060
    %v2062 = vpop.f32.mrb[0].mxu0
    %v2063 = vpop.f32.mrb[0].mxu0
    %v2064 = vpop.f32.mrb[0].mxu0
    %2065 = vdwg.mxu0
    %2067 = vrot.lane.b32.xlu0 %v1706, 96
    %v2068 = vpop.permute.xlu0 %2067
    %v2070 = vsel %vm567, %v1966, 0
    %v2073 = vsel %vm622, %v2068, 0
    %2075 = vmatprep.subr.bf16.mxu0 0
    %2076 = vmatpush1.bf16.msra.mxu0 %v2073
    %2077 = vmatprep.subr.bf16.mxu0 0
    %2078 = vmatpush1.bf16.msra.mxu0 0
    %2079 = vmatprep.subr.bf16.mxu0 0
    %2080 = vmatpush1.bf16.msra.mxu0 0
    %2081 = vmatprep.subr.bf16.mxu0 0
    %2082 = vmatpush1.bf16.msra.mxu0 0
    %2083 = vmatprep.subr.bf16.mxu0 0
    %2084 = vmatpush1.bf16.msra.mxu0 0
    %2085 = vmatprep.subr.bf16.mxu0 0
    %2086 = vmatpush1.bf16.msra.mxu0 0
    %2087 = vmatprep.subr.bf16.mxu0 0
    %2088 = vmatpush1.bf16.msra.mxu0 0
    %2089 = vmatprep.subr.bf16.mxu0 0
    %2090 = vmatpush1.bf16.msra.mxu0 0
    %2091 = vmatprep.subr.bf16.mxu0 0
    %2092 = vmatpush1.bf16.msra.mxu0 0
    %2093 = vmatprep.subr.bf16.mxu0 0
    %2094 = vmatpush1.bf16.msra.mxu0 0
    %2095 = vmatprep.subr.bf16.mxu0 0
    %2096 = vmatpush1.bf16.msra.mxu0 0
    %2097 = vmatprep.subr.bf16.mxu0 0
    %2098 = vmatpush1.bf16.msra.mxu0 0
    %2099 = vmatprep.subr.bf16.mxu0 0
    %2100 = vmatpush1.bf16.msra.mxu0 0
    %2101 = vmatprep.subr.bf16.mxu0 0
    %2102 = vmatpush1.bf16.msra.mxu0 0
    %2103 = vmatprep.subr.bf16.mxu0 0
    %2104 = vmatpush1.bf16.msra.mxu0 0
    %2105 = vmatprep.subr.bf16.mxu0 0
    %2106 = vmatpush1.bf16.msra.mxu0 0
    %2107 = vmatprep.mubr.bf16.mxu0 0
    %2108 = vmatmul.mubr.bf16.gmra.mrb[0].mxu0 %v2070
    %v2109 = vpop.f32.mrb[0].mxu0
    %v2110 = vadd.f32 0.0, %v2109
    %v2111 = vpop.f32.mrb[0].mxu0
    %v2112 = vpop.f32.mrb[0].mxu0
    %v2113 = vpop.f32.mrb[0].mxu0
    %2114 = vdwg.mxu0
    %2116 = vrot.lane.b32.xlu0 %v1707, 96
    %v2117 = vpop.permute.xlu0 %2116
    %v2119 = vsel %vm567, %v1967, 0
    %v2122 = vsel %vm622, %v2117, 0
    %2124 = vmatprep.subr.bf16.mxu0 0
    %2125 = vmatpush1.bf16.msra.mxu0 %v2122
    %2126 = vmatprep.subr.bf16.mxu0 0
    %2127 = vmatpush1.bf16.msra.mxu0 0
    %2128 = vmatprep.subr.bf16.mxu0 0
    %2129 = vmatpush1.bf16.msra.mxu0 0
    %2130 = vmatprep.subr.bf16.mxu0 0
    %2131 = vmatpush1.bf16.msra.mxu0 0
    %2132 = vmatprep.subr.bf16.mxu0 0
    %2133 = vmatpush1.bf16.msra.mxu0 0
    %2134 = vmatprep.subr.bf16.mxu0 0
    %2135 = vmatpush1.bf16.msra.mxu0 0
    %2136 = vmatprep.subr.bf16.mxu0 0
    %2137 = vmatpush1.bf16.msra.mxu0 0
    %2138 = vmatprep.subr.bf16.mxu0 0
    %2139 = vmatpush1.bf16.msra.mxu0 0
    %2140 = vmatprep.subr.bf16.mxu0 0
    %2141 = vmatpush1.bf16.msra.mxu0 0
    %2142 = vmatprep.subr.bf16.mxu0 0
    %2143 = vmatpush1.bf16.msra.mxu0 0
    %2144 = vmatprep.subr.bf16.mxu0 0
    %2145 = vmatpush1.bf16.msra.mxu0 0
    %2146 = vmatprep.subr.bf16.mxu0 0
    %2147 = vmatpush1.bf16.msra.mxu0 0
    %2148 = vmatprep.subr.bf16.mxu0 0
    %2149 = vmatpush1.bf16.msra.mxu0 0
    %2150 = vmatprep.subr.bf16.mxu0 0
    %2151 = vmatpush1.bf16.msra.mxu0 0
    %2152 = vmatprep.subr.bf16.mxu0 0
    %2153 = vmatpush1.bf16.msra.mxu0 0
    %2154 = vmatprep.subr.bf16.mxu0 0
    %2155 = vmatpush1.bf16.msra.mxu0 0
    %2156 = vmatprep.mubr.bf16.mxu0 0
    %2157 = vmatmul.mubr.bf16.gmra.mrb[0].mxu0 %v2119
    %v2158 = vpop.f32.mrb[0].mxu0
    %v2159 = vadd.f32 0.0, %v2158
    %v2160 = vpop.f32.mrb[0].mxu0
    %v2161 = vpop.f32.mrb[0].mxu0
    %v2162 = vpop.f32.mrb[0].mxu0
    %2163 = vdwg.mxu0
    %2166 = vrot.lane.b32.xlu0 %v2110, 16
    %v2167 = vpop.permute.xlu0 %2166
    %2168 = vrot.lane.b32.xlu0 %v2159, 16
    %v2169 = vpop.permute.xlu0 %2168
    %v2172 = vsel %vm140, %v2012, %v2167
    %v2173 = vsel %vm140, %v2061, %v2169
    %v2174 = vlaneseq
    %v2175 = vshrl.u32 %v2174, 7
    %v2176 = vsub.s32 0, %v2175
    %v2177 = vrot.slane %v1632, %v2176
    %v2178 = vlaneseq
    %v2179 = vshrl.u32 %v2178, 7
    %v2180 = vsub.s32 0, %v2179
    %v2181 = vrot.slane %v1639, %v2180
    %v2184 = vmul.f32 %v2177, %v1613
    %v2185 = vmul.f32 %v2181, %v1615
    %2188 = vrot.lane.b32.xlu0 %v1612, 32
    %v2189 = vpop.permute.xlu0 %2188
    %2190 = vrot.lane.b32.xlu0 %v1614, 32
    %v2191 = vpop.permute.xlu0 %2190
    %v2194 = vmul.f32 %v2177, %v2189
    %v2195 = vmul.f32 %v2181, %v2191
    %2198 = vrot.lane.b32.xlu0 %v1613, 96
    %v2199 = vpop.permute.xlu0 %2198
    %2200 = vrot.lane.b32.xlu0 %v1615, 96
    %v2201 = vpop.permute.xlu0 %2200
    %v2204 = vmul.f32 %v2177, %v2199
    %v2205 = vmul.f32 %v2181, %v2201
    %2208 = vrot.lane.b32.xlu0 %v2184, 112
    %v2209 = vpop.permute.xlu0 %2208
    %2210 = vrot.lane.b32.xlu0 %v2185, 112
    %v2211 = vpop.permute.xlu0 %2210
    %v2214 = vpack.c.bf16 %v2184, %v2184
    %v2215 = vpack.c.bf16 %v2185, %v2185
    %v2216 = vpack.c.bf16 %v2209, %v2209
    %v2217 = vpack.c.bf16 %v2211, %v2211
    %2220 = vrot.lane.b32.xlu0 %v2194, 112
    %v2221 = vpop.permute.xlu0 %2220
    %2222 = vrot.lane.b32.xlu0 %v2195, 112
    %v2223 = vpop.permute.xlu0 %2222
    %v2226 = vpack.c.bf16 %v2194, %v2194
    %v2227 = vpack.c.bf16 %v2195, %v2195
    %v2228 = vpack.c.bf16 %v2221, %v2221
    %v2229 = vpack.c.bf16 %v2223, %v2223
    %2232 = vrot.lane.b32.xlu0 %v2204, 112
    %v2233 = vpop.permute.xlu0 %2232
    %2234 = vrot.lane.b32.xlu0 %v2205, 112
    %v2235 = vpop.permute.xlu0 %2234
    %v2238 = vpack.c.bf16 %v2204, %v2204
    %v2239 = vpack.c.bf16 %v2205, %v2205
    %v2240 = vpack.c.bf16 %v2233, %v2233
    %v2241 = vpack.c.bf16 %v2235, %v2235
    %v2243 = vsel %vm140, %v2214, 0
    %v2246 = vsel %vm140, %v2226, 0
    %2248 = vmatprep.subr.bf16.mxu0 0
    %2249 = vmatpush1.bf16.xpose.msra.mxu0 %v2246
    %2250 = vmatprep.subr.bf16.mxu0 0
    %2251 = vmatpush1.bf16.xpose.msra.mxu0 0
    %2252 = vmatprep.subr.bf16.mxu0 0
    %2253 = vmatpush1.bf16.xpose.msra.mxu0 0
    %2254 = vmatprep.subr.bf16.mxu0 0
    %2255 = vmatpush1.bf16.xpose.msra.mxu0 0
    %2256 = vmatprep.subr.bf16.mxu0 0
    %2257 = vmatpush1.bf16.xpose.msra.mxu0 0
    %2258 = vmatprep.subr.bf16.mxu0 0
    %2259 = vmatpush1.bf16.xpose.msra.mxu0 0
    %2260 = vmatprep.subr.bf16.mxu0 0
    %2261 = vmatpush1.bf16.xpose.msra.mxu0 0
    %2262 = vmatprep.subr.bf16.mxu0 0
    %2263 = vmatpush1.bf16.xpose.msra.mxu0 0
    %2264 = vmatprep.subr.bf16.mxu0 0
    %2265 = vmatpush1.bf16.xpose.msra.mxu0 0
    %2266 = vmatprep.subr.bf16.mxu0 0
    %2267 = vmatpush1.bf16.xpose.msra.mxu0 0
    %2268 = vmatprep.subr.bf16.mxu0 0
    %2269 = vmatpush1.bf16.xpose.msra.mxu0 0
    %2270 = vmatprep.subr.bf16.mxu0 0
    %2271 = vmatpush1.bf16.xpose.msra.mxu0 0
    %2272 = vmatprep.subr.bf16.mxu0 0
    %2273 = vmatpush1.bf16.xpose.msra.mxu0 0
    %2274 = vmatprep.subr.bf16.mxu0 0
    %2275 = vmatpush1.bf16.xpose.msra.mxu0 0
    %2276 = vmatprep.subr.bf16.mxu0 0
    %2277 = vmatpush1.bf16.xpose.msra.mxu0 0
    %2278 = vmatprep.subr.bf16.mxu0 0
    %2279 = vmatpush1.bf16.xpose.msra.mxu0 0
    %2280 = vmatprep.mubr.bf16.mxu0 0
    %2281 = vmatmul.mubr.bf16.gmra.mrb[0].mxu0 %v2243
    %v2282 = vpop.f32.mrb[0].mxu0
    %v2283 = vadd.f32 0.0, %v2282
    %v2284 = vpop.f32.mrb[0].mxu0
    %v2285 = vpop.f32.mrb[0].mxu0
    %v2286 = vpop.f32.mrb[0].mxu0
    %2287 = vdwg.mxu0
    %v2289 = vsel %vm140, %v2215, 0
    %v2292 = vsel %vm140, %v2227, 0
    %2294 = vmatprep.subr.bf16.mxu0 0
    %2295 = vmatpush1.bf16.xpose.msra.mxu0 %v2292
    %2296 = vmatprep.subr.bf16.mxu0 0
    %2297 = vmatpush1.bf16.xpose.msra.mxu0 0
    %2298 = vmatprep.subr.bf16.mxu0 0
    %2299 = vmatpush1.bf16.xpose.msra.mxu0 0
    %2300 = vmatprep.subr.bf16.mxu0 0
    %2301 = vmatpush1.bf16.xpose.msra.mxu0 0
    %2302 = vmatprep.subr.bf16.mxu0 0
    %2303 = vmatpush1.bf16.xpose.msra.mxu0 0
    %2304 = vmatprep.subr.bf16.mxu0 0
    %2305 = vmatpush1.bf16.xpose.msra.mxu0 0
    %2306 = vmatprep.subr.bf16.mxu0 0
    %2307 = vmatpush1.bf16.xpose.msra.mxu0 0
    %2308 = vmatprep.subr.bf16.mxu0 0
    %2309 = vmatpush1.bf16.xpose.msra.mxu0 0
    %2310 = vmatprep.subr.bf16.mxu0 0
    %2311 = vmatpush1.bf16.xpose.msra.mxu0 0
    %2312 = vmatprep.subr.bf16.mxu0 0
    %2313 = vmatpush1.bf16.xpose.msra.mxu0 0
    %2314 = vmatprep.subr.bf16.mxu0 0
    %2315 = vmatpush1.bf16.xpose.msra.mxu0 0
    %2316 = vmatprep.subr.bf16.mxu0 0
    %2317 = vmatpush1.bf16.xpose.msra.mxu0 0
    %2318 = vmatprep.subr.bf16.mxu0 0
    %2319 = vmatpush1.bf16.xpose.msra.mxu0 0
    %2320 = vmatprep.subr.bf16.mxu0 0
    %2321 = vmatpush1.bf16.xpose.msra.mxu0 0
    %2322 = vmatprep.subr.bf16.mxu0 0
    %2323 = vmatpush1.bf16.xpose.msra.mxu0 0
    %2324 = vmatprep.subr.bf16.mxu0 0
    %2325 = vmatpush1.bf16.xpose.msra.mxu0 0
    %2326 = vmatprep.mubr.bf16.mxu0 0
    %2327 = vmatmul.mubr.bf16.gmra.mrb[0].mxu0 %v2289
    %v2328 = vpop.f32.mrb[0].mxu0
    %v2329 = vadd.f32 0.0, %v2328
    %v2330 = vpop.f32.mrb[0].mxu0
    %v2331 = vpop.f32.mrb[0].mxu0
    %v2332 = vpop.f32.mrb[0].mxu0
    %2333 = vdwg.mxu0
    %v2335 = vsel %vm140, %v2216, 0
    %v2338 = vsel %vm140, %v2228, 0
    %2340 = vmatprep.subr.bf16.mxu0 0
    %2341 = vmatpush1.bf16.xpose.msra.mxu0 %v2338
    %2342 = vmatprep.subr.bf16.mxu0 0
    %2343 = vmatpush1.bf16.xpose.msra.mxu0 0
    %2344 = vmatprep.subr.bf16.mxu0 0
    %2345 = vmatpush1.bf16.xpose.msra.mxu0 0
    %2346 = vmatprep.subr.bf16.mxu0 0
    %2347 = vmatpush1.bf16.xpose.msra.mxu0 0
    %2348 = vmatprep.subr.bf16.mxu0 0
    %2349 = vmatpush1.bf16.xpose.msra.mxu0 0
    %2350 = vmatprep.subr.bf16.mxu0 0
    %2351 = vmatpush1.bf16.xpose.msra.mxu0 0
    %2352 = vmatprep.subr.bf16.mxu0 0
    %2353 = vmatpush1.bf16.xpose.msra.mxu0 0
    %2354 = vmatprep.subr.bf16.mxu0 0
    %2355 = vmatpush1.bf16.xpose.msra.mxu0 0
    %2356 = vmatprep.subr.bf16.mxu0 0
    %2357 = vmatpush1.bf16.xpose.msra.mxu0 0
    %2358 = vmatprep.subr.bf16.mxu0 0
    %2359 = vmatpush1.bf16.xpose.msra.mxu0 0
    %2360 = vmatprep.subr.bf16.mxu0 0
    %2361 = vmatpush1.bf16.xpose.msra.mxu0 0
    %2362 = vmatprep.subr.bf16.mxu0 0
    %2363 = vmatpush1.bf16.xpose.msra.mxu0 0
    %2364 = vmatprep.subr.bf16.mxu0 0
    %2365 = vmatpush1.bf16.xpose.msra.mxu0 0
    %2366 = vmatprep.subr.bf16.mxu0 0
    %2367 = vmatpush1.bf16.xpose.msra.mxu0 0
    %2368 = vmatprep.subr.bf16.mxu0 0
    %2369 = vmatpush1.bf16.xpose.msra.mxu0 0
    %2370 = vmatprep.subr.bf16.mxu0 0
    %2371 = vmatpush1.bf16.xpose.msra.mxu0 0
    %2372 = vmatprep.mubr.bf16.mxu0 0
    %2373 = vmatmul.mubr.bf16.gmra.mrb[0].mxu0 %v2335
    %v2374 = vpop.f32.mrb[0].mxu0
    %v2375 = vadd.f32 0.0, %v2374
    %v2376 = vpop.f32.mrb[0].mxu0
    %v2377 = vpop.f32.mrb[0].mxu0
    %v2378 = vpop.f32.mrb[0].mxu0
    %2379 = vdwg.mxu0
    %v2381 = vsel %vm140, %v2217, 0
    %v2384 = vsel %vm140, %v2229, 0
    %2386 = vmatprep.subr.bf16.mxu0 0
    %2387 = vmatpush1.bf16.xpose.msra.mxu0 %v2384
    %2388 = vmatprep.subr.bf16.mxu0 0
    %2389 = vmatpush1.bf16.xpose.msra.mxu0 0
    %2390 = vmatprep.subr.bf16.mxu0 0
    %2391 = vmatpush1.bf16.xpose.msra.mxu0 0
    %2392 = vmatprep.subr.bf16.mxu0 0
    %2393 = vmatpush1.bf16.xpose.msra.mxu0 0
    %2394 = vmatprep.subr.bf16.mxu0 0
    %2395 = vmatpush1.bf16.xpose.msra.mxu0 0
    %2396 = vmatprep.subr.bf16.mxu0 0
    %2397 = vmatpush1.bf16.xpose.msra.mxu0 0
    %2398 = vmatprep.subr.bf16.mxu0 0
    %2399 = vmatpush1.bf16.xpose.msra.mxu0 0
    %2400 = vmatprep.subr.bf16.mxu0 0
    %2401 = vmatpush1.bf16.xpose.msra.mxu0 0
    %2402 = vmatprep.subr.bf16.mxu0 0
    %2403 = vmatpush1.bf16.xpose.msra.mxu0 0
    %2404 = vmatprep.subr.bf16.mxu0 0
    %2405 = vmatpush1.bf16.xpose.msra.mxu0 0
    %2406 = vmatprep.subr.bf16.mxu0 0
    %2407 = vmatpush1.bf16.xpose.msra.mxu0 0
    %2408 = vmatprep.subr.bf16.mxu0 0
    %2409 = vmatpush1.bf16.xpose.msra.mxu0 0
    %2410 = vmatprep.subr.bf16.mxu0 0
    %2411 = vmatpush1.bf16.xpose.msra.mxu0 0
    %2412 = vmatprep.subr.bf16.mxu0 0
    %2413 = vmatpush1.bf16.xpose.msra.mxu0 0
    %2414 = vmatprep.subr.bf16.mxu0 0
    %2415 = vmatpush1.bf16.xpose.msra.mxu0 0
    %2416 = vmatprep.subr.bf16.mxu0 0
    %2417 = vmatpush1.bf16.xpose.msra.mxu0 0
    %2418 = vmatprep.mubr.bf16.mxu0 0
    %2419 = vmatmul.mubr.bf16.gmra.mrb[0].mxu0 %v2381
    %v2420 = vpop.f32.mrb[0].mxu0
    %v2421 = vadd.f32 0.0, %v2420
    %v2422 = vpop.f32.mrb[0].mxu0
    %v2423 = vpop.f32.mrb[0].mxu0
    %v2424 = vpop.f32.mrb[0].mxu0
    %2425 = vdwg.mxu0
    %v2426 = vmul.f32 %v2283, 0.25
    %v2427 = vmul.f32 %v2329, 0.25
    %v2428 = vmul.f32 %v2375, 0.25
    %v2429 = vmul.f32 %v2421, 0.25
    %v2430 = vsel %vm567, %v2426, -inf
    %2431 = vmax.xlane.f32.xlu0 %v2430
    %v2432 = vpop.xlane.xlu0 %2431
    %v2433 = vsel %vm567, %v2427, -inf
    %2434 = vmax.xlane.f32.xlu0 %v2433
    %v2435 = vpop.xlane.xlu0 %2434
    %v2436 = vsel %vm567, %v2428, -inf
    %2437 = vmax.xlane.f32.xlu0 %v2436
    %v2438 = vpop.xlane.xlu0 %2437
    %v2439 = vsel %vm567, %v2429, -inf
    %2440 = vmax.xlane.f32.xlu0 %v2439
    %v2441 = vpop.xlane.xlu0 %2440
    %v2442 = vsub.f32 %v2426, %v2432
    %v2443 = vsub.f32 %v2427, %v2435
    %v2444 = vsub.f32 %v2428, %v2438
    %v2445 = vsub.f32 %v2429, %v2441
    %v2446 = vmul.f32 %v2442, 1.442695
    %v2447 = vpow.pop %v2446
    %v2448 = vmul.f32 %v2443, 1.442695
    %v2449 = vpow.pop %v2448
    %v2450 = vmul.f32 %v2444, 1.442695
    %v2451 = vpow.pop %v2450
    %v2452 = vmul.f32 %v2445, 1.442695
    %v2453 = vpow.pop %v2452
    %v2454 = vsel %vm567, %v2447, 0.0
    %2455 = vadd.xlane.f32.xlu0 %v2454
    %v2456 = vpop.xlane.xlu0 %2455
    %v2457 = vsel %vm567, %v2449, 0.0
    %2458 = vadd.xlane.f32.xlu0 %v2457
    %v2459 = vpop.xlane.xlu0 %2458
    %v2460 = vsel %vm567, %v2451, 0.0
    %2461 = vadd.xlane.f32.xlu0 %v2460
    %v2462 = vpop.xlane.xlu0 %2461
    %v2463 = vsel %vm567, %v2453, 0.0
    %2464 = vadd.xlane.f32.xlu0 %v2463
    %v2465 = vpop.xlane.xlu0 %2464
    %v2466 = vrcp.pop %v2456
    %v2467 = vrcp.pop %v2459
    %v2468 = vrcp.pop %v2462
    %v2469 = vrcp.pop %v2465
    %v2470 = vmul.f32 %v2447, %v2466
    %v2471 = vmul.f32 %v2449, %v2467
    %v2472 = vmul.f32 %v2451, %v2468
    %v2473 = vmul.f32 %v2453, %v2469
    %v2474 = vpack.c.bf16 %v2470, %v2470
    %v2475 = vpack.c.bf16 %v2471, %v2471
    %v2476 = vpack.c.bf16 %v2472, %v2472
    %v2477 = vpack.c.bf16 %v2473, %v2473
    %v2479 = vsel %vm567, %v2474, 0
    %v2482 = vsel %vm622, %v2238, 0
    %2484 = vmatprep.subr.bf16.mxu0 0
    %2485 = vmatpush1.bf16.msra.mxu0 %v2482
    %2486 = vmatprep.subr.bf16.mxu0 0
    %2487 = vmatpush1.bf16.msra.mxu0 0
    %2488 = vmatprep.subr.bf16.mxu0 0
    %2489 = vmatpush1.bf16.msra.mxu0 0
    %2490 = vmatprep.subr.bf16.mxu0 0
    %2491 = vmatpush1.bf16.msra.mxu0 0
    %2492 = vmatprep.subr.bf16.mxu0 0
    %2493 = vmatpush1.bf16.msra.mxu0 0
    %2494 = vmatprep.subr.bf16.mxu0 0
    %2495 = vmatpush1.bf16.msra.mxu0 0
    %2496 = vmatprep.subr.bf16.mxu0 0
    %2497 = vmatpush1.bf16.msra.mxu0 0
    %2498 = vmatprep.subr.bf16.mxu0 0
    %2499 = vmatpush1.bf16.msra.mxu0 0
    %2500 = vmatprep.subr.bf16.mxu0 0
    %2501 = vmatpush1.bf16.msra.mxu0 0
    %2502 = vmatprep.subr.bf16.mxu0 0
    %2503 = vmatpush1.bf16.msra.mxu0 0
    %2504 = vmatprep.subr.bf16.mxu0 0
    %2505 = vmatpush1.bf16.msra.mxu0 0
    %2506 = vmatprep.subr.bf16.mxu0 0
    %2507 = vmatpush1.bf16.msra.mxu0 0
    %2508 = vmatprep.subr.bf16.mxu0 0
    %2509 = vmatpush1.bf16.msra.mxu0 0
    %2510 = vmatprep.subr.bf16.mxu0 0
    %2511 = vmatpush1.bf16.msra.mxu0 0
    %2512 = vmatprep.subr.bf16.mxu0 0
    %2513 = vmatpush1.bf16.msra.mxu0 0
    %2514 = vmatprep.subr.bf16.mxu0 0
    %2515 = vmatpush1.bf16.msra.mxu0 0
    %2516 = vmatprep.mubr.bf16.mxu0 0
    %2517 = vmatmul.mubr.bf16.gmra.mrb[0].mxu0 %v2479
    %v2518 = vpop.f32.mrb[0].mxu0
    %v2519 = vadd.f32 0.0, %v2518
    %v2520 = vpop.f32.mrb[0].mxu0
    %v2521 = vpop.f32.mrb[0].mxu0
    %v2522 = vpop.f32.mrb[0].mxu0
    %2523 = vdwg.mxu0
    %v2525 = vsel %vm567, %v2475, 0
    %v2528 = vsel %vm622, %v2239, 0
    %2530 = vmatprep.subr.bf16.mxu0 0
    %2531 = vmatpush1.bf16.msra.mxu0 %v2528
    %2532 = vmatprep.subr.bf16.mxu0 0
    %2533 = vmatpush1.bf16.msra.mxu0 0
    %2534 = vmatprep.subr.bf16.mxu0 0
    %2535 = vmatpush1.bf16.msra.mxu0 0
    %2536 = vmatprep.subr.bf16.mxu0 0
    %2537 = vmatpush1.bf16.msra.mxu0 0
    %2538 = vmatprep.subr.bf16.mxu0 0
    %2539 = vmatpush1.bf16.msra.mxu0 0
    %2540 = vmatprep.subr.bf16.mxu0 0
    %2541 = vmatpush1.bf16.msra.mxu0 0
    %2542 = vmatprep.subr.bf16.mxu0 0
    %2543 = vmatpush1.bf16.msra.mxu0 0
    %2544 = vmatprep.subr.bf16.mxu0 0
    %2545 = vmatpush1.bf16.msra.mxu0 0
    %2546 = vmatprep.subr.bf16.mxu0 0
    %2547 = vmatpush1.bf16.msra.mxu0 0
    %2548 = vmatprep.subr.bf16.mxu0 0
    %2549 = vmatpush1.bf16.msra.mxu0 0
    %2550 = vmatprep.subr.bf16.mxu0 0
    %2551 = vmatpush1.bf16.msra.mxu0 0
    %2552 = vmatprep.subr.bf16.mxu0 0
    %2553 = vmatpush1.bf16.msra.mxu0 0
    %2554 = vmatprep.subr.bf16.mxu0 0
    %2555 = vmatpush1.bf16.msra.mxu0 0
    %2556 = vmatprep.subr.bf16.mxu0 0
    %2557 = vmatpush1.bf16.msra.mxu0 0
    %2558 = vmatprep.subr.bf16.mxu0 0
    %2559 = vmatpush1.bf16.msra.mxu0 0
    %2560 = vmatprep.subr.bf16.mxu0 0
    %2561 = vmatpush1.bf16.msra.mxu0 0
    %2562 = vmatprep.mubr.bf16.mxu0 0
    %2563 = vmatmul.mubr.bf16.gmra.mrb[0].mxu0 %v2525
    %v2564 = vpop.f32.mrb[0].mxu0
    %v2565 = vadd.f32 0.0, %v2564
    %v2566 = vpop.f32.mrb[0].mxu0
    %v2567 = vpop.f32.mrb[0].mxu0
    %v2568 = vpop.f32.mrb[0].mxu0
    %2569 = vdwg.mxu0
    %v2571 = vsel %vm567, %v2476, 0
    %v2574 = vsel %vm622, %v2240, 0
    %2576 = vmatprep.subr.bf16.mxu0 0
    %2577 = vmatpush1.bf16.msra.mxu0 %v2574
    %2578 = vmatprep.subr.bf16.mxu0 0
    %2579 = vmatpush1.bf16.msra.mxu0 0
    %2580 = vmatprep.subr.bf16.mxu0 0
    %2581 = vmatpush1.bf16.msra.mxu0 0
    %2582 = vmatprep.subr.bf16.mxu0 0
    %2583 = vmatpush1.bf16.msra.mxu0 0
    %2584 = vmatprep.subr.bf16.mxu0 0
    %2585 = vmatpush1.bf16.msra.mxu0 0
    %2586 = vmatprep.subr.bf16.mxu0 0
    %2587 = vmatpush1.bf16.msra.mxu0 0
    %2588 = vmatprep.subr.bf16.mxu0 0
    %2589 = vmatpush1.bf16.msra.mxu0 0
    %2590 = vmatprep.subr.bf16.mxu0 0
    %2591 = vmatpush1.bf16.msra.mxu0 0
    %2592 = vmatprep.subr.bf16.mxu0 0
    %2593 = vmatpush1.bf16.msra.mxu0 0
    %2594 = vmatprep.subr.bf16.mxu0 0
    %2595 = vmatpush1.bf16.msra.mxu0 0
    %2596 = vmatprep.subr.bf16.mxu0 0
    %2597 = vmatpush1.bf16.msra.mxu0 0
    %2598 = vmatprep.subr.bf16.mxu0 0
    %2599 = vmatpush1.bf16.msra.mxu0 0
    %2600 = vmatprep.subr.bf16.mxu0 0
    %2601 = vmatpush1.bf16.msra.mxu0 0
    %2602 = vmatprep.subr.bf16.mxu0 0
    %2603 = vmatpush1.bf16.msra.mxu0 0
    %2604 = vmatprep.subr.bf16.mxu0 0
    %2605 = vmatpush1.bf16.msra.mxu0 0
    %2606 = vmatprep.subr.bf16.mxu0 0
    %2607 = vmatpush1.bf16.msra.mxu0 0
    %2608 = vmatprep.mubr.bf16.mxu0 0
    %2609 = vmatmul.mubr.bf16.gmra.mrb[0].mxu0 %v2571
    %v2610 = vpop.f32.mrb[0].mxu0
    %v2611 = vadd.f32 0.0, %v2610
    %v2612 = vpop.f32.mrb[0].mxu0
    %v2613 = vpop.f32.mrb[0].mxu0
    %v2614 = vpop.f32.mrb[0].mxu0
    %2615 = vdwg.mxu0
    %v2617 = vsel %vm567, %v2477, 0
    %v2620 = vsel %vm622, %v2241, 0
    %2622 = vmatprep.subr.bf16.mxu0 0
    %2623 = vmatpush1.bf16.msra.mxu0 %v2620
    %2624 = vmatprep.subr.bf16.mxu0 0
    %2625 = vmatpush1.bf16.msra.mxu0 0
    %2626 = vmatprep.subr.bf16.mxu0 0
    %2627 = vmatpush1.bf16.msra.mxu0 0
    %2628 = vmatprep.subr.bf16.mxu0 0
    %2629 = vmatpush1.bf16.msra.mxu0 0
    %2630 = vmatprep.subr.bf16.mxu0 0
    %2631 = vmatpush1.bf16.msra.mxu0 0
    %2632 = vmatprep.subr.bf16.mxu0 0
    %2633 = vmatpush1.bf16.msra.mxu0 0
    %2634 = vmatprep.subr.bf16.mxu0 0
    %2635 = vmatpush1.bf16.msra.mxu0 0
    %2636 = vmatprep.subr.bf16.mxu0 0
    %2637 = vmatpush1.bf16.msra.mxu0 0
    %2638 = vmatprep.subr.bf16.mxu0 0
    %2639 = vmatpush1.bf16.msra.mxu0 0
    %2640 = vmatprep.subr.bf16.mxu0 0
    %2641 = vmatpush1.bf16.msra.mxu0 0
    %2642 = vmatprep.subr.bf16.mxu0 0
    %2643 = vmatpush1.bf16.msra.mxu0 0
    %2644 = vmatprep.subr.bf16.mxu0 0
    %2645 = vmatpush1.bf16.msra.mxu0 0
    %2646 = vmatprep.subr.bf16.mxu0 0
    %2647 = vmatpush1.bf16.msra.mxu0 0
    %2648 = vmatprep.subr.bf16.mxu0 0
    %2649 = vmatpush1.bf16.msra.mxu0 0
    %2650 = vmatprep.subr.bf16.mxu0 0
    %2651 = vmatpush1.bf16.msra.mxu0 0
    %2652 = vmatprep.subr.bf16.mxu0 0
    %2653 = vmatpush1.bf16.msra.mxu0 0
    %2654 = vmatprep.mubr.bf16.mxu0 0
    %2655 = vmatmul.mubr.bf16.gmra.mrb[0].mxu0 %v2617
    %v2656 = vpop.f32.mrb[0].mxu0
    %v2657 = vadd.f32 0.0, %v2656
    %v2658 = vpop.f32.mrb[0].mxu0
    %v2659 = vpop.f32.mrb[0].mxu0
    %v2660 = vpop.f32.mrb[0].mxu0
    %2661 = vdwg.mxu0
    %2664 = vrot.lane.b32.xlu0 %v2611, 16
    %v2665 = vpop.permute.xlu0 %2664
    %2666 = vrot.lane.b32.xlu0 %v2657, 16
    %v2667 = vpop.permute.xlu0 %2666
    %v2670 = vsel %vm140, %v2519, %v2665
    %v2671 = vsel %vm140, %v2565, %v2667
    %v2672 = vadd.f32 %v1373, %v2172
    %v2673 = vadd.f32 %v1374, %v2173
    %2676 = vrot.lane.b32.xlu0 %v2670, 32
    %v2677 = vpop.permute.xlu0 %2676
    %2678 = vrot.lane.b32.xlu0 %v2671, 32
    %v2679 = vpop.permute.xlu0 %2678
    %v2682 = vadd.f32 %v1375, %v2677
    %v2683 = vadd.f32 %v1376, %v2679
    %2686 = vrot.lane.b32.xlu0 %v2682, 96
    %v2687 = vpop.permute.xlu0 %2686
    %2688 = vrot.lane.b32.xlu0 %v2683, 96
    %v2689 = vpop.permute.xlu0 %2688
    %v2692 = vpack.c.bf16 %v2673, %v2672
    %v2693 = vpack.c.bf16 %v2689, %v2687
    %v2695 = vlaneseq
    %v2696 = vshrl.u32 %v2695, 7
    %v2697 = vsub.s32 0, %v2696
    %v2698 = vrot.slane %v1396, %v2697
    %v2704 = vunpack.c.l.b16 %v1391
    %v2705 = vunpack.c.l.b16 %v1392
    %v2706 = vunpack.c.l.b16 %v1393
    %v2707 = vunpack.c.l.b16 %v1394
    %v2708 = vpack.c.b16 %v2705, %v2704
    %v2709 = vpack.c.b16 %v2707, %v2706
    %v2713 = vsel %vm255, %v2692, 0
    %v2716 = vsel %vm255, %v2693, 0
    %2718 = vmatprep.subr.bf16.mxu0 0
    %2719 = vmatpush1.bf16.msra.mxu0 %v2708
    %2720 = vmatprep.subr.bf16.mxu0 0
    %2721 = vmatpush1.bf16.msra.mxu0 %v2709
    %2722 = vmatprep.subr.bf16.mxu0 0
    %2723 = vmatpush1.bf16.msra.mxu0 0
    %2724 = vmatprep.subr.bf16.mxu0 0
    %2725 = vmatpush1.bf16.msra.mxu0 0
    %2726 = vmatprep.subr.bf16.mxu0 0
    %2727 = vmatpush1.bf16.msra.mxu0 0
    %2728 = vmatprep.subr.bf16.mxu0 0
    %2729 = vmatpush1.bf16.msra.mxu0 0
    %2730 = vmatprep.subr.bf16.mxu0 0
    %2731 = vmatpush1.bf16.msra.mxu0 0
    %2732 = vmatprep.subr.bf16.mxu0 0
    %2733 = vmatpush1.bf16.msra.mxu0 0
    %2734 = vmatprep.subr.bf16.mxu0 0
    %2735 = vmatpush1.bf16.msra.mxu0 0
    %2736 = vmatprep.subr.bf16.mxu0 0
    %2737 = vmatpush1.bf16.msra.mxu0 0
    %2738 = vmatprep.subr.bf16.mxu0 0
    %2739 = vmatpush1.bf16.msra.mxu0 0
    %2740 = vmatprep.subr.bf16.mxu0 0
    %2741 = vmatpush1.bf16.msra.mxu0 0
    %2742 = vmatprep.subr.bf16.mxu0 0
    %2743 = vmatpush1.bf16.msra.mxu0 0
    %2744 = vmatprep.subr.bf16.mxu0 0
    %2745 = vmatpush1.bf16.msra.mxu0 0
    %2746 = vmatprep.subr.bf16.mxu0 0
    %2747 = vmatpush1.bf16.msra.mxu0 0
    %2748 = vmatprep.subr.bf16.mxu0 0
    %2749 = vmatpush1.bf16.msra.mxu0 0
    %2750 = vmatprep.mubr.bf16.mxu0 0
    %2751 = vmatmul.mubr.bf16.gmra.mrb[0].mxu0 %v2713
    %v2752 = vpop.f32.mrb[0].mxu0
    %v2753 = vadd.f32 %v2698, %v2752
    %v2754 = vpop.f32.mrb[0].mxu0
    %v2755 = vpop.f32.mrb[0].mxu0
    %v2756 = vadd.f32 %v2698, %v2755
    %v2757 = vpop.f32.mrb[0].mxu0
    %2758 = vmatprep.mubr.bf16.mxu0 0
    %2759 = vmatmul.mubr.bf16.gmra.mrb[0].mxu0 %v2716
    %v2760 = vpop.f32.mrb[0].mxu0
    %v2761 = vadd.f32 %v2698, %v2760
    %v2762 = vpop.f32.mrb[0].mxu0
    %v2763 = vpop.f32.mrb[0].mxu0
    %v2764 = vadd.f32 %v2698, %v2763
    %v2765 = vpop.f32.mrb[0].mxu0
    %2766 = vdwg.mxu0
    %v2767 = vmax.f32 %v2753, 0.0
    %v2768 = vmax.f32 %v2756, 0.0
    %v2769 = vmax.f32 %v2761, 0.0
    %v2770 = vmax.f32 %v2764, 0.0
    %v2771 = vadd.f32 %v1373, %v2767
    %v2772 = vadd.f32 %v1374, %v2768
    %v2773 = vadd.f32 %v1375, %v2769
    %v2774 = vadd.f32 %v1376, %v2770
    %v2775 = vadd.f32 %v2767, %v1369
    %v2776 = vadd.f32 %v2768, %v1370
    %v2777 = vadd.f32 %v2775, %v196
    %v2778 = vadd.f32 %v2776, %v197
    %v2779 = vadd.f32 %v2769, %v1371
    %v2780 = vadd.f32 %v2770, %v1372
    %v2781 = vadd.f32 %v2779, %v198
    %v2782 = vadd.f32 %v2780, %v199
    %s2783 = scalar_lea.vmem [#allocation5], 64
    %v2784 = vld [vmem:[%s2783] sm:$0xff]
    %v2785 = vld [vmem:[%s2783 + $0x8] sm:$0xff]
    %v2786 = vld [vmem:[%s2783 + $0x10] sm:$0xff]
    %v2787 = vld [vmem:[%s2783 + $0x18] sm:$0xff]
    %s2788 = scalar_lea.vmem [#allocation7], 4
    %v2789 = vld [vmem:[%s2788] sm:$0x3]
    %s2790 = scalar_lea.vmem [#allocation8], 32
    %v2791 = vld [vmem:[%s2790] sm:$0xf]
    %v2792 = vld [vmem:[%s2790 + $0x4] sm:$0xf]
    %v2793 = vld [vmem:[%s2790 + $0x8] sm:$0xf]
    %v2794 = vld [vmem:[%s2790 + $0xc] sm:$0xf]
    %v2795 = vld [vmem:[%s2790 + $0x10] sm:$0xf]
    %v2796 = vld [vmem:[%s2790 + $0x14] sm:$0xf]
    %v2797 = vld [vmem:[%s2790 + $0x18] sm:$0xf]
    %v2798 = vld [vmem:[%s2790 + $0x1c] sm:$0xf]
    %s2799 = scalar_lea.vmem [#allocation11], 3
    %v2800 = vld [vmem:[%s2799] sm:$0x1]
    %2803 = vrot.lane.b32.xlu0 %v2781, 96
    %v2804 = vpop.permute.xlu0 %2803
    %2805 = vrot.lane.b32.xlu0 %v2782, 96
    %v2806 = vpop.permute.xlu0 %2805
    %v2809 = vpack.c.bf16 %v2778, %v2777
    %v2810 = vpack.c.bf16 %v2806, %v2804
    %v2812 = vlaneseq
    %v2813 = vshrl.u32 %v2812, 7
    %v2814 = vsub.s32 0, %v2813
    %v2815 = vrot.slane %v2789, %v2814
    %v2816 = vlaneseq
    %v2817 = vshrl.u32 %v2816, 7
    %v2818 = vsub.s32 1, %v2817
    %v2819 = vrot.slane %v2789, %v2818
    %v2826 = vunpack.c.l.b16 %v2784
    %v2827 = vunpack.c.h.b16 %v2784
    %v2828 = vunpack.c.l.b16 %v2785
    %v2829 = vunpack.c.h.b16 %v2785
    %v2830 = vunpack.c.l.b16 %v2786
    %v2831 = vunpack.c.h.b16 %v2786
    %v2832 = vunpack.c.l.b16 %v2787
    %v2833 = vunpack.c.h.b16 %v2787
    %v2834 = vpack.c.b16 %v2828, %v2826
    %v2835 = vpack.c.b16 %v2829, %v2827
    %v2836 = vpack.c.b16 %v2832, %v2830
    %v2837 = vpack.c.b16 %v2833, %v2831
    %v2843 = vsel %vm255, %v2809, 0
    %v2846 = vsel %vm255, %v2810, 0
    %2848 = vmatprep.subr.bf16.mxu0 %v2835
    %2849 = vmatpush1.bf16.msra.mxu0 %v2834
    %2850 = vmatprep.subr.bf16.mxu0 %v2837
    %2851 = vmatpush1.bf16.msra.mxu0 %v2836
    %2852 = vmatprep.subr.bf16.mxu0 0
    %2853 = vmatpush1.bf16.msra.mxu0 0
    %2854 = vmatprep.subr.bf16.mxu0 0
    %2855 = vmatpush1.bf16.msra.mxu0 0
    %2856 = vmatprep.subr.bf16.mxu0 0
    %2857 = vmatpush1.bf16.msra.mxu0 0
    %2858 = vmatprep.subr.bf16.mxu0 0
    %2859 = vmatpush1.bf16.msra.mxu0 0
    %2860 = vmatprep.subr.bf16.mxu0 0
    %2861 = vmatpush1.bf16.msra.mxu0 0
    %2862 = vmatprep.subr.bf16.mxu0 0
    %2863 = vmatpush1.bf16.msra.mxu0 0
    %2864 = vmatprep.subr.bf16.mxu0 0
    %2865 = vmatpush1.bf16.msra.mxu0 0
    %2866 = vmatprep.subr.bf16.mxu0 0
    %2867 = vmatpush1.bf16.msra.mxu0 0
    %2868 = vmatprep.subr.bf16.mxu0 0
    %2869 = vmatpush1.bf16.msra.mxu0 0
    %2870 = vmatprep.subr.bf16.mxu0 0
    %2871 = vmatpush1.bf16.msra.mxu0 0
    %2872 = vmatprep.subr.bf16.mxu0 0
    %2873 = vmatpush1.bf16.msra.mxu0 0
    %2874 = vmatprep.subr.bf16.mxu0 0
    %2875 = vmatpush1.bf16.msra.mxu0 0
    %2876 = vmatprep.subr.bf16.mxu0 0
    %2877 = vmatpush1.bf16.msra.mxu0 0
    %2878 = vmatprep.subr.bf16.mxu0 0
    %2879 = vmatpush1.bf16.msra.mxu0 0
    %2880 = vmatprep.mubr.bf16.mxu0 0
    %2881 = vmatmul.mubr.bf16.gmra.mrb[0].mxu0 %v2843
    %v2882 = vpop.f32.mrb[0].mxu0
    %v2883 = vadd.f32 %v2815, %v2882
    %v2884 = vpop.f32.mrb[0].mxu0
    %v2885 = vpop.f32.mrb[0].mxu0
    %v2886 = vadd.f32 %v2815, %v2885
    %v2887 = vpop.f32.mrb[0].mxu0
    %2888 = vmatprep.mubr.bf16.mxu0 0
    %2889 = vmatmul.mubr.bf16.gmra.mrb[0].mxu0 %v2846
    %v2890 = vpop.f32.mrb[0].mxu0
    %v2891 = vadd.f32 %v2815, %v2890
    %v2892 = vpop.f32.mrb[0].mxu0
    %v2893 = vadd.f32 %v2819, %v2892
    %v2894 = vpop.f32.mrb[0].mxu0
    %v2895 = vadd.f32 %v2815, %v2894
    %v2896 = vpop.f32.mrb[0].mxu0
    %v2897 = vadd.f32 %v2819, %v2896
    %2898 = vdwg.mxu0
    %v2899 = vmax.f32 %v2883, 0.0
    %v2900 = vmax.f32 %v2886, 0.0
    %v2901 = vmax.f32 %v2891, 0.0
    %v2902 = vmax.f32 %v2893, 0.0
    %v2903 = vmax.f32 %v2895, 0.0
    %v2904 = vmax.f32 %v2897, 0.0
    %2907 = vrot.lane.b32.xlu0 %v2899, 112
    %v2908 = vpop.permute.xlu0 %2907
    %2909 = vrot.lane.b32.xlu0 %v2900, 112
    %v2910 = vpop.permute.xlu0 %2909
    %v2913 = vpack.c.bf16 %v2899, %v2899
    %v2914 = vpack.c.bf16 %v2900, %v2900
    %v2915 = vpack.c.bf16 %v2908, %v2908
    %v2916 = vpack.c.bf16 %v2910, %v2910
    %2919 = vrot.lane.b32.xlu0 %v2901, 112
    %v2920 = vpop.permute.xlu0 %2919
    %2921 = vrot.lane.b32.xlu0 %v2903, 112
    %v2922 = vpop.permute.xlu0 %2921
    %v2925 = vpack.c.bf16 %v2901, %v2901
    %v2926 = vpack.c.bf16 %v2903, %v2903
    %v2927 = vpack.c.bf16 %v2920, %v2920
    %v2928 = vpack.c.bf16 %v2922, %v2922
    %2931 = vrot.lane.b32.xlu0 %v2902, 112
    %v2932 = vpop.permute.xlu0 %2931
    %2933 = vrot.lane.b32.xlu0 %v2904, 112
    %v2934 = vpop.permute.xlu0 %2933
    %v2937 = vpack.c.bf16 %v2902, %v2902
    %v2938 = vpack.c.bf16 %v2904, %v2904
    %v2939 = vpack.c.bf16 %v2932, %v2932
    %v2940 = vpack.c.bf16 %v2934, %v2934
    %2942 = vrot.lane.b32.xlu0 %v2913, 96
    %v2943 = vpop.permute.xlu0 %2942
    %2945 = vrot.lane.b32.xlu0 %v2925, 32
    %v2946 = vpop.permute.xlu0 %2945
    %v2948 = vsel %vm140, %v2943, 0
    %v2951 = vsel %vm140, %v2946, 0
    %2953 = vmatprep.subr.bf16.mxu0 0
    %2954 = vmatpush1.bf16.xpose.msra.mxu0 %v2951
    %2955 = vmatprep.subr.bf16.mxu0 0
    %2956 = vmatpush1.bf16.xpose.msra.mxu0 0
    %2957 = vmatprep.subr.bf16.mxu0 0
    %2958 = vmatpush1.bf16.xpose.msra.mxu0 0
    %2959 = vmatprep.subr.bf16.mxu0 0
    %2960 = vmatpush1.bf16.xpose.msra.mxu0 0
    %2961 = vmatprep.subr.bf16.mxu0 0
    %2962 = vmatpush1.bf16.xpose.msra.mxu0 0
    %2963 = vmatprep.subr.bf16.mxu0 0
    %2964 = vmatpush1.bf16.xpose.msra.mxu0 0
    %2965 = vmatprep.subr.bf16.mxu0 0
    %2966 = vmatpush1.bf16.xpose.msra.mxu0 0
    %2967 = vmatprep.subr.bf16.mxu0 0
    %2968 = vmatpush1.bf16.xpose.msra.mxu0 0
    %2969 = vmatprep.subr.bf16.mxu0 0
    %2970 = vmatpush1.bf16.xpose.msra.mxu0 0
    %2971 = vmatprep.subr.bf16.mxu0 0
    %2972 = vmatpush1.bf16.xpose.msra.mxu0 0
    %2973 = vmatprep.subr.bf16.mxu0 0
    %2974 = vmatpush1.bf16.xpose.msra.mxu0 0
    %2975 = vmatprep.subr.bf16.mxu0 0
    %2976 = vmatpush1.bf16.xpose.msra.mxu0 0
    %2977 = vmatprep.subr.bf16.mxu0 0
    %2978 = vmatpush1.bf16.xpose.msra.mxu0 0
    %2979 = vmatprep.subr.bf16.mxu0 0
    %2980 = vmatpush1.bf16.xpose.msra.mxu0 0
    %2981 = vmatprep.subr.bf16.mxu0 0
    %2982 = vmatpush1.bf16.xpose.msra.mxu0 0
    %2983 = vmatprep.subr.bf16.mxu0 0
    %2984 = vmatpush1.bf16.xpose.msra.mxu0 0
    %2985 = vmatprep.mubr.bf16.mxu0 0
    %2986 = vmatmul.mubr.bf16.gmra.mrb[0].mxu0 %v2948
    %v2987 = vpop.f32.mrb[0].mxu0
    %v2988 = vadd.f32 0.0, %v2987
    %v2989 = vpop.f32.mrb[0].mxu0
    %v2990 = vpop.f32.mrb[0].mxu0
    %v2991 = vpop.f32.mrb[0].mxu0
    %2992 = vdwg.mxu0
    %2994 = vrot.lane.b32.xlu0 %v2914, 96
    %v2995 = vpop.permute.xlu0 %2994
    %2997 = vrot.lane.b32.xlu0 %v2926, 32
    %v2998 = vpop.permute.xlu0 %2997
    %v3000 = vsel %vm140, %v2995, 0
    %v3003 = vsel %vm140, %v2998, 0
    %3005 = vmatprep.subr.bf16.mxu0 0
    %3006 = vmatpush1.bf16.xpose.msra.mxu0 %v3003
    %3007 = vmatprep.subr.bf16.mxu0 0
    %3008 = vmatpush1.bf16.xpose.msra.mxu0 0
    %3009 = vmatprep.subr.bf16.mxu0 0
    %3010 = vmatpush1.bf16.xpose.msra.mxu0 0
    %3011 = vmatprep.subr.bf16.mxu0 0
    %3012 = vmatpush1.bf16.xpose.msra.mxu0 0
    %3013 = vmatprep.subr.bf16.mxu0 0
    %3014 = vmatpush1.bf16.xpose.msra.mxu0 0
    %3015 = vmatprep.subr.bf16.mxu0 0
    %3016 = vmatpush1.bf16.xpose.msra.mxu0 0
    %3017 = vmatprep.subr.bf16.mxu0 0
    %3018 = vmatpush1.bf16.xpose.msra.mxu0 0
    %3019 = vmatprep.subr.bf16.mxu0 0
    %3020 = vmatpush1.bf16.xpose.msra.mxu0 0
    %3021 = vmatprep.subr.bf16.mxu0 0
    %3022 = vmatpush1.bf16.xpose.msra.mxu0 0
    %3023 = vmatprep.subr.bf16.mxu0 0
    %3024 = vmatpush1.bf16.xpose.msra.mxu0 0
    %3025 = vmatprep.subr.bf16.mxu0 0
    %3026 = vmatpush1.bf16.xpose.msra.mxu0 0
    %3027 = vmatprep.subr.bf16.mxu0 0
    %3028 = vmatpush1.bf16.xpose.msra.mxu0 0
    %3029 = vmatprep.subr.bf16.mxu0 0
    %3030 = vmatpush1.bf16.xpose.msra.mxu0 0
    %3031 = vmatprep.subr.bf16.mxu0 0
    %3032 = vmatpush1.bf16.xpose.msra.mxu0 0
    %3033 = vmatprep.subr.bf16.mxu0 0
    %3034 = vmatpush1.bf16.xpose.msra.mxu0 0
    %3035 = vmatprep.subr.bf16.mxu0 0
    %3036 = vmatpush1.bf16.xpose.msra.mxu0 0
    %3037 = vmatprep.mubr.bf16.mxu0 0
    %3038 = vmatmul.mubr.bf16.gmra.mrb[0].mxu0 %v3000
    %v3039 = vpop.f32.mrb[0].mxu0
    %v3040 = vadd.f32 0.0, %v3039
    %v3041 = vpop.f32.mrb[0].mxu0
    %v3042 = vpop.f32.mrb[0].mxu0
    %v3043 = vpop.f32.mrb[0].mxu0
    %3044 = vdwg.mxu0
    %3046 = vrot.lane.b32.xlu0 %v2915, 96
    %v3047 = vpop.permute.xlu0 %3046
    %3049 = vrot.lane.b32.xlu0 %v2927, 32
    %v3050 = vpop.permute.xlu0 %3049
    %v3052 = vsel %vm140, %v3047, 0
    %v3055 = vsel %vm140, %v3050, 0
    %3057 = vmatprep.subr.bf16.mxu0 0
    %3058 = vmatpush1.bf16.xpose.msra.mxu0 %v3055
    %3059 = vmatprep.subr.bf16.mxu0 0
    %3060 = vmatpush1.bf16.xpose.msra.mxu0 0
    %3061 = vmatprep.subr.bf16.mxu0 0
    %3062 = vmatpush1.bf16.xpose.msra.mxu0 0
    %3063 = vmatprep.subr.bf16.mxu0 0
    %3064 = vmatpush1.bf16.xpose.msra.mxu0 0
    %3065 = vmatprep.subr.bf16.mxu0 0
    %3066 = vmatpush1.bf16.xpose.msra.mxu0 0
    %3067 = vmatprep.subr.bf16.mxu0 0
    %3068 = vmatpush1.bf16.xpose.msra.mxu0 0
    %3069 = vmatprep.subr.bf16.mxu0 0
    %3070 = vmatpush1.bf16.xpose.msra.mxu0 0
    %3071 = vmatprep.subr.bf16.mxu0 0
    %3072 = vmatpush1.bf16.xpose.msra.mxu0 0
    %3073 = vmatprep.subr.bf16.mxu0 0
    %3074 = vmatpush1.bf16.xpose.msra.mxu0 0
    %3075 = vmatprep.subr.bf16.mxu0 0
    %3076 = vmatpush1.bf16.xpose.msra.mxu0 0
    %3077 = vmatprep.subr.bf16.mxu0 0
    %3078 = vmatpush1.bf16.xpose.msra.mxu0 0
    %3079 = vmatprep.subr.bf16.mxu0 0
    %3080 = vmatpush1.bf16.xpose.msra.mxu0 0
    %3081 = vmatprep.subr.bf16.mxu0 0
    %3082 = vmatpush1.bf16.xpose.msra.mxu0 0
    %3083 = vmatprep.subr.bf16.mxu0 0
    %3084 = vmatpush1.bf16.xpose.msra.mxu0 0
    %3085 = vmatprep.subr.bf16.mxu0 0
    %3086 = vmatpush1.bf16.xpose.msra.mxu0 0
    %3087 = vmatprep.subr.bf16.mxu0 0
    %3088 = vmatpush1.bf16.xpose.msra.mxu0 0
    %3089 = vmatprep.mubr.bf16.mxu0 0
    %3090 = vmatmul.mubr.bf16.gmra.mrb[0].mxu0 %v3052
    %v3091 = vpop.f32.mrb[0].mxu0
    %v3092 = vadd.f32 0.0, %v3091
    %v3093 = vpop.f32.mrb[0].mxu0
    %v3094 = vpop.f32.mrb[0].mxu0
    %v3095 = vpop.f32.mrb[0].mxu0
    %3096 = vdwg.mxu0
    %3098 = vrot.lane.b32.xlu0 %v2916, 96
    %v3099 = vpop.permute.xlu0 %3098
    %3101 = vrot.lane.b32.xlu0 %v2928, 32
    %v3102 = vpop.permute.xlu0 %3101
    %v3104 = vsel %vm140, %v3099, 0
    %v3107 = vsel %vm140, %v3102, 0
    %3109 = vmatprep.subr.bf16.mxu0 0
    %3110 = vmatpush1.bf16.xpose.msra.mxu0 %v3107
    %3111 = vmatprep.subr.bf16.mxu0 0
    %3112 = vmatpush1.bf16.xpose.msra.mxu0 0
    %3113 = vmatprep.subr.bf16.mxu0 0
    %3114 = vmatpush1.bf16.xpose.msra.mxu0 0
    %3115 = vmatprep.subr.bf16.mxu0 0
    %3116 = vmatpush1.bf16.xpose.msra.mxu0 0
    %3117 = vmatprep.subr.bf16.mxu0 0
    %3118 = vmatpush1.bf16.xpose.msra.mxu0 0
    %3119 = vmatprep.subr.bf16.mxu0 0
    %3120 = vmatpush1.bf16.xpose.msra.mxu0 0
    %3121 = vmatprep.subr.bf16.mxu0 0
    %3122 = vmatpush1.bf16.xpose.msra.mxu0 0
    %3123 = vmatprep.subr.bf16.mxu0 0
    %3124 = vmatpush1.bf16.xpose.msra.mxu0 0
    %3125 = vmatprep.subr.bf16.mxu0 0
    %3126 = vmatpush1.bf16.xpose.msra.mxu0 0
    %3127 = vmatprep.subr.bf16.mxu0 0
    %3128 = vmatpush1.bf16.xpose.msra.mxu0 0
    %3129 = vmatprep.subr.bf16.mxu0 0
    %3130 = vmatpush1.bf16.xpose.msra.mxu0 0
    %3131 = vmatprep.subr.bf16.mxu0 0
    %3132 = vmatpush1.bf16.xpose.msra.mxu0 0
    %3133 = vmatprep.subr.bf16.mxu0 0
    %3134 = vmatpush1.bf16.xpose.msra.mxu0 0
    %3135 = vmatprep.subr.bf16.mxu0 0
    %3136 = vmatpush1.bf16.xpose.msra.mxu0 0
    %3137 = vmatprep.subr.bf16.mxu0 0
    %3138 = vmatpush1.bf16.xpose.msra.mxu0 0
    %3139 = vmatprep.subr.bf16.mxu0 0
    %3140 = vmatpush1.bf16.xpose.msra.mxu0 0
    %3141 = vmatprep.mubr.bf16.mxu0 0
    %3142 = vmatmul.mubr.bf16.gmra.mrb[0].mxu0 %v3104
    %v3143 = vpop.f32.mrb[0].mxu0
    %v3144 = vadd.f32 0.0, %v3143
    %v3145 = vpop.f32.mrb[0].mxu0
    %v3146 = vpop.f32.mrb[0].mxu0
    %v3147 = vpop.f32.mrb[0].mxu0
    %3148 = vdwg.mxu0
    %v3149 = vmul.f32 %v2988, 0.25
    %v3150 = vmul.f32 %v3040, 0.25
    %v3151 = vmul.f32 %v3092, 0.25
    %v3152 = vmul.f32 %v3144, 0.25
    %v3153 = vsel %vm567, %v3149, -inf
    %3154 = vmax.xlane.f32.xlu0 %v3153
    %v3155 = vpop.xlane.xlu0 %3154
    %v3156 = vsel %vm567, %v3150, -inf
    %3157 = vmax.xlane.f32.xlu0 %v3156
    %v3158 = vpop.xlane.xlu0 %3157
    %v3159 = vsel %vm567, %v3151, -inf
    %3160 = vmax.xlane.f32.xlu0 %v3159
    %v3161 = vpop.xlane.xlu0 %3160
    %v3162 = vsel %vm567, %v3152, -inf
    %3163 = vmax.xlane.f32.xlu0 %v3162
    %v3164 = vpop.xlane.xlu0 %3163
    %v3165 = vsub.f32 %v3149, %v3155
    %v3166 = vsub.f32 %v3150, %v3158
    %v3167 = vsub.f32 %v3151, %v3161
    %v3168 = vsub.f32 %v3152, %v3164
    %v3169 = vmul.f32 %v3165, 1.442695
    %v3170 = vpow.pop %v3169
    %v3171 = vmul.f32 %v3166, 1.442695
    %v3172 = vpow.pop %v3171
    %v3173 = vmul.f32 %v3167, 1.442695
    %v3174 = vpow.pop %v3173
    %v3175 = vmul.f32 %v3168, 1.442695
    %v3176 = vpow.pop %v3175
    %v3177 = vsel %vm567, %v3170, 0.0
    %3178 = vadd.xlane.f32.xlu0 %v3177
    %v3179 = vpop.xlane.xlu0 %3178
    %v3180 = vsel %vm567, %v3172, 0.0
    %3181 = vadd.xlane.f32.xlu0 %v3180
    %v3182 = vpop.xlane.xlu0 %3181
    %v3183 = vsel %vm567, %v3174, 0.0
    %3184 = vadd.xlane.f32.xlu0 %v3183
    %v3185 = vpop.xlane.xlu0 %3184
    %v3186 = vsel %vm567, %v3176, 0.0
    %3187 = vadd.xlane.f32.xlu0 %v3186
    %v3188 = vpop.xlane.xlu0 %3187
    %v3189 = vrcp.pop %v3179
    %v3190 = vrcp.pop %v3182
    %v3191 = vrcp.pop %v3185
    %v3192 = vrcp.pop %v3188
    %v3193 = vmul.f32 %v3170, %v3189
    %v3194 = vmul.f32 %v3172, %v3190
    %v3195 = vmul.f32 %v3174, %v3191
    %v3196 = vmul.f32 %v3176, %v3192
    %v3197 = vpack.c.bf16 %v3193, %v3193
    %v3198 = vpack.c.bf16 %v3194, %v3194
    %v3199 = vpack.c.bf16 %v3195, %v3195
    %v3200 = vpack.c.bf16 %v3196, %v3196
    %3202 = vrot.lane.b32.xlu0 %v2937, 96
    %v3203 = vpop.permute.xlu0 %3202
    %v3205 = vsel %vm567, %v3197, 0
    %v3208 = vsel %vm622, %v3203, 0
    %3210 = vmatprep.subr.bf16.mxu0 0
    %3211 = vmatpush1.bf16.msra.mxu0 %v3208
    %3212 = vmatprep.subr.bf16.mxu0 0
    %3213 = vmatpush1.bf16.msra.mxu0 0
    %3214 = vmatprep.subr.bf16.mxu0 0
    %3215 = vmatpush1.bf16.msra.mxu0 0
    %3216 = vmatprep.subr.bf16.mxu0 0
    %3217 = vmatpush1.bf16.msra.mxu0 0
    %3218 = vmatprep.subr.bf16.mxu0 0
    %3219 = vmatpush1.bf16.msra.mxu0 0
    %3220 = vmatprep.subr.bf16.mxu0 0
    %3221 = vmatpush1.bf16.msra.mxu0 0
    %3222 = vmatprep.subr.bf16.mxu0 0
    %3223 = vmatpush1.bf16.msra.mxu0 0
    %3224 = vmatprep.subr.bf16.mxu0 0
    %3225 = vmatpush1.bf16.msra.mxu0 0
    %3226 = vmatprep.subr.bf16.mxu0 0
    %3227 = vmatpush1.bf16.msra.mxu0 0
    %3228 = vmatprep.subr.bf16.mxu0 0
    %3229 = vmatpush1.bf16.msra.mxu0 0
    %3230 = vmatprep.subr.bf16.mxu0 0
    %3231 = vmatpush1.bf16.msra.mxu0 0
    %3232 = vmatprep.subr.bf16.mxu0 0
    %3233 = vmatpush1.bf16.msra.mxu0 0
    %3234 = vmatprep.subr.bf16.mxu0 0
    %3235 = vmatpush1.bf16.msra.mxu0 0
    %3236 = vmatprep.subr.bf16.mxu0 0
    %3237 = vmatpush1.bf16.msra.mxu0 0
    %3238 = vmatprep.subr.bf16.mxu0 0
    %3239 = vmatpush1.bf16.msra.mxu0 0
    %3240 = vmatprep.subr.bf16.mxu0 0
    %3241 = vmatpush1.bf16.msra.mxu0 0
    %3242 = vmatprep.mubr.bf16.mxu0 0
    %3243 = vmatmul.mubr.bf16.gmra.mrb[0].mxu0 %v3205
    %v3244 = vpop.f32.mrb[0].mxu0
    %v3245 = vadd.f32 0.0, %v3244
    %v3246 = vpop.f32.mrb[0].mxu0
    %v3247 = vpop.f32.mrb[0].mxu0
    %v3248 = vpop.f32.mrb[0].mxu0
    %3249 = vdwg.mxu0
    %3251 = vrot.lane.b32.xlu0 %v2938, 96
    %v3252 = vpop.permute.xlu0 %3251
    %v3254 = vsel %vm567, %v3198, 0
    %v3257 = vsel %vm622, %v3252, 0
    %3259 = vmatprep.subr.bf16.mxu0 0
    %3260 = vmatpush1.bf16.msra.mxu0 %v3257
    %3261 = vmatprep.subr.bf16.mxu0 0
    %3262 = vmatpush1.bf16.msra.mxu0 0
    %3263 = vmatprep.subr.bf16.mxu0 0
    %3264 = vmatpush1.bf16.msra.mxu0 0
    %3265 = vmatprep.subr.bf16.mxu0 0
    %3266 = vmatpush1.bf16.msra.mxu0 0
    %3267 = vmatprep.subr.bf16.mxu0 0
    %3268 = vmatpush1.bf16.msra.mxu0 0
    %3269 = vmatprep.subr.bf16.mxu0 0
    %3270 = vmatpush1.bf16.msra.mxu0 0
    %3271 = vmatprep.subr.bf16.mxu0 0
    %3272 = vmatpush1.bf16.msra.mxu0 0
    %3273 = vmatprep.subr.bf16.mxu0 0
    %3274 = vmatpush1.bf16.msra.mxu0 0
    %3275 = vmatprep.subr.bf16.mxu0 0
    %3276 = vmatpush1.bf16.msra.mxu0 0
    %3277 = vmatprep.subr.bf16.mxu0 0
    %3278 = vmatpush1.bf16.msra.mxu0 0
    %3279 = vmatprep.subr.bf16.mxu0 0
    %3280 = vmatpush1.bf16.msra.mxu0 0
    %3281 = vmatprep.subr.bf16.mxu0 0
    %3282 = vmatpush1.bf16.msra.mxu0 0
    %3283 = vmatprep.subr.bf16.mxu0 0
    %3284 = vmatpush1.bf16.msra.mxu0 0
    %3285 = vmatprep.subr.bf16.mxu0 0
    %3286 = vmatpush1.bf16.msra.mxu0 0
    %3287 = vmatprep.subr.bf16.mxu0 0
    %3288 = vmatpush1.bf16.msra.mxu0 0
    %3289 = vmatprep.subr.bf16.mxu0 0
    %3290 = vmatpush1.bf16.msra.mxu0 0
    %3291 = vmatprep.mubr.bf16.mxu0 0
    %3292 = vmatmul.mubr.bf16.gmra.mrb[0].mxu0 %v3254
    %v3293 = vpop.f32.mrb[0].mxu0
    %v3294 = vadd.f32 0.0, %v3293
    %v3295 = vpop.f32.mrb[0].mxu0
    %v3296 = vpop.f32.mrb[0].mxu0
    %v3297 = vpop.f32.mrb[0].mxu0
    %3298 = vdwg.mxu0
    %3300 = vrot.lane.b32.xlu0 %v2939, 96
    %v3301 = vpop.permute.xlu0 %3300
    %v3303 = vsel %vm567, %v3199, 0
    %v3306 = vsel %vm622, %v3301, 0
    %3308 = vmatprep.subr.bf16.mxu0 0
    %3309 = vmatpush1.bf16.msra.mxu0 %v3306
    %3310 = vmatprep.subr.bf16.mxu0 0
    %3311 = vmatpush1.bf16.msra.mxu0 0
    %3312 = vmatprep.subr.bf16.mxu0 0
    %3313 = vmatpush1.bf16.msra.mxu0 0
    %3314 = vmatprep.subr.bf16.mxu0 0
    %3315 = vmatpush1.bf16.msra.mxu0 0
    %3316 = vmatprep.subr.bf16.mxu0 0
    %3317 = vmatpush1.bf16.msra.mxu0 0
    %3318 = vmatprep.subr.bf16.mxu0 0
    %3319 = vmatpush1.bf16.msra.mxu0 0
    %3320 = vmatprep.subr.bf16.mxu0 0
    %3321 = vmatpush1.bf16.msra.mxu0 0
    %3322 = vmatprep.subr.bf16.mxu0 0
    %3323 = vmatpush1.bf16.msra.mxu0 0
    %3324 = vmatprep.subr.bf16.mxu0 0
    %3325 = vmatpush1.bf16.msra.mxu0 0
    %3326 = vmatprep.subr.bf16.mxu0 0
    %3327 = vmatpush1.bf16.msra.mxu0 0
    %3328 = vmatprep.subr.bf16.mxu0 0
    %3329 = vmatpush1.bf16.msra.mxu0 0
    %3330 = vmatprep.subr.bf16.mxu0 0
    %3331 = vmatpush1.bf16.msra.mxu0 0
    %3332 = vmatprep.subr.bf16.mxu0 0
    %3333 = vmatpush1.bf16.msra.mxu0 0
    %3334 = vmatprep.subr.bf16.mxu0 0
    %3335 = vmatpush1.bf16.msra.mxu0 0
    %3336 = vmatprep.subr.bf16.mxu0 0
    %3337 = vmatpush1.bf16.msra.mxu0 0
    %3338 = vmatprep.subr.bf16.mxu0 0
    %3339 = vmatpush1.bf16.msra.mxu0 0
    %3340 = vmatprep.mubr.bf16.mxu0 0
    %3341 = vmatmul.mubr.bf16.gmra.mrb[0].mxu0 %v3303
    %v3342 = vpop.f32.mrb[0].mxu0
    %v3343 = vadd.f32 0.0, %v3342
    %v3344 = vpop.f32.mrb[0].mxu0
    %v3345 = vpop.f32.mrb[0].mxu0
    %v3346 = vpop.f32.mrb[0].mxu0
    %3347 = vdwg.mxu0
    %3349 = vrot.lane.b32.xlu0 %v2940, 96
    %v3350 = vpop.permute.xlu0 %3349
    %v3352 = vsel %vm567, %v3200, 0
    %v3355 = vsel %vm622, %v3350, 0
    %3357 = vmatprep.subr.bf16.mxu0 0
    %3358 = vmatpush1.bf16.msra.mxu0 %v3355
    %3359 = vmatprep.subr.bf16.mxu0 0
    %3360 = vmatpush1.bf16.msra.mxu0 0
    %3361 = vmatprep.subr.bf16.mxu0 0
    %3362 = vmatpush1.bf16.msra.mxu0 0
    %3363 = vmatprep.subr.bf16.mxu0 0
    %3364 = vmatpush1.bf16.msra.mxu0 0
    %3365 = vmatprep.subr.bf16.mxu0 0
    %3366 = vmatpush1.bf16.msra.mxu0 0
    %3367 = vmatprep.subr.bf16.mxu0 0
    %3368 = vmatpush1.bf16.msra.mxu0 0
    %3369 = vmatprep.subr.bf16.mxu0 0
    %3370 = vmatpush1.bf16.msra.mxu0 0
    %3371 = vmatprep.subr.bf16.mxu0 0
    %3372 = vmatpush1.bf16.msra.mxu0 0
    %3373 = vmatprep.subr.bf16.mxu0 0
    %3374 = vmatpush1.bf16.msra.mxu0 0
    %3375 = vmatprep.subr.bf16.mxu0 0
    %3376 = vmatpush1.bf16.msra.mxu0 0
    %3377 = vmatprep.subr.bf16.mxu0 0
    %3378 = vmatpush1.bf16.msra.mxu0 0
    %3379 = vmatprep.subr.bf16.mxu0 0
    %3380 = vmatpush1.bf16.msra.mxu0 0
    %3381 = vmatprep.subr.bf16.mxu0 0
    %3382 = vmatpush1.bf16.msra.mxu0 0
    %3383 = vmatprep.subr.bf16.mxu0 0
    %3384 = vmatpush1.bf16.msra.mxu0 0
    %3385 = vmatprep.subr.bf16.mxu0 0
    %3386 = vmatpush1.bf16.msra.mxu0 0
    %3387 = vmatprep.subr.bf16.mxu0 0
    %3388 = vmatpush1.bf16.msra.mxu0 0
    %3389 = vmatprep.mubr.bf16.mxu0 0
    %3390 = vmatmul.mubr.bf16.gmra.mrb[0].mxu0 %v3352
    %v3391 = vpop.f32.mrb[0].mxu0
    %v3392 = vadd.f32 0.0, %v3391
    %v3393 = vpop.f32.mrb[0].mxu0
    %v3394 = vpop.f32.mrb[0].mxu0
    %v3395 = vpop.f32.mrb[0].mxu0
    %3396 = vdwg.mxu0
    %3399 = vrot.lane.b32.xlu0 %v3343, 16
    %v3400 = vpop.permute.xlu0 %3399
    %3401 = vrot.lane.b32.xlu0 %v3392, 16
    %v3402 = vpop.permute.xlu0 %3401
    %v3405 = vsel %vm140, %v3245, %v3400
    %v3406 = vsel %vm140, %v3294, %v3402
    %v3408 = vsel %vm140, %v2937, 0
    %v3411 = vsel %vm140, %v2913, 0
    %3413 = vmatprep.subr.bf16.mxu0 0
    %3414 = vmatpush1.bf16.xpose.msra.mxu0 %v3411
    %3415 = vmatprep.subr.bf16.mxu0 0
    %3416 = vmatpush1.bf16.xpose.msra.mxu0 0
    %3417 = vmatprep.subr.bf16.mxu0 0
    %3418 = vmatpush1.bf16.xpose.msra.mxu0 0
    %3419 = vmatprep.subr.bf16.mxu0 0
    %3420 = vmatpush1.bf16.xpose.msra.mxu0 0
    %3421 = vmatprep.subr.bf16.mxu0 0
    %3422 = vmatpush1.bf16.xpose.msra.mxu0 0
    %3423 = vmatprep.subr.bf16.mxu0 0
    %3424 = vmatpush1.bf16.xpose.msra.mxu0 0
    %3425 = vmatprep.subr.bf16.mxu0 0
    %3426 = vmatpush1.bf16.xpose.msra.mxu0 0
    %3427 = vmatprep.subr.bf16.mxu0 0
    %3428 = vmatpush1.bf16.xpose.msra.mxu0 0
    %3429 = vmatprep.subr.bf16.mxu0 0
    %3430 = vmatpush1.bf16.xpose.msra.mxu0 0
    %3431 = vmatprep.subr.bf16.mxu0 0
    %3432 = vmatpush1.bf16.xpose.msra.mxu0 0
    %3433 = vmatprep.subr.bf16.mxu0 0
    %3434 = vmatpush1.bf16.xpose.msra.mxu0 0
    %3435 = vmatprep.subr.bf16.mxu0 0
    %3436 = vmatpush1.bf16.xpose.msra.mxu0 0
    %3437 = vmatprep.subr.bf16.mxu0 0
    %3438 = vmatpush1.bf16.xpose.msra.mxu0 0
    %3439 = vmatprep.subr.bf16.mxu0 0
    %3440 = vmatpush1.bf16.xpose.msra.mxu0 0
    %3441 = vmatprep.subr.bf16.mxu0 0
    %3442 = vmatpush1.bf16.xpose.msra.mxu0 0
    %3443 = vmatprep.subr.bf16.mxu0 0
    %3444 = vmatpush1.bf16.xpose.msra.mxu0 0
    %3445 = vmatprep.mubr.bf16.mxu0 0
    %3446 = vmatmul.mubr.bf16.gmra.mrb[0].mxu0 %v3408
    %v3447 = vpop.f32.mrb[0].mxu0
    %v3448 = vadd.f32 0.0, %v3447
    %v3449 = vpop.f32.mrb[0].mxu0
    %v3450 = vpop.f32.mrb[0].mxu0
    %v3451 = vpop.f32.mrb[0].mxu0
    %3452 = vdwg.mxu0
    %v3454 = vsel %vm140, %v2938, 0
    %v3457 = vsel %vm140, %v2914, 0
    %3459 = vmatprep.subr.bf16.mxu0 0
    %3460 = vmatpush1.bf16.xpose.msra.mxu0 %v3457
    %3461 = vmatprep.subr.bf16.mxu0 0
    %3462 = vmatpush1.bf16.xpose.msra.mxu0 0
    %3463 = vmatprep.subr.bf16.mxu0 0
    %3464 = vmatpush1.bf16.xpose.msra.mxu0 0
    %3465 = vmatprep.subr.bf16.mxu0 0
    %3466 = vmatpush1.bf16.xpose.msra.mxu0 0
    %3467 = vmatprep.subr.bf16.mxu0 0
    %3468 = vmatpush1.bf16.xpose.msra.mxu0 0
    %3469 = vmatprep.subr.bf16.mxu0 0
    %3470 = vmatpush1.bf16.xpose.msra.mxu0 0
    %3471 = vmatprep.subr.bf16.mxu0 0
    %3472 = vmatpush1.bf16.xpose.msra.mxu0 0
    %3473 = vmatprep.subr.bf16.mxu0 0
    %3474 = vmatpush1.bf16.xpose.msra.mxu0 0
    %3475 = vmatprep.subr.bf16.mxu0 0
    %3476 = vmatpush1.bf16.xpose.msra.mxu0 0
    %3477 = vmatprep.subr.bf16.mxu0 0
    %3478 = vmatpush1.bf16.xpose.msra.mxu0 0
    %3479 = vmatprep.subr.bf16.mxu0 0
    %3480 = vmatpush1.bf16.xpose.msra.mxu0 0
    %3481 = vmatprep.subr.bf16.mxu0 0
    %3482 = vmatpush1.bf16.xpose.msra.mxu0 0
    %3483 = vmatprep.subr.bf16.mxu0 0
    %3484 = vmatpush1.bf16.xpose.msra.mxu0 0
    %3485 = vmatprep.subr.bf16.mxu0 0
    %3486 = vmatpush1.bf16.xpose.msra.mxu0 0
    %3487 = vmatprep.subr.bf16.mxu0 0
    %3488 = vmatpush1.bf16.xpose.msra.mxu0 0
    %3489 = vmatprep.subr.bf16.mxu0 0
    %3490 = vmatpush1.bf16.xpose.msra.mxu0 0
    %3491 = vmatprep.mubr.bf16.mxu0 0
    %3492 = vmatmul.mubr.bf16.gmra.mrb[0].mxu0 %v3454
    %v3493 = vpop.f32.mrb[0].mxu0
    %v3494 = vadd.f32 0.0, %v3493
    %v3495 = vpop.f32.mrb[0].mxu0
    %v3496 = vpop.f32.mrb[0].mxu0
    %v3497 = vpop.f32.mrb[0].mxu0
    %3498 = vdwg.mxu0
    %v3500 = vsel %vm140, %v2939, 0
    %v3503 = vsel %vm140, %v2915, 0
    %3505 = vmatprep.subr.bf16.mxu0 0
    %3506 = vmatpush1.bf16.xpose.msra.mxu0 %v3503
    %3507 = vmatprep.subr.bf16.mxu0 0
    %3508 = vmatpush1.bf16.xpose.msra.mxu0 0
    %3509 = vmatprep.subr.bf16.mxu0 0
    %3510 = vmatpush1.bf16.xpose.msra.mxu0 0
    %3511 = vmatprep.subr.bf16.mxu0 0
    %3512 = vmatpush1.bf16.xpose.msra.mxu0 0
    %3513 = vmatprep.subr.bf16.mxu0 0
    %3514 = vmatpush1.bf16.xpose.msra.mxu0 0
    %3515 = vmatprep.subr.bf16.mxu0 0
    %3516 = vmatpush1.bf16.xpose.msra.mxu0 0
    %3517 = vmatprep.subr.bf16.mxu0 0
    %3518 = vmatpush1.bf16.xpose.msra.mxu0 0
    %3519 = vmatprep.subr.bf16.mxu0 0
    %3520 = vmatpush1.bf16.xpose.msra.mxu0 0
    %3521 = vmatprep.subr.bf16.mxu0 0
    %3522 = vmatpush1.bf16.xpose.msra.mxu0 0
    %3523 = vmatprep.subr.bf16.mxu0 0
    %3524 = vmatpush1.bf16.xpose.msra.mxu0 0
    %3525 = vmatprep.subr.bf16.mxu0 0
    %3526 = vmatpush1.bf16.xpose.msra.mxu0 0
    %3527 = vmatprep.subr.bf16.mxu0 0
    %3528 = vmatpush1.bf16.xpose.msra.mxu0 0
    %3529 = vmatprep.subr.bf16.mxu0 0
    %3530 = vmatpush1.bf16.xpose.msra.mxu0 0
    %3531 = vmatprep.subr.bf16.mxu0 0
    %3532 = vmatpush1.bf16.xpose.msra.mxu0 0
    %3533 = vmatprep.subr.bf16.mxu0 0
    %3534 = vmatpush1.bf16.xpose.msra.mxu0 0
    %3535 = vmatprep.subr.bf16.mxu0 0
    %3536 = vmatpush1.bf16.xpose.msra.mxu0 0
    %3537 = vmatprep.mubr.bf16.mxu0 0
    %3538 = vmatmul.mubr.bf16.gmra.mrb[0].mxu0 %v3500
    %v3539 = vpop.f32.mrb[0].mxu0
    %v3540 = vadd.f32 0.0, %v3539
    %v3541 = vpop.f32.mrb[0].mxu0
    %v3542 = vpop.f32.mrb[0].mxu0
    %v3543 = vpop.f32.mrb[0].mxu0
    %3544 = vdwg.mxu0
    %v3546 = vsel %vm140, %v2940, 0
    %v3549 = vsel %vm140, %v2916, 0
    %3551 = vmatprep.subr.bf16.mxu0 0
    %3552 = vmatpush1.bf16.xpose.msra.mxu0 %v3549
    %3553 = vmatprep.subr.bf16.mxu0 0
    %3554 = vmatpush1.bf16.xpose.msra.mxu0 0
    %3555 = vmatprep.subr.bf16.mxu0 0
    %3556 = vmatpush1.bf16.xpose.msra.mxu0 0
    %3557 = vmatprep.subr.bf16.mxu0 0
    %3558 = vmatpush1.bf16.xpose.msra.mxu0 0
    %3559 = vmatprep.subr.bf16.mxu0 0
    %3560 = vmatpush1.bf16.xpose.msra.mxu0 0
    %3561 = vmatprep.subr.bf16.mxu0 0
    %3562 = vmatpush1.bf16.xpose.msra.mxu0 0
    %3563 = vmatprep.subr.bf16.mxu0 0
    %3564 = vmatpush1.bf16.xpose.msra.mxu0 0
    %3565 = vmatprep.subr.bf16.mxu0 0
    %3566 = vmatpush1.bf16.xpose.msra.mxu0 0
    %3567 = vmatprep.subr.bf16.mxu0 0
    %3568 = vmatpush1.bf16.xpose.msra.mxu0 0
    %3569 = vmatprep.subr.bf16.mxu0 0
    %3570 = vmatpush1.bf16.xpose.msra.mxu0 0
    %3571 = vmatprep.subr.bf16.mxu0 0
    %3572 = vmatpush1.bf16.xpose.msra.mxu0 0
    %3573 = vmatprep.subr.bf16.mxu0 0
    %3574 = vmatpush1.bf16.xpose.msra.mxu0 0
    %3575 = vmatprep.subr.bf16.mxu0 0
    %3576 = vmatpush1.bf16.xpose.msra.mxu0 0
    %3577 = vmatprep.subr.bf16.mxu0 0
    %3578 = vmatpush1.bf16.xpose.msra.mxu0 0
    %3579 = vmatprep.subr.bf16.mxu0 0
    %3580 = vmatpush1.bf16.xpose.msra.mxu0 0
    %3581 = vmatprep.subr.bf16.mxu0 0
    %3582 = vmatpush1.bf16.xpose.msra.mxu0 0
    %3583 = vmatprep.mubr.bf16.mxu0 0
    %3584 = vmatmul.mubr.bf16.gmra.mrb[0].mxu0 %v3546
    %v3585 = vpop.f32.mrb[0].mxu0
    %v3586 = vadd.f32 0.0, %v3585
    %v3587 = vpop.f32.mrb[0].mxu0
    %v3588 = vpop.f32.mrb[0].mxu0
    %v3589 = vpop.f32.mrb[0].mxu0
    %3590 = vdwg.mxu0
    %v3591 = vmul.f32 %v3448, 0.25
    %v3592 = vmul.f32 %v3494, 0.25
    %v3593 = vmul.f32 %v3540, 0.25
    %v3594 = vmul.f32 %v3586, 0.25
    %v3595 = vsel %vm567, %v3591, -inf
    %3596 = vmax.xlane.f32.xlu0 %v3595
    %v3597 = vpop.xlane.xlu0 %3596
    %v3598 = vsel %vm567, %v3592, -inf
    %3599 = vmax.xlane.f32.xlu0 %v3598
    %v3600 = vpop.xlane.xlu0 %3599
    %v3601 = vsel %vm567, %v3593, -inf
    %3602 = vmax.xlane.f32.xlu0 %v3601
    %v3603 = vpop.xlane.xlu0 %3602
    %v3604 = vsel %vm567, %v3594, -inf
    %3605 = vmax.xlane.f32.xlu0 %v3604
    %v3606 = vpop.xlane.xlu0 %3605
    %v3607 = vsub.f32 %v3591, %v3597
    %v3608 = vsub.f32 %v3592, %v3600
    %v3609 = vsub.f32 %v3593, %v3603
    %v3610 = vsub.f32 %v3594, %v3606
    %v3611 = vmul.f32 %v3607, 1.442695
    %v3612 = vpow.pop %v3611
    %v3613 = vmul.f32 %v3608, 1.442695
    %v3614 = vpow.pop %v3613
    %v3615 = vmul.f32 %v3609, 1.442695
    %v3616 = vpow.pop %v3615
    %v3617 = vmul.f32 %v3610, 1.442695
    %v3618 = vpow.pop %v3617
    %v3619 = vsel %vm567, %v3612, 0.0
    %3620 = vadd.xlane.f32.xlu0 %v3619
    %v3621 = vpop.xlane.xlu0 %3620
    %v3622 = vsel %vm567, %v3614, 0.0
    %3623 = vadd.xlane.f32.xlu0 %v3622
    %v3624 = vpop.xlane.xlu0 %3623
    %v3625 = vsel %vm567, %v3616, 0.0
    %3626 = vadd.xlane.f32.xlu0 %v3625
    %v3627 = vpop.xlane.xlu0 %3626
    %v3628 = vsel %vm567, %v3618, 0.0
    %3629 = vadd.xlane.f32.xlu0 %v3628
    %v3630 = vpop.xlane.xlu0 %3629
    %v3631 = vrcp.pop %v3621
    %v3632 = vrcp.pop %v3624
    %v3633 = vrcp.pop %v3627
    %v3634 = vrcp.pop %v3630
    %v3635 = vmul.f32 %v3612, %v3631
    %v3636 = vmul.f32 %v3614, %v3632
    %v3637 = vmul.f32 %v3616, %v3633
    %v3638 = vmul.f32 %v3618, %v3634
    %v3639 = vpack.c.bf16 %v3635, %v3635
    %v3640 = vpack.c.bf16 %v3636, %v3636
    %v3641 = vpack.c.bf16 %v3637, %v3637
    %v3642 = vpack.c.bf16 %v3638, %v3638
    %3643 = vrot.lane.b32.xlu0 %v2913, 64
    %v3644 = vpop.permute.xlu0 %3643
    %v3646 = vsel %vm567, %v3639, 0
    %v3649 = vsel %vm622, %v3644, 0
    %3651 = vmatprep.subr.bf16.mxu0 0
    %3652 = vmatpush1.bf16.msra.mxu0 %v3649
    %3653 = vmatprep.subr.bf16.mxu0 0
    %3654 = vmatpush1.bf16.msra.mxu0 0
    %3655 = vmatprep.subr.bf16.mxu0 0
    %3656 = vmatpush1.bf16.msra.mxu0 0
    %3657 = vmatprep.subr.bf16.mxu0 0
    %3658 = vmatpush1.bf16.msra.mxu0 0
    %3659 = vmatprep.subr.bf16.mxu0 0
    %3660 = vmatpush1.bf16.msra.mxu0 0
    %3661 = vmatprep.subr.bf16.mxu0 0
    %3662 = vmatpush1.bf16.msra.mxu0 0
    %3663 = vmatprep.subr.bf16.mxu0 0
    %3664 = vmatpush1.bf16.msra.mxu0 0
    %3665 = vmatprep.subr.bf16.mxu0 0
    %3666 = vmatpush1.bf16.msra.mxu0 0
    %3667 = vmatprep.subr.bf16.mxu0 0
    %3668 = vmatpush1.bf16.msra.mxu0 0
    %3669 = vmatprep.subr.bf16.mxu0 0
    %3670 = vmatpush1.bf16.msra.mxu0 0
    %3671 = vmatprep.subr.bf16.mxu0 0
    %3672 = vmatpush1.bf16.msra.mxu0 0
    %3673 = vmatprep.subr.bf16.mxu0 0
    %3674 = vmatpush1.bf16.msra.mxu0 0
    %3675 = vmatprep.subr.bf16.mxu0 0
    %3676 = vmatpush1.bf16.msra.mxu0 0
    %3677 = vmatprep.subr.bf16.mxu0 0
    %3678 = vmatpush1.bf16.msra.mxu0 0
    %3679 = vmatprep.subr.bf16.mxu0 0
    %3680 = vmatpush1.bf16.msra.mxu0 0
    %3681 = vmatprep.subr.bf16.mxu0 0
    %3682 = vmatpush1.bf16.msra.mxu0 0
    %3683 = vmatprep.mubr.bf16.mxu0 0
    %3684 = vmatmul.mubr.bf16.gmra.mrb[0].mxu0 %v3646
    %v3685 = vpop.f32.mrb[0].mxu0
    %v3686 = vadd.f32 0.0, %v3685
    %v3687 = vpop.f32.mrb[0].mxu0
    %v3688 = vpop.f32.mrb[0].mxu0
    %v3689 = vpop.f32.mrb[0].mxu0
    %3690 = vdwg.mxu0
    %3691 = vrot.lane.b32.xlu0 %v2914, 64
    %v3692 = vpop.permute.xlu0 %3691
    %v3694 = vsel %vm567, %v3640, 0
    %v3697 = vsel %vm622, %v3692, 0
    %3699 = vmatprep.subr.bf16.mxu0 0
    %3700 = vmatpush1.bf16.msra.mxu0 %v3697
    %3701 = vmatprep.subr.bf16.mxu0 0
    %3702 = vmatpush1.bf16.msra.mxu0 0
    %3703 = vmatprep.subr.bf16.mxu0 0
    %3704 = vmatpush1.bf16.msra.mxu0 0
    %3705 = vmatprep.subr.bf16.mxu0 0
    %3706 = vmatpush1.bf16.msra.mxu0 0
    %3707 = vmatprep.subr.bf16.mxu0 0
    %3708 = vmatpush1.bf16.msra.mxu0 0
    %3709 = vmatprep.subr.bf16.mxu0 0
    %3710 = vmatpush1.bf16.msra.mxu0 0
    %3711 = vmatprep.subr.bf16.mxu0 0
    %3712 = vmatpush1.bf16.msra.mxu0 0
    %3713 = vmatprep.subr.bf16.mxu0 0
    %3714 = vmatpush1.bf16.msra.mxu0 0
    %3715 = vmatprep.subr.bf16.mxu0 0
    %3716 = vmatpush1.bf16.msra.mxu0 0
    %3717 = vmatprep.subr.bf16.mxu0 0
    %3718 = vmatpush1.bf16.msra.mxu0 0
    %3719 = vmatprep.subr.bf16.mxu0 0
    %3720 = vmatpush1.bf16.msra.mxu0 0
    %3721 = vmatprep.subr.bf16.mxu0 0
    %3722 = vmatpush1.bf16.msra.mxu0 0
    %3723 = vmatprep.subr.bf16.mxu0 0
    %3724 = vmatpush1.bf16.msra.mxu0 0
    %3725 = vmatprep.subr.bf16.mxu0 0
    %3726 = vmatpush1.bf16.msra.mxu0 0
    %3727 = vmatprep.subr.bf16.mxu0 0
    %3728 = vmatpush1.bf16.msra.mxu0 0
    %3729 = vmatprep.subr.bf16.mxu0 0
    %3730 = vmatpush1.bf16.msra.mxu0 0
    %3731 = vmatprep.mubr.bf16.mxu0 0
    %3732 = vmatmul.mubr.bf16.gmra.mrb[0].mxu0 %v3694
    %v3733 = vpop.f32.mrb[0].mxu0
    %v3734 = vadd.f32 0.0, %v3733
    %v3735 = vpop.f32.mrb[0].mxu0
    %v3736 = vpop.f32.mrb[0].mxu0
    %v3737 = vpop.f32.mrb[0].mxu0
    %3738 = vdwg.mxu0
    %3739 = vrot.lane.b32.xlu0 %v2915, 64
    %v3740 = vpop.permute.xlu0 %3739
    %v3742 = vsel %vm567, %v3641, 0
    %v3745 = vsel %vm622, %v3740, 0
    %3747 = vmatprep.subr.bf16.mxu0 0
    %3748 = vmatpush1.bf16.msra.mxu0 %v3745
    %3749 = vmatprep.subr.bf16.mxu0 0
    %3750 = vmatpush1.bf16.msra.mxu0 0
    %3751 = vmatprep.subr.bf16.mxu0 0
    %3752 = vmatpush1.bf16.msra.mxu0 0
    %3753 = vmatprep.subr.bf16.mxu0 0
    %3754 = vmatpush1.bf16.msra.mxu0 0
    %3755 = vmatprep.subr.bf16.mxu0 0
    %3756 = vmatpush1.bf16.msra.mxu0 0
    %3757 = vmatprep.subr.bf16.mxu0 0
    %3758 = vmatpush1.bf16.msra.mxu0 0
    %3759 = vmatprep.subr.bf16.mxu0 0
    %3760 = vmatpush1.bf16.msra.mxu0 0
    %3761 = vmatprep.subr.bf16.mxu0 0
    %3762 = vmatpush1.bf16.msra.mxu0 0
    %3763 = vmatprep.subr.bf16.mxu0 0
    %3764 = vmatpush1.bf16.msra.mxu0 0
    %3765 = vmatprep.subr.bf16.mxu0 0
    %3766 = vmatpush1.bf16.msra.mxu0 0
    %3767 = vmatprep.subr.bf16.mxu0 0
    %3768 = vmatpush1.bf16.msra.mxu0 0
    %3769 = vmatprep.subr.bf16.mxu0 0
    %3770 = vmatpush1.bf16.msra.mxu0 0
    %3771 = vmatprep.subr.bf16.mxu0 0
    %3772 = vmatpush1.bf16.msra.mxu0 0
    %3773 = vmatprep.subr.bf16.mxu0 0
    %3774 = vmatpush1.bf16.msra.mxu0 0
    %3775 = vmatprep.subr.bf16.mxu0 0
    %3776 = vmatpush1.bf16.msra.mxu0 0
    %3777 = vmatprep.subr.bf16.mxu0 0
    %3778 = vmatpush1.bf16.msra.mxu0 0
    %3779 = vmatprep.mubr.bf16.mxu0 0
    %3780 = vmatmul.mubr.bf16.gmra.mrb[0].mxu0 %v3742
    %v3781 = vpop.f32.mrb[0].mxu0
    %v3782 = vadd.f32 0.0, %v3781
    %v3783 = vpop.f32.mrb[0].mxu0
    %v3784 = vpop.f32.mrb[0].mxu0
    %v3785 = vpop.f32.mrb[0].mxu0
    %3786 = vdwg.mxu0
    %3787 = vrot.lane.b32.xlu0 %v2916, 64
    %v3788 = vpop.permute.xlu0 %3787
    %v3790 = vsel %vm567, %v3642, 0
    %v3793 = vsel %vm622, %v3788, 0
    %3795 = vmatprep.subr.bf16.mxu0 0
    %3796 = vmatpush1.bf16.msra.mxu0 %v3793
    %3797 = vmatprep.subr.bf16.mxu0 0
    %3798 = vmatpush1.bf16.msra.mxu0 0
    %3799 = vmatprep.subr.bf16.mxu0 0
    %3800 = vmatpush1.bf16.msra.mxu0 0
    %3801 = vmatprep.subr.bf16.mxu0 0
    %3802 = vmatpush1.bf16.msra.mxu0 0
    %3803 = vmatprep.subr.bf16.mxu0 0
    %3804 = vmatpush1.bf16.msra.mxu0 0
    %3805 = vmatprep.subr.bf16.mxu0 0
    %3806 = vmatpush1.bf16.msra.mxu0 0
    %3807 = vmatprep.subr.bf16.mxu0 0
    %3808 = vmatpush1.bf16.msra.mxu0 0
    %3809 = vmatprep.subr.bf16.mxu0 0
    %3810 = vmatpush1.bf16.msra.mxu0 0
    %3811 = vmatprep.subr.bf16.mxu0 0
    %3812 = vmatpush1.bf16.msra.mxu0 0
    %3813 = vmatprep.subr.bf16.mxu0 0
    %3814 = vmatpush1.bf16.msra.mxu0 0
    %3815 = vmatprep.subr.bf16.mxu0 0
    %3816 = vmatpush1.bf16.msra.mxu0 0
    %3817 = vmatprep.subr.bf16.mxu0 0
    %3818 = vmatpush1.bf16.msra.mxu0 0
    %3819 = vmatprep.subr.bf16.mxu0 0
    %3820 = vmatpush1.bf16.msra.mxu0 0
    %3821 = vmatprep.subr.bf16.mxu0 0
    %3822 = vmatpush1.bf16.msra.mxu0 0
    %3823 = vmatprep.subr.bf16.mxu0 0
    %3824 = vmatpush1.bf16.msra.mxu0 0
    %3825 = vmatprep.subr.bf16.mxu0 0
    %3826 = vmatpush1.bf16.msra.mxu0 0
    %3827 = vmatprep.mubr.bf16.mxu0 0
    %3828 = vmatmul.mubr.bf16.gmra.mrb[0].mxu0 %v3790
    %v3829 = vpop.f32.mrb[0].mxu0
    %v3830 = vadd.f32 0.0, %v3829
    %v3831 = vpop.f32.mrb[0].mxu0
    %v3832 = vpop.f32.mrb[0].mxu0
    %v3833 = vpop.f32.mrb[0].mxu0
    %3834 = vdwg.mxu0
    %3837 = vrot.lane.b32.xlu0 %v3782, 16
    %v3838 = vpop.permute.xlu0 %3837
    %3839 = vrot.lane.b32.xlu0 %v3830, 16
    %v3840 = vpop.permute.xlu0 %3839
    %v3843 = vsel %vm140, %v3686, %v3838
    %v3844 = vsel %vm140, %v3734, %v3840
    %3847 = vrot.lane.b32.xlu0 %v3405, 32
    %v3848 = vpop.permute.xlu0 %3847
    %3849 = vrot.lane.b32.xlu0 %v3406, 32
    %v3850 = vpop.permute.xlu0 %3849
    %v3853 = vsel %vm255, %v2777, %v3848
    %v3854 = vsel %vm255, %v2778, %v3850
    %3857 = vrot.lane.b32.xlu0 %v3843, 32
    %v3858 = vpop.permute.xlu0 %3857
    %3859 = vrot.lane.b32.xlu0 %v3844, 32
    %v3860 = vpop.permute.xlu0 %3859
    %v3863 = vsel %vm255, %v2804, %v3858
    %v3864 = vsel %vm255, %v2806, %v3860
    %v3865 = vpack.c.bf16 %v3854, %v3853
    %v3866 = vpack.c.bf16 %v3864, %v3863
    %v3868 = vlaneseq
    %v3869 = vshrl.u32 %v3868, 7
    %v3870 = vsub.s32 0, %v3869
    %v3871 = vrot.slane %v2800, %v3870
    %v3881 = vunpack.c.l.b16 %v2791
    %v3882 = vunpack.c.l.b16 %v2792
    %v3883 = vunpack.c.l.b16 %v2793
    %v3884 = vunpack.c.l.b16 %v2794
    %v3885 = vunpack.c.l.b16 %v2795
    %v3886 = vunpack.c.l.b16 %v2796
    %v3887 = vunpack.c.l.b16 %v2797
    %v3888 = vunpack.c.l.b16 %v2798
    %v3889 = vpack.c.b16 %v3882, %v3881
    %v3890 = vpack.c.b16 %v3884, %v3883
    %v3891 = vpack.c.b16 %v3886, %v3885
    %v3892 = vpack.c.b16 %v3888, %v3887
    %v3898 = vsel %vm1313, %v3865, 0
    %v3901 = vsel %vm1313, %v3866, 0
    %3903 = vmatprep.subr.bf16.mxu0 0
    %3904 = vmatpush1.bf16.msra.mxu0 %v3889
    %3905 = vmatprep.subr.bf16.mxu0 0
    %3906 = vmatpush1.bf16.msra.mxu0 %v3890
    %3907 = vmatprep.subr.bf16.mxu0 0
    %3908 = vmatpush1.bf16.msra.mxu0 %v3891
    %3909 = vmatprep.subr.bf16.mxu0 0
    %3910 = vmatpush1.bf16.msra.mxu0 %v3892
    %3911 = vmatprep.subr.bf16.mxu0 0
    %3912 = vmatpush1.bf16.msra.mxu0 0
    %3913 = vmatprep.subr.bf16.mxu0 0
    %3914 = vmatpush1.bf16.msra.mxu0 0
    %3915 = vmatprep.subr.bf16.mxu0 0
    %3916 = vmatpush1.bf16.msra.mxu0 0
    %3917 = vmatprep.subr.bf16.mxu0 0
    %3918 = vmatpush1.bf16.msra.mxu0 0
    %3919 = vmatprep.subr.bf16.mxu0 0
    %3920 = vmatpush1.bf16.msra.mxu0 0
    %3921 = vmatprep.subr.bf16.mxu0 0
    %3922 = vmatpush1.bf16.msra.mxu0 0
    %3923 = vmatprep.subr.bf16.mxu0 0
    %3924 = vmatpush1.bf16.msra.mxu0 0
    %3925 = vmatprep.subr.bf16.mxu0 0
    %3926 = vmatpush1.bf16.msra.mxu0 0
    %3927 = vmatprep.subr.bf16.mxu0 0
    %3928 = vmatpush1.bf16.msra.mxu0 0
    %3929 = vmatprep.subr.bf16.mxu0 0
    %3930 = vmatpush1.bf16.msra.mxu0 0
    %3931 = vmatprep.subr.bf16.mxu0 0
    %3932 = vmatpush1.bf16.msra.mxu0 0
    %3933 = vmatprep.subr.bf16.mxu0 0
    %3934 = vmatpush1.bf16.msra.mxu0 0
    %3935 = vmatprep.mubr.bf16.mxu0 0
    %3936 = vmatmul.mubr.bf16.gmra.mrb[0].mxu0 %v3898
    %v3937 = vpop.f32.mrb[0].mxu0
    %v3938 = vadd.f32 %v3871, %v3937
    %v3939 = vpop.f32.mrb[0].mxu0
    %v3940 = vpop.f32.mrb[0].mxu0
    %v3941 = vadd.f32 %v3871, %v3940
    %v3942 = vpop.f32.mrb[0].mxu0
    %3943 = vmatprep.mubr.bf16.mxu0 0
    %3944 = vmatmul.mubr.bf16.gmra.mrb[0].mxu0 %v3901
    %v3945 = vpop.f32.mrb[0].mxu0
    %v3946 = vadd.f32 %v3871, %v3945
    %v3947 = vpop.f32.mrb[0].mxu0
    %v3948 = vpop.f32.mrb[0].mxu0
    %v3949 = vadd.f32 %v3871, %v3948
    %v3950 = vpop.f32.mrb[0].mxu0
    %3951 = vdwg.mxu0
    %v3952 = vmax.f32 %v3938, 0.0
    %v3953 = vmax.f32 %v3941, 0.0
    %v3954 = vmax.f32 %v3946, 0.0
    %v3955 = vmax.f32 %v3949, 0.0
    %v3956 = vadd.f32 %v3952, %v2777
    %v3957 = vadd.f32 %v3953, %v2778
    %v3958 = vadd.f32 %v3954, %v2781
    %v3959 = vadd.f32 %v3955, %v2782
    %s3960 = scalar_lea.vmem [#allocation10], 32
    %v3961 = vld [vmem:[%s3960] sm:$0xf]
    %v3962 = vld [vmem:[%s3960 + $0x4] sm:$0xf]
    %v3963 = vld [vmem:[%s3960 + $0x8] sm:$0xf]
    %v3964 = vld [vmem:[%s3960 + $0xc] sm:$0xf]
    %s3965 = scalar_lea.vmem [#allocation11], 4
    %v3966 = vld [vmem:[%s3965] sm:$0x1]
    %s3967 = scalar_lea.vmem [#allocation5], 96
    %v3968 = vld [vmem:[%s3967] sm:$0xff]
    %v3969 = vld [vmem:[%s3967 + $0x8] sm:$0xff]
    %v3970 = vld [vmem:[%s3967 + $0x10] sm:$0xff]
    %v3971 = vld [vmem:[%s3967 + $0x18] sm:$0xff]
    %s3972 = scalar_lea.vmem [#allocation7], 6
    %v3973 = vld [vmem:[%s3972] sm:$0x3]
    %s3974 = scalar_lea.vmem [#allocation10], 48
    %v3975 = vld [vmem:[%s3974] sm:$0xf]
    %v3976 = vld [vmem:[%s3974 + $0x4] sm:$0xf]
    %v3977 = vld [vmem:[%s3974 + $0x8] sm:$0xf]
    %v3978 = vld [vmem:[%s3974 + $0xc] sm:$0xf]
    %s3979 = scalar_lea.vmem [#allocation11], 5
    %v3980 = vld [vmem:[%s3979] sm:$0x1]
    %v3981 = vsel %vm255, %v3956, 0.0
    %v3982 = vrot.slane %v3981, 4
    %v3983 = vadd.f32 %v3981, %v3982
    %v3984 = vrot.slane %v3983, 2
    %v3985 = vadd.f32 %v3983, %v3984
    %v3986 = vrot.slane %v3985, 1
    %v3987 = vadd.f32 %v3985, %v3986
    %v3988 = vsel %vm255, %v3957, 0.0
    %v3989 = vrot.slane %v3988, 4
    %v3990 = vadd.f32 %v3988, %v3989
    %v3991 = vrot.slane %v3990, 2
    %v3992 = vadd.f32 %v3990, %v3991
    %v3993 = vrot.slane %v3992, 1
    %v3994 = vadd.f32 %v3992, %v3993
    %v3995 = vmul.f32 %v3987, 0.125
    %v3996 = vmul.f32 %v3994, 0.125
    %v3997 = vsel %vm1413, %v3958, 0.0
    %v3998 = vrot.slane %v3997, 4
    %v3999 = vadd.f32 %v3997, %v3998
    %v4000 = vrot.slane %v3999, 2
    %v4001 = vadd.f32 %v3999, %v4000
    %v4002 = vrot.slane %v4001, 1
    %v4003 = vadd.f32 %v4001, %v4002
    %v4004 = vsel %vm1413, %v3959, 0.0
    %v4005 = vrot.slane %v4004, 4
    %v4006 = vadd.f32 %v4004, %v4005
    %v4007 = vrot.slane %v4006, 2
    %v4008 = vadd.f32 %v4006, %v4007
    %v4009 = vrot.slane %v4008, 1
    %v4010 = vadd.f32 %v4008, %v4009
    %v4011 = vmul.f32 %v4003, 0.125
    %v4012 = vmul.f32 %v4010, 0.125
    %v4015 = vsel %vm1432, %v3996, %v3995
    %v4019 = vsel %vm1437, %v4012, %v4011
    %4020 = vrot.lane.b32.xlu0 %v4019, 96
    %v4021 = vpop.permute.xlu0 %4020
    %v4023 = vsel %vm1442, %v4015, %v4021
    %v4024 = vpack.c.bf16 %v4023, %v4023
    %v4026 = vlaneseq
    %v4027 = vshrl.u32 %v4026, 7
    %v4028 = vsub.s32 0, %v4027
    %v4029 = vrot.slane %v3966, %v4028
    %v4035 = vunpack.c.l.b16 %v3961
    %v4036 = vunpack.c.l.b16 %v3962
    %v4037 = vunpack.c.l.b16 %v3963
    %v4038 = vunpack.c.l.b16 %v3964
    %v4039 = vpack.c.b16 %v4036, %v4035
    %v4040 = vpack.c.b16 %v4038, %v4037
    %v4044 = vsel %vm255, %v4024, 0
    %4046 = vmatprep.subr.bf16.mxu0 0
    %4047 = vmatpush1.bf16.msra.mxu0 %v4039
    %4048 = vmatprep.subr.bf16.mxu0 0
    %4049 = vmatpush1.bf16.msra.mxu0 %v4040
    %4050 = vmatprep.subr.bf16.mxu0 0
    %4051 = vmatpush1.bf16.msra.mxu0 0
    %4052 = vmatprep.subr.bf16.mxu0 0
    %4053 = vmatpush1.bf16.msra.mxu0 0
    %4054 = vmatprep.subr.bf16.mxu0 0
    %4055 = vmatpush1.bf16.msra.mxu0 0
    %4056 = vmatprep.subr.bf16.mxu0 0
    %4057 = vmatpush1.bf16.msra.mxu0 0
    %4058 = vmatprep.subr.bf16.mxu0 0
    %4059 = vmatpush1.bf16.msra.mxu0 0
    %4060 = vmatprep.subr.bf16.mxu0 0
    %4061 = vmatpush1.bf16.msra.mxu0 0
    %4062 = vmatprep.subr.bf16.mxu0 0
    %4063 = vmatpush1.bf16.msra.mxu0 0
    %4064 = vmatprep.subr.bf16.mxu0 0
    %4065 = vmatpush1.bf16.msra.mxu0 0
    %4066 = vmatprep.subr.bf16.mxu0 0
    %4067 = vmatpush1.bf16.msra.mxu0 0
    %4068 = vmatprep.subr.bf16.mxu0 0
    %4069 = vmatpush1.bf16.msra.mxu0 0
    %4070 = vmatprep.subr.bf16.mxu0 0
    %4071 = vmatpush1.bf16.msra.mxu0 0
    %4072 = vmatprep.subr.bf16.mxu0 0
    %4073 = vmatpush1.bf16.msra.mxu0 0
    %4074 = vmatprep.subr.bf16.mxu0 0
    %4075 = vmatpush1.bf16.msra.mxu0 0
    %4076 = vmatprep.subr.bf16.mxu0 0
    %4077 = vmatpush1.bf16.msra.mxu0 0
    %4078 = vmatprep.mubr.bf16.mxu0 0
    %4079 = vmatmul.mubr.bf16.gmra.mrb[0].mxu0 %v4044
    %v4080 = vpop.f32.mrb[0].mxu0
    %v4081 = vadd.f32 %v4029, %v4080
    %v4082 = vpop.f32.mrb[0].mxu0
    %v4083 = vpop.f32.mrb[0].mxu0
    %v4084 = vpop.f32.mrb[0].mxu0
    %4085 = vdwg.mxu0
    %v4086 = vxor.u32 %v4081, 2147483648
    %v4087 = vmul.f32 %v4086, 1.442695
    %v4088 = vpow.pop %v4087
    %v4089 = vadd.f32 %v4088, 1.0
    %v4090 = vrcp.pop %v4089
    %v4091 = vmul.f32 1.0, %v4090
    %4094 = vrot.lane.b32.xlu0 %v3958, 96
    %v4095 = vpop.permute.xlu0 %4094
    %4096 = vrot.lane.b32.xlu0 %v3959, 96
    %v4097 = vpop.permute.xlu0 %4096
    %v4100 = vpack.c.bf16 %v3957, %v3956
    %v4101 = vpack.c.bf16 %v4097, %v4095
    %v4103 = vlaneseq
    %v4104 = vshrl.u32 %v4103, 7
    %v4105 = vsub.s32 0, %v4104
    %v4106 = vrot.slane %v3973, %v4105
    %v4107 = vlaneseq
    %v4108 = vshrl.u32 %v4107, 7
    %v4109 = vsub.s32 1, %v4108
    %v4110 = vrot.slane %v3973, %v4109
    %v4117 = vunpack.c.l.b16 %v3968
    %v4118 = vunpack.c.h.b16 %v3968
    %v4119 = vunpack.c.l.b16 %v3969
    %v4120 = vunpack.c.h.b16 %v3969
    %v4121 = vunpack.c.l.b16 %v3970
    %v4122 = vunpack.c.h.b16 %v3970
    %v4123 = vunpack.c.l.b16 %v3971
    %v4124 = vunpack.c.h.b16 %v3971
    %v4125 = vpack.c.b16 %v4119, %v4117
    %v4126 = vpack.c.b16 %v4120, %v4118
    %v4127 = vpack.c.b16 %v4123, %v4121
    %v4128 = vpack.c.b16 %v4124, %v4122
    %v4134 = vsel %vm255, %v4100, 0
    %v4137 = vsel %vm255, %v4101, 0
    %4139 = vmatprep.subr.bf16.mxu0 %v4126
    %4140 = vmatpush1.bf16.msra.mxu0 %v4125
    %4141 = vmatprep.subr.bf16.mxu0 %v4128
    %4142 = vmatpush1.bf16.msra.mxu0 %v4127
    %4143 = vmatprep.subr.bf16.mxu0 0
    %4144 = vmatpush1.bf16.msra.mxu0 0
    %4145 = vmatprep.subr.bf16.mxu0 0
    %4146 = vmatpush1.bf16.msra.mxu0 0
    %4147 = vmatprep.subr.bf16.mxu0 0
    %4148 = vmatpush1.bf16.msra.mxu0 0
    %4149 = vmatprep.subr.bf16.mxu0 0
    %4150 = vmatpush1.bf16.msra.mxu0 0
    %4151 = vmatprep.subr.bf16.mxu0 0
    %4152 = vmatpush1.bf16.msra.mxu0 0
    %4153 = vmatprep.subr.bf16.mxu0 0
    %4154 = vmatpush1.bf16.msra.mxu0 0
    %4155 = vmatprep.subr.bf16.mxu0 0
    %4156 = vmatpush1.bf16.msra.mxu0 0
    %4157 = vmatprep.subr.bf16.mxu0 0
    %4158 = vmatpush1.bf16.msra.mxu0 0
    %4159 = vmatprep.subr.bf16.mxu0 0
    %4160 = vmatpush1.bf16.msra.mxu0 0
    %4161 = vmatprep.subr.bf16.mxu0 0
    %4162 = vmatpush1.bf16.msra.mxu0 0
    %4163 = vmatprep.subr.bf16.mxu0 0
    %4164 = vmatpush1.bf16.msra.mxu0 0
    %4165 = vmatprep.subr.bf16.mxu0 0
    %4166 = vmatpush1.bf16.msra.mxu0 0
    %4167 = vmatprep.subr.bf16.mxu0 0
    %4168 = vmatpush1.bf16.msra.mxu0 0
    %4169 = vmatprep.subr.bf16.mxu0 0
    %4170 = vmatpush1.bf16.msra.mxu0 0
    %4171 = vmatprep.mubr.bf16.mxu0 0
    %4172 = vmatmul.mubr.bf16.gmra.mrb[0].mxu0 %v4134
    %v4173 = vpop.f32.mrb[0].mxu0
    %v4174 = vadd.f32 %v4106, %v4173
    %v4175 = vpop.f32.mrb[0].mxu0
    %v4176 = vpop.f32.mrb[0].mxu0
    %v4177 = vadd.f32 %v4106, %v4176
    %v4178 = vpop.f32.mrb[0].mxu0
    %4179 = vmatprep.mubr.bf16.mxu0 0
    %4180 = vmatmul.mubr.bf16.gmra.mrb[0].mxu0 %v4137
    %v4181 = vpop.f32.mrb[0].mxu0
    %v4182 = vadd.f32 %v4106, %v4181
    %v4183 = vpop.f32.mrb[0].mxu0
    %v4184 = vadd.f32 %v4110, %v4183
    %v4185 = vpop.f32.mrb[0].mxu0
    %v4186 = vadd.f32 %v4106, %v4185
    %v4187 = vpop.f32.mrb[0].mxu0
    %v4188 = vadd.f32 %v4110, %v4187
    %4189 = vdwg.mxu0
    %v4190 = vmax.f32 %v4174, 0.0
    %v4191 = vmax.f32 %v4177, 0.0
    %v4192 = vmax.f32 %v4182, 0.0
    %v4193 = vmax.f32 %v4184, 0.0
    %v4194 = vmax.f32 %v4186, 0.0
    %v4195 = vmax.f32 %v4188, 0.0
    %v4196 = vadd.f32 %v4091, 1.0
    %v4199 = vunpack.c.l.s4 1966171168
    %v4200 = vunpack.c.0.s8 %v4199
    %v4201 = vlaneseq
    %v4202 = vshrl.u32 %v4201, 7
    %v4203 = vsub.s32 %v4200, %v4202
    %v4204 = vrot.slane %v4196, %v4203
    %v4205 = vcombine.high %v4204, %v4204
    %v4207 = vunpack.c.l.s4 1966171168
    %v4208 = vunpack.c.0.s8 %v4207
    %v4209 = vlaneseq
    %v4210 = vshrl.u32 %v4209, 7
    %v4211 = vsub.s32 %v4208, %v4210
    %v4212 = vrot.slane %v4204, %v4211
    %v4214 = vunpack.c.l.s4 1966171168
    %v4215 = vunpack.c.0.s8 %v4214
    %v4216 = vlaneseq
    %v4217 = vshrl.u32 %v4216, 7
    %v4218 = vsub.s32 %v4215, %v4217
    %v4219 = vrot.slane %v4205, %v4218
    %v4220 = vcombine.high %v4212, %v4212
    %v4221 = vcombine.high %v4219, %v4219
    %v4222 = vlaneseq
    %v4223 = vshrl.u32 %v4222, 7
    %v4224 = vsub.s32 0, %v4223
    %v4225 = vrot.slane %v4220, %v4224
    %v4226 = vlaneseq
    %v4227 = vshrl.u32 %v4226, 7
    %v4228 = vsub.s32 0, %v4227
    %v4229 = vrot.slane %v4221, %v4228
    %v4232 = vmul.f32 %v4225, %v4190
    %v4233 = vmul.f32 %v4229, %v4191
    %4236 = vrot.lane.b32.xlu0 %v4190, 32
    %v4237 = vpop.permute.xlu0 %4236
    %4238 = vrot.lane.b32.xlu0 %v4191, 32
    %v4239 = vpop.permute.xlu0 %4238
    %v4242 = vmul.f32 %v4225, %v4237
    %v4243 = vmul.f32 %v4229, %v4239
    %4244 = vrot.lane.b32.xlu0 %v4190, 96
    %v4245 = vpop.permute.xlu0 %4244
    %4246 = vrot.lane.b32.xlu0 %v4191, 96
    %v4247 = vpop.permute.xlu0 %4246
    %v4250 = vmul.f32 %v4225, %v4245
    %v4251 = vmul.f32 %v4229, %v4247
    %4254 = vrot.lane.b32.xlu0 %v4232, 112
    %v4255 = vpop.permute.xlu0 %4254
    %4256 = vrot.lane.b32.xlu0 %v4233, 112
    %v4257 = vpop.permute.xlu0 %4256
    %v4260 = vpack.c.bf16 %v4232, %v4232
    %v4261 = vpack.c.bf16 %v4233, %v4233
    %v4262 = vpack.c.bf16 %v4255, %v4255
    %v4263 = vpack.c.bf16 %v4257, %v4257
    %4266 = vrot.lane.b32.xlu0 %v4242, 112
    %v4267 = vpop.permute.xlu0 %4266
    %4268 = vrot.lane.b32.xlu0 %v4243, 112
    %v4269 = vpop.permute.xlu0 %4268
    %v4272 = vpack.c.bf16 %v4242, %v4242
    %v4273 = vpack.c.bf16 %v4243, %v4243
    %v4274 = vpack.c.bf16 %v4267, %v4267
    %v4275 = vpack.c.bf16 %v4269, %v4269
    %4278 = vrot.lane.b32.xlu0 %v4250, 112
    %v4279 = vpop.permute.xlu0 %4278
    %4280 = vrot.lane.b32.xlu0 %v4251, 112
    %v4281 = vpop.permute.xlu0 %4280
    %v4284 = vpack.c.bf16 %v4250, %v4250
    %v4285 = vpack.c.bf16 %v4251, %v4251
    %v4286 = vpack.c.bf16 %v4279, %v4279
    %v4287 = vpack.c.bf16 %v4281, %v4281
    %4289 = vrot.lane.b32.xlu0 %v4260, 96
    %v4290 = vpop.permute.xlu0 %4289
    %4292 = vrot.lane.b32.xlu0 %v4272, 96
    %v4293 = vpop.permute.xlu0 %4292
    %v4295 = vsel %vm140, %v4290, 0
    %v4298 = vsel %vm140, %v4293, 0
    %4300 = vmatprep.subr.bf16.mxu0 0
    %4301 = vmatpush1.bf16.xpose.msra.mxu0 %v4298
    %4302 = vmatprep.subr.bf16.mxu0 0
    %4303 = vmatpush1.bf16.xpose.msra.mxu0 0
    %4304 = vmatprep.subr.bf16.mxu0 0
    %4305 = vmatpush1.bf16.xpose.msra.mxu0 0
    %4306 = vmatprep.subr.bf16.mxu0 0
    %4307 = vmatpush1.bf16.xpose.msra.mxu0 0
    %4308 = vmatprep.subr.bf16.mxu0 0
    %4309 = vmatpush1.bf16.xpose.msra.mxu0 0
    %4310 = vmatprep.subr.bf16.mxu0 0
    %4311 = vmatpush1.bf16.xpose.msra.mxu0 0
    %4312 = vmatprep.subr.bf16.mxu0 0
    %4313 = vmatpush1.bf16.xpose.msra.mxu0 0
    %4314 = vmatprep.subr.bf16.mxu0 0
    %4315 = vmatpush1.bf16.xpose.msra.mxu0 0
    %4316 = vmatprep.subr.bf16.mxu0 0
    %4317 = vmatpush1.bf16.xpose.msra.mxu0 0
    %4318 = vmatprep.subr.bf16.mxu0 0
    %4319 = vmatpush1.bf16.xpose.msra.mxu0 0
    %4320 = vmatprep.subr.bf16.mxu0 0
    %4321 = vmatpush1.bf16.xpose.msra.mxu0 0
    %4322 = vmatprep.subr.bf16.mxu0 0
    %4323 = vmatpush1.bf16.xpose.msra.mxu0 0
    %4324 = vmatprep.subr.bf16.mxu0 0
    %4325 = vmatpush1.bf16.xpose.msra.mxu0 0
    %4326 = vmatprep.subr.bf16.mxu0 0
    %4327 = vmatpush1.bf16.xpose.msra.mxu0 0
    %4328 = vmatprep.subr.bf16.mxu0 0
    %4329 = vmatpush1.bf16.xpose.msra.mxu0 0
    %4330 = vmatprep.subr.bf16.mxu0 0
    %4331 = vmatpush1.bf16.xpose.msra.mxu0 0
    %4332 = vmatprep.mubr.bf16.mxu0 0
    %4333 = vmatmul.mubr.bf16.gmra.mrb[0].mxu0 %v4295
    %v4334 = vpop.f32.mrb[0].mxu0
    %v4335 = vadd.f32 0.0, %v4334
    %v4336 = vpop.f32.mrb[0].mxu0
    %v4337 = vpop.f32.mrb[0].mxu0
    %v4338 = vpop.f32.mrb[0].mxu0
    %4339 = vdwg.mxu0
    %4341 = vrot.lane.b32.xlu0 %v4261, 96
    %v4342 = vpop.permute.xlu0 %4341
    %4344 = vrot.lane.b32.xlu0 %v4273, 96
    %v4345 = vpop.permute.xlu0 %4344
    %v4347 = vsel %vm140, %v4342, 0
    %v4350 = vsel %vm140, %v4345, 0
    %4352 = vmatprep.subr.bf16.mxu0 0
    %4353 = vmatpush1.bf16.xpose.msra.mxu0 %v4350
    %4354 = vmatprep.subr.bf16.mxu0 0
    %4355 = vmatpush1.bf16.xpose.msra.mxu0 0
    %4356 = vmatprep.subr.bf16.mxu0 0
    %4357 = vmatpush1.bf16.xpose.msra.mxu0 0
    %4358 = vmatprep.subr.bf16.mxu0 0
    %4359 = vmatpush1.bf16.xpose.msra.mxu0 0
    %4360 = vmatprep.subr.bf16.mxu0 0
    %4361 = vmatpush1.bf16.xpose.msra.mxu0 0
    %4362 = vmatprep.subr.bf16.mxu0 0
    %4363 = vmatpush1.bf16.xpose.msra.mxu0 0
    %4364 = vmatprep.subr.bf16.mxu0 0
    %4365 = vmatpush1.bf16.xpose.msra.mxu0 0
    %4366 = vmatprep.subr.bf16.mxu0 0
    %4367 = vmatpush1.bf16.xpose.msra.mxu0 0
    %4368 = vmatprep.subr.bf16.mxu0 0
    %4369 = vmatpush1.bf16.xpose.msra.mxu0 0
    %4370 = vmatprep.subr.bf16.mxu0 0
    %4371 = vmatpush1.bf16.xpose.msra.mxu0 0
    %4372 = vmatprep.subr.bf16.mxu0 0
    %4373 = vmatpush1.bf16.xpose.msra.mxu0 0
    %4374 = vmatprep.subr.bf16.mxu0 0
    %4375 = vmatpush1.bf16.xpose.msra.mxu0 0
    %4376 = vmatprep.subr.bf16.mxu0 0
    %4377 = vmatpush1.bf16.xpose.msra.mxu0 0
    %4378 = vmatprep.subr.bf16.mxu0 0
    %4379 = vmatpush1.bf16.xpose.msra.mxu0 0
    %4380 = vmatprep.subr.bf16.mxu0 0
    %4381 = vmatpush1.bf16.xpose.msra.mxu0 0
    %4382 = vmatprep.subr.bf16.mxu0 0
    %4383 = vmatpush1.bf16.xpose.msra.mxu0 0
    %4384 = vmatprep.mubr.bf16.mxu0 0
    %4385 = vmatmul.mubr.bf16.gmra.mrb[0].mxu0 %v4347
    %v4386 = vpop.f32.mrb[0].mxu0
    %v4387 = vadd.f32 0.0, %v4386
    %v4388 = vpop.f32.mrb[0].mxu0
    %v4389 = vpop.f32.mrb[0].mxu0
    %v4390 = vpop.f32.mrb[0].mxu0
    %4391 = vdwg.mxu0
    %4393 = vrot.lane.b32.xlu0 %v4262, 96
    %v4394 = vpop.permute.xlu0 %4393
    %4396 = vrot.lane.b32.xlu0 %v4274, 96
    %v4397 = vpop.permute.xlu0 %4396
    %v4399 = vsel %vm140, %v4394, 0
    %v4402 = vsel %vm140, %v4397, 0
    %4404 = vmatprep.subr.bf16.mxu0 0
    %4405 = vmatpush1.bf16.xpose.msra.mxu0 %v4402
    %4406 = vmatprep.subr.bf16.mxu0 0
    %4407 = vmatpush1.bf16.xpose.msra.mxu0 0
    %4408 = vmatprep.subr.bf16.mxu0 0
    %4409 = vmatpush1.bf16.xpose.msra.mxu0 0
    %4410 = vmatprep.subr.bf16.mxu0 0
    %4411 = vmatpush1.bf16.xpose.msra.mxu0 0
    %4412 = vmatprep.subr.bf16.mxu0 0
    %4413 = vmatpush1.bf16.xpose.msra.mxu0 0
    %4414 = vmatprep.subr.bf16.mxu0 0
    %4415 = vmatpush1.bf16.xpose.msra.mxu0 0
    %4416 = vmatprep.subr.bf16.mxu0 0
    %4417 = vmatpush1.bf16.xpose.msra.mxu0 0
    %4418 = vmatprep.subr.bf16.mxu0 0
    %4419 = vmatpush1.bf16.xpose.msra.mxu0 0
    %4420 = vmatprep.subr.bf16.mxu0 0
    %4421 = vmatpush1.bf16.xpose.msra.mxu0 0
    %4422 = vmatprep.subr.bf16.mxu0 0
    %4423 = vmatpush1.bf16.xpose.msra.mxu0 0
    %4424 = vmatprep.subr.bf16.mxu0 0
    %4425 = vmatpush1.bf16.xpose.msra.mxu0 0
    %4426 = vmatprep.subr.bf16.mxu0 0
    %4427 = vmatpush1.bf16.xpose.msra.mxu0 0
    %4428 = vmatprep.subr.bf16.mxu0 0
    %4429 = vmatpush1.bf16.xpose.msra.mxu0 0
    %4430 = vmatprep.subr.bf16.mxu0 0
    %4431 = vmatpush1.bf16.xpose.msra.mxu0 0
    %4432 = vmatprep.subr.bf16.mxu0 0
    %4433 = vmatpush1.bf16.xpose.msra.mxu0 0
    %4434 = vmatprep.subr.bf16.mxu0 0
    %4435 = vmatpush1.bf16.xpose.msra.mxu0 0
    %4436 = vmatprep.mubr.bf16.mxu0 0
    %4437 = vmatmul.mubr.bf16.gmra.mrb[0].mxu0 %v4399
    %v4438 = vpop.f32.mrb[0].mxu0
    %v4439 = vadd.f32 0.0, %v4438
    %v4440 = vpop.f32.mrb[0].mxu0
    %v4441 = vpop.f32.mrb[0].mxu0
    %v4442 = vpop.f32.mrb[0].mxu0
    %4443 = vdwg.mxu0
    %4445 = vrot.lane.b32.xlu0 %v4263, 96
    %v4446 = vpop.permute.xlu0 %4445
    %4448 = vrot.lane.b32.xlu0 %v4275, 96
    %v4449 = vpop.permute.xlu0 %4448
    %v4451 = vsel %vm140, %v4446, 0
    %v4454 = vsel %vm140, %v4449, 0
    %4456 = vmatprep.subr.bf16.mxu0 0
    %4457 = vmatpush1.bf16.xpose.msra.mxu0 %v4454
    %4458 = vmatprep.subr.bf16.mxu0 0
    %4459 = vmatpush1.bf16.xpose.msra.mxu0 0
    %4460 = vmatprep.subr.bf16.mxu0 0
    %4461 = vmatpush1.bf16.xpose.msra.mxu0 0
    %4462 = vmatprep.subr.bf16.mxu0 0
    %4463 = vmatpush1.bf16.xpose.msra.mxu0 0
    %4464 = vmatprep.subr.bf16.mxu0 0
    %4465 = vmatpush1.bf16.xpose.msra.mxu0 0
    %4466 = vmatprep.subr.bf16.mxu0 0
    %4467 = vmatpush1.bf16.xpose.msra.mxu0 0
    %4468 = vmatprep.subr.bf16.mxu0 0
    %4469 = vmatpush1.bf16.xpose.msra.mxu0 0
    %4470 = vmatprep.subr.bf16.mxu0 0
    %4471 = vmatpush1.bf16.xpose.msra.mxu0 0
    %4472 = vmatprep.subr.bf16.mxu0 0
    %4473 = vmatpush1.bf16.xpose.msra.mxu0 0
    %4474 = vmatprep.subr.bf16.mxu0 0
    %4475 = vmatpush1.bf16.xpose.msra.mxu0 0
    %4476 = vmatprep.subr.bf16.mxu0 0
    %4477 = vmatpush1.bf16.xpose.msra.mxu0 0
    %4478 = vmatprep.subr.bf16.mxu0 0
    %4479 = vmatpush1.bf16.xpose.msra.mxu0 0
    %4480 = vmatprep.subr.bf16.mxu0 0
    %4481 = vmatpush1.bf16.xpose.msra.mxu0 0
    %4482 = vmatprep.subr.bf16.mxu0 0
    %4483 = vmatpush1.bf16.xpose.msra.mxu0 0
    %4484 = vmatprep.subr.bf16.mxu0 0
    %4485 = vmatpush1.bf16.xpose.msra.mxu0 0
    %4486 = vmatprep.subr.bf16.mxu0 0
    %4487 = vmatpush1.bf16.xpose.msra.mxu0 0
    %4488 = vmatprep.mubr.bf16.mxu0 0
    %4489 = vmatmul.mubr.bf16.gmra.mrb[0].mxu0 %v4451
    %v4490 = vpop.f32.mrb[0].mxu0
    %v4491 = vadd.f32 0.0, %v4490
    %v4492 = vpop.f32.mrb[0].mxu0
    %v4493 = vpop.f32.mrb[0].mxu0
    %v4494 = vpop.f32.mrb[0].mxu0
    %4495 = vdwg.mxu0
    %v4496 = vmul.f32 %v4335, 0.25
    %v4497 = vmul.f32 %v4387, 0.25
    %v4498 = vmul.f32 %v4439, 0.25
    %v4499 = vmul.f32 %v4491, 0.25
    %v4500 = vsel %vm567, %v4496, -inf
    %4501 = vmax.xlane.f32.xlu0 %v4500
    %v4502 = vpop.xlane.xlu0 %4501
    %v4503 = vsel %vm567, %v4497, -inf
    %4504 = vmax.xlane.f32.xlu0 %v4503
    %v4505 = vpop.xlane.xlu0 %4504
    %v4506 = vsel %vm567, %v4498, -inf
    %4507 = vmax.xlane.f32.xlu0 %v4506
    %v4508 = vpop.xlane.xlu0 %4507
    %v4509 = vsel %vm567, %v4499, -inf
    %4510 = vmax.xlane.f32.xlu0 %v4509
    %v4511 = vpop.xlane.xlu0 %4510
    %v4512 = vsub.f32 %v4496, %v4502
    %v4513 = vsub.f32 %v4497, %v4505
    %v4514 = vsub.f32 %v4498, %v4508
    %v4515 = vsub.f32 %v4499, %v4511
    %v4516 = vmul.f32 %v4512, 1.442695
    %v4517 = vpow.pop %v4516
    %v4518 = vmul.f32 %v4513, 1.442695
    %v4519 = vpow.pop %v4518
    %v4520 = vmul.f32 %v4514, 1.442695
    %v4521 = vpow.pop %v4520
    %v4522 = vmul.f32 %v4515, 1.442695
    %v4523 = vpow.pop %v4522
    %v4524 = vsel %vm567, %v4517, 0.0
    %4525 = vadd.xlane.f32.xlu0 %v4524
    %v4526 = vpop.xlane.xlu0 %4525
    %v4527 = vsel %vm567, %v4519, 0.0
    %4528 = vadd.xlane.f32.xlu0 %v4527
    %v4529 = vpop.xlane.xlu0 %4528
    %v4530 = vsel %vm567, %v4521, 0.0
    %4531 = vadd.xlane.f32.xlu0 %v4530
    %v4532 = vpop.xlane.xlu0 %4531
    %v4533 = vsel %vm567, %v4523, 0.0
    %4534 = vadd.xlane.f32.xlu0 %v4533
    %v4535 = vpop.xlane.xlu0 %4534
    %v4536 = vrcp.pop %v4526
    %v4537 = vrcp.pop %v4529
    %v4538 = vrcp.pop %v4532
    %v4539 = vrcp.pop %v4535
    %v4540 = vmul.f32 %v4517, %v4536
    %v4541 = vmul.f32 %v4519, %v4537
    %v4542 = vmul.f32 %v4521, %v4538
    %v4543 = vmul.f32 %v4523, %v4539
    %v4544 = vpack.c.bf16 %v4540, %v4540
    %v4545 = vpack.c.bf16 %v4541, %v4541
    %v4546 = vpack.c.bf16 %v4542, %v4542
    %v4547 = vpack.c.bf16 %v4543, %v4543
    %4549 = vrot.lane.b32.xlu0 %v4284, 96
    %v4550 = vpop.permute.xlu0 %4549
    %v4552 = vsel %vm567, %v4544, 0
    %v4555 = vsel %vm622, %v4550, 0
    %4557 = vmatprep.subr.bf16.mxu0 0
    %4558 = vmatpush1.bf16.msra.mxu0 %v4555
    %4559 = vmatprep.subr.bf16.mxu0 0
    %4560 = vmatpush1.bf16.msra.mxu0 0
    %4561 = vmatprep.subr.bf16.mxu0 0
    %4562 = vmatpush1.bf16.msra.mxu0 0
    %4563 = vmatprep.subr.bf16.mxu0 0
    %4564 = vmatpush1.bf16.msra.mxu0 0
    %4565 = vmatprep.subr.bf16.mxu0 0
    %4566 = vmatpush1.bf16.msra.mxu0 0
    %4567 = vmatprep.subr.bf16.mxu0 0
    %4568 = vmatpush1.bf16.msra.mxu0 0
    %4569 = vmatprep.subr.bf16.mxu0 0
    %4570 = vmatpush1.bf16.msra.mxu0 0
    %4571 = vmatprep.subr.bf16.mxu0 0
    %4572 = vmatpush1.bf16.msra.mxu0 0
    %4573 = vmatprep.subr.bf16.mxu0 0
    %4574 = vmatpush1.bf16.msra.mxu0 0
    %4575 = vmatprep.subr.bf16.mxu0 0
    %4576 = vmatpush1.bf16.msra.mxu0 0
    %4577 = vmatprep.subr.bf16.mxu0 0
    %4578 = vmatpush1.bf16.msra.mxu0 0
    %4579 = vmatprep.subr.bf16.mxu0 0
    %4580 = vmatpush1.bf16.msra.mxu0 0
    %4581 = vmatprep.subr.bf16.mxu0 0
    %4582 = vmatpush1.bf16.msra.mxu0 0
    %4583 = vmatprep.subr.bf16.mxu0 0
    %4584 = vmatpush1.bf16.msra.mxu0 0
    %4585 = vmatprep.subr.bf16.mxu0 0
    %4586 = vmatpush1.bf16.msra.mxu0 0
    %4587 = vmatprep.subr.bf16.mxu0 0
    %4588 = vmatpush1.bf16.msra.mxu0 0
    %4589 = vmatprep.mubr.bf16.mxu0 0
    %4590 = vmatmul.mubr.bf16.gmra.mrb[0].mxu0 %v4552
    %v4591 = vpop.f32.mrb[0].mxu0
    %v4592 = vadd.f32 0.0, %v4591
    %v4593 = vpop.f32.mrb[0].mxu0
    %v4594 = vpop.f32.mrb[0].mxu0
    %v4595 = vpop.f32.mrb[0].mxu0
    %4596 = vdwg.mxu0
    %4598 = vrot.lane.b32.xlu0 %v4285, 96
    %v4599 = vpop.permute.xlu0 %4598
    %v4601 = vsel %vm567, %v4545, 0
    %v4604 = vsel %vm622, %v4599, 0
    %4606 = vmatprep.subr.bf16.mxu0 0
    %4607 = vmatpush1.bf16.msra.mxu0 %v4604
    %4608 = vmatprep.subr.bf16.mxu0 0
    %4609 = vmatpush1.bf16.msra.mxu0 0
    %4610 = vmatprep.subr.bf16.mxu0 0
    %4611 = vmatpush1.bf16.msra.mxu0 0
    %4612 = vmatprep.subr.bf16.mxu0 0
    %4613 = vmatpush1.bf16.msra.mxu0 0
    %4614 = vmatprep.subr.bf16.mxu0 0
    %4615 = vmatpush1.bf16.msra.mxu0 0
    %4616 = vmatprep.subr.bf16.mxu0 0
    %4617 = vmatpush1.bf16.msra.mxu0 0
    %4618 = vmatprep.subr.bf16.mxu0 0
    %4619 = vmatpush1.bf16.msra.mxu0 0
    %4620 = vmatprep.subr.bf16.mxu0 0
    %4621 = vmatpush1.bf16.msra.mxu0 0
    %4622 = vmatprep.subr.bf16.mxu0 0
    %4623 = vmatpush1.bf16.msra.mxu0 0
    %4624 = vmatprep.subr.bf16.mxu0 0
    %4625 = vmatpush1.bf16.msra.mxu0 0
    %4626 = vmatprep.subr.bf16.mxu0 0
    %4627 = vmatpush1.bf16.msra.mxu0 0
    %4628 = vmatprep.subr.bf16.mxu0 0
    %4629 = vmatpush1.bf16.msra.mxu0 0
    %4630 = vmatprep.subr.bf16.mxu0 0
    %4631 = vmatpush1.bf16.msra.mxu0 0
    %4632 = vmatprep.subr.bf16.mxu0 0
    %4633 = vmatpush1.bf16.msra.mxu0 0
    %4634 = vmatprep.subr.bf16.mxu0 0
    %4635 = vmatpush1.bf16.msra.mxu0 0
    %4636 = vmatprep.subr.bf16.mxu0 0
    %4637 = vmatpush1.bf16.msra.mxu0 0
    %4638 = vmatprep.mubr.bf16.mxu0 0
    %4639 = vmatmul.mubr.bf16.gmra.mrb[0].mxu0 %v4601
    %v4640 = vpop.f32.mrb[0].mxu0
    %v4641 = vadd.f32 0.0, %v4640
    %v4642 = vpop.f32.mrb[0].mxu0
    %v4643 = vpop.f32.mrb[0].mxu0
    %v4644 = vpop.f32.mrb[0].mxu0
    %4645 = vdwg.mxu0
    %4647 = vrot.lane.b32.xlu0 %v4286, 96
    %v4648 = vpop.permute.xlu0 %4647
    %v4650 = vsel %vm567, %v4546, 0
    %v4653 = vsel %vm622, %v4648, 0
    %4655 = vmatprep.subr.bf16.mxu0 0
    %4656 = vmatpush1.bf16.msra.mxu0 %v4653
    %4657 = vmatprep.subr.bf16.mxu0 0
    %4658 = vmatpush1.bf16.msra.mxu0 0
    %4659 = vmatprep.subr.bf16.mxu0 0
    %4660 = vmatpush1.bf16.msra.mxu0 0
    %4661 = vmatprep.subr.bf16.mxu0 0
    %4662 = vmatpush1.bf16.msra.mxu0 0
    %4663 = vmatprep.subr.bf16.mxu0 0
    %4664 = vmatpush1.bf16.msra.mxu0 0
    %4665 = vmatprep.subr.bf16.mxu0 0
    %4666 = vmatpush1.bf16.msra.mxu0 0
    %4667 = vmatprep.subr.bf16.mxu0 0
    %4668 = vmatpush1.bf16.msra.mxu0 0
    %4669 = vmatprep.subr.bf16.mxu0 0
    %4670 = vmatpush1.bf16.msra.mxu0 0
    %4671 = vmatprep.subr.bf16.mxu0 0
    %4672 = vmatpush1.bf16.msra.mxu0 0
    %4673 = vmatprep.subr.bf16.mxu0 0
    %4674 = vmatpush1.bf16.msra.mxu0 0
    %4675 = vmatprep.subr.bf16.mxu0 0
    %4676 = vmatpush1.bf16.msra.mxu0 0
    %4677 = vmatprep.subr.bf16.mxu0 0
    %4678 = vmatpush1.bf16.msra.mxu0 0
    %4679 = vmatprep.subr.bf16.mxu0 0
    %4680 = vmatpush1.bf16.msra.mxu0 0
    %4681 = vmatprep.subr.bf16.mxu0 0
    %4682 = vmatpush1.bf16.msra.mxu0 0
    %4683 = vmatprep.subr.bf16.mxu0 0
    %4684 = vmatpush1.bf16.msra.mxu0 0
    %4685 = vmatprep.subr.bf16.mxu0 0
    %4686 = vmatpush1.bf16.msra.mxu0 0
    %4687 = vmatprep.mubr.bf16.mxu0 0
    %4688 = vmatmul.mubr.bf16.gmra.mrb[0].mxu0 %v4650
    %v4689 = vpop.f32.mrb[0].mxu0
    %v4690 = vadd.f32 0.0, %v4689
    %v4691 = vpop.f32.mrb[0].mxu0
    %v4692 = vpop.f32.mrb[0].mxu0
    %v4693 = vpop.f32.mrb[0].mxu0
    %4694 = vdwg.mxu0
    %4696 = vrot.lane.b32.xlu0 %v4287, 96
    %v4697 = vpop.permute.xlu0 %4696
    %v4699 = vsel %vm567, %v4547, 0
    %v4702 = vsel %vm622, %v4697, 0
    %4704 = vmatprep.subr.bf16.mxu0 0
    %4705 = vmatpush1.bf16.msra.mxu0 %v4702
    %4706 = vmatprep.subr.bf16.mxu0 0
    %4707 = vmatpush1.bf16.msra.mxu0 0
    %4708 = vmatprep.subr.bf16.mxu0 0
    %4709 = vmatpush1.bf16.msra.mxu0 0
    %4710 = vmatprep.subr.bf16.mxu0 0
    %4711 = vmatpush1.bf16.msra.mxu0 0
    %4712 = vmatprep.subr.bf16.mxu0 0
    %4713 = vmatpush1.bf16.msra.mxu0 0
    %4714 = vmatprep.subr.bf16.mxu0 0
    %4715 = vmatpush1.bf16.msra.mxu0 0
    %4716 = vmatprep.subr.bf16.mxu0 0
    %4717 = vmatpush1.bf16.msra.mxu0 0
    %4718 = vmatprep.subr.bf16.mxu0 0
    %4719 = vmatpush1.bf16.msra.mxu0 0
    %4720 = vmatprep.subr.bf16.mxu0 0
    %4721 = vmatpush1.bf16.msra.mxu0 0
    %4722 = vmatprep.subr.bf16.mxu0 0
    %4723 = vmatpush1.bf16.msra.mxu0 0
    %4724 = vmatprep.subr.bf16.mxu0 0
    %4725 = vmatpush1.bf16.msra.mxu0 0
    %4726 = vmatprep.subr.bf16.mxu0 0
    %4727 = vmatpush1.bf16.msra.mxu0 0
    %4728 = vmatprep.subr.bf16.mxu0 0
    %4729 = vmatpush1.bf16.msra.mxu0 0
    %4730 = vmatprep.subr.bf16.mxu0 0
    %4731 = vmatpush1.bf16.msra.mxu0 0
    %4732 = vmatprep.subr.bf16.mxu0 0
    %4733 = vmatpush1.bf16.msra.mxu0 0
    %4734 = vmatprep.subr.bf16.mxu0 0
    %4735 = vmatpush1.bf16.msra.mxu0 0
    %4736 = vmatprep.mubr.bf16.mxu0 0
    %4737 = vmatmul.mubr.bf16.gmra.mrb[0].mxu0 %v4699
    %v4738 = vpop.f32.mrb[0].mxu0
    %v4739 = vadd.f32 0.0, %v4738
    %v4740 = vpop.f32.mrb[0].mxu0
    %v4741 = vpop.f32.mrb[0].mxu0
    %v4742 = vpop.f32.mrb[0].mxu0
    %4743 = vdwg.mxu0
    %4746 = vrot.lane.b32.xlu0 %v4690, 16
    %v4747 = vpop.permute.xlu0 %4746
    %4748 = vrot.lane.b32.xlu0 %v4739, 16
    %v4749 = vpop.permute.xlu0 %4748
    %v4752 = vsel %vm140, %v4592, %v4747
    %v4753 = vsel %vm140, %v4641, %v4749
    %v4754 = vlaneseq
    %v4755 = vshrl.u32 %v4754, 7
    %v4756 = vsub.s32 0, %v4755
    %v4757 = vrot.slane %v4212, %v4756
    %v4758 = vlaneseq
    %v4759 = vshrl.u32 %v4758, 7
    %v4760 = vsub.s32 0, %v4759
    %v4761 = vrot.slane %v4219, %v4760
    %v4764 = vmul.f32 %v4757, %v4193
    %v4765 = vmul.f32 %v4761, %v4195
    %4768 = vrot.lane.b32.xlu0 %v4192, 32
    %v4769 = vpop.permute.xlu0 %4768
    %4770 = vrot.lane.b32.xlu0 %v4194, 32
    %v4771 = vpop.permute.xlu0 %4770
    %v4774 = vmul.f32 %v4757, %v4769
    %v4775 = vmul.f32 %v4761, %v4771
    %4778 = vrot.lane.b32.xlu0 %v4193, 96
    %v4779 = vpop.permute.xlu0 %4778
    %4780 = vrot.lane.b32.xlu0 %v4195, 96
    %v4781 = vpop.permute.xlu0 %4780
    %v4784 = vmul.f32 %v4757, %v4779
    %v4785 = vmul.f32 %v4761, %v4781
    %4788 = vrot.lane.b32.xlu0 %v4764, 112
    %v4789 = vpop.permute.xlu0 %4788
    %4790 = vrot.lane.b32.xlu0 %v4765, 112
    %v4791 = vpop.permute.xlu0 %4790
    %v4794 = vpack.c.bf16 %v4764, %v4764
    %v4795 = vpack.c.bf16 %v4765, %v4765
    %v4796 = vpack.c.bf16 %v4789, %v4789
    %v4797 = vpack.c.bf16 %v4791, %v4791
    %4800 = vrot.lane.b32.xlu0 %v4774, 112
    %v4801 = vpop.permute.xlu0 %4800
    %4802 = vrot.lane.b32.xlu0 %v4775, 112
    %v4803 = vpop.permute.xlu0 %4802
    %v4806 = vpack.c.bf16 %v4774, %v4774
    %v4807 = vpack.c.bf16 %v4775, %v4775
    %v4808 = vpack.c.bf16 %v4801, %v4801
    %v4809 = vpack.c.bf16 %v4803, %v4803
    %4812 = vrot.lane.b32.xlu0 %v4784, 112
    %v4813 = vpop.permute.xlu0 %4812
    %4814 = vrot.lane.b32.xlu0 %v4785, 112
    %v4815 = vpop.permute.xlu0 %4814
    %v4818 = vpack.c.bf16 %v4784, %v4784
    %v4819 = vpack.c.bf16 %v4785, %v4785
    %v4820 = vpack.c.bf16 %v4813, %v4813
    %v4821 = vpack.c.bf16 %v4815, %v4815
    %v4823 = vsel %vm140, %v4794, 0
    %v4826 = vsel %vm140, %v4806, 0
    %4828 = vmatprep.subr.bf16.mxu0 0
    %4829 = vmatpush1.bf16.xpose.msra.mxu0 %v4826
    %4830 = vmatprep.subr.bf16.mxu0 0
    %4831 = vmatpush1.bf16.xpose.msra.mxu0 0
    %4832 = vmatprep.subr.bf16.mxu0 0
    %4833 = vmatpush1.bf16.xpose.msra.mxu0 0
    %4834 = vmatprep.subr.bf16.mxu0 0
    %4835 = vmatpush1.bf16.xpose.msra.mxu0 0
    %4836 = vmatprep.subr.bf16.mxu0 0
    %4837 = vmatpush1.bf16.xpose.msra.mxu0 0
    %4838 = vmatprep.subr.bf16.mxu0 0
    %4839 = vmatpush1.bf16.xpose.msra.mxu0 0
    %4840 = vmatprep.subr.bf16.mxu0 0
    %4841 = vmatpush1.bf16.xpose.msra.mxu0 0
    %4842 = vmatprep.subr.bf16.mxu0 0
    %4843 = vmatpush1.bf16.xpose.msra.mxu0 0
    %4844 = vmatprep.subr.bf16.mxu0 0
    %4845 = vmatpush1.bf16.xpose.msra.mxu0 0
    %4846 = vmatprep.subr.bf16.mxu0 0
    %4847 = vmatpush1.bf16.xpose.msra.mxu0 0
    %4848 = vmatprep.subr.bf16.mxu0 0
    %4849 = vmatpush1.bf16.xpose.msra.mxu0 0
    %4850 = vmatprep.subr.bf16.mxu0 0
    %4851 = vmatpush1.bf16.xpose.msra.mxu0 0
    %4852 = vmatprep.subr.bf16.mxu0 0
    %4853 = vmatpush1.bf16.xpose.msra.mxu0 0
    %4854 = vmatprep.subr.bf16.mxu0 0
    %4855 = vmatpush1.bf16.xpose.msra.mxu0 0
    %4856 = vmatprep.subr.bf16.mxu0 0
    %4857 = vmatpush1.bf16.xpose.msra.mxu0 0
    %4858 = vmatprep.subr.bf16.mxu0 0
    %4859 = vmatpush1.bf16.xpose.msra.mxu0 0
    %4860 = vmatprep.mubr.bf16.mxu0 0
    %4861 = vmatmul.mubr.bf16.gmra.mrb[0].mxu0 %v4823
    %v4862 = vpop.f32.mrb[0].mxu0
    %v4863 = vadd.f32 0.0, %v4862
    %v4864 = vpop.f32.mrb[0].mxu0
    %v4865 = vpop.f32.mrb[0].mxu0
    %v4866 = vpop.f32.mrb[0].mxu0
    %4867 = vdwg.mxu0
    %v4869 = vsel %vm140, %v4795, 0
    %v4872 = vsel %vm140, %v4807, 0
    %4874 = vmatprep.subr.bf16.mxu0 0
    %4875 = vmatpush1.bf16.xpose.msra.mxu0 %v4872
    %4876 = vmatprep.subr.bf16.mxu0 0
    %4877 = vmatpush1.bf16.xpose.msra.mxu0 0
    %4878 = vmatprep.subr.bf16.mxu0 0
    %4879 = vmatpush1.bf16.xpose.msra.mxu0 0
    %4880 = vmatprep.subr.bf16.mxu0 0
    %4881 = vmatpush1.bf16.xpose.msra.mxu0 0
    %4882 = vmatprep.subr.bf16.mxu0 0
    %4883 = vmatpush1.bf16.xpose.msra.mxu0 0
    %4884 = vmatprep.subr.bf16.mxu0 0
    %4885 = vmatpush1.bf16.xpose.msra.mxu0 0
    %4886 = vmatprep.subr.bf16.mxu0 0
    %4887 = vmatpush1.bf16.xpose.msra.mxu0 0
    %4888 = vmatprep.subr.bf16.mxu0 0
    %4889 = vmatpush1.bf16.xpose.msra.mxu0 0
    %4890 = vmatprep.subr.bf16.mxu0 0
    %4891 = vmatpush1.bf16.xpose.msra.mxu0 0
    %4892 = vmatprep.subr.bf16.mxu0 0
    %4893 = vmatpush1.bf16.xpose.msra.mxu0 0
    %4894 = vmatprep.subr.bf16.mxu0 0
    %4895 = vmatpush1.bf16.xpose.msra.mxu0 0
    %4896 = vmatprep.subr.bf16.mxu0 0
    %4897 = vmatpush1.bf16.xpose.msra.mxu0 0
    %4898 = vmatprep.subr.bf16.mxu0 0
    %4899 = vmatpush1.bf16.xpose.msra.mxu0 0
    %4900 = vmatprep.subr.bf16.mxu0 0
    %4901 = vmatpush1.bf16.xpose.msra.mxu0 0
    %4902 = vmatprep.subr.bf16.mxu0 0
    %4903 = vmatpush1.bf16.xpose.msra.mxu0 0
    %4904 = vmatprep.subr.bf16.mxu0 0
    %4905 = vmatpush1.bf16.xpose.msra.mxu0 0
    %4906 = vmatprep.mubr.bf16.mxu0 0
    %4907 = vmatmul.mubr.bf16.gmra.mrb[0].mxu0 %v4869
    %v4908 = vpop.f32.mrb[0].mxu0
    %v4909 = vadd.f32 0.0, %v4908
    %v4910 = vpop.f32.mrb[0].mxu0
    %v4911 = vpop.f32.mrb[0].mxu0
    %v4912 = vpop.f32.mrb[0].mxu0
    %4913 = vdwg.mxu0
    %v4915 = vsel %vm140, %v4796, 0
    %v4918 = vsel %vm140, %v4808, 0
    %4920 = vmatprep.subr.bf16.mxu0 0
    %4921 = vmatpush1.bf16.xpose.msra.mxu0 %v4918
    %4922 = vmatprep.subr.bf16.mxu0 0
    %4923 = vmatpush1.bf16.xpose.msra.mxu0 0
    %4924 = vmatprep.subr.bf16.mxu0 0
    %4925 = vmatpush1.bf16.xpose.msra.mxu0 0
    %4926 = vmatprep.subr.bf16.mxu0 0
    %4927 = vmatpush1.bf16.xpose.msra.mxu0 0
    %4928 = vmatprep.subr.bf16.mxu0 0
    %4929 = vmatpush1.bf16.xpose.msra.mxu0 0
    %4930 = vmatprep.subr.bf16.mxu0 0
    %4931 = vmatpush1.bf16.xpose.msra.mxu0 0
    %4932 = vmatprep.subr.bf16.mxu0 0
    %4933 = vmatpush1.bf16.xpose.msra.mxu0 0
    %4934 = vmatprep.subr.bf16.mxu0 0
    %4935 = vmatpush1.bf16.xpose.msra.mxu0 0
    %4936 = vmatprep.subr.bf16.mxu0 0
    %4937 = vmatpush1.bf16.xpose.msra.mxu0 0
    %4938 = vmatprep.subr.bf16.mxu0 0
    %4939 = vmatpush1.bf16.xpose.msra.mxu0 0
    %4940 = vmatprep.subr.bf16.mxu0 0
    %4941 = vmatpush1.bf16.xpose.msra.mxu0 0
    %4942 = vmatprep.subr.bf16.mxu0 0
    %4943 = vmatpush1.bf16.xpose.msra.mxu0 0
    %4944 = vmatprep.subr.bf16.mxu0 0
    %4945 = vmatpush1.bf16.xpose.msra.mxu0 0
    %4946 = vmatprep.subr.bf16.mxu0 0
    %4947 = vmatpush1.bf16.xpose.msra.mxu0 0
    %4948 = vmatprep.subr.bf16.mxu0 0
    %4949 = vmatpush1.bf16.xpose.msra.mxu0 0
    %4950 = vmatprep.subr.bf16.mxu0 0
    %4951 = vmatpush1.bf16.xpose.msra.mxu0 0
    %4952 = vmatprep.mubr.bf16.mxu0 0
    %4953 = vmatmul.mubr.bf16.gmra.mrb[0].mxu0 %v4915
    %v4954 = vpop.f32.mrb[0].mxu0
    %v4955 = vadd.f32 0.0, %v4954
    %v4956 = vpop.f32.mrb[0].mxu0
    %v4957 = vpop.f32.mrb[0].mxu0
    %v4958 = vpop.f32.mrb[0].mxu0
    %4959 = vdwg.mxu0
    %v4961 = vsel %vm140, %v4797, 0
    %v4964 = vsel %vm140, %v4809, 0
    %4966 = vmatprep.subr.bf16.mxu0 0
    %4967 = vmatpush1.bf16.xpose.msra.mxu0 %v4964
    %4968 = vmatprep.subr.bf16.mxu0 0
    %4969 = vmatpush1.bf16.xpose.msra.mxu0 0
    %4970 = vmatprep.subr.bf16.mxu0 0
    %4971 = vmatpush1.bf16.xpose.msra.mxu0 0
    %4972 = vmatprep.subr.bf16.mxu0 0
    %4973 = vmatpush1.bf16.xpose.msra.mxu0 0
    %4974 = vmatprep.subr.bf16.mxu0 0
    %4975 = vmatpush1.bf16.xpose.msra.mxu0 0
    %4976 = vmatprep.subr.bf16.mxu0 0
    %4977 = vmatpush1.bf16.xpose.msra.mxu0 0
    %4978 = vmatprep.subr.bf16.mxu0 0
    %4979 = vmatpush1.bf16.xpose.msra.mxu0 0
    %4980 = vmatprep.subr.bf16.mxu0 0
    %4981 = vmatpush1.bf16.xpose.msra.mxu0 0
    %4982 = vmatprep.subr.bf16.mxu0 0
    %4983 = vmatpush1.bf16.xpose.msra.mxu0 0
    %4984 = vmatprep.subr.bf16.mxu0 0
    %4985 = vmatpush1.bf16.xpose.msra.mxu0 0
    %4986 = vmatprep.subr.bf16.mxu0 0
    %4987 = vmatpush1.bf16.xpose.msra.mxu0 0
    %4988 = vmatprep.subr.bf16.mxu0 0
    %4989 = vmatpush1.bf16.xpose.msra.mxu0 0
    %4990 = vmatprep.subr.bf16.mxu0 0
    %4991 = vmatpush1.bf16.xpose.msra.mxu0 0
    %4992 = vmatprep.subr.bf16.mxu0 0
    %4993 = vmatpush1.bf16.xpose.msra.mxu0 0
    %4994 = vmatprep.subr.bf16.mxu0 0
    %4995 = vmatpush1.bf16.xpose.msra.mxu0 0
    %4996 = vmatprep.subr.bf16.mxu0 0
    %4997 = vmatpush1.bf16.xpose.msra.mxu0 0
    %4998 = vmatprep.mubr.bf16.mxu0 0
    %4999 = vmatmul.mubr.bf16.gmra.mrb[0].mxu0 %v4961
    %v5000 = vpop.f32.mrb[0].mxu0
    %v5001 = vadd.f32 0.0, %v5000
    %v5002 = vpop.f32.mrb[0].mxu0
    %v5003 = vpop.f32.mrb[0].mxu0
    %v5004 = vpop.f32.mrb[0].mxu0
    %5005 = vdwg.mxu0
    %v5006 = vmul.f32 %v4863, 0.25
    %v5007 = vmul.f32 %v4909, 0.25
    %v5008 = vmul.f32 %v4955, 0.25
    %v5009 = vmul.f32 %v5001, 0.25
    %v5010 = vsel %vm567, %v5006, -inf
    %5011 = vmax.xlane.f32.xlu0 %v5010
    %v5012 = vpop.xlane.xlu0 %5011
    %v5013 = vsel %vm567, %v5007, -inf
    %5014 = vmax.xlane.f32.xlu0 %v5013
    %v5015 = vpop.xlane.xlu0 %5014
    %v5016 = vsel %vm567, %v5008, -inf
    %5017 = vmax.xlane.f32.xlu0 %v5016
    %v5018 = vpop.xlane.xlu0 %5017
    %v5019 = vsel %vm567, %v5009, -inf
    %5020 = vmax.xlane.f32.xlu0 %v5019
    %v5021 = vpop.xlane.xlu0 %5020
    %v5022 = vsub.f32 %v5006, %v5012
    %v5023 = vsub.f32 %v5007, %v5015
    %v5024 = vsub.f32 %v5008, %v5018
    %v5025 = vsub.f32 %v5009, %v5021
    %v5026 = vmul.f32 %v5022, 1.442695
    %v5027 = vpow.pop %v5026
    %v5028 = vmul.f32 %v5023, 1.442695
    %v5029 = vpow.pop %v5028
    %v5030 = vmul.f32 %v5024, 1.442695
    %v5031 = vpow.pop %v5030
    %v5032 = vmul.f32 %v5025, 1.442695
    %v5033 = vpow.pop %v5032
    %v5034 = vsel %vm567, %v5027, 0.0
    %5035 = vadd.xlane.f32.xlu0 %v5034
    %v5036 = vpop.xlane.xlu0 %5035
    %v5037 = vsel %vm567, %v5029, 0.0
    %5038 = vadd.xlane.f32.xlu0 %v5037
    %v5039 = vpop.xlane.xlu0 %5038
    %v5040 = vsel %vm567, %v5031, 0.0
    %5041 = vadd.xlane.f32.xlu0 %v5040
    %v5042 = vpop.xlane.xlu0 %5041
    %v5043 = vsel %vm567, %v5033, 0.0
    %5044 = vadd.xlane.f32.xlu0 %v5043
    %v5045 = vpop.xlane.xlu0 %5044
    %v5046 = vrcp.pop %v5036
    %v5047 = vrcp.pop %v5039
    %v5048 = vrcp.pop %v5042
    %v5049 = vrcp.pop %v5045
    %v5050 = vmul.f32 %v5027, %v5046
    %v5051 = vmul.f32 %v5029, %v5047
    %v5052 = vmul.f32 %v5031, %v5048
    %v5053 = vmul.f32 %v5033, %v5049
    %v5054 = vpack.c.bf16 %v5050, %v5050
    %v5055 = vpack.c.bf16 %v5051, %v5051
    %v5056 = vpack.c.bf16 %v5052, %v5052
    %v5057 = vpack.c.bf16 %v5053, %v5053
    %v5059 = vsel %vm567, %v5054, 0
    %v5062 = vsel %vm622, %v4818, 0
    %5064 = vmatprep.subr.bf16.mxu0 0
    %5065 = vmatpush1.bf16.msra.mxu0 %v5062
    %5066 = vmatprep.subr.bf16.mxu0 0
    %5067 = vmatpush1.bf16.msra.mxu0 0
    %5068 = vmatprep.subr.bf16.mxu0 0
    %5069 = vmatpush1.bf16.msra.mxu0 0
    %5070 = vmatprep.subr.bf16.mxu0 0
    %5071 = vmatpush1.bf16.msra.mxu0 0
    %5072 = vmatprep.subr.bf16.mxu0 0
    %5073 = vmatpush1.bf16.msra.mxu0 0
    %5074 = vmatprep.subr.bf16.mxu0 0
    %5075 = vmatpush1.bf16.msra.mxu0 0
    %5076 = vmatprep.subr.bf16.mxu0 0
    %5077 = vmatpush1.bf16.msra.mxu0 0
    %5078 = vmatprep.subr.bf16.mxu0 0
    %5079 = vmatpush1.bf16.msra.mxu0 0
    %5080 = vmatprep.subr.bf16.mxu0 0
    %5081 = vmatpush1.bf16.msra.mxu0 0
    %5082 = vmatprep.subr.bf16.mxu0 0
    %5083 = vmatpush1.bf16.msra.mxu0 0
    %5084 = vmatprep.subr.bf16.mxu0 0
    %5085 = vmatpush1.bf16.msra.mxu0 0
    %5086 = vmatprep.subr.bf16.mxu0 0
    %5087 = vmatpush1.bf16.msra.mxu0 0
    %5088 = vmatprep.subr.bf16.mxu0 0
    %5089 = vmatpush1.bf16.msra.mxu0 0
    %5090 = vmatprep.subr.bf16.mxu0 0
    %5091 = vmatpush1.bf16.msra.mxu0 0
    %5092 = vmatprep.subr.bf16.mxu0 0
    %5093 = vmatpush1.bf16.msra.mxu0 0
    %5094 = vmatprep.subr.bf16.mxu0 0
    %5095 = vmatpush1.bf16.msra.mxu0 0
    %5096 = vmatprep.mubr.bf16.mxu0 0
    %5097 = vmatmul.mubr.bf16.gmra.mrb[0].mxu0 %v5059
    %v5098 = vpop.f32.mrb[0].mxu0
    %v5099 = vadd.f32 0.0, %v5098
    %v5100 = vpop.f32.mrb[0].mxu0
    %v5101 = vpop.f32.mrb[0].mxu0
    %v5102 = vpop.f32.mrb[0].mxu0
    %5103 = vdwg.mxu0
    %v5105 = vsel %vm567, %v5055, 0
    %v5108 = vsel %vm622, %v4819, 0
    %5110 = vmatprep.subr.bf16.mxu0 0
    %5111 = vmatpush1.bf16.msra.mxu0 %v5108
    %5112 = vmatprep.subr.bf16.mxu0 0
    %5113 = vmatpush1.bf16.msra.mxu0 0
    %5114 = vmatprep.subr.bf16.mxu0 0
    %5115 = vmatpush1.bf16.msra.mxu0 0
    %5116 = vmatprep.subr.bf16.mxu0 0
    %5117 = vmatpush1.bf16.msra.mxu0 0
    %5118 = vmatprep.subr.bf16.mxu0 0
    %5119 = vmatpush1.bf16.msra.mxu0 0
    %5120 = vmatprep.subr.bf16.mxu0 0
    %5121 = vmatpush1.bf16.msra.mxu0 0
    %5122 = vmatprep.subr.bf16.mxu0 0
    %5123 = vmatpush1.bf16.msra.mxu0 0
    %5124 = vmatprep.subr.bf16.mxu0 0
    %5125 = vmatpush1.bf16.msra.mxu0 0
    %5126 = vmatprep.subr.bf16.mxu0 0
    %5127 = vmatpush1.bf16.msra.mxu0 0
    %5128 = vmatprep.subr.bf16.mxu0 0
    %5129 = vmatpush1.bf16.msra.mxu0 0
    %5130 = vmatprep.subr.bf16.mxu0 0
    %5131 = vmatpush1.bf16.msra.mxu0 0
    %5132 = vmatprep.subr.bf16.mxu0 0
    %5133 = vmatpush1.bf16.msra.mxu0 0
    %5134 = vmatprep.subr.bf16.mxu0 0
    %5135 = vmatpush1.bf16.msra.mxu0 0
    %5136 = vmatprep.subr.bf16.mxu0 0
    %5137 = vmatpush1.bf16.msra.mxu0 0
    %5138 = vmatprep.subr.bf16.mxu0 0
    %5139 = vmatpush1.bf16.msra.mxu0 0
    %5140 = vmatprep.subr.bf16.mxu0 0
    %5141 = vmatpush1.bf16.msra.mxu0 0
    %5142 = vmatprep.mubr.bf16.mxu0 0
    %5143 = vmatmul.mubr.bf16.gmra.mrb[0].mxu0 %v5105
    %v5144 = vpop.f32.mrb[0].mxu0
    %v5145 = vadd.f32 0.0, %v5144
    %v5146 = vpop.f32.mrb[0].mxu0
    %v5147 = vpop.f32.mrb[0].mxu0
    %v5148 = vpop.f32.mrb[0].mxu0
    %5149 = vdwg.mxu0
    %v5151 = vsel %vm567, %v5056, 0
    %v5154 = vsel %vm622, %v4820, 0
    %5156 = vmatprep.subr.bf16.mxu0 0
    %5157 = vmatpush1.bf16.msra.mxu0 %v5154
    %5158 = vmatprep.subr.bf16.mxu0 0
    %5159 = vmatpush1.bf16.msra.mxu0 0
    %5160 = vmatprep.subr.bf16.mxu0 0
    %5161 = vmatpush1.bf16.msra.mxu0 0
    %5162 = vmatprep.subr.bf16.mxu0 0
    %5163 = vmatpush1.bf16.msra.mxu0 0
    %5164 = vmatprep.subr.bf16.mxu0 0
    %5165 = vmatpush1.bf16.msra.mxu0 0
    %5166 = vmatprep.subr.bf16.mxu0 0
    %5167 = vmatpush1.bf16.msra.mxu0 0
    %5168 = vmatprep.subr.bf16.mxu0 0
    %5169 = vmatpush1.bf16.msra.mxu0 0
    %5170 = vmatprep.subr.bf16.mxu0 0
    %5171 = vmatpush1.bf16.msra.mxu0 0
    %5172 = vmatprep.subr.bf16.mxu0 0
    %5173 = vmatpush1.bf16.msra.mxu0 0
    %5174 = vmatprep.subr.bf16.mxu0 0
    %5175 = vmatpush1.bf16.msra.mxu0 0
    %5176 = vmatprep.subr.bf16.mxu0 0
    %5177 = vmatpush1.bf16.msra.mxu0 0
    %5178 = vmatprep.subr.bf16.mxu0 0
    %5179 = vmatpush1.bf16.msra.mxu0 0
    %5180 = vmatprep.subr.bf16.mxu0 0
    %5181 = vmatpush1.bf16.msra.mxu0 0
    %5182 = vmatprep.subr.bf16.mxu0 0
    %5183 = vmatpush1.bf16.msra.mxu0 0
    %5184 = vmatprep.subr.bf16.mxu0 0
    %5185 = vmatpush1.bf16.msra.mxu0 0
    %5186 = vmatprep.subr.bf16.mxu0 0
    %5187 = vmatpush1.bf16.msra.mxu0 0
    %5188 = vmatprep.mubr.bf16.mxu0 0
    %5189 = vmatmul.mubr.bf16.gmra.mrb[0].mxu0 %v5151
    %v5190 = vpop.f32.mrb[0].mxu0
    %v5191 = vadd.f32 0.0, %v5190
    %v5192 = vpop.f32.mrb[0].mxu0
    %v5193 = vpop.f32.mrb[0].mxu0
    %v5194 = vpop.f32.mrb[0].mxu0
    %5195 = vdwg.mxu0
    %v5197 = vsel %vm567, %v5057, 0
    %v5200 = vsel %vm622, %v4821, 0
    %5202 = vmatprep.subr.bf16.mxu0 0
    %5203 = vmatpush1.bf16.msra.mxu0 %v5200
    %5204 = vmatprep.subr.bf16.mxu0 0
    %5205 = vmatpush1.bf16.msra.mxu0 0
    %5206 = vmatprep.subr.bf16.mxu0 0
    %5207 = vmatpush1.bf16.msra.mxu0 0
    %5208 = vmatprep.subr.bf16.mxu0 0
    %5209 = vmatpush1.bf16.msra.mxu0 0
    %5210 = vmatprep.subr.bf16.mxu0 0
    %5211 = vmatpush1.bf16.msra.mxu0 0
    %5212 = vmatprep.subr.bf16.mxu0 0
    %5213 = vmatpush1.bf16.msra.mxu0 0
    %5214 = vmatprep.subr.bf16.mxu0 0
    %5215 = vmatpush1.bf16.msra.mxu0 0
    %5216 = vmatprep.subr.bf16.mxu0 0
    %5217 = vmatpush1.bf16.msra.mxu0 0
    %5218 = vmatprep.subr.bf16.mxu0 0
    %5219 = vmatpush1.bf16.msra.mxu0 0
    %5220 = vmatprep.subr.bf16.mxu0 0
    %5221 = vmatpush1.bf16.msra.mxu0 0
    %5222 = vmatprep.subr.bf16.mxu0 0
    %5223 = vmatpush1.bf16.msra.mxu0 0
    %5224 = vmatprep.subr.bf16.mxu0 0
    %5225 = vmatpush1.bf16.msra.mxu0 0
    %5226 = vmatprep.subr.bf16.mxu0 0
    %5227 = vmatpush1.bf16.msra.mxu0 0
    %5228 = vmatprep.subr.bf16.mxu0 0
    %5229 = vmatpush1.bf16.msra.mxu0 0
    %5230 = vmatprep.subr.bf16.mxu0 0
    %5231 = vmatpush1.bf16.msra.mxu0 0
    %5232 = vmatprep.subr.bf16.mxu0 0
    %5233 = vmatpush1.bf16.msra.mxu0 0
    %5234 = vmatprep.mubr.bf16.mxu0 0
    %5235 = vmatmul.mubr.bf16.gmra.mrb[0].mxu0 %v5197
    %v5236 = vpop.f32.mrb[0].mxu0
    %v5237 = vadd.f32 0.0, %v5236
    %v5238 = vpop.f32.mrb[0].mxu0
    %v5239 = vpop.f32.mrb[0].mxu0
    %v5240 = vpop.f32.mrb[0].mxu0
    %5241 = vdwg.mxu0
    %5244 = vrot.lane.b32.xlu0 %v5191, 16
    %v5245 = vpop.permute.xlu0 %5244
    %5246 = vrot.lane.b32.xlu0 %v5237, 16
    %v5247 = vpop.permute.xlu0 %5246
    %v5250 = vsel %vm140, %v5099, %v5245
    %v5251 = vsel %vm140, %v5145, %v5247
    %v5252 = vadd.f32 %v3956, %v4752
    %v5253 = vadd.f32 %v3957, %v4753
    %5256 = vrot.lane.b32.xlu0 %v5250, 32
    %v5257 = vpop.permute.xlu0 %5256
    %5258 = vrot.lane.b32.xlu0 %v5251, 32
    %v5259 = vpop.permute.xlu0 %5258
    %v5262 = vadd.f32 %v3958, %v5257
    %v5263 = vadd.f32 %v3959, %v5259
    %5266 = vrot.lane.b32.xlu0 %v5262, 96
    %v5267 = vpop.permute.xlu0 %5266
    %5268 = vrot.lane.b32.xlu0 %v5263, 96
    %v5269 = vpop.permute.xlu0 %5268
    %v5272 = vpack.c.bf16 %v5253, %v5252
    %v5273 = vpack.c.bf16 %v5269, %v5267
    %v5275 = vlaneseq
    %v5276 = vshrl.u32 %v5275, 7
    %v5277 = vsub.s32 0, %v5276
    %v5278 = vrot.slane %v3980, %v5277
    %v5284 = vunpack.c.l.b16 %v3975
    %v5285 = vunpack.c.l.b16 %v3976
    %v5286 = vunpack.c.l.b16 %v3977
    %v5287 = vunpack.c.l.b16 %v3978
    %v5288 = vpack.c.b16 %v5285, %v5284
    %v5289 = vpack.c.b16 %v5287, %v5286
    %v5293 = vsel %vm255, %v5272, 0
    %v5296 = vsel %vm255, %v5273, 0
    %5298 = vmatprep.subr.bf16.mxu0 0
    %5299 = vmatpush1.bf16.msra.mxu0 %v5288
    %5300 = vmatprep.subr.bf16.mxu0 0
    %5301 = vmatpush1.bf16.msra.mxu0 %v5289
    %5302 = vmatprep.subr.bf16.mxu0 0
    %5303 = vmatpush1.bf16.msra.mxu0 0
    %5304 = vmatprep.subr.bf16.mxu0 0
    %5305 = vmatpush1.bf16.msra.mxu0 0
    %5306 = vmatprep.subr.bf16.mxu0 0
    %5307 = vmatpush1.bf16.msra.mxu0 0
    %5308 = vmatprep.subr.bf16.mxu0 0
    %5309 = vmatpush1.bf16.msra.mxu0 0
    %5310 = vmatprep.subr.bf16.mxu0 0
    %5311 = vmatpush1.bf16.msra.mxu0 0
    %5312 = vmatprep.subr.bf16.mxu0 0
    %5313 = vmatpush1.bf16.msra.mxu0 0
    %5314 = vmatprep.subr.bf16.mxu0 0
    %5315 = vmatpush1.bf16.msra.mxu0 0
    %5316 = vmatprep.subr.bf16.mxu0 0
    %5317 = vmatpush1.bf16.msra.mxu0 0
    %5318 = vmatprep.subr.bf16.mxu0 0
    %5319 = vmatpush1.bf16.msra.mxu0 0
    %5320 = vmatprep.subr.bf16.mxu0 0
    %5321 = vmatpush1.bf16.msra.mxu0 0
    %5322 = vmatprep.subr.bf16.mxu0 0
    %5323 = vmatpush1.bf16.msra.mxu0 0
    %5324 = vmatprep.subr.bf16.mxu0 0
    %5325 = vmatpush1.bf16.msra.mxu0 0
    %5326 = vmatprep.subr.bf16.mxu0 0
    %5327 = vmatpush1.bf16.msra.mxu0 0
    %5328 = vmatprep.subr.bf16.mxu0 0
    %5329 = vmatpush1.bf16.msra.mxu0 0
    %5330 = vmatprep.mubr.bf16.mxu0 0
    %5331 = vmatmul.mubr.bf16.gmra.mrb[0].mxu0 %v5293
    %v5332 = vpop.f32.mrb[0].mxu0
    %v5333 = vadd.f32 %v5278, %v5332
    %v5334 = vpop.f32.mrb[0].mxu0
    %v5335 = vpop.f32.mrb[0].mxu0
    %v5336 = vadd.f32 %v5278, %v5335
    %v5337 = vpop.f32.mrb[0].mxu0
    %5338 = vmatprep.mubr.bf16.mxu0 0
    %5339 = vmatmul.mubr.bf16.gmra.mrb[0].mxu0 %v5296
    %v5340 = vpop.f32.mrb[0].mxu0
    %v5341 = vadd.f32 %v5278, %v5340
    %v5342 = vpop.f32.mrb[0].mxu0
    %v5343 = vpop.f32.mrb[0].mxu0
    %v5344 = vadd.f32 %v5278, %v5343
    %v5345 = vpop.f32.mrb[0].mxu0
    %5346 = vdwg.mxu0
    %v5347 = vmax.f32 %v5333, 0.0
    %v5348 = vmax.f32 %v5336, 0.0
    %v5349 = vmax.f32 %v5341, 0.0
    %v5350 = vmax.f32 %v5344, 0.0
    %v5351 = vadd.f32 %v2771, %v3952
    %v5352 = vadd.f32 %v2772, %v3953
    %v5353 = vadd.f32 %v5351, %v5347
    %v5354 = vadd.f32 %v5352, %v5348
    %v5355 = vadd.f32 %v2773, %v3954
    %v5356 = vadd.f32 %v2774, %v3955
    %v5357 = vadd.f32 %v5355, %v5349
    %v5358 = vadd.f32 %v5356, %v5350
    %5359 = vst.msk [vmem:[#allocation13] sm:$0xff] %vm255, %v5353
    %5360 = vst.msk [vmem:[#allocation13 + $0x8] sm:$0xff] %vm255, %v5354
    %5363 = vrot.lane.b32.xlu0 %v5357, 96
    %v5364 = vpop.permute.xlu0 %5363
    %5365 = vrot.lane.b32.xlu0 %v5358, 96
    %v5366 = vpop.permute.xlu0 %5365
    %5369 = vst.msk [vmem:[#allocation14] sm:$0xff] %vm255, %v5364
    %5370 = vst.msk [vmem:[#allocation14 + $0x8] sm:$0xff] %vm255, %v5366
    // Predicated region
    $region62: #{multiblocks_forward.1} parent=1 // pred_check
      _
    $region63: #{multiblocks_forward.1} parent=1 // pred_check_branch
      %5372 = sbr.rel (0) target = $region65
    $region64: #{multiblocks_forward.1} parent=1 // pred_region
      %s5374 = ssub.s32 256, 256
      %5375 = vsyncadd [#allocation4], %s5374
      %s5376 = sshll.u32 [#allocation13], 4
      %s5377 = int_to_ptr.vmem [resolvable:$true] %s5376
      %5382 = dma.vmem_to_hbm [thread:$0]  %s5377, 256, %s9, [#allocation4], 128, 128, 8
    $region65: #{multiblocks_forward.1} parent=1 // pred_fallthru
      _
    // Predicated region
    $region66: #{multiblocks_forward.1} parent=1 // pred_check
      _
    $region67: #{multiblocks_forward.1} parent=1 // pred_check_branch
      %5384 = sbr.rel (0) target = $region69
    $region68: #{multiblocks_forward.1} parent=1 // pred_region
      %s5386 = ssub.s32 256, 256
      %5387 = vsyncadd [#allocation15], %s5386
      %s5388 = sshll.u32 [#allocation14], 4
      %s5389 = int_to_ptr.vmem [resolvable:$true] %s5388
      %5394 = dma.vmem_to_hbm [thread:$0]  %s5389, 256, %s10, [#allocation15], 128, 128, 8
    $region69: #{multiblocks_forward.1} parent=1 // pred_fallthru
      _
    // Predicated region
    $region70: #{multiblocks_forward.1} parent=1 // pred_check
      _
    $region71: #{multiblocks_forward.1} parent=1 // pred_check_branch
      %5396 = sbr.rel (0) target = $region73
    $region72: #{multiblocks_forward.1} parent=1 // pred_region
      %5397 = dma.done [#allocation4], 256
    $region73: #{multiblocks_forward.1} parent=1 // pred_fallthru
      _
    // Predicated region
    $region74: #{multiblocks_forward.1} parent=1 // pred_check
      _
    $region75: #{multiblocks_forward.1} parent=1 // pred_check_branch
      %5399 = sbr.rel (0) target = $region77
    $region76: #{multiblocks_forward.1} parent=1 // pred_region
      %5400 = dma.done [#allocation15], 256
    $region77: #{multiblocks_forward.1} parent=1 // pred_fallthru
      _
    %5401 = vsyncpa [#allocation3], 1
    %5402 = vsyncpa [#allocation6], 1
    %5403 = vsyncpa [#allocation9], 1
    %5404 = vsyncpa [#allocation12], 1
    %5405 = vsyncpa [#allocation4], 1
    %5406 = vsyncpa [#allocation15], 1

</llo_original>
